<compile_context>
chip_gen: v7x
topology: tpu7x:2x2x1
jax: 0.10.0
libtpu: 0.0.40
codegen_flags: <defaults>
</compile_context>

<pallas_src>
import numpy as np
import jax
import jax.numpy as jnp
from jax.experimental import pallas as pl
from jax.experimental.pallas import tpu as pltpu

ALPHABET_LEN = 26   # len(Arguments().alphabet)
CLASS_PAD = 32      # class dim padded to a full sublane tile


# ---------------------------------------------------------------------------
# Fused kernel (whole network for one batch tile of `tb` images, batch on lanes)
# ---------------------------------------------------------------------------
def _make_kernel(tb):
    f32, bf16 = jnp.float32, jnp.bfloat16

    def kernel(x_ref, a1_ref, b1_ref, a2_ref, b2_ref,
               wf1_ref, c1_ref, wf2_ref, c2_ref, wf3_ref, c3_ref,
               wf4_ref, c4_ref, out_ref, h1_ref, h2_ref):
        a1 = a1_ref[...]                                     # (448, 192) bf16
        a2 = a2_ref[...]                                     # (320, 672) bf16
        # Hoisted bias lane-broadcasts (computed once, reused in every loop iteration).
        b1b = jnp.broadcast_to(b1_ref[...], (14, 8, tb))     # f32
        b2b = jnp.broadcast_to(b2_ref[...], (5, 16, tb))     # f32

        # ---- conv1 + bias + ReLU + 2x2 max-pool: one paired-row MXU dot per pool row
        @pl.loop(0, 14)
        def _(oi):
            r = pl.multiple_of(2 * oi, 2)
            patch = x_ref[pl.ds(r, 6), :, :].reshape(6 * 32, tb)          # (192, tb) bf16
            acc = jnp.dot(a1, patch, preferred_element_type=f32)          # (448, tb) f32
            m = jnp.maximum(acc[:224], acc[224:]).reshape(14, 2, 8, tb)   # pool rows
            pooled = jnp.maximum(m[:, 0], m[:, 1])                        # pool cols -> (14,8,tb)
            h1_ref[oi, :, :] = (jnp.maximum(pooled + b1b, 0.0)
                                .reshape(112, tb).astype(bf16))

        # ---- conv2 + bias + ReLU + 2x2 max-pool (5 iterations, kept unrolled)
        for oi in range(5):
            patch = h1_ref[2 * oi:2 * oi + 6, :, :].reshape(672, tb)      # (672, tb) bf16
            acc = jnp.dot(a2, patch, preferred_element_type=f32)          # (320, tb) f32
            m = jnp.maximum(acc[:160], acc[160:]).reshape(5, 2, 16, tb)
            pooled = jnp.maximum(m[:, 0], m[:, 1])                        # (5, 16, tb)
            h2_ref[oi, :, :] = (jnp.maximum(pooled + b2b, 0.0)
                                .reshape(80, tb).astype(bf16))

        # ---- FC head, batch on lanes: (out, in) @ (in, tb), all padded to 128
        h = h2_ref[...].reshape(400, tb)                                  # (H,W,C)-order, bf16
        h = jnp.maximum(jnp.dot(wf1_ref[...], h, preferred_element_type=f32)
                        + c1_ref[...], 0.0).astype(bf16)
        h = jnp.maximum(jnp.dot(wf2_ref[...], h, preferred_element_type=f32)
                        + c2_ref[...], 0.0).astype(bf16)
        h = jnp.maximum(jnp.dot(wf3_ref[...], h, preferred_element_type=f32)
                        + c3_ref[...], 0.0).astype(bf16)
        logits = jnp.dot(wf4_ref[...], h, preferred_element_type=f32) + c4_ref[...]

        # stable log_softmax over axis 0; padded class rows carry a -1e30 bias so their
        # exp underflows to 0 and the normalization only sees the 26 real classes.
        z = logits - jnp.max(logits, axis=0, keepdims=True)
        out_ref[...] = z - jnp.log(jnp.sum(jnp.exp(z), axis=0, keepdims=True))

    return kernel


# ---------------------------------------------------------------------------
# One-time, host-side parameter preparation (hoisted out of the jitted hot path)
# ---------------------------------------------------------------------------
def prepare_params(p):
    f32 = np.float32
    w1 = np.asarray(p["w_conv1"], f32)            # (6, 1, 5, 5)  (Cout,Cin,kH,kW)
    w2 = np.asarray(p["w_conv2"], f32)            # (16, 6, 5, 5)

    # paired conv1 Toeplitz: rows (pair, j, co8) = 2*28*8 = 448, cols (di6, j2) = 192
    a1 = np.zeros((2, 28, 8, 6, 32), f32)
    for pr in range(2):
        for j in range(28):
            a1[pr, j, :6, pr:pr + 5, j:j + 5] = w1[:, 0]
    a1 = a1.reshape(448, 192)
    b1 = np.zeros((14, 8, 1), f32)
    b1[:, :6, 0] = np.asarray(p["b_conv1"], f32)[None, :]

    # paired conv2 Toeplitz: rows (pair, j, co) = 2*10*16 = 320, cols (di6, j2_14, ci8) = 672
    w2t = np.transpose(w2, (0, 2, 3, 1))          # (co, dr, dc, ci)
    a2 = np.zeros((2, 10, 16, 6, 14, 8), f32)
    for pr in range(2):
        for j in range(10):
            a2[pr, j, :, pr:pr + 5, j:j + 5, :6] = w2t
    a2 = a2.reshape(320, 672)
    b2 = np.zeros((5, 16, 1), f32)
    b2[:, :, 0] = np.asarray(p["b_conv2"], f32)[None, :]

    # fc1: permute PyTorch (C,H,W)-flatten columns into the kernel's (H,W,C) order
    # (one-time weight permutation, zero runtime cost); pad in/out dims to 128.
    idx = np.asarray([c * 25 + h * 5 + w
                      for h in range(5) for w in range(5) for c in range(16)], np.int32)
    wf1 = np.zeros((128, 400), f32); wf1[:120] = np.asarray(p["w_fc1"], f32)[:, idx]
    cf1 = np.zeros((128, 1), f32);   cf1[:120, 0] = np.asarray(p["b_fc1"], f32)
    wf2 = np.zeros((128, 128), f32); wf2[:84, :120] = np.asarray(p["w_fc2"], f32)
    cf2 = np.zeros((128, 1), f32);   cf2[:84, 0] = np.asarray(p["b_fc2"], f32)
    wf3 = np.zeros((128, 128), f32); wf3[:63, :84] = np.asarray(p["w_fc3"], f32)
    cf3 = np.zeros((128, 1), f32);   cf3[:63, 0] = np.asarray(p["b_fc3"], f32)
    # class dim padded 26 -> 32; padded rows get a huge negative bias (ignored by softmax)
    wf4 = np.zeros((CLASS_PAD, 128), f32)
    wf4[:ALPHABET_LEN, :63] = np.asarray(p["w_fc4"], f32)
    cf4 = np.full((CLASS_PAD, 1), -1e30, f32)
    cf4[:ALPHABET_LEN, 0] = np.asarray(p["b_fc4"], f32)

    bf16, jf32 = jnp.bfloat16, jnp.float32
    return (jnp.asarray(a1, bf16), jnp.asarray(b1, jf32),
            jnp.asarray(a2, bf16), jnp.asarray(b2, jf32),
            jnp.asarray(wf1, bf16), jnp.asarray(cf1, jf32),
            jnp.asarray(wf2, bf16), jnp.asarray(cf2, jf32),
            jnp.asarray(wf3, bf16), jnp.asarray(cf3, jf32),
            jnp.asarray(wf4, bf16), jnp.asarray(cf4, jf32))


def _resident_spec(arr):
    nd = arr.ndim
    return pl.BlockSpec(arr.shape, lambda i, _nd=nd: (0,) * _nd)


# ---------------------------------------------------------------------------
# Public forward (matches ConvolutionalNN.forward; x: NCHW (B, 1, 32, 32))
# Takes the PREPARED weight tuple (call prepare_params once, outside jit).
# ---------------------------------------------------------------------------
def forward(weights, x_nchw):
    B, C, H, W = x_nchw.shape
    assert (C, H, W) == (1, 32, 32), "LeNet head expects 1x32x32 inputs"

    # batch on the lane axis: (32, 32, B); bf16 halves input DMA bytes.
    x = jnp.transpose(x_nchw.reshape(B, 32, 32), (1, 2, 0)).astype(jnp.bfloat16)

    tb = 128                                     # always lane-dense (pad batch to 128)
    bp = ((B + tb - 1) // tb) * tb
    if bp != B:
        x = jnp.pad(x, ((0, 0), (0, 0), (0, bp - B)))

    out = pl.pallas_call(
        _make_kernel(tb),
        out_shape=jax.ShapeDtypeStruct((CLASS_PAD, bp), jnp.float32),
        grid_spec=pltpu.PrefetchScalarGridSpec(
            num_scalar_prefetch=0,
            grid=(bp // tb,),
            in_specs=[pl.BlockSpec((32, 32, tb), lambda i: (0, 0, i))]
                     + [_resident_spec(w) for w in weights],
            out_specs=pl.BlockSpec((CLASS_PAD, tb), lambda i: (0, i)),
            scratch_shapes=[pltpu.VMEM((14, 112, tb), jnp.bfloat16),   # pooled conv1
                            pltpu.VMEM((5, 80, tb), jnp.bfloat16)]),   # pooled conv2
        compiler_params=pltpu.CompilerParams(
            dimension_semantics=("parallel",),
            vmem_limit_bytes=32 * 1024 * 1024),
    )(x, *weights)

    return jnp.transpose(out)[:B, :ALPHABET_LEN]   # (B, 26) log-probabilities


# ---------------------------------------------------------------------------
# Params + pure-JAX reference (for correctness checking only)
# ---------------------------------------------------------------------------
def init_params(key):
    ks = jax.random.split(key, 12)

    def u(k, shape, fan_in):
        bound = fan_in ** -0.5
        return jax.random.uniform(k, shape, jnp.float32, -bound, bound)

    return {
        "w_conv1": u(ks[0], (6, 1, 5, 5), 25),   "b_conv1": u(ks[1], (6,), 25),
        "w_conv2": u(ks[2], (16, 6, 5, 5), 150), "b_conv2": u(ks[3], (16,), 150),
        "w_fc1": u(ks[4], (120, 400), 400),      "b_fc1": u(ks[5], (120,), 400),
        "w_fc2": u(ks[6], (84, 120), 120),       "b_fc2": u(ks[7], (84,), 120),
        "w_fc3": u(ks[8], (63, 84), 84),         "b_fc3": u(ks[9], (63,), 84),
        "w_fc4": u(ks[10], (ALPHABET_LEN, 63), 63),
        "b_fc4": u(ks[11], (ALPHABET_LEN,), 63),
    }


def reference_forward(params, x):
    def pool(t):
        b, c, h, w = t.shape
        return t.reshape(b, c, h // 2, 2, w // 2, 2).max(axis=(3, 5))

    dn = ("NCHW", "OIHW", "NCHW")
    out = jax.lax.conv_general_dilated(x, params["w_conv1"], (1, 1), "VALID",
                                       dimension_numbers=dn)
    out = pool(jax.nn.relu(out + params["b_conv1"].reshape(1, -1, 1, 1)))
    out = jax.lax.conv_general_dilated(out, params["w_conv2"], (1, 1), "VALID",
                                       dimension_numbers=dn)
    out = pool(jax.nn.relu(out + params["b_conv2"].reshape(1, -1, 1, 1)))
    out = out.reshape(out.shape[0], -1)
    out = jax.nn.relu(out @ params["w_fc1"].T + params["b_fc1"])
    out = jax.nn.relu(out @ params["w_fc2"].T + params["b_fc2"])
    out = jax.nn.relu(out @ params["w_fc3"].T + params["b_fc3"])
    out = out @ params["w_fc4"].T + params["b_fc4"]
    return jax.nn.log_softmax(out, axis=-1)


if __name__ == "__main__":
    key = jax.random.PRNGKey(0)
    kx, kp = jax.random.split(key)

    batch = 8
    x = jax.random.normal(kx, (batch, 1, 32, 32), jnp.float32)
    params = init_params(kp)

    weights = prepare_params(params)          # one-time prep, hoisted out of the hot path
    fwd = jax.jit(forward)
    out = jax.block_until_ready(fwd(weights, x))

    assert out.shape == (batch, ALPHABET_LEN)
    assert bool(jnp.all(jnp.isfinite(out)))
    # log-softmax rows sum (in prob space) to ~1
    assert jnp.allclose(jnp.sum(jnp.exp(out), axis=-1), 1.0, atol=1e-3)
    # match the PyTorch-semantics reference (bf16 MXU dots -> loose tolerance)
    ref = reference_forward(params, x)
    max_err = float(jnp.max(jnp.abs(out - ref)))
    assert max_err < 0.1, f"mismatch vs reference: {max_err}"

    print("KERNEL_OK")
</pallas_src>

<mosaic_0001>
module attributes {stable_mosaic.version = 11 : i64} {
  func.func @kernel(%arg0: i32, %arg1: memref<32x32x128xbf16, #tpu.memory_space<vmem>>, %arg2: memref<448x192xbf16, #tpu.memory_space<vmem>>, %arg3: memref<14x8x1xf32, #tpu.memory_space<vmem>>, %arg4: memref<320x672xbf16, #tpu.memory_space<vmem>>, %arg5: memref<5x16x1xf32, #tpu.memory_space<vmem>>, %arg6: memref<128x400xbf16, #tpu.memory_space<vmem>>, %arg7: memref<128x1xf32, #tpu.memory_space<vmem>>, %arg8: memref<128x128xbf16, #tpu.memory_space<vmem>>, %arg9: memref<128x1xf32, #tpu.memory_space<vmem>>, %arg10: memref<128x128xbf16, #tpu.memory_space<vmem>>, %arg11: memref<128x1xf32, #tpu.memory_space<vmem>>, %arg12: memref<32x128xbf16, #tpu.memory_space<vmem>>, %arg13: memref<32x1xf32, #tpu.memory_space<vmem>>, %arg14: memref<32x128xf32, #tpu.memory_space<vmem>>, %arg15: memref<14x112x128xbf16, #tpu.memory_space<vmem>>, %arg16: memref<5x80x128xbf16, #tpu.memory_space<vmem>>) attributes {dimension_semantics = [#tpu.dimension_semantics<parallel>], iteration_bounds = array<i64: 1>, scalar_prefetch = 0 : i64, scratch_operands = 2 : i64, tpu.core_type = #tpu.core_type<tc>, window_params = [{transform_indices = @transform_0, window_bounds = array<i64: 32, 32, 128>}, {pipeline_mode = #tpu.pipeline_mode<synchronous>, transform_indices = @transform_1, window_bounds = array<i64: 448, 192>}, {pipeline_mode = #tpu.pipeline_mode<synchronous>, transform_indices = @transform_2, window_bounds = array<i64: 14, 8, 1>}, {pipeline_mode = #tpu.pipeline_mode<synchronous>, transform_indices = @transform_3, window_bounds = array<i64: 320, 672>}, {pipeline_mode = #tpu.pipeline_mode<synchronous>, transform_indices = @transform_4, window_bounds = array<i64: 5, 16, 1>}, {pipeline_mode = #tpu.pipeline_mode<synchronous>, transform_indices = @transform_5, window_bounds = array<i64: 128, 400>}, {pipeline_mode = #tpu.pipeline_mode<synchronous>, transform_indices = @transform_6, window_bounds = array<i64: 128, 1>}, {pipeline_mode = #tpu.pipeline_mode<synchronous>, transform_indices = @transform_7, window_bounds = array<i64: 128, 128>}, {pipeline_mode = #tpu.pipeline_mode<synchronous>, transform_indices = @transform_8, window_bounds = array<i64: 128, 1>}, {pipeline_mode = #tpu.pipeline_mode<synchronous>, transform_indices = @transform_9, window_bounds = array<i64: 128, 128>}, {pipeline_mode = #tpu.pipeline_mode<synchronous>, transform_indices = @transform_10, window_bounds = array<i64: 128, 1>}, {pipeline_mode = #tpu.pipeline_mode<synchronous>, transform_indices = @transform_11, window_bounds = array<i64: 32, 128>}, {pipeline_mode = #tpu.pipeline_mode<synchronous>, transform_indices = @transform_12, window_bounds = array<i64: 32, 1>}, {transform_indices = @transform_13, window_bounds = array<i64: 32, 128>}]} {
    %c0 = arith.constant 0 : index
    %c0_0 = arith.constant 0 : index
    %0 = vector.load %arg2[%c0, %c0_0] : memref<448x192xbf16, #tpu.memory_space<vmem>>, vector<448x192xbf16>
    %c0_1 = arith.constant 0 : index
    %c0_2 = arith.constant 0 : index
    %1 = vector.load %arg4[%c0_1, %c0_2] : memref<320x672xbf16, #tpu.memory_space<vmem>>, vector<320x672xbf16>
    %c0_3 = arith.constant 0 : index
    %c0_4 = arith.constant 0 : index
    %c0_5 = arith.constant 0 : index
    %2 = vector.load %arg3[%c0_3, %c0_4, %c0_5] : memref<14x8x1xf32, #tpu.memory_space<vmem>>, vector<14x8x1xf32>
    %3 = vector.shape_cast %2 : vector<14x8x1xf32> to vector<14x8x1xf32>
    %4 = vector.broadcast %3 : vector<14x8x1xf32> to vector<14x8x128xf32>
    %c0_6 = arith.constant 0 : index
    %c0_7 = arith.constant 0 : index
    %c0_8 = arith.constant 0 : index
    %5 = vector.load %arg5[%c0_6, %c0_7, %c0_8] : memref<5x16x1xf32, #tpu.memory_space<vmem>>, vector<5x16x1xf32>
    %6 = vector.shape_cast %5 : vector<5x16x1xf32> to vector<5x16x1xf32>
    %7 = vector.broadcast %6 : vector<5x16x1xf32> to vector<5x16x128xf32>
    %c0_i32 = arith.constant 0 : i32
    %c14_i32 = arith.constant 14 : i32
    %8 = arith.addi %c0_i32, %c14_i32 : i32
    %c1_i32 = arith.constant 1 : i32
    scf.for %arg17 = %c0_i32 to %8 step %c1_i32  : i32 {
      %c1_i32_73 = arith.constant 1 : i32
      %151 = arith.muli %arg17, %c1_i32_73 : i32
      %c0_i32_74 = arith.constant 0 : i32
      %152 = arith.addi %c0_i32_74, %151 : i32
      %c2_i32 = arith.constant 2 : i32
      %153 = arith.muli %c2_i32, %152 : i32
      %154 = tpu.assume_multiple %153, 2 : i32
      %155 = arith.index_cast %154 : i32 to index
      %c0_75 = arith.constant 0 : index
      %c0_76 = arith.constant 0 : index
      %156 = vector.load %arg1[%155, %c0_75, %c0_76] : memref<32x32x128xbf16, #tpu.memory_space<vmem>>, vector<6x32x128xbf16>
      %157 = vector.shape_cast %156 : vector<6x32x128xbf16> to vector<192x128xbf16>
      %cst_77 = arith.constant dense<0.000000e+00> : vector<448x128xf32>
      %158 = tpu.matmul %0, %157, %cst_77 {dimension_numbers = #tpu.dot_dimension_numbers<[1], [0], [0], [1], [0, 0, 1, 1], [], []>} : vector<448x192xbf16>, vector<192x128xbf16>, vector<448x128xf32> -> vector<448x128xf32>
      %159 = vector.extract_strided_slice %158 {offsets = [0, 0], sizes = [224, 128], strides = [1, 1]} : vector<448x128xf32> to vector<224x128xf32>
      %160 = vector.extract_strided_slice %158 {offsets = [224, 0], sizes = [224, 128], strides = [1, 1]} : vector<448x128xf32> to vector<224x128xf32>
      %161 = arith.maximumf %159, %160 : vector<224x128xf32>
      %162 = vector.shape_cast %161 : vector<224x128xf32> to vector<14x2x8x128xf32>
      %163 = vector.extract_strided_slice %162 {offsets = [0, 0, 0, 0], sizes = [14, 1, 8, 128], strides = [1, 1, 1, 1]} : vector<14x2x8x128xf32> to vector<14x1x8x128xf32>
      %164 = vector.shape_cast %163 : vector<14x1x8x128xf32> to vector<14x8x128xf32>
      %165 = vector.extract_strided_slice %162 {offsets = [0, 1, 0, 0], sizes = [14, 1, 8, 128], strides = [1, 1, 1, 1]} : vector<14x2x8x128xf32> to vector<14x1x8x128xf32>
      %166 = vector.shape_cast %165 : vector<14x1x8x128xf32> to vector<14x8x128xf32>
      %167 = arith.maximumf %164, %166 : vector<14x8x128xf32>
      %168 = arith.addf %167, %4 : vector<14x8x128xf32>
      %cst_78 = arith.constant 0.000000e+00 : f32
      %169 = vector.broadcast %cst_78 : f32 to vector<14x8x128xf32>
      %170 = arith.maximumf %168, %169 : vector<14x8x128xf32>
      %171 = vector.shape_cast %170 : vector<14x8x128xf32> to vector<112x128xf32>
      %172 = arith.truncf %171 : vector<112x128xf32> to vector<112x128xbf16>
      %173 = arith.index_cast %152 : i32 to index
      %c0_79 = arith.constant 0 : index
      %c0_80 = arith.constant 0 : index
      %174 = vector.load %arg15[%173, %c0_79, %c0_80] : memref<14x112x128xbf16, #tpu.memory_space<vmem>>, vector<1x112x128xbf16>
      %175 = vector.shape_cast %174 : vector<1x112x128xbf16> to vector<112x128xbf16>
      %176 = vector.shape_cast %172 : vector<112x128xbf16> to vector<1x112x128xbf16>
      tpu.vector_store %arg15[%173, %c0_79, %c0_80], %176 {strides = array<i32>} : memref<14x112x128xbf16, #tpu.memory_space<vmem>>, vector<1x112x128xbf16>,
    }
    %c14_i32_9 = arith.constant 14 : i32
    %c0_10 = arith.constant 0 : index
    %c0_11 = arith.constant 0 : index
    %c0_12 = arith.constant 0 : index
    %9 = vector.load %arg15[%c0_10, %c0_11, %c0_12] : memref<14x112x128xbf16, #tpu.memory_space<vmem>>, vector<6x112x128xbf16>
    %10 = vector.shape_cast %9 : vector<6x112x128xbf16> to vector<672x128xbf16>
    %cst = arith.constant dense<0.000000e+00> : vector<320x128xf32>
    %11 = tpu.matmul %1, %10, %cst {dimension_numbers = #tpu.dot_dimension_numbers<[1], [0], [0], [1], [0, 0, 1, 1], [], []>} : vector<320x672xbf16>, vector<672x128xbf16>, vector<320x128xf32> -> vector<320x128xf32>
    %12 = vector.extract_strided_slice %11 {offsets = [0, 0], sizes = [160, 128], strides = [1, 1]} : vector<320x128xf32> to vector<160x128xf32>
    %13 = vector.extract_strided_slice %11 {offsets = [160, 0], sizes = [160, 128], strides = [1, 1]} : vector<320x128xf32> to vector<160x128xf32>
    %14 = arith.maximumf %12, %13 : vector<160x128xf32>
    %15 = vector.shape_cast %14 : vector<160x128xf32> to vector<5x2x16x128xf32>
    %16 = vector.extract_strided_slice %15 {offsets = [0, 0, 0, 0], sizes = [5, 1, 16, 128], strides = [1, 1, 1, 1]} : vector<5x2x16x128xf32> to vector<5x1x16x128xf32>
    %17 = vector.shape_cast %16 : vector<5x1x16x128xf32> to vector<5x16x128xf32>
    %18 = vector.extract_strided_slice %15 {offsets = [0, 1, 0, 0], sizes = [5, 1, 16, 128], strides = [1, 1, 1, 1]} : vector<5x2x16x128xf32> to vector<5x1x16x128xf32>
    %19 = vector.shape_cast %18 : vector<5x1x16x128xf32> to vector<5x16x128xf32>
    %20 = arith.maximumf %17, %19 : vector<5x16x128xf32>
    %21 = arith.addf %20, %7 : vector<5x16x128xf32>
    %cst_13 = arith.constant 0.000000e+00 : f32
    %22 = vector.broadcast %cst_13 : f32 to vector<5x16x128xf32>
    %23 = arith.maximumf %21, %22 : vector<5x16x128xf32>
    %24 = vector.shape_cast %23 : vector<5x16x128xf32> to vector<80x128xf32>
    %25 = arith.truncf %24 : vector<80x128xf32> to vector<80x128xbf16>
    %c0_14 = arith.constant 0 : index
    %c0_15 = arith.constant 0 : index
    %c0_16 = arith.constant 0 : index
    %26 = vector.load %arg16[%c0_14, %c0_15, %c0_16] : memref<5x80x128xbf16, #tpu.memory_space<vmem>>, vector<1x80x128xbf16>
    %27 = vector.shape_cast %26 : vector<1x80x128xbf16> to vector<80x128xbf16>
    %28 = vector.shape_cast %25 : vector<80x128xbf16> to vector<1x80x128xbf16>
    tpu.vector_store %arg16[%c0_14, %c0_15, %c0_16], %28 {strides = array<i32>} : memref<5x80x128xbf16, #tpu.memory_space<vmem>>, vector<1x80x128xbf16>,
    %c2 = arith.constant 2 : index
    %c0_17 = arith.constant 0 : index
    %c0_18 = arith.constant 0 : index
    %29 = vector.load %arg15[%c2, %c0_17, %c0_18] : memref<14x112x128xbf16, #tpu.memory_space<vmem>>, vector<6x112x128xbf16>
    %30 = vector.shape_cast %29 : vector<6x112x128xbf16> to vector<672x128xbf16>
    %cst_19 = arith.constant dense<0.000000e+00> : vector<320x128xf32>
    %31 = tpu.matmul %1, %30, %cst_19 {dimension_numbers = #tpu.dot_dimension_numbers<[1], [0], [0], [1], [0, 0, 1, 1], [], []>} : vector<320x672xbf16>, vector<672x128xbf16>, vector<320x128xf32> -> vector<320x128xf32>
    %32 = vector.extract_strided_slice %31 {offsets = [0, 0], sizes = [160, 128], strides = [1, 1]} : vector<320x128xf32> to vector<160x128xf32>
    %33 = vector.extract_strided_slice %31 {offsets = [160, 0], sizes = [160, 128], strides = [1, 1]} : vector<320x128xf32> to vector<160x128xf32>
    %34 = arith.maximumf %32, %33 : vector<160x128xf32>
    %35 = vector.shape_cast %34 : vector<160x128xf32> to vector<5x2x16x128xf32>
    %36 = vector.extract_strided_slice %35 {offsets = [0, 0, 0, 0], sizes = [5, 1, 16, 128], strides = [1, 1, 1, 1]} : vector<5x2x16x128xf32> to vector<5x1x16x128xf32>
    %37 = vector.shape_cast %36 : vector<5x1x16x128xf32> to vector<5x16x128xf32>
    %38 = vector.extract_strided_slice %35 {offsets = [0, 1, 0, 0], sizes = [5, 1, 16, 128], strides = [1, 1, 1, 1]} : vector<5x2x16x128xf32> to vector<5x1x16x128xf32>
    %39 = vector.shape_cast %38 : vector<5x1x16x128xf32> to vector<5x16x128xf32>
    %40 = arith.maximumf %37, %39 : vector<5x16x128xf32>
    %41 = arith.addf %40, %7 : vector<5x16x128xf32>
    %cst_20 = arith.constant 0.000000e+00 : f32
    %42 = vector.broadcast %cst_20 : f32 to vector<5x16x128xf32>
    %43 = arith.maximumf %41, %42 : vector<5x16x128xf32>
    %44 = vector.shape_cast %43 : vector<5x16x128xf32> to vector<80x128xf32>
    %45 = arith.truncf %44 : vector<80x128xf32> to vector<80x128xbf16>
    %c1 = arith.constant 1 : index
    %c0_21 = arith.constant 0 : index
    %c0_22 = arith.constant 0 : index
    %46 = vector.load %arg16[%c1, %c0_21, %c0_22] : memref<5x80x128xbf16, #tpu.memory_space<vmem>>, vector<1x80x128xbf16>
    %47 = vector.shape_cast %46 : vector<1x80x128xbf16> to vector<80x128xbf16>
    %48 = vector.shape_cast %45 : vector<80x128xbf16> to vector<1x80x128xbf16>
    tpu.vector_store %arg16[%c1, %c0_21, %c0_22], %48 {strides = array<i32>} : memref<5x80x128xbf16, #tpu.memory_space<vmem>>, vector<1x80x128xbf16>,
    %c4 = arith.constant 4 : index
    %c0_23 = arith.constant 0 : index
    %c0_24 = arith.constant 0 : index
    %49 = vector.load %arg15[%c4, %c0_23, %c0_24] : memref<14x112x128xbf16, #tpu.memory_space<vmem>>, vector<6x112x128xbf16>
    %50 = vector.shape_cast %49 : vector<6x112x128xbf16> to vector<672x128xbf16>
    %cst_25 = arith.constant dense<0.000000e+00> : vector<320x128xf32>
    %51 = tpu.matmul %1, %50, %cst_25 {dimension_numbers = #tpu.dot_dimension_numbers<[1], [0], [0], [1], [0, 0, 1, 1], [], []>} : vector<320x672xbf16>, vector<672x128xbf16>, vector<320x128xf32> -> vector<320x128xf32>
    %52 = vector.extract_strided_slice %51 {offsets = [0, 0], sizes = [160, 128], strides = [1, 1]} : vector<320x128xf32> to vector<160x128xf32>
    %53 = vector.extract_strided_slice %51 {offsets = [160, 0], sizes = [160, 128], strides = [1, 1]} : vector<320x128xf32> to vector<160x128xf32>
    %54 = arith.maximumf %52, %53 : vector<160x128xf32>
    %55 = vector.shape_cast %54 : vector<160x128xf32> to vector<5x2x16x128xf32>
    %56 = vector.extract_strided_slice %55 {offsets = [0, 0, 0, 0], sizes = [5, 1, 16, 128], strides = [1, 1, 1, 1]} : vector<5x2x16x128xf32> to vector<5x1x16x128xf32>
    %57 = vector.shape_cast %56 : vector<5x1x16x128xf32> to vector<5x16x128xf32>
    %58 = vector.extract_strided_slice %55 {offsets = [0, 1, 0, 0], sizes = [5, 1, 16, 128], strides = [1, 1, 1, 1]} : vector<5x2x16x128xf32> to vector<5x1x16x128xf32>
    %59 = vector.shape_cast %58 : vector<5x1x16x128xf32> to vector<5x16x128xf32>
    %60 = arith.maximumf %57, %59 : vector<5x16x128xf32>
    %61 = arith.addf %60, %7 : vector<5x16x128xf32>
    %cst_26 = arith.constant 0.000000e+00 : f32
    %62 = vector.broadcast %cst_26 : f32 to vector<5x16x128xf32>
    %63 = arith.maximumf %61, %62 : vector<5x16x128xf32>
    %64 = vector.shape_cast %63 : vector<5x16x128xf32> to vector<80x128xf32>
    %65 = arith.truncf %64 : vector<80x128xf32> to vector<80x128xbf16>
    %c2_27 = arith.constant 2 : index
    %c0_28 = arith.constant 0 : index
    %c0_29 = arith.constant 0 : index
    %66 = vector.load %arg16[%c2_27, %c0_28, %c0_29] : memref<5x80x128xbf16, #tpu.memory_space<vmem>>, vector<1x80x128xbf16>
    %67 = vector.shape_cast %66 : vector<1x80x128xbf16> to vector<80x128xbf16>
    %68 = vector.shape_cast %65 : vector<80x128xbf16> to vector<1x80x128xbf16>
    tpu.vector_store %arg16[%c2_27, %c0_28, %c0_29], %68 {strides = array<i32>} : memref<5x80x128xbf16, #tpu.memory_space<vmem>>, vector<1x80x128xbf16>,
    %c6 = arith.constant 6 : index
    %c0_30 = arith.constant 0 : index
    %c0_31 = arith.constant 0 : index
    %69 = vector.load %arg15[%c6, %c0_30, %c0_31] : memref<14x112x128xbf16, #tpu.memory_space<vmem>>, vector<6x112x128xbf16>
    %70 = vector.shape_cast %69 : vector<6x112x128xbf16> to vector<672x128xbf16>
    %cst_32 = arith.constant dense<0.000000e+00> : vector<320x128xf32>
    %71 = tpu.matmul %1, %70, %cst_32 {dimension_numbers = #tpu.dot_dimension_numbers<[1], [0], [0], [1], [0, 0, 1, 1], [], []>} : vector<320x672xbf16>, vector<672x128xbf16>, vector<320x128xf32> -> vector<320x128xf32>
    %72 = vector.extract_strided_slice %71 {offsets = [0, 0], sizes = [160, 128], strides = [1, 1]} : vector<320x128xf32> to vector<160x128xf32>
    %73 = vector.extract_strided_slice %71 {offsets = [160, 0], sizes = [160, 128], strides = [1, 1]} : vector<320x128xf32> to vector<160x128xf32>
    %74 = arith.maximumf %72, %73 : vector<160x128xf32>
    %75 = vector.shape_cast %74 : vector<160x128xf32> to vector<5x2x16x128xf32>
    %76 = vector.extract_strided_slice %75 {offsets = [0, 0, 0, 0], sizes = [5, 1, 16, 128], strides = [1, 1, 1, 1]} : vector<5x2x16x128xf32> to vector<5x1x16x128xf32>
    %77 = vector.shape_cast %76 : vector<5x1x16x128xf32> to vector<5x16x128xf32>
    %78 = vector.extract_strided_slice %75 {offsets = [0, 1, 0, 0], sizes = [5, 1, 16, 128], strides = [1, 1, 1, 1]} : vector<5x2x16x128xf32> to vector<5x1x16x128xf32>
    %79 = vector.shape_cast %78 : vector<5x1x16x128xf32> to vector<5x16x128xf32>
    %80 = arith.maximumf %77, %79 : vector<5x16x128xf32>
    %81 = arith.addf %80, %7 : vector<5x16x128xf32>
    %cst_33 = arith.constant 0.000000e+00 : f32
    %82 = vector.broadcast %cst_33 : f32 to vector<5x16x128xf32>
    %83 = arith.maximumf %81, %82 : vector<5x16x128xf32>
    %84 = vector.shape_cast %83 : vector<5x16x128xf32> to vector<80x128xf32>
    %85 = arith.truncf %84 : vector<80x128xf32> to vector<80x128xbf16>
    %c3 = arith.constant 3 : index
    %c0_34 = arith.constant 0 : index
    %c0_35 = arith.constant 0 : index
    %86 = vector.load %arg16[%c3, %c0_34, %c0_35] : memref<5x80x128xbf16, #tpu.memory_space<vmem>>, vector<1x80x128xbf16>
    %87 = vector.shape_cast %86 : vector<1x80x128xbf16> to vector<80x128xbf16>
    %88 = vector.shape_cast %85 : vector<80x128xbf16> to vector<1x80x128xbf16>
    tpu.vector_store %arg16[%c3, %c0_34, %c0_35], %88 {strides = array<i32>} : memref<5x80x128xbf16, #tpu.memory_space<vmem>>, vector<1x80x128xbf16>,
    %c8 = arith.constant 8 : index
    %c0_36 = arith.constant 0 : index
    %c0_37 = arith.constant 0 : index
    %89 = vector.load %arg15[%c8, %c0_36, %c0_37] : memref<14x112x128xbf16, #tpu.memory_space<vmem>>, vector<6x112x128xbf16>
    %90 = vector.shape_cast %89 : vector<6x112x128xbf16> to vector<672x128xbf16>
    %cst_38 = arith.constant dense<0.000000e+00> : vector<320x128xf32>
    %91 = tpu.matmul %1, %90, %cst_38 {dimension_numbers = #tpu.dot_dimension_numbers<[1], [0], [0], [1], [0, 0, 1, 1], [], []>} : vector<320x672xbf16>, vector<672x128xbf16>, vector<320x128xf32> -> vector<320x128xf32>
    %92 = vector.extract_strided_slice %91 {offsets = [0, 0], sizes = [160, 128], strides = [1, 1]} : vector<320x128xf32> to vector<160x128xf32>
    %93 = vector.extract_strided_slice %91 {offsets = [160, 0], sizes = [160, 128], strides = [1, 1]} : vector<320x128xf32> to vector<160x128xf32>
    %94 = arith.maximumf %92, %93 : vector<160x128xf32>
    %95 = vector.shape_cast %94 : vector<160x128xf32> to vector<5x2x16x128xf32>
    %96 = vector.extract_strided_slice %95 {offsets = [0, 0, 0, 0], sizes = [5, 1, 16, 128], strides = [1, 1, 1, 1]} : vector<5x2x16x128xf32> to vector<5x1x16x128xf32>
    %97 = vector.shape_cast %96 : vector<5x1x16x128xf32> to vector<5x16x128xf32>
    %98 = vector.extract_strided_slice %95 {offsets = [0, 1, 0, 0], sizes = [5, 1, 16, 128], strides = [1, 1, 1, 1]} : vector<5x2x16x128xf32> to vector<5x1x16x128xf32>
    %99 = vector.shape_cast %98 : vector<5x1x16x128xf32> to vector<5x16x128xf32>
    %100 = arith.maximumf %97, %99 : vector<5x16x128xf32>
    %101 = arith.addf %100, %7 : vector<5x16x128xf32>
    %cst_39 = arith.constant 0.000000e+00 : f32
    %102 = vector.broadcast %cst_39 : f32 to vector<5x16x128xf32>
    %103 = arith.maximumf %101, %102 : vector<5x16x128xf32>
    %104 = vector.shape_cast %103 : vector<5x16x128xf32> to vector<80x128xf32>
    %105 = arith.truncf %104 : vector<80x128xf32> to vector<80x128xbf16>
    %c4_40 = arith.constant 4 : index
    %c0_41 = arith.constant 0 : index
    %c0_42 = arith.constant 0 : index
    %106 = vector.load %arg16[%c4_40, %c0_41, %c0_42] : memref<5x80x128xbf16, #tpu.memory_space<vmem>>, vector<1x80x128xbf16>
    %107 = vector.shape_cast %106 : vector<1x80x128xbf16> to vector<80x128xbf16>
    %108 = vector.shape_cast %105 : vector<80x128xbf16> to vector<1x80x128xbf16>
    tpu.vector_store %arg16[%c4_40, %c0_41, %c0_42], %108 {strides = array<i32>} : memref<5x80x128xbf16, #tpu.memory_space<vmem>>, vector<1x80x128xbf16>,
    %c0_43 = arith.constant 0 : index
    %c0_44 = arith.constant 0 : index
    %c0_45 = arith.constant 0 : index
    %109 = vector.load %arg16[%c0_43, %c0_44, %c0_45] : memref<5x80x128xbf16, #tpu.memory_space<vmem>>, vector<5x80x128xbf16>
    %110 = vector.shape_cast %109 : vector<5x80x128xbf16> to vector<400x128xbf16>
    %c0_46 = arith.constant 0 : index
    %c0_47 = arith.constant 0 : index
    %111 = vector.load %arg6[%c0_46, %c0_47] : memref<128x400xbf16, #tpu.memory_space<vmem>>, vector<128x400xbf16>
    %cst_48 = arith.constant dense<0.000000e+00> : vector<128x128xf32>
    %112 = tpu.matmul %111, %110, %cst_48 {dimension_numbers = #tpu.dot_dimension_numbers<[1], [0], [0], [1], [0, 0, 1, 1], [], []>} : vector<128x400xbf16>, vector<400x128xbf16>, vector<128x128xf32> -> vector<128x128xf32>
    %c0_49 = arith.constant 0 : index
    %c0_50 = arith.constant 0 : index
    %113 = vector.load %arg7[%c0_49, %c0_50] : memref<128x1xf32, #tpu.memory_space<vmem>>, vector<128x1xf32>
    %114 = vector.broadcast %113 : vector<128x1xf32> to vector<128x128xf32>
    %115 = arith.addf %112, %114 : vector<128x128xf32>
    %cst_51 = arith.constant 0.000000e+00 : f32
    %116 = vector.broadcast %cst_51 : f32 to vector<128x128xf32>
    %117 = arith.maximumf %115, %116 : vector<128x128xf32>
    %118 = arith.truncf %117 : vector<128x128xf32> to vector<128x128xbf16>
    %c0_52 = arith.constant 0 : index
    %c0_53 = arith.constant 0 : index
    %119 = vector.load %arg8[%c0_52, %c0_53] : memref<128x128xbf16, #tpu.memory_space<vmem>>, vector<128x128xbf16>
    %cst_54 = arith.constant dense<0.000000e+00> : vector<128x128xf32>
    %120 = tpu.matmul %119, %118, %cst_54 {dimension_numbers = #tpu.dot_dimension_numbers<[1], [0], [0], [1], [0, 0, 1, 1], [], []>} : vector<128x128xbf16>, vector<128x128xbf16>, vector<128x128xf32> -> vector<128x128xf32>
    %c0_55 = arith.constant 0 : index
    %c0_56 = arith.constant 0 : index
    %121 = vector.load %arg9[%c0_55, %c0_56] : memref<128x1xf32, #tpu.memory_space<vmem>>, vector<128x1xf32>
    %122 = vector.broadcast %121 : vector<128x1xf32> to vector<128x128xf32>
    %123 = arith.addf %120, %122 : vector<128x128xf32>
    %cst_57 = arith.constant 0.000000e+00 : f32
    %124 = vector.broadcast %cst_57 : f32 to vector<128x128xf32>
    %125 = arith.maximumf %123, %124 : vector<128x128xf32>
    %126 = arith.truncf %125 : vector<128x128xf32> to vector<128x128xbf16>
    %c0_58 = arith.constant 0 : index
    %c0_59 = arith.constant 0 : index
    %127 = vector.load %arg10[%c0_58, %c0_59] : memref<128x128xbf16, #tpu.memory_space<vmem>>, vector<128x128xbf16>
    %cst_60 = arith.constant dense<0.000000e+00> : vector<128x128xf32>
    %128 = tpu.matmul %127, %126, %cst_60 {dimension_numbers = #tpu.dot_dimension_numbers<[1], [0], [0], [1], [0, 0, 1, 1], [], []>} : vector<128x128xbf16>, vector<128x128xbf16>, vector<128x128xf32> -> vector<128x128xf32>
    %c0_61 = arith.constant 0 : index
    %c0_62 = arith.constant 0 : index
    %129 = vector.load %arg11[%c0_61, %c0_62] : memref<128x1xf32, #tpu.memory_space<vmem>>, vector<128x1xf32>
    %130 = vector.broadcast %129 : vector<128x1xf32> to vector<128x128xf32>
    %131 = arith.addf %128, %130 : vector<128x128xf32>
    %cst_63 = arith.constant 0.000000e+00 : f32
    %132 = vector.broadcast %cst_63 : f32 to vector<128x128xf32>
    %133 = arith.maximumf %131, %132 : vector<128x128xf32>
    %134 = arith.truncf %133 : vector<128x128xf32> to vector<128x128xbf16>
    %c0_64 = arith.constant 0 : index
    %c0_65 = arith.constant 0 : index
    %135 = vector.load %arg12[%c0_64, %c0_65] : memref<32x128xbf16, #tpu.memory_space<vmem>>, vector<32x128xbf16>
    %cst_66 = arith.constant dense<0.000000e+00> : vector<32x128xf32>
    %136 = tpu.matmul %135, %134, %cst_66 {dimension_numbers = #tpu.dot_dimension_numbers<[1], [0], [0], [1], [0, 0, 1, 1], [], []>} : vector<32x128xbf16>, vector<128x128xbf16>, vector<32x128xf32> -> vector<32x128xf32>
    %c0_67 = arith.constant 0 : index
    %c0_68 = arith.constant 0 : index
    %137 = vector.load %arg13[%c0_67, %c0_68] : memref<32x1xf32, #tpu.memory_space<vmem>>, vector<32x1xf32>
    %138 = vector.broadcast %137 : vector<32x1xf32> to vector<32x128xf32>
    %139 = arith.addf %136, %138 : vector<32x128xf32>
    %cst_69 = arith.constant dense<0xFF800000> : vector<128xf32>
    %140 = vector.multi_reduction <maximumf>, %139, %cst_69 [0] : vector<32x128xf32> to vector<128xf32>
    %141 = vector.shape_cast %140 : vector<128xf32> to vector<1x128xf32>
    %142 = vector.broadcast %141 : vector<1x128xf32> to vector<32x128xf32>
    %143 = arith.subf %139, %142 : vector<32x128xf32>
    %144 = math.exp %143 : vector<32x128xf32>
    %cst_70 = arith.constant dense<0.000000e+00> : vector<128xf32>
    %145 = vector.multi_reduction <add>, %144, %cst_70 [0] : vector<32x128xf32> to vector<128xf32>
    %146 = vector.shape_cast %145 : vector<128xf32> to vector<1x128xf32>
    %147 = math.log %146 : vector<1x128xf32>
    %148 = vector.broadcast %147 : vector<1x128xf32> to vector<32x128xf32>
    %149 = arith.subf %143, %148 : vector<32x128xf32>
    %c0_71 = arith.constant 0 : index
    %c0_72 = arith.constant 0 : index
    %150 = vector.load %arg14[%c0_71, %c0_72] : memref<32x128xf32, #tpu.memory_space<vmem>>, vector<32x128xf32>
    tpu.vector_store %arg14[%c0_71, %c0_72], %149 {strides = array<i32>} : memref<32x128xf32, #tpu.memory_space<vmem>>, vector<32x128xf32>,
    return
  }
  func.func @transform_0(%arg0: i32) -> (i32, i32, i32) {
    %c0_i32 = arith.constant 0 : i32
    %c0_i32_0 = arith.constant 0 : i32
    %c0_i32_1 = arith.constant 0 : i32
    return %c0_i32, %c0_i32_0, %arg0 : i32, i32, i32
  }
  func.func @transform_1(%arg0: i32) -> (i32, i32) {
    %c0_i32 = arith.constant 0 : i32
    %c0_i32_0 = arith.constant 0 : i32
    %c0_i32_1 = arith.constant 0 : i32
    return %c0_i32, %c0_i32_0 : i32, i32
  }
  func.func @transform_2(%arg0: i32) -> (i32, i32, i32) {
    %c0_i32 = arith.constant 0 : i32
    %c0_i32_0 = arith.constant 0 : i32
    %c0_i32_1 = arith.constant 0 : i32
    %c0_i32_2 = arith.constant 0 : i32
    return %c0_i32, %c0_i32_0, %c0_i32_1 : i32, i32, i32
  }
  func.func @transform_3(%arg0: i32) -> (i32, i32) {
    %c0_i32 = arith.constant 0 : i32
    %c0_i32_0 = arith.constant 0 : i32
    %c0_i32_1 = arith.constant 0 : i32
    return %c0_i32, %c0_i32_0 : i32, i32
  }
  func.func @transform_4(%arg0: i32) -> (i32, i32, i32) {
    %c0_i32 = arith.constant 0 : i32
    %c0_i32_0 = arith.constant 0 : i32
    %c0_i32_1 = arith.constant 0 : i32
    %c0_i32_2 = arith.constant 0 : i32
    return %c0_i32, %c0_i32_0, %c0_i32_1 : i32, i32, i32
  }
  func.func @transform_5(%arg0: i32) -> (i32, i32) {
    %c0_i32 = arith.constant 0 : i32
    %c0_i32_0 = arith.constant 0 : i32
    %c0_i32_1 = arith.constant 0 : i32
    return %c0_i32, %c0_i32_0 : i32, i32
  }
  func.func @transform_6(%arg0: i32) -> (i32, i32) {
    %c0_i32 = arith.constant 0 : i32
    %c0_i32_0 = arith.constant 0 : i32
    %c0_i32_1 = arith.constant 0 : i32
    return %c0_i32, %c0_i32_0 : i32, i32
  }
  func.func @transform_7(%arg0: i32) -> (i32, i32) {
    %c0_i32 = arith.constant 0 : i32
    %c0_i32_0 = arith.constant 0 : i32
    %c0_i32_1 = arith.constant 0 : i32
    return %c0_i32, %c0_i32_0 : i32, i32
  }
  func.func @transform_8(%arg0: i32) -> (i32, i32) {
    %c0_i32 = arith.constant 0 : i32
    %c0_i32_0 = arith.constant 0 : i32
    %c0_i32_1 = arith.constant 0 : i32
    return %c0_i32, %c0_i32_0 : i32, i32
  }
  func.func @transform_9(%arg0: i32) -> (i32, i32) {
    %c0_i32 = arith.constant 0 : i32
    %c0_i32_0 = arith.constant 0 : i32
    %c0_i32_1 = arith.constant 0 : i32
    return %c0_i32, %c0_i32_0 : i32, i32
  }
  func.func @transform_10(%arg0: i32) -> (i32, i32) {
    %c0_i32 = arith.constant 0 : i32
    %c0_i32_0 = arith.constant 0 : i32
    %c0_i32_1 = arith.constant 0 : i32
    return %c0_i32, %c0_i32_0 : i32, i32
  }
  func.func @transform_11(%arg0: i32) -> (i32, i32) {
    %c0_i32 = arith.constant 0 : i32
    %c0_i32_0 = arith.constant 0 : i32
    %c0_i32_1 = arith.constant 0 : i32
    return %c0_i32, %c0_i32_0 : i32, i32
  }
  func.func @transform_12(%arg0: i32) -> (i32, i32) {
    %c0_i32 = arith.constant 0 : i32
    %c0_i32_0 = arith.constant 0 : i32
    %c0_i32_1 = arith.constant 0 : i32
    return %c0_i32, %c0_i32_0 : i32, i32
  }
  func.func @transform_13(%arg0: i32) -> (i32, i32) {
    %c0_i32 = arith.constant 0 : i32
    %c0_i32_0 = arith.constant 0 : i32
    return %c0_i32, %arg0 : i32, i32
  }
}

</mosaic_0001>

<llo_original>
// kernel: forward.1
$region0: #{forward.1}
  #allocation0 [shape = 'u32[]', space=smem, size = 0x4, offset = 0x4, fixed_abs, tag = 'smem constant byte address 0x4 - core index']
  #allocation1 [shape = 'u32[144,128]{1,0:T(1,128)}', space=vmem, size = 0x12000, scoped, tag = 'internal scratch']
  #allocation2 [shape = 'bf16[14,112,128]{2,1,0:T(16,128)(2,1)}', space=vmem, size = 0x62000, scoped, tag = 'scratch operand']
  #allocation3 [shape = 'bf16[5,80,128]{2,1,0:T(16,128)(2,1)}', space=vmem, size = 0x19000, scoped, tag = 'scratch operand']
  %s0 = inlined_call_operand.vmem [shape: bf16[32,32,128], index: 0, kind: input, shape index: {}]
  %s1 = inlined_call_operand.vmem [shape: bf16[448,192], index: 1, kind: input, shape index: {}]
  %s2 = inlined_call_operand.vmem [shape: f32[14,8,1], index: 2, kind: input, shape index: {}]
  %s3 = inlined_call_operand.vmem [shape: bf16[320,672], index: 3, kind: input, shape index: {}]
  %s4 = inlined_call_operand.vmem [shape: f32[5,16,1], index: 4, kind: input, shape index: {}]
  %s5 = inlined_call_operand.vmem [shape: bf16[128,400], index: 5, kind: input, shape index: {}]
  %s6 = inlined_call_operand.vmem [shape: f32[128,1], index: 6, kind: input, shape index: {}]
  %s7 = inlined_call_operand.vmem [shape: bf16[128,128], index: 7, kind: input, shape index: {}]
  %s8 = inlined_call_operand.vmem [shape: f32[128,1], index: 8, kind: input, shape index: {}]
  %s9 = inlined_call_operand.vmem [shape: bf16[128,128], index: 9, kind: input, shape index: {}]
  %s10 = inlined_call_operand.vmem [shape: f32[128,1], index: 10, kind: input, shape index: {}]
  %s11 = inlined_call_operand.vmem [shape: bf16[32,128], index: 11, kind: input, shape index: {}]
  %s12 = inlined_call_operand.vmem [shape: f32[32,1], index: 12, kind: input, shape index: {}]
  %s13 = inlined_call_operand.vmem [shape: f32[32,128], index: 13, kind: output, shape index: {}]
  %s14 = sld [smem:[#allocation0]]
  $region69: #{forward.1} parent=0
    _
  %s16 = ssub.s32 1, %s14
  %s17 = scalar_select 0, %s16, %s14
  // Predicated region
  $region2: #{forward.1} parent=0 // pred_check
    _
  $region3: #{forward.1} parent=0 // pred_check_branch
    %19 = sbr.rel (0) target = $region5
  $region4: #{forward.1} parent=0 // pred_region
    _
  $region5: #{forward.1} parent=0 // pred_fallthru
    _
  // Predicated region
  $region6: #{forward.1} parent=0 // pred_check
    _
  $region7: #{forward.1} parent=0 // pred_check_branch
    %21 = sbr.rel (0) target = $region9
  $region8: #{forward.1} parent=0 // pred_region
    _
  $region9: #{forward.1} parent=0 // pred_fallthru
    _
  // Predicated region
  $region10: #{forward.1} parent=0 // pred_check
    _
  $region11: #{forward.1} parent=0 // pred_check_branch
    %23 = sbr.rel (0) target = $region13
  $region12: #{forward.1} parent=0 // pred_region
    _
  $region13: #{forward.1} parent=0 // pred_fallthru
    _
  // Predicated region
  $region14: #{forward.1} parent=0 // pred_check
    _
  $region15: #{forward.1} parent=0 // pred_check_branch
    %25 = sbr.rel (0) target = $region17
  $region16: #{forward.1} parent=0 // pred_region
    _
  $region17: #{forward.1} parent=0 // pred_fallthru
    _
  // Predicated region
  $region18: #{forward.1} parent=0 // pred_check
    _
  $region19: #{forward.1} parent=0 // pred_check_branch
    %27 = sbr.rel (0) target = $region21
  $region20: #{forward.1} parent=0 // pred_region
    _
  $region21: #{forward.1} parent=0 // pred_fallthru
    _
  // Predicated region
  $region22: #{forward.1} parent=0 // pred_check
    _
  $region23: #{forward.1} parent=0 // pred_check_branch
    %29 = sbr.rel (0) target = $region25
  $region24: #{forward.1} parent=0 // pred_region
    _
  $region25: #{forward.1} parent=0 // pred_fallthru
    _
  // Predicated region
  $region26: #{forward.1} parent=0 // pred_check
    _
  $region27: #{forward.1} parent=0 // pred_check_branch
    %31 = sbr.rel (0) target = $region29
  $region28: #{forward.1} parent=0 // pred_region
    _
  $region29: #{forward.1} parent=0 // pred_fallthru
    _
  // Predicated region
  $region30: #{forward.1} parent=0 // pred_check
    _
  $region31: #{forward.1} parent=0 // pred_check_branch
    %33 = sbr.rel (0) target = $region33
  $region32: #{forward.1} parent=0 // pred_region
    _
  $region33: #{forward.1} parent=0 // pred_fallthru
    _
  // Predicated region
  $region34: #{forward.1} parent=0 // pred_check
    _
  $region35: #{forward.1} parent=0 // pred_check_branch
    %35 = sbr.rel (0) target = $region37
  $region36: #{forward.1} parent=0 // pred_region
    _
  $region37: #{forward.1} parent=0 // pred_fallthru
    _
  // Predicated region
  $region38: #{forward.1} parent=0 // pred_check
    _
  $region39: #{forward.1} parent=0 // pred_check_branch
    %37 = sbr.rel (0) target = $region41
  $region40: #{forward.1} parent=0 // pred_region
    _
  $region41: #{forward.1} parent=0 // pred_fallthru
    _
  // Predicated region
  $region42: #{forward.1} parent=0 // pred_check
    _
  $region43: #{forward.1} parent=0 // pred_check_branch
    %39 = sbr.rel (0) target = $region45
  $region44: #{forward.1} parent=0 // pred_region
    _
  $region45: #{forward.1} parent=0 // pred_fallthru
    _
  // Predicated region
  $region46: #{forward.1} parent=0 // pred_check
    _
  $region47: #{forward.1} parent=0 // pred_check_branch
    %41 = sbr.rel (0) target = $region49
  $region48: #{forward.1} parent=0 // pred_region
    _
  $region49: #{forward.1} parent=0 // pred_fallthru
    _
  // Predicated region
  $region50: #{forward.1} parent=0 // pred_check
    _
  $region51: #{forward.1} parent=0 // pred_check_branch
    %43 = sbr.rel (0) target = $region53
  $region52: #{forward.1} parent=0 // pred_region
    _
  $region53: #{forward.1} parent=0 // pred_fallthru
    _
  %v45 = vld [vmem:[%s1] sm:$0xff]
  %v46 = vld [vmem:[%s1 + $0x8] sm:$0xff]
  %v47 = vld [vmem:[%s1 + $0x10] sm:$0xff]
  %v48 = vld [vmem:[%s1 + $0x18] sm:$0xff]
  %v49 = vld [vmem:[%s1 + $0x20] sm:$0xff]
  %v50 = vld [vmem:[%s1 + $0x28] sm:$0xff]
  %v51 = vld [vmem:[%s1 + $0x30] sm:$0xff]
  %v52 = vld [vmem:[%s1 + $0x38] sm:$0xff]
  %v53 = vld [vmem:[%s1 + $0x40] sm:$0xff]
  %v54 = vld [vmem:[%s1 + $0x48] sm:$0xff]
  %v55 = vld [vmem:[%s1 + $0x50] sm:$0xff]
  %v56 = vld [vmem:[%s1 + $0x58] sm:$0xff]
  %v57 = vld [vmem:[%s1 + $0x60] sm:$0xff]
  %v58 = vld [vmem:[%s1 + $0x68] sm:$0xff]
  %v59 = vld [vmem:[%s1 + $0x70] sm:$0xff]
  %v60 = vld [vmem:[%s1 + $0x78] sm:$0xff]
  %v61 = vld [vmem:[%s1 + $0x80] sm:$0xff]
  %v62 = vld [vmem:[%s1 + $0x88] sm:$0xff]
  %v63 = vld [vmem:[%s1 + $0x90] sm:$0xff]
  %v64 = vld [vmem:[%s1 + $0x98] sm:$0xff]
  %v65 = vld [vmem:[%s1 + $0xa0] sm:$0xff]
  %v66 = vld [vmem:[%s1 + $0xa8] sm:$0xff]
  %v67 = vld [vmem:[%s1 + $0xb0] sm:$0xff]
  %v68 = vld [vmem:[%s1 + $0xb8] sm:$0xff]
  %v69 = vld [vmem:[%s1 + $0xc0] sm:$0xff]
  %v70 = vld [vmem:[%s1 + $0xc8] sm:$0xff]
  %v71 = vld [vmem:[%s1 + $0xd0] sm:$0xff]
  %v72 = vld [vmem:[%s1 + $0xd8] sm:$0xff]
  %v73 = vld [vmem:[%s1 + $0xe0] sm:$0xff]
  %v74 = vld [vmem:[%s1 + $0xe8] sm:$0xff]
  %v75 = vld [vmem:[%s1 + $0xf0] sm:$0xff]
  %v76 = vld [vmem:[%s1 + $0xf8] sm:$0xff]
  %v77 = vld [vmem:[%s1 + $0x100] sm:$0xff]
  %v78 = vld [vmem:[%s1 + $0x108] sm:$0xff]
  %v79 = vld [vmem:[%s1 + $0x110] sm:$0xff]
  %v80 = vld [vmem:[%s1 + $0x118] sm:$0xff]
  %v81 = vld [vmem:[%s1 + $0x120] sm:$0xff]
  %v82 = vld [vmem:[%s1 + $0x128] sm:$0xff]
  %v83 = vld [vmem:[%s1 + $0x130] sm:$0xff]
  %v84 = vld [vmem:[%s1 + $0x138] sm:$0xff]
  %v85 = vld [vmem:[%s1 + $0x140] sm:$0xff]
  %v86 = vld [vmem:[%s1 + $0x148] sm:$0xff]
  %v87 = vld [vmem:[%s1 + $0x150] sm:$0xff]
  %v88 = vld [vmem:[%s1 + $0x158] sm:$0xff]
  %v89 = vld [vmem:[%s1 + $0x160] sm:$0xff]
  %v90 = vld [vmem:[%s1 + $0x168] sm:$0xff]
  %v91 = vld [vmem:[%s1 + $0x170] sm:$0xff]
  %v92 = vld [vmem:[%s1 + $0x178] sm:$0xff]
  %v93 = vld [vmem:[%s1 + $0x180] sm:$0xff]
  %v94 = vld [vmem:[%s1 + $0x188] sm:$0xff]
  %v95 = vld [vmem:[%s1 + $0x190] sm:$0xff]
  %v96 = vld [vmem:[%s1 + $0x198] sm:$0xff]
  %v97 = vld [vmem:[%s1 + $0x1a0] sm:$0xff]
  %v98 = vld [vmem:[%s1 + $0x1a8] sm:$0xff]
  %v99 = vld [vmem:[%s1 + $0x1b0] sm:$0xff]
  %v100 = vld [vmem:[%s1 + $0x1b8] sm:$0xff]
  %v101 = vld [vmem:[%s3] sm:$0xff]
  %v102 = vld [vmem:[%s3 + $0x8] sm:$0xff]
  %v103 = vld [vmem:[%s3 + $0x10] sm:$0xff]
  %v104 = vld [vmem:[%s3 + $0x18] sm:$0xff]
  %v105 = vld [vmem:[%s3 + $0x20] sm:$0xff]
  %v106 = vld [vmem:[%s3 + $0x28] sm:$0xff]
  %v107 = vld [vmem:[%s3 + $0x30] sm:$0xff]
  %v108 = vld [vmem:[%s3 + $0x38] sm:$0xff]
  %v109 = vld [vmem:[%s3 + $0x40] sm:$0xff]
  %v110 = vld [vmem:[%s3 + $0x48] sm:$0xff]
  %v111 = vld [vmem:[%s3 + $0x50] sm:$0xff]
  %v112 = vld [vmem:[%s3 + $0x58] sm:$0xff]
  %v113 = vld [vmem:[%s3 + $0x60] sm:$0xff]
  %v114 = vld [vmem:[%s3 + $0x68] sm:$0xff]
  %v115 = vld [vmem:[%s3 + $0x70] sm:$0xff]
  %v116 = vld [vmem:[%s3 + $0x78] sm:$0xff]
  %v117 = vld [vmem:[%s3 + $0x80] sm:$0xff]
  %v118 = vld [vmem:[%s3 + $0x88] sm:$0xff]
  %v119 = vld [vmem:[%s3 + $0x90] sm:$0xff]
  %v120 = vld [vmem:[%s3 + $0x98] sm:$0xff]
  %v121 = vld [vmem:[%s3 + $0xa0] sm:$0xff]
  %v122 = vld [vmem:[%s3 + $0xa8] sm:$0xff]
  %v123 = vld [vmem:[%s3 + $0xb0] sm:$0xff]
  %v124 = vld [vmem:[%s3 + $0xb8] sm:$0xff]
  %v125 = vld [vmem:[%s3 + $0xc0] sm:$0xff]
  %v126 = vld [vmem:[%s3 + $0xc8] sm:$0xff]
  %v127 = vld [vmem:[%s3 + $0xd0] sm:$0xff]
  %v128 = vld [vmem:[%s3 + $0xd8] sm:$0xff]
  %v129 = vld [vmem:[%s3 + $0xe0] sm:$0xff]
  %v130 = vld [vmem:[%s3 + $0xe8] sm:$0xff]
  %v131 = vld [vmem:[%s3 + $0xf0] sm:$0xff]
  %v132 = vld [vmem:[%s3 + $0xf8] sm:$0xff]
  %v133 = vld [vmem:[%s3 + $0x100] sm:$0xff]
  %v134 = vld [vmem:[%s3 + $0x108] sm:$0xff]
  %v135 = vld [vmem:[%s3 + $0x110] sm:$0xff]
  %v136 = vld [vmem:[%s3 + $0x118] sm:$0xff]
  %v137 = vld [vmem:[%s3 + $0x120] sm:$0xff]
  %v138 = vld [vmem:[%s3 + $0x128] sm:$0xff]
  %v139 = vld [vmem:[%s3 + $0x130] sm:$0xff]
  %v140 = vld [vmem:[%s3 + $0x138] sm:$0xff]
  %v141 = vld [vmem:[%s3 + $0x140] sm:$0xff]
  %v142 = vld [vmem:[%s3 + $0x148] sm:$0xff]
  %v143 = vld [vmem:[%s3 + $0x150] sm:$0xff]
  %v144 = vld [vmem:[%s3 + $0x158] sm:$0xff]
  %v145 = vld [vmem:[%s3 + $0x160] sm:$0xff]
  %v146 = vld [vmem:[%s3 + $0x168] sm:$0xff]
  %v147 = vld [vmem:[%s3 + $0x170] sm:$0xff]
  %v148 = vld [vmem:[%s3 + $0x178] sm:$0xff]
  %v149 = vld [vmem:[%s3 + $0x180] sm:$0xff]
  %v150 = vld [vmem:[%s3 + $0x188] sm:$0xff]
  %v151 = vld [vmem:[%s3 + $0x190] sm:$0xff]
  %v152 = vld [vmem:[%s3 + $0x198] sm:$0xff]
  %v153 = vld [vmem:[%s3 + $0x1a0] sm:$0xff]
  %v154 = vld [vmem:[%s3 + $0x1a8] sm:$0xff]
  %v155 = vld [vmem:[%s3 + $0x1b0] sm:$0xff]
  %v156 = vld [vmem:[%s3 + $0x1b8] sm:$0xff]
  %v157 = vld [vmem:[%s3 + $0x1c0] sm:$0xff]
  %v158 = vld [vmem:[%s3 + $0x1c8] sm:$0xff]
  %v159 = vld [vmem:[%s3 + $0x1d0] sm:$0xff]
  %v160 = vld [vmem:[%s3 + $0x1d8] sm:$0xff]
  %v161 = vld [vmem:[%s3 + $0x1e0] sm:$0xff]
  %v162 = vld [vmem:[%s3 + $0x1e8] sm:$0xff]
  %v163 = vld [vmem:[%s3 + $0x1f0] sm:$0xff]
  %v164 = vld [vmem:[%s3 + $0x1f8] sm:$0xff]
  %v165 = vld [vmem:[%s3 + $0x200] sm:$0xff]
  %v166 = vld [vmem:[%s3 + $0x208] sm:$0xff]
  %v167 = vld [vmem:[%s3 + $0x210] sm:$0xff]
  %v168 = vld [vmem:[%s3 + $0x218] sm:$0xff]
  %v169 = vld [vmem:[%s3 + $0x220] sm:$0xff]
  %v170 = vld [vmem:[%s3 + $0x228] sm:$0xff]
  %v171 = vld [vmem:[%s3 + $0x230] sm:$0xff]
  %v172 = vld [vmem:[%s3 + $0x238] sm:$0xff]
  %v173 = vld [vmem:[%s3 + $0x240] sm:$0xff]
  %v174 = vld [vmem:[%s3 + $0x248] sm:$0xff]
  %v175 = vld [vmem:[%s3 + $0x250] sm:$0xff]
  %v176 = vld [vmem:[%s3 + $0x258] sm:$0xff]
  %v177 = vld [vmem:[%s3 + $0x260] sm:$0xff]
  %v178 = vld [vmem:[%s3 + $0x268] sm:$0xff]
  %v179 = vld [vmem:[%s3 + $0x270] sm:$0xff]
  %v180 = vld [vmem:[%s3 + $0x278] sm:$0xff]
  %v181 = vld [vmem:[%s3 + $0x280] sm:$0xff]
  %v182 = vld [vmem:[%s3 + $0x288] sm:$0xff]
  %v183 = vld [vmem:[%s3 + $0x290] sm:$0xff]
  %v184 = vld [vmem:[%s3 + $0x298] sm:$0xff]
  %v185 = vld [vmem:[%s3 + $0x2a0] sm:$0xff]
  %v186 = vld [vmem:[%s3 + $0x2a8] sm:$0xff]
  %v187 = vld [vmem:[%s3 + $0x2b0] sm:$0xff]
  %v188 = vld [vmem:[%s3 + $0x2b8] sm:$0xff]
  %v189 = vld [vmem:[%s3 + $0x2c0] sm:$0xff]
  %v190 = vld [vmem:[%s3 + $0x2c8] sm:$0xff]
  %v191 = vld [vmem:[%s3 + $0x2d0] sm:$0xff]
  %v192 = vld [vmem:[%s3 + $0x2d8] sm:$0xff]
  %v193 = vld [vmem:[%s3 + $0x2e0] sm:$0xff]
  %v194 = vld [vmem:[%s3 + $0x2e8] sm:$0xff]
  %v195 = vld [vmem:[%s3 + $0x2f0] sm:$0xff]
  %v196 = vld [vmem:[%s3 + $0x2f8] sm:$0xff]
  %v197 = vld [vmem:[%s3 + $0x300] sm:$0xff]
  %v198 = vld [vmem:[%s3 + $0x308] sm:$0xff]
  %v199 = vld [vmem:[%s3 + $0x310] sm:$0xff]
  %v200 = vld [vmem:[%s3 + $0x318] sm:$0xff]
  %v201 = vld [vmem:[%s3 + $0x320] sm:$0xff]
  %v202 = vld [vmem:[%s3 + $0x328] sm:$0xff]
  %v203 = vld [vmem:[%s3 + $0x330] sm:$0xff]
  %v204 = vld [vmem:[%s3 + $0x338] sm:$0xff]
  %v205 = vld [vmem:[%s3 + $0x340] sm:$0xff]
  %v206 = vld [vmem:[%s3 + $0x348] sm:$0xff]
  %v207 = vld [vmem:[%s3 + $0x350] sm:$0xff]
  %v208 = vld [vmem:[%s3 + $0x358] sm:$0xff]
  %v209 = vld [vmem:[%s3 + $0x360] sm:$0xff]
  %v210 = vld [vmem:[%s3 + $0x368] sm:$0xff]
  %v211 = vld [vmem:[%s3 + $0x370] sm:$0xff]
  %v212 = vld [vmem:[%s3 + $0x378] sm:$0xff]
  %v213 = vld [vmem:[%s3 + $0x380] sm:$0xff]
  %v214 = vld [vmem:[%s3 + $0x388] sm:$0xff]
  %v215 = vld [vmem:[%s3 + $0x390] sm:$0xff]
  %v216 = vld [vmem:[%s3 + $0x398] sm:$0xff]
  %v217 = vld [vmem:[%s3 + $0x3a0] sm:$0xff]
  %v218 = vld [vmem:[%s3 + $0x3a8] sm:$0xff]
  %v219 = vld [vmem:[%s3 + $0x3b0] sm:$0xff]
  %v220 = vld [vmem:[%s3 + $0x3b8] sm:$0xff]
  %v221 = vld [vmem:[%s2] sm:$0xff]
  %v222 = vld [vmem:[%s2 + $0x8] sm:$0xff]
  %v223 = vld [vmem:[%s2 + $0x10] sm:$0xff]
  %v224 = vld [vmem:[%s2 + $0x18] sm:$0xff]
  %v225 = vld [vmem:[%s2 + $0x20] sm:$0xff]
  %v226 = vld [vmem:[%s2 + $0x28] sm:$0xff]
  %v227 = vld [vmem:[%s2 + $0x30] sm:$0xff]
  %v228 = vld [vmem:[%s2 + $0x38] sm:$0xff]
  %v229 = vld [vmem:[%s2 + $0x40] sm:$0xff]
  %v230 = vld [vmem:[%s2 + $0x48] sm:$0xff]
  %v231 = vld [vmem:[%s2 + $0x50] sm:$0xff]
  %v232 = vld [vmem:[%s2 + $0x58] sm:$0xff]
  %v233 = vld [vmem:[%s2 + $0x60] sm:$0xff]
  %v234 = vld [vmem:[%s2 + $0x68] sm:$0xff]
  %236 = vset.pattern.permute.xlu0 0
  %237 = vperm.xlu0 %236, %v221
  %v238 = vpop.permute.xlu0 %237
  %241 = vset.pattern.permute.xlu0 0
  %242 = vperm.xlu0 %241, %v222
  %v243 = vpop.permute.xlu0 %242
  %246 = vset.pattern.permute.xlu0 0
  %247 = vperm.xlu0 %246, %v223
  %v248 = vpop.permute.xlu0 %247
  %251 = vset.pattern.permute.xlu0 0
  %252 = vperm.xlu0 %251, %v224
  %v253 = vpop.permute.xlu0 %252
  %256 = vset.pattern.permute.xlu0 0
  %257 = vperm.xlu0 %256, %v225
  %v258 = vpop.permute.xlu0 %257
  %261 = vset.pattern.permute.xlu0 0
  %262 = vperm.xlu0 %261, %v226
  %v263 = vpop.permute.xlu0 %262
  %266 = vset.pattern.permute.xlu0 0
  %267 = vperm.xlu0 %266, %v227
  %v268 = vpop.permute.xlu0 %267
  %271 = vset.pattern.permute.xlu0 0
  %272 = vperm.xlu0 %271, %v228
  %v273 = vpop.permute.xlu0 %272
  %276 = vset.pattern.permute.xlu0 0
  %277 = vperm.xlu0 %276, %v229
  %v278 = vpop.permute.xlu0 %277
  %281 = vset.pattern.permute.xlu0 0
  %282 = vperm.xlu0 %281, %v230
  %v283 = vpop.permute.xlu0 %282
  %286 = vset.pattern.permute.xlu0 0
  %287 = vperm.xlu0 %286, %v231
  %v288 = vpop.permute.xlu0 %287
  %291 = vset.pattern.permute.xlu0 0
  %292 = vperm.xlu0 %291, %v232
  %v293 = vpop.permute.xlu0 %292
  %296 = vset.pattern.permute.xlu0 0
  %297 = vperm.xlu0 %296, %v233
  %v298 = vpop.permute.xlu0 %297
  %301 = vset.pattern.permute.xlu0 0
  %302 = vperm.xlu0 %301, %v234
  %v303 = vpop.permute.xlu0 %302
  %v305 = vld [vmem:[%s4] sm:$0xff]
  %v306 = vld [vmem:[%s4 + $0x8] sm:$0xff]
  %v307 = vld [vmem:[%s4 + $0x10] sm:$0xff]
  %v308 = vld [vmem:[%s4 + $0x18] sm:$0xff]
  %v309 = vld [vmem:[%s4 + $0x20] sm:$0xff]
  %v310 = vld [vmem:[%s4 + $0x28] sm:$0xff]
  %v311 = vld [vmem:[%s4 + $0x30] sm:$0xff]
  %v312 = vld [vmem:[%s4 + $0x38] sm:$0xff]
  %v313 = vld [vmem:[%s4 + $0x40] sm:$0xff]
  %v314 = vld [vmem:[%s4 + $0x48] sm:$0xff]
  %316 = vset.pattern.permute.xlu0 0
  %317 = vperm.xlu0 %316, %v305
  %v318 = vpop.permute.xlu0 %317
  %321 = vset.pattern.permute.xlu0 0
  %322 = vperm.xlu0 %321, %v306
  %v323 = vpop.permute.xlu0 %322
  %326 = vset.pattern.permute.xlu0 0
  %327 = vperm.xlu0 %326, %v307
  %v328 = vpop.permute.xlu0 %327
  %331 = vset.pattern.permute.xlu0 0
  %332 = vperm.xlu0 %331, %v308
  %v333 = vpop.permute.xlu0 %332
  %336 = vset.pattern.permute.xlu0 0
  %337 = vperm.xlu0 %336, %v309
  %v338 = vpop.permute.xlu0 %337
  %341 = vset.pattern.permute.xlu0 0
  %342 = vperm.xlu0 %341, %v310
  %v343 = vpop.permute.xlu0 %342
  %346 = vset.pattern.permute.xlu0 0
  %347 = vperm.xlu0 %346, %v311
  %v348 = vpop.permute.xlu0 %347
  %351 = vset.pattern.permute.xlu0 0
  %352 = vperm.xlu0 %351, %v312
  %v353 = vpop.permute.xlu0 %352
  %356 = vset.pattern.permute.xlu0 0
  %357 = vperm.xlu0 %356, %v313
  %v358 = vpop.permute.xlu0 %357
  %361 = vset.pattern.permute.xlu0 0
  %362 = vperm.xlu0 %361, %v314
  %v363 = vpop.permute.xlu0 %362
  loop: start=0, step=1, limit=14
  $region54: #{forward.1} parent=0 // loop_pre_header
    _
  $region55: #{forward.1} parent=0 // loop_header
    %s366 = sphi 0, %s370
    %p367 = scmp.ge.s32.totalorder %s366, 14
  $region56: #{forward.1} parent=0 // loop_header_branch
    %369 = sbr.rel (%p367) target = $region60
  $region57: #{forward.1} parent=0 // loop_body
    %s371 = smul.u32 %s366, 2
    %s372 = smul.u32 %s371, 4
    %s373 = smul.addr %s372, 4
    %s374 = scalar_lea.vmem %s0, %s373
    %v375 = vld [vmem:[%s374] sm:$0xf]
    %v376 = vld [vmem:[%s374 + $0x4] sm:$0xf]
    %v377 = vld [vmem:[%s374 + $0x8] sm:$0xf]
    %v378 = vld [vmem:[%s374 + $0xc] sm:$0xf]
    %v379 = vld [vmem:[%s374 + $0x10] sm:$0xf]
    %v380 = vld [vmem:[%s374 + $0x14] sm:$0xf]
    %v381 = vld [vmem:[%s374 + $0x18] sm:$0xf]
    %v382 = vld [vmem:[%s374 + $0x1c] sm:$0xf]
    %v383 = vld [vmem:[%s374 + $0x20] sm:$0xf]
    %v384 = vld [vmem:[%s374 + $0x24] sm:$0xf]
    %v385 = vld [vmem:[%s374 + $0x28] sm:$0xf]
    %v386 = vld [vmem:[%s374 + $0x2c] sm:$0xf]
    %v387 = vld [vmem:[%s374 + $0x30] sm:$0xf]
    %v388 = vld [vmem:[%s374 + $0x34] sm:$0xf]
    %v389 = vld [vmem:[%s374 + $0x38] sm:$0xf]
    %v390 = vld [vmem:[%s374 + $0x3c] sm:$0xf]
    %v391 = vld [vmem:[%s374 + $0x40] sm:$0xf]
    %v392 = vld [vmem:[%s374 + $0x44] sm:$0xf]
    %v393 = vld [vmem:[%s374 + $0x48] sm:$0xf]
    %v394 = vld [vmem:[%s374 + $0x4c] sm:$0xf]
    %v395 = vld [vmem:[%s374 + $0x50] sm:$0xf]
    %v396 = vld [vmem:[%s374 + $0x54] sm:$0xf]
    %v397 = vld [vmem:[%s374 + $0x58] sm:$0xf]
    %v398 = vld [vmem:[%s374 + $0x5c] sm:$0xf]
    %v455 = vunpack.c.l.b16 %v45
    %v456 = vunpack.c.h.b16 %v45
    %v457 = vunpack.c.l.b16 %v46
    %v458 = vunpack.c.h.b16 %v46
    %v459 = vunpack.c.l.b16 %v47
    %v460 = vunpack.c.h.b16 %v47
    %v461 = vunpack.c.l.b16 %v48
    %v462 = vunpack.c.h.b16 %v48
    %v463 = vunpack.c.l.b16 %v49
    %v464 = vunpack.c.h.b16 %v49
    %v465 = vunpack.c.l.b16 %v50
    %v466 = vunpack.c.h.b16 %v50
    %v467 = vunpack.c.l.b16 %v51
    %v468 = vunpack.c.h.b16 %v51
    %v469 = vunpack.c.l.b16 %v52
    %v470 = vunpack.c.h.b16 %v52
    %v471 = vunpack.c.l.b16 %v53
    %v472 = vunpack.c.h.b16 %v53
    %v473 = vunpack.c.l.b16 %v54
    %v474 = vunpack.c.h.b16 %v54
    %v475 = vunpack.c.l.b16 %v55
    %v476 = vunpack.c.h.b16 %v55
    %v477 = vunpack.c.l.b16 %v56
    %v478 = vunpack.c.h.b16 %v56
    %v479 = vunpack.c.l.b16 %v57
    %v480 = vunpack.c.h.b16 %v57
    %v481 = vunpack.c.l.b16 %v58
    %v482 = vunpack.c.h.b16 %v58
    %v483 = vunpack.c.l.b16 %v59
    %v484 = vunpack.c.h.b16 %v59
    %v485 = vunpack.c.l.b16 %v60
    %v486 = vunpack.c.h.b16 %v60
    %v487 = vunpack.c.l.b16 %v61
    %v488 = vunpack.c.h.b16 %v61
    %v489 = vunpack.c.l.b16 %v62
    %v490 = vunpack.c.h.b16 %v62
    %v491 = vunpack.c.l.b16 %v63
    %v492 = vunpack.c.h.b16 %v63
    %v493 = vunpack.c.l.b16 %v64
    %v494 = vunpack.c.h.b16 %v64
    %v495 = vunpack.c.l.b16 %v65
    %v496 = vunpack.c.h.b16 %v65
    %v497 = vunpack.c.l.b16 %v66
    %v498 = vunpack.c.h.b16 %v66
    %v499 = vunpack.c.l.b16 %v67
    %v500 = vunpack.c.h.b16 %v67
    %v501 = vunpack.c.l.b16 %v68
    %v502 = vunpack.c.h.b16 %v68
    %v503 = vunpack.c.l.b16 %v69
    %v504 = vunpack.c.h.b16 %v69
    %v505 = vunpack.c.l.b16 %v70
    %v506 = vunpack.c.h.b16 %v70
    %v507 = vunpack.c.l.b16 %v71
    %v508 = vunpack.c.h.b16 %v71
    %v509 = vunpack.c.l.b16 %v72
    %v510 = vunpack.c.h.b16 %v72
    %v511 = vunpack.c.l.b16 %v73
    %v512 = vunpack.c.h.b16 %v73
    %v513 = vunpack.c.l.b16 %v74
    %v514 = vunpack.c.h.b16 %v74
    %v515 = vunpack.c.l.b16 %v75
    %v516 = vunpack.c.h.b16 %v75
    %v517 = vunpack.c.l.b16 %v76
    %v518 = vunpack.c.h.b16 %v76
    %v519 = vunpack.c.l.b16 %v77
    %v520 = vunpack.c.h.b16 %v77
    %v521 = vunpack.c.l.b16 %v78
    %v522 = vunpack.c.h.b16 %v78
    %v523 = vunpack.c.l.b16 %v79
    %v524 = vunpack.c.h.b16 %v79
    %v525 = vunpack.c.l.b16 %v80
    %v526 = vunpack.c.h.b16 %v80
    %v527 = vunpack.c.l.b16 %v81
    %v528 = vunpack.c.h.b16 %v81
    %v529 = vunpack.c.l.b16 %v82
    %v530 = vunpack.c.h.b16 %v82
    %v531 = vunpack.c.l.b16 %v83
    %v532 = vunpack.c.h.b16 %v83
    %v533 = vunpack.c.l.b16 %v84
    %v534 = vunpack.c.h.b16 %v84
    %v535 = vunpack.c.l.b16 %v85
    %v536 = vunpack.c.h.b16 %v85
    %v537 = vunpack.c.l.b16 %v86
    %v538 = vunpack.c.h.b16 %v86
    %v539 = vunpack.c.l.b16 %v87
    %v540 = vunpack.c.h.b16 %v87
    %v541 = vunpack.c.l.b16 %v88
    %v542 = vunpack.c.h.b16 %v88
    %v543 = vunpack.c.l.b16 %v89
    %v544 = vunpack.c.h.b16 %v89
    %v545 = vunpack.c.l.b16 %v90
    %v546 = vunpack.c.h.b16 %v90
    %v547 = vunpack.c.l.b16 %v91
    %v548 = vunpack.c.h.b16 %v91
    %v549 = vunpack.c.l.b16 %v92
    %v550 = vunpack.c.h.b16 %v92
    %v551 = vunpack.c.l.b16 %v93
    %v552 = vunpack.c.h.b16 %v93
    %v553 = vunpack.c.l.b16 %v94
    %v554 = vunpack.c.h.b16 %v94
    %v555 = vunpack.c.l.b16 %v95
    %v556 = vunpack.c.h.b16 %v95
    %v557 = vunpack.c.l.b16 %v96
    %v558 = vunpack.c.h.b16 %v96
    %v559 = vunpack.c.l.b16 %v97
    %v560 = vunpack.c.h.b16 %v97
    %v561 = vunpack.c.l.b16 %v98
    %v562 = vunpack.c.h.b16 %v98
    %v563 = vunpack.c.l.b16 %v99
    %v564 = vunpack.c.h.b16 %v99
    %v565 = vunpack.c.l.b16 %v100
    %v566 = vunpack.c.h.b16 %v100
    %v567 = vpack.c.b16 %v457, %v455
    %v568 = vpack.c.b16 %v458, %v456
    %v569 = vpack.c.b16 %v461, %v459
    %v570 = vpack.c.b16 %v462, %v460
    %v571 = vpack.c.b16 %v465, %v463
    %v572 = vpack.c.b16 %v466, %v464
    %v573 = vpack.c.b16 %v469, %v467
    %v574 = vpack.c.b16 %v470, %v468
    %v575 = vpack.c.b16 %v473, %v471
    %v576 = vpack.c.b16 %v474, %v472
    %v577 = vpack.c.b16 %v477, %v475
    %v578 = vpack.c.b16 %v478, %v476
    %v579 = vpack.c.b16 %v481, %v479
    %v580 = vpack.c.b16 %v482, %v480
    %v581 = vpack.c.b16 %v485, %v483
    %v582 = vpack.c.b16 %v486, %v484
    %v583 = vpack.c.b16 %v489, %v487
    %v584 = vpack.c.b16 %v490, %v488
    %v585 = vpack.c.b16 %v493, %v491
    %v586 = vpack.c.b16 %v494, %v492
    %v587 = vpack.c.b16 %v497, %v495
    %v588 = vpack.c.b16 %v498, %v496
    %v589 = vpack.c.b16 %v501, %v499
    %v590 = vpack.c.b16 %v502, %v500
    %v591 = vpack.c.b16 %v505, %v503
    %v592 = vpack.c.b16 %v506, %v504
    %v593 = vpack.c.b16 %v509, %v507
    %v594 = vpack.c.b16 %v510, %v508
    %v595 = vpack.c.b16 %v513, %v511
    %v596 = vpack.c.b16 %v514, %v512
    %v597 = vpack.c.b16 %v517, %v515
    %v598 = vpack.c.b16 %v518, %v516
    %v599 = vpack.c.b16 %v521, %v519
    %v600 = vpack.c.b16 %v522, %v520
    %v601 = vpack.c.b16 %v525, %v523
    %v602 = vpack.c.b16 %v526, %v524
    %v603 = vpack.c.b16 %v529, %v527
    %v604 = vpack.c.b16 %v530, %v528
    %v605 = vpack.c.b16 %v533, %v531
    %v606 = vpack.c.b16 %v534, %v532
    %v607 = vpack.c.b16 %v537, %v535
    %v608 = vpack.c.b16 %v538, %v536
    %v609 = vpack.c.b16 %v541, %v539
    %v610 = vpack.c.b16 %v542, %v540
    %v611 = vpack.c.b16 %v545, %v543
    %v612 = vpack.c.b16 %v546, %v544
    %v613 = vpack.c.b16 %v549, %v547
    %v614 = vpack.c.b16 %v550, %v548
    %v615 = vpack.c.b16 %v553, %v551
    %v616 = vpack.c.b16 %v554, %v552
    %v617 = vpack.c.b16 %v557, %v555
    %v618 = vpack.c.b16 %v558, %v556
    %v619 = vpack.c.b16 %v561, %v559
    %v620 = vpack.c.b16 %v562, %v560
    %v621 = vpack.c.b16 %v565, %v563
    %v622 = vpack.c.b16 %v566, %v564
    %v675 = vunpack.c.l.b16 %v375
    %v676 = vunpack.c.l.b16 %v376
    %v677 = vunpack.c.l.b16 %v377
    %v678 = vunpack.c.l.b16 %v378
    %v679 = vunpack.c.l.b16 %v379
    %v680 = vunpack.c.l.b16 %v380
    %v681 = vunpack.c.l.b16 %v381
    %v682 = vunpack.c.l.b16 %v382
    %v683 = vunpack.c.l.b16 %v383
    %v684 = vunpack.c.l.b16 %v384
    %v685 = vunpack.c.l.b16 %v385
    %v686 = vunpack.c.l.b16 %v386
    %v687 = vunpack.c.l.b16 %v387
    %v688 = vunpack.c.l.b16 %v388
    %v689 = vunpack.c.l.b16 %v389
    %v690 = vunpack.c.l.b16 %v390
    %v691 = vunpack.c.l.b16 %v391
    %v692 = vunpack.c.l.b16 %v392
    %v693 = vunpack.c.l.b16 %v393
    %v694 = vunpack.c.l.b16 %v394
    %v695 = vunpack.c.l.b16 %v395
    %v696 = vunpack.c.l.b16 %v396
    %v697 = vunpack.c.l.b16 %v397
    %v698 = vunpack.c.l.b16 %v398
    %v699 = vpack.c.b16 %v676, %v675
    %v700 = vpack.c.b16 %v678, %v677
    %v701 = vpack.c.b16 %v680, %v679
    %v702 = vpack.c.b16 %v682, %v681
    %v703 = vpack.c.b16 %v684, %v683
    %v704 = vpack.c.b16 %v686, %v685
    %v705 = vpack.c.b16 %v688, %v687
    %v706 = vpack.c.b16 %v690, %v689
    %v707 = vpack.c.b16 %v692, %v691
    %v708 = vpack.c.b16 %v694, %v693
    %v709 = vpack.c.b16 %v696, %v695
    %v710 = vpack.c.b16 %v698, %v697
    %vm723 = vcmask 523264
    %v725 = vsel %vm723, %v568, 0
    %v728 = vsel %vm723, %v570, 0
    %v731 = vsel %vm723, %v572, 0
    %v734 = vsel %vm723, %v574, 0
    %v737 = vsel %vm723, %v576, 0
    %v740 = vsel %vm723, %v578, 0
    %v743 = vsel %vm723, %v580, 0
    %v746 = vsel %vm723, %v582, 0
    %v749 = vsel %vm723, %v584, 0
    %v752 = vsel %vm723, %v586, 0
    %v755 = vsel %vm723, %v588, 0
    %v758 = vsel %vm723, %v590, 0
    %v761 = vsel %vm723, %v592, 0
    %v764 = vsel %vm723, %v594, 0
    %v767 = vsel %vm723, %v596, 0
    %v770 = vsel %vm723, %v598, 0
    %v773 = vsel %vm723, %v600, 0
    %v776 = vsel %vm723, %v602, 0
    %v779 = vsel %vm723, %v604, 0
    %v782 = vsel %vm723, %v606, 0
    %v785 = vsel %vm723, %v608, 0
    %v788 = vsel %vm723, %v610, 0
    %v791 = vsel %vm723, %v612, 0
    %v794 = vsel %vm723, %v614, 0
    %v797 = vsel %vm723, %v616, 0
    %v800 = vsel %vm723, %v618, 0
    %v803 = vsel %vm723, %v620, 0
    %v806 = vsel %vm723, %v622, 0
    %808 = vmatprep.subr.bf16.mxu0 0
    %809 = vmatpush1.bf16.msra.mxu0 %v699
    %810 = vmatprep.subr.bf16.mxu0 0
    %811 = vmatpush1.bf16.msra.mxu0 %v700
    %812 = vmatprep.subr.bf16.mxu0 0
    %813 = vmatpush1.bf16.msra.mxu0 %v701
    %814 = vmatprep.subr.bf16.mxu0 0
    %815 = vmatpush1.bf16.msra.mxu0 %v702
    %816 = vmatprep.subr.bf16.mxu0 0
    %817 = vmatpush1.bf16.msra.mxu0 %v703
    %818 = vmatprep.subr.bf16.mxu0 0
    %819 = vmatpush1.bf16.msra.mxu0 %v704
    %820 = vmatprep.subr.bf16.mxu0 0
    %821 = vmatpush1.bf16.msra.mxu0 %v705
    %822 = vmatprep.subr.bf16.mxu0 0
    %823 = vmatpush1.bf16.msra.mxu0 %v706
    %824 = vmatprep.subr.bf16.mxu0 0
    %825 = vmatpush1.bf16.msra.mxu0 %v707
    %826 = vmatprep.subr.bf16.mxu0 0
    %827 = vmatpush1.bf16.msra.mxu0 %v708
    %828 = vmatprep.subr.bf16.mxu0 0
    %829 = vmatpush1.bf16.msra.mxu0 %v709
    %830 = vmatprep.subr.bf16.mxu0 0
    %831 = vmatpush1.bf16.msra.mxu0 %v710
    %832 = vmatprep.subr.bf16.mxu0 0
    %833 = vmatpush1.bf16.msra.mxu0 0
    %834 = vmatprep.subr.bf16.mxu0 0
    %835 = vmatpush1.bf16.msra.mxu0 0
    %836 = vmatprep.subr.bf16.mxu0 0
    %837 = vmatpush1.bf16.msra.mxu0 0
    %838 = vmatprep.subr.bf16.mxu0 0
    %839 = vmatpush1.bf16.msra.mxu0 0
    %840 = vmatprep.mubr.bf16.mxu0 %v725
    %841 = vmatmul.mubr.bf16.gmra.mrb[0].mxu0 %v567
    %v842 = vpop.f32.mrb[0].mxu0
    %v843 = vadd.f32 0.0, %v842
    %v844 = vpop.f32.mrb[0].mxu0
    %v845 = vpop.f32.mrb[0].mxu0
    %v846 = vadd.f32 0.0, %v845
    %v847 = vpop.f32.mrb[0].mxu0
    %848 = vmatprep.mubr.bf16.mxu0 %v728
    %849 = vmatmul.mubr.bf16.gmra.mrb[0].mxu0 %v569
    %v850 = vpop.f32.mrb[0].mxu0
    %v851 = vadd.f32 0.0, %v850
    %v852 = vpop.f32.mrb[0].mxu0
    %v853 = vpop.f32.mrb[0].mxu0
    %v854 = vadd.f32 0.0, %v853
    %v855 = vpop.f32.mrb[0].mxu0
    %856 = vmatprep.mubr.bf16.mxu0 %v731
    %857 = vmatmul.mubr.bf16.gmra.mrb[0].mxu0 %v571
    %v858 = vpop.f32.mrb[0].mxu0
    %v859 = vadd.f32 0.0, %v858
    %v860 = vpop.f32.mrb[0].mxu0
    %v861 = vpop.f32.mrb[0].mxu0
    %v862 = vadd.f32 0.0, %v861
    %v863 = vpop.f32.mrb[0].mxu0
    %864 = vmatprep.mubr.bf16.mxu0 %v734
    %865 = vmatmul.mubr.bf16.gmra.mrb[0].mxu0 %v573
    %v866 = vpop.f32.mrb[0].mxu0
    %v867 = vadd.f32 0.0, %v866
    %v868 = vpop.f32.mrb[0].mxu0
    %v869 = vpop.f32.mrb[0].mxu0
    %v870 = vadd.f32 0.0, %v869
    %v871 = vpop.f32.mrb[0].mxu0
    %872 = vmatprep.mubr.bf16.mxu0 %v737
    %873 = vmatmul.mubr.bf16.gmra.mrb[0].mxu0 %v575
    %v874 = vpop.f32.mrb[0].mxu0
    %v875 = vadd.f32 0.0, %v874
    %v876 = vpop.f32.mrb[0].mxu0
    %v877 = vpop.f32.mrb[0].mxu0
    %v878 = vadd.f32 0.0, %v877
    %v879 = vpop.f32.mrb[0].mxu0
    %880 = vmatprep.mubr.bf16.mxu0 %v740
    %881 = vmatmul.mubr.bf16.gmra.mrb[0].mxu0 %v577
    %v882 = vpop.f32.mrb[0].mxu0
    %v883 = vadd.f32 0.0, %v882
    %v884 = vpop.f32.mrb[0].mxu0
    %v885 = vpop.f32.mrb[0].mxu0
    %v886 = vadd.f32 0.0, %v885
    %v887 = vpop.f32.mrb[0].mxu0
    %888 = vmatprep.mubr.bf16.mxu0 %v743
    %889 = vmatmul.mubr.bf16.gmra.mrb[0].mxu0 %v579
    %v890 = vpop.f32.mrb[0].mxu0
    %v891 = vadd.f32 0.0, %v890
    %v892 = vpop.f32.mrb[0].mxu0
    %v893 = vpop.f32.mrb[0].mxu0
    %v894 = vadd.f32 0.0, %v893
    %v895 = vpop.f32.mrb[0].mxu0
    %896 = vmatprep.mubr.bf16.mxu0 %v746
    %897 = vmatmul.mubr.bf16.gmra.mrb[0].mxu0 %v581
    %v898 = vpop.f32.mrb[0].mxu0
    %v899 = vadd.f32 0.0, %v898
    %v900 = vpop.f32.mrb[0].mxu0
    %v901 = vpop.f32.mrb[0].mxu0
    %v902 = vadd.f32 0.0, %v901
    %v903 = vpop.f32.mrb[0].mxu0
    %904 = vmatprep.mubr.bf16.mxu0 %v749
    %905 = vmatmul.mubr.bf16.gmra.mrb[0].mxu0 %v583
    %v906 = vpop.f32.mrb[0].mxu0
    %v907 = vadd.f32 0.0, %v906
    %v908 = vpop.f32.mrb[0].mxu0
    %v909 = vpop.f32.mrb[0].mxu0
    %v910 = vadd.f32 0.0, %v909
    %v911 = vpop.f32.mrb[0].mxu0
    %912 = vmatprep.mubr.bf16.mxu0 %v752
    %913 = vmatmul.mubr.bf16.gmra.mrb[0].mxu0 %v585
    %v914 = vpop.f32.mrb[0].mxu0
    %v915 = vadd.f32 0.0, %v914
    %v916 = vpop.f32.mrb[0].mxu0
    %v917 = vpop.f32.mrb[0].mxu0
    %v918 = vadd.f32 0.0, %v917
    %v919 = vpop.f32.mrb[0].mxu0
    %920 = vmatprep.mubr.bf16.mxu0 %v755
    %921 = vmatmul.mubr.bf16.gmra.mrb[0].mxu0 %v587
    %v922 = vpop.f32.mrb[0].mxu0
    %v923 = vadd.f32 0.0, %v922
    %v924 = vpop.f32.mrb[0].mxu0
    %v925 = vpop.f32.mrb[0].mxu0
    %v926 = vadd.f32 0.0, %v925
    %v927 = vpop.f32.mrb[0].mxu0
    %928 = vmatprep.mubr.bf16.mxu0 %v758
    %929 = vmatmul.mubr.bf16.gmra.mrb[0].mxu0 %v589
    %v930 = vpop.f32.mrb[0].mxu0
    %v931 = vadd.f32 0.0, %v930
    %v932 = vpop.f32.mrb[0].mxu0
    %v933 = vpop.f32.mrb[0].mxu0
    %v934 = vadd.f32 0.0, %v933
    %v935 = vpop.f32.mrb[0].mxu0
    %936 = vmatprep.mubr.bf16.mxu0 %v761
    %937 = vmatmul.mubr.bf16.gmra.mrb[0].mxu0 %v591
    %v938 = vpop.f32.mrb[0].mxu0
    %v939 = vadd.f32 0.0, %v938
    %v940 = vpop.f32.mrb[0].mxu0
    %v941 = vpop.f32.mrb[0].mxu0
    %v942 = vadd.f32 0.0, %v941
    %v943 = vpop.f32.mrb[0].mxu0
    %944 = vmatprep.mubr.bf16.mxu0 %v764
    %945 = vmatmul.mubr.bf16.gmra.mrb[0].mxu0 %v593
    %v946 = vpop.f32.mrb[0].mxu0
    %v947 = vadd.f32 0.0, %v946
    %v948 = vpop.f32.mrb[0].mxu0
    %v949 = vpop.f32.mrb[0].mxu0
    %v950 = vadd.f32 0.0, %v949
    %v951 = vpop.f32.mrb[0].mxu0
    %952 = vmatprep.mubr.bf16.mxu0 %v767
    %953 = vmatmul.mubr.bf16.gmra.mrb[0].mxu0 %v595
    %v954 = vpop.f32.mrb[0].mxu0
    %v955 = vadd.f32 0.0, %v954
    %v956 = vpop.f32.mrb[0].mxu0
    %v957 = vpop.f32.mrb[0].mxu0
    %v958 = vadd.f32 0.0, %v957
    %v959 = vpop.f32.mrb[0].mxu0
    %960 = vmatprep.mubr.bf16.mxu0 %v770
    %961 = vmatmul.mubr.bf16.gmra.mrb[0].mxu0 %v597
    %v962 = vpop.f32.mrb[0].mxu0
    %v963 = vadd.f32 0.0, %v962
    %v964 = vpop.f32.mrb[0].mxu0
    %v965 = vpop.f32.mrb[0].mxu0
    %v966 = vadd.f32 0.0, %v965
    %v967 = vpop.f32.mrb[0].mxu0
    %968 = vmatprep.mubr.bf16.mxu0 %v773
    %969 = vmatmul.mubr.bf16.gmra.mrb[0].mxu0 %v599
    %v970 = vpop.f32.mrb[0].mxu0
    %v971 = vadd.f32 0.0, %v970
    %v972 = vpop.f32.mrb[0].mxu0
    %v973 = vpop.f32.mrb[0].mxu0
    %v974 = vadd.f32 0.0, %v973
    %v975 = vpop.f32.mrb[0].mxu0
    %976 = vmatprep.mubr.bf16.mxu0 %v776
    %977 = vmatmul.mubr.bf16.gmra.mrb[0].mxu0 %v601
    %v978 = vpop.f32.mrb[0].mxu0
    %v979 = vadd.f32 0.0, %v978
    %v980 = vpop.f32.mrb[0].mxu0
    %v981 = vpop.f32.mrb[0].mxu0
    %v982 = vadd.f32 0.0, %v981
    %v983 = vpop.f32.mrb[0].mxu0
    %984 = vmatprep.mubr.bf16.mxu0 %v779
    %985 = vmatmul.mubr.bf16.gmra.mrb[0].mxu0 %v603
    %v986 = vpop.f32.mrb[0].mxu0
    %v987 = vadd.f32 0.0, %v986
    %v988 = vpop.f32.mrb[0].mxu0
    %v989 = vpop.f32.mrb[0].mxu0
    %v990 = vadd.f32 0.0, %v989
    %v991 = vpop.f32.mrb[0].mxu0
    %992 = vmatprep.mubr.bf16.mxu0 %v782
    %993 = vmatmul.mubr.bf16.gmra.mrb[0].mxu0 %v605
    %v994 = vpop.f32.mrb[0].mxu0
    %v995 = vadd.f32 0.0, %v994
    %v996 = vpop.f32.mrb[0].mxu0
    %v997 = vpop.f32.mrb[0].mxu0
    %v998 = vadd.f32 0.0, %v997
    %v999 = vpop.f32.mrb[0].mxu0
    %1000 = vmatprep.mubr.bf16.mxu0 %v785
    %1001 = vmatmul.mubr.bf16.gmra.mrb[0].mxu0 %v607
    %v1002 = vpop.f32.mrb[0].mxu0
    %v1003 = vadd.f32 0.0, %v1002
    %v1004 = vpop.f32.mrb[0].mxu0
    %v1005 = vpop.f32.mrb[0].mxu0
    %v1006 = vadd.f32 0.0, %v1005
    %v1007 = vpop.f32.mrb[0].mxu0
    %1008 = vmatprep.mubr.bf16.mxu0 %v788
    %1009 = vmatmul.mubr.bf16.gmra.mrb[0].mxu0 %v609
    %v1010 = vpop.f32.mrb[0].mxu0
    %v1011 = vadd.f32 0.0, %v1010
    %v1012 = vpop.f32.mrb[0].mxu0
    %v1013 = vpop.f32.mrb[0].mxu0
    %v1014 = vadd.f32 0.0, %v1013
    %v1015 = vpop.f32.mrb[0].mxu0
    %1016 = vmatprep.mubr.bf16.mxu0 %v791
    %1017 = vmatmul.mubr.bf16.gmra.mrb[0].mxu0 %v611
    %v1018 = vpop.f32.mrb[0].mxu0
    %v1019 = vadd.f32 0.0, %v1018
    %v1020 = vpop.f32.mrb[0].mxu0
    %v1021 = vpop.f32.mrb[0].mxu0
    %v1022 = vadd.f32 0.0, %v1021
    %v1023 = vpop.f32.mrb[0].mxu0
    %1024 = vmatprep.mubr.bf16.mxu0 %v794
    %1025 = vmatmul.mubr.bf16.gmra.mrb[0].mxu0 %v613
    %v1026 = vpop.f32.mrb[0].mxu0
    %v1027 = vadd.f32 0.0, %v1026
    %v1028 = vpop.f32.mrb[0].mxu0
    %v1029 = vpop.f32.mrb[0].mxu0
    %v1030 = vadd.f32 0.0, %v1029
    %v1031 = vpop.f32.mrb[0].mxu0
    %1032 = vmatprep.mubr.bf16.mxu0 %v797
    %1033 = vmatmul.mubr.bf16.gmra.mrb[0].mxu0 %v615
    %v1034 = vpop.f32.mrb[0].mxu0
    %v1035 = vadd.f32 0.0, %v1034
    %v1036 = vpop.f32.mrb[0].mxu0
    %v1037 = vpop.f32.mrb[0].mxu0
    %v1038 = vadd.f32 0.0, %v1037
    %v1039 = vpop.f32.mrb[0].mxu0
    %1040 = vmatprep.mubr.bf16.mxu0 %v800
    %1041 = vmatmul.mubr.bf16.gmra.mrb[0].mxu0 %v617
    %v1042 = vpop.f32.mrb[0].mxu0
    %v1043 = vadd.f32 0.0, %v1042
    %v1044 = vpop.f32.mrb[0].mxu0
    %v1045 = vpop.f32.mrb[0].mxu0
    %v1046 = vadd.f32 0.0, %v1045
    %v1047 = vpop.f32.mrb[0].mxu0
    %1048 = vmatprep.mubr.bf16.mxu0 %v803
    %1049 = vmatmul.mubr.bf16.gmra.mrb[0].mxu0 %v619
    %v1050 = vpop.f32.mrb[0].mxu0
    %v1051 = vadd.f32 0.0, %v1050
    %v1052 = vpop.f32.mrb[0].mxu0
    %v1053 = vpop.f32.mrb[0].mxu0
    %v1054 = vadd.f32 0.0, %v1053
    %v1055 = vpop.f32.mrb[0].mxu0
    %1056 = vmatprep.mubr.bf16.mxu0 %v806
    %1057 = vmatmul.mubr.bf16.gmra.mrb[0].mxu0 %v621
    %v1058 = vpop.f32.mrb[0].mxu0
    %v1059 = vadd.f32 0.0, %v1058
    %v1060 = vpop.f32.mrb[0].mxu0
    %v1061 = vpop.f32.mrb[0].mxu0
    %v1062 = vadd.f32 0.0, %v1061
    %v1063 = vpop.f32.mrb[0].mxu0
    %1064 = vdwg.mxu0
    %v1065 = vmax.f32 %v843, %v955
    %v1066 = vmax.f32 %v846, %v958
    %v1067 = vmax.f32 %v851, %v963
    %v1068 = vmax.f32 %v854, %v966
    %v1069 = vmax.f32 %v859, %v971
    %v1070 = vmax.f32 %v862, %v974
    %v1071 = vmax.f32 %v867, %v979
    %v1072 = vmax.f32 %v870, %v982
    %v1073 = vmax.f32 %v875, %v987
    %v1074 = vmax.f32 %v878, %v990
    %v1075 = vmax.f32 %v883, %v995
    %v1076 = vmax.f32 %v886, %v998
    %v1077 = vmax.f32 %v891, %v1003
    %v1078 = vmax.f32 %v894, %v1006
    %v1079 = vmax.f32 %v899, %v1011
    %v1080 = vmax.f32 %v902, %v1014
    %v1081 = vmax.f32 %v907, %v1019
    %v1082 = vmax.f32 %v910, %v1022
    %v1083 = vmax.f32 %v915, %v1027
    %v1084 = vmax.f32 %v918, %v1030
    %v1085 = vmax.f32 %v923, %v1035
    %v1086 = vmax.f32 %v926, %v1038
    %v1087 = vmax.f32 %v931, %v1043
    %v1088 = vmax.f32 %v934, %v1046
    %v1089 = vmax.f32 %v939, %v1051
    %v1090 = vmax.f32 %v942, %v1054
    %v1091 = vmax.f32 %v947, %v1059
    %v1092 = vmax.f32 %v950, %v1062
    %v1093 = vmax.f32 %v1065, %v1066
    %v1094 = vmax.f32 %v1067, %v1068
    %v1095 = vmax.f32 %v1069, %v1070
    %v1096 = vmax.f32 %v1071, %v1072
    %v1097 = vmax.f32 %v1073, %v1074
    %v1098 = vmax.f32 %v1075, %v1076
    %v1099 = vmax.f32 %v1077, %v1078
    %v1100 = vmax.f32 %v1079, %v1080
    %v1101 = vmax.f32 %v1081, %v1082
    %v1102 = vmax.f32 %v1083, %v1084
    %v1103 = vmax.f32 %v1085, %v1086
    %v1104 = vmax.f32 %v1087, %v1088
    %v1105 = vmax.f32 %v1089, %v1090
    %v1106 = vmax.f32 %v1091, %v1092
    %v1107 = vadd.f32 %v1093, %v238
    %v1108 = vadd.f32 %v1094, %v243
    %v1109 = vadd.f32 %v1095, %v248
    %v1110 = vadd.f32 %v1096, %v253
    %v1111 = vadd.f32 %v1097, %v258
    %v1112 = vadd.f32 %v1098, %v263
    %v1113 = vadd.f32 %v1099, %v268
    %v1114 = vadd.f32 %v1100, %v273
    %v1115 = vadd.f32 %v1101, %v278
    %v1116 = vadd.f32 %v1102, %v283
    %v1117 = vadd.f32 %v1103, %v288
    %v1118 = vadd.f32 %v1104, %v293
    %v1119 = vadd.f32 %v1105, %v298
    %v1120 = vadd.f32 %v1106, %v303
    %v1121 = vmax.f32 %v1107, 0.0
    %v1122 = vmax.f32 %v1108, 0.0
    %v1123 = vmax.f32 %v1109, 0.0
    %v1124 = vmax.f32 %v1110, 0.0
    %v1125 = vmax.f32 %v1111, 0.0
    %v1126 = vmax.f32 %v1112, 0.0
    %v1127 = vmax.f32 %v1113, 0.0
    %v1128 = vmax.f32 %v1114, 0.0
    %v1129 = vmax.f32 %v1115, 0.0
    %v1130 = vmax.f32 %v1116, 0.0
    %v1131 = vmax.f32 %v1117, 0.0
    %v1132 = vmax.f32 %v1118, 0.0
    %v1133 = vmax.f32 %v1119, 0.0
    %v1134 = vmax.f32 %v1120, 0.0
    %v1135 = vpack.c.bf16 %v1122, %v1121
    %v1136 = vpack.c.bf16 %v1124, %v1123
    %v1137 = vpack.c.bf16 %v1126, %v1125
    %v1138 = vpack.c.bf16 %v1128, %v1127
    %v1139 = vpack.c.bf16 %v1130, %v1129
    %v1140 = vpack.c.bf16 %v1132, %v1131
    %v1141 = vpack.c.bf16 %v1134, %v1133
    %s1142 = smul.u32 %s366, 7
    %s1143 = smul.addr %s1142, 8
    %s1144 = scalar_lea.vmem [#allocation2], %s1143
    %1145 = vst [vmem:[%s1144] sm:$0xff] %v1135
    %1146 = vst [vmem:[%s1144 + $0x8] sm:$0xff] %v1136
    %1147 = vst [vmem:[%s1144 + $0x10] sm:$0xff] %v1137
    %1148 = vst [vmem:[%s1144 + $0x18] sm:$0xff] %v1138
    %1149 = vst [vmem:[%s1144 + $0x20] sm:$0xff] %v1139
    %1150 = vst [vmem:[%s1144 + $0x28] sm:$0xff] %v1140
    %1151 = vst [vmem:[%s1144 + $0x30] sm:$0xff] %v1141
  $region58: #{forward.1} parent=0 // loop_footer
    %s370 = sadd.s32 1, %s366
  $region59: #{forward.1} parent=0 // loop_footer_branch
    %365 = sbr.rel target = $region55
  $region60: #{forward.1} parent=0 // loop_exit
    _
  %v1152 = vld [vmem:[#allocation2] sm:$0xff]
  %v1153 = vld [vmem:[#allocation2 + $0x8] sm:$0xff]
  %v1154 = vld [vmem:[#allocation2 + $0x10] sm:$0xff]
  %v1155 = vld [vmem:[#allocation2 + $0x18] sm:$0xff]
  %v1156 = vld [vmem:[#allocation2 + $0x20] sm:$0xff]
  %v1157 = vld [vmem:[#allocation2 + $0x28] sm:$0xff]
  %v1158 = vld [vmem:[#allocation2 + $0x30] sm:$0xff]
  %v1159 = vld [vmem:[#allocation2 + $0x38] sm:$0xff]
  %v1160 = vld [vmem:[#allocation2 + $0x40] sm:$0xff]
  %v1161 = vld [vmem:[#allocation2 + $0x48] sm:$0xff]
  %v1162 = vld [vmem:[#allocation2 + $0x50] sm:$0xff]
  %v1163 = vld [vmem:[#allocation2 + $0x58] sm:$0xff]
  %v1164 = vld [vmem:[#allocation2 + $0x60] sm:$0xff]
  %v1165 = vld [vmem:[#allocation2 + $0x68] sm:$0xff]
  %v1166 = vld [vmem:[#allocation2 + $0x70] sm:$0xff]
  %v1167 = vld [vmem:[#allocation2 + $0x78] sm:$0xff]
  %v1168 = vld [vmem:[#allocation2 + $0x80] sm:$0xff]
  %v1169 = vld [vmem:[#allocation2 + $0x88] sm:$0xff]
  %v1170 = vld [vmem:[#allocation2 + $0x90] sm:$0xff]
  %v1171 = vld [vmem:[#allocation2 + $0x98] sm:$0xff]
  %v1172 = vld [vmem:[#allocation2 + $0xa0] sm:$0xff]
  %v1173 = vld [vmem:[#allocation2 + $0xa8] sm:$0xff]
  %v1174 = vld [vmem:[#allocation2 + $0xb0] sm:$0xff]
  %v1175 = vld [vmem:[#allocation2 + $0xb8] sm:$0xff]
  %v1176 = vld [vmem:[#allocation2 + $0xc0] sm:$0xff]
  %v1177 = vld [vmem:[#allocation2 + $0xc8] sm:$0xff]
  %v1178 = vld [vmem:[#allocation2 + $0xd0] sm:$0xff]
  %v1179 = vld [vmem:[#allocation2 + $0xd8] sm:$0xff]
  %v1180 = vld [vmem:[#allocation2 + $0xe0] sm:$0xff]
  %v1181 = vld [vmem:[#allocation2 + $0xe8] sm:$0xff]
  %v1182 = vld [vmem:[#allocation2 + $0xf0] sm:$0xff]
  %v1183 = vld [vmem:[#allocation2 + $0xf8] sm:$0xff]
  %v1184 = vld [vmem:[#allocation2 + $0x100] sm:$0xff]
  %v1185 = vld [vmem:[#allocation2 + $0x108] sm:$0xff]
  %v1186 = vld [vmem:[#allocation2 + $0x110] sm:$0xff]
  %v1187 = vld [vmem:[#allocation2 + $0x118] sm:$0xff]
  %v1188 = vld [vmem:[#allocation2 + $0x120] sm:$0xff]
  %v1189 = vld [vmem:[#allocation2 + $0x128] sm:$0xff]
  %v1190 = vld [vmem:[#allocation2 + $0x130] sm:$0xff]
  %v1191 = vld [vmem:[#allocation2 + $0x138] sm:$0xff]
  %v1192 = vld [vmem:[#allocation2 + $0x140] sm:$0xff]
  %v1193 = vld [vmem:[#allocation2 + $0x148] sm:$0xff]
  %v1314 = vunpack.c.l.b16 %v101
  %v1315 = vunpack.c.h.b16 %v101
  %v1316 = vunpack.c.l.b16 %v102
  %v1317 = vunpack.c.h.b16 %v102
  %v1318 = vunpack.c.l.b16 %v103
  %v1319 = vunpack.c.h.b16 %v103
  %v1320 = vunpack.c.l.b16 %v104
  %v1321 = vunpack.c.h.b16 %v104
  %v1322 = vunpack.c.l.b16 %v105
  %v1323 = vunpack.c.h.b16 %v105
  %v1324 = vunpack.c.l.b16 %v106
  %v1325 = vunpack.c.h.b16 %v106
  %v1326 = vunpack.c.l.b16 %v107
  %v1327 = vunpack.c.h.b16 %v107
  %v1328 = vunpack.c.l.b16 %v108
  %v1329 = vunpack.c.h.b16 %v108
  %v1330 = vunpack.c.l.b16 %v109
  %v1331 = vunpack.c.h.b16 %v109
  %v1332 = vunpack.c.l.b16 %v110
  %v1333 = vunpack.c.h.b16 %v110
  %v1334 = vunpack.c.l.b16 %v111
  %v1335 = vunpack.c.h.b16 %v111
  %v1336 = vunpack.c.l.b16 %v112
  %v1337 = vunpack.c.h.b16 %v112
  %v1338 = vunpack.c.l.b16 %v113
  %v1339 = vunpack.c.h.b16 %v113
  %v1340 = vunpack.c.l.b16 %v114
  %v1341 = vunpack.c.h.b16 %v114
  %v1342 = vunpack.c.l.b16 %v115
  %v1343 = vunpack.c.h.b16 %v115
  %v1344 = vunpack.c.l.b16 %v116
  %v1345 = vunpack.c.h.b16 %v116
  %v1346 = vunpack.c.l.b16 %v117
  %v1347 = vunpack.c.h.b16 %v117
  %v1348 = vunpack.c.l.b16 %v118
  %v1349 = vunpack.c.h.b16 %v118
  %v1350 = vunpack.c.l.b16 %v119
  %v1351 = vunpack.c.h.b16 %v119
  %v1352 = vunpack.c.l.b16 %v120
  %v1353 = vunpack.c.h.b16 %v120
  %v1354 = vunpack.c.l.b16 %v121
  %v1355 = vunpack.c.h.b16 %v121
  %v1356 = vunpack.c.l.b16 %v122
  %v1357 = vunpack.c.h.b16 %v122
  %v1358 = vunpack.c.l.b16 %v123
  %v1359 = vunpack.c.h.b16 %v123
  %v1360 = vunpack.c.l.b16 %v124
  %v1361 = vunpack.c.h.b16 %v124
  %v1362 = vunpack.c.l.b16 %v125
  %v1363 = vunpack.c.h.b16 %v125
  %v1364 = vunpack.c.l.b16 %v126
  %v1365 = vunpack.c.h.b16 %v126
  %v1366 = vunpack.c.l.b16 %v127
  %v1367 = vunpack.c.h.b16 %v127
  %v1368 = vunpack.c.l.b16 %v128
  %v1369 = vunpack.c.h.b16 %v128
  %v1370 = vunpack.c.l.b16 %v129
  %v1371 = vunpack.c.h.b16 %v129
  %v1372 = vunpack.c.l.b16 %v130
  %v1373 = vunpack.c.h.b16 %v130
  %v1374 = vunpack.c.l.b16 %v131
  %v1375 = vunpack.c.h.b16 %v131
  %v1376 = vunpack.c.l.b16 %v132
  %v1377 = vunpack.c.h.b16 %v132
  %v1378 = vunpack.c.l.b16 %v133
  %v1379 = vunpack.c.h.b16 %v133
  %v1380 = vunpack.c.l.b16 %v134
  %v1381 = vunpack.c.h.b16 %v134
  %v1382 = vunpack.c.l.b16 %v135
  %v1383 = vunpack.c.h.b16 %v135
  %v1384 = vunpack.c.l.b16 %v136
  %v1385 = vunpack.c.h.b16 %v136
  %v1386 = vunpack.c.l.b16 %v137
  %v1387 = vunpack.c.h.b16 %v137
  %v1388 = vunpack.c.l.b16 %v138
  %v1389 = vunpack.c.h.b16 %v138
  %v1390 = vunpack.c.l.b16 %v139
  %v1391 = vunpack.c.h.b16 %v139
  %v1392 = vunpack.c.l.b16 %v140
  %v1393 = vunpack.c.h.b16 %v140
  %v1394 = vunpack.c.l.b16 %v141
  %v1395 = vunpack.c.h.b16 %v141
  %v1396 = vunpack.c.l.b16 %v142
  %v1397 = vunpack.c.h.b16 %v142
  %v1398 = vunpack.c.l.b16 %v143
  %v1399 = vunpack.c.h.b16 %v143
  %v1400 = vunpack.c.l.b16 %v144
  %v1401 = vunpack.c.h.b16 %v144
  %v1402 = vunpack.c.l.b16 %v145
  %v1403 = vunpack.c.h.b16 %v145
  %v1404 = vunpack.c.l.b16 %v146
  %v1405 = vunpack.c.h.b16 %v146
  %v1406 = vunpack.c.l.b16 %v147
  %v1407 = vunpack.c.h.b16 %v147
  %v1408 = vunpack.c.l.b16 %v148
  %v1409 = vunpack.c.h.b16 %v148
  %v1410 = vunpack.c.l.b16 %v149
  %v1411 = vunpack.c.h.b16 %v149
  %v1412 = vunpack.c.l.b16 %v150
  %v1413 = vunpack.c.h.b16 %v150
  %v1414 = vunpack.c.l.b16 %v151
  %v1415 = vunpack.c.h.b16 %v151
  %v1416 = vunpack.c.l.b16 %v152
  %v1417 = vunpack.c.h.b16 %v152
  %v1418 = vunpack.c.l.b16 %v153
  %v1419 = vunpack.c.h.b16 %v153
  %v1420 = vunpack.c.l.b16 %v154
  %v1421 = vunpack.c.h.b16 %v154
  %v1422 = vunpack.c.l.b16 %v155
  %v1423 = vunpack.c.h.b16 %v155
  %v1424 = vunpack.c.l.b16 %v156
  %v1425 = vunpack.c.h.b16 %v156
  %v1426 = vunpack.c.l.b16 %v157
  %v1427 = vunpack.c.h.b16 %v157
  %v1428 = vunpack.c.l.b16 %v158
  %v1429 = vunpack.c.h.b16 %v158
  %v1430 = vunpack.c.l.b16 %v159
  %v1431 = vunpack.c.h.b16 %v159
  %v1432 = vunpack.c.l.b16 %v160
  %v1433 = vunpack.c.h.b16 %v160
  %v1434 = vunpack.c.l.b16 %v161
  %v1435 = vunpack.c.h.b16 %v161
  %v1436 = vunpack.c.l.b16 %v162
  %v1437 = vunpack.c.h.b16 %v162
  %v1438 = vunpack.c.l.b16 %v163
  %v1439 = vunpack.c.h.b16 %v163
  %v1440 = vunpack.c.l.b16 %v164
  %v1441 = vunpack.c.h.b16 %v164
  %v1442 = vunpack.c.l.b16 %v165
  %v1443 = vunpack.c.h.b16 %v165
  %v1444 = vunpack.c.l.b16 %v166
  %v1445 = vunpack.c.h.b16 %v166
  %v1446 = vunpack.c.l.b16 %v167
  %v1447 = vunpack.c.h.b16 %v167
  %v1448 = vunpack.c.l.b16 %v168
  %v1449 = vunpack.c.h.b16 %v168
  %v1450 = vunpack.c.l.b16 %v169
  %v1451 = vunpack.c.h.b16 %v169
  %v1452 = vunpack.c.l.b16 %v170
  %v1453 = vunpack.c.h.b16 %v170
  %v1454 = vunpack.c.l.b16 %v171
  %v1455 = vunpack.c.h.b16 %v171
  %v1456 = vunpack.c.l.b16 %v172
  %v1457 = vunpack.c.h.b16 %v172
  %v1458 = vunpack.c.l.b16 %v173
  %v1459 = vunpack.c.h.b16 %v173
  %v1460 = vunpack.c.l.b16 %v174
  %v1461 = vunpack.c.h.b16 %v174
  %v1462 = vunpack.c.l.b16 %v175
  %v1463 = vunpack.c.h.b16 %v175
  %v1464 = vunpack.c.l.b16 %v176
  %v1465 = vunpack.c.h.b16 %v176
  %v1466 = vunpack.c.l.b16 %v177
  %v1467 = vunpack.c.h.b16 %v177
  %v1468 = vunpack.c.l.b16 %v178
  %v1469 = vunpack.c.h.b16 %v178
  %v1470 = vunpack.c.l.b16 %v179
  %v1471 = vunpack.c.h.b16 %v179
  %v1472 = vunpack.c.l.b16 %v180
  %v1473 = vunpack.c.h.b16 %v180
  %v1474 = vunpack.c.l.b16 %v181
  %v1475 = vunpack.c.h.b16 %v181
  %v1476 = vunpack.c.l.b16 %v182
  %v1477 = vunpack.c.h.b16 %v182
  %v1478 = vunpack.c.l.b16 %v183
  %v1479 = vunpack.c.h.b16 %v183
  %v1480 = vunpack.c.l.b16 %v184
  %v1481 = vunpack.c.h.b16 %v184
  %v1482 = vunpack.c.l.b16 %v185
  %v1483 = vunpack.c.h.b16 %v185
  %v1484 = vunpack.c.l.b16 %v186
  %v1485 = vunpack.c.h.b16 %v186
  %v1486 = vunpack.c.l.b16 %v187
  %v1487 = vunpack.c.h.b16 %v187
  %v1488 = vunpack.c.l.b16 %v188
  %v1489 = vunpack.c.h.b16 %v188
  %v1490 = vunpack.c.l.b16 %v189
  %v1491 = vunpack.c.h.b16 %v189
  %v1492 = vunpack.c.l.b16 %v190
  %v1493 = vunpack.c.h.b16 %v190
  %v1494 = vunpack.c.l.b16 %v191
  %v1495 = vunpack.c.h.b16 %v191
  %v1496 = vunpack.c.l.b16 %v192
  %v1497 = vunpack.c.h.b16 %v192
  %v1498 = vunpack.c.l.b16 %v193
  %v1499 = vunpack.c.h.b16 %v193
  %v1500 = vunpack.c.l.b16 %v194
  %v1501 = vunpack.c.h.b16 %v194
  %v1502 = vunpack.c.l.b16 %v195
  %v1503 = vunpack.c.h.b16 %v195
  %v1504 = vunpack.c.l.b16 %v196
  %v1505 = vunpack.c.h.b16 %v196
  %v1506 = vunpack.c.l.b16 %v197
  %v1507 = vunpack.c.h.b16 %v197
  %v1508 = vunpack.c.l.b16 %v198
  %v1509 = vunpack.c.h.b16 %v198
  %v1510 = vunpack.c.l.b16 %v199
  %v1511 = vunpack.c.h.b16 %v199
  %v1512 = vunpack.c.l.b16 %v200
  %v1513 = vunpack.c.h.b16 %v200
  %v1514 = vunpack.c.l.b16 %v201
  %v1515 = vunpack.c.h.b16 %v201
  %v1516 = vunpack.c.l.b16 %v202
  %v1517 = vunpack.c.h.b16 %v202
  %v1518 = vunpack.c.l.b16 %v203
  %v1519 = vunpack.c.h.b16 %v203
  %v1520 = vunpack.c.l.b16 %v204
  %v1521 = vunpack.c.h.b16 %v204
  %v1522 = vunpack.c.l.b16 %v205
  %v1523 = vunpack.c.h.b16 %v205
  %v1524 = vunpack.c.l.b16 %v206
  %v1525 = vunpack.c.h.b16 %v206
  %v1526 = vunpack.c.l.b16 %v207
  %v1527 = vunpack.c.h.b16 %v207
  %v1528 = vunpack.c.l.b16 %v208
  %v1529 = vunpack.c.h.b16 %v208
  %v1530 = vunpack.c.l.b16 %v209
  %v1531 = vunpack.c.h.b16 %v209
  %v1532 = vunpack.c.l.b16 %v210
  %v1533 = vunpack.c.h.b16 %v210
  %v1534 = vunpack.c.l.b16 %v211
  %v1535 = vunpack.c.h.b16 %v211
  %v1536 = vunpack.c.l.b16 %v212
  %v1537 = vunpack.c.h.b16 %v212
  %v1538 = vunpack.c.l.b16 %v213
  %v1539 = vunpack.c.h.b16 %v213
  %v1540 = vunpack.c.l.b16 %v214
  %v1541 = vunpack.c.h.b16 %v214
  %v1542 = vunpack.c.l.b16 %v215
  %v1543 = vunpack.c.h.b16 %v215
  %v1544 = vunpack.c.l.b16 %v216
  %v1545 = vunpack.c.h.b16 %v216
  %v1546 = vunpack.c.l.b16 %v217
  %v1547 = vunpack.c.h.b16 %v217
  %v1548 = vunpack.c.l.b16 %v218
  %v1549 = vunpack.c.h.b16 %v218
  %v1550 = vunpack.c.l.b16 %v219
  %v1551 = vunpack.c.h.b16 %v219
  %v1552 = vunpack.c.l.b16 %v220
  %v1553 = vunpack.c.h.b16 %v220
  %v1554 = vpack.c.b16 %v1320, %v1314
  %v1555 = vpack.c.b16 %v1321, %v1315
  %v1556 = vpack.c.b16 %v1322, %v1316
  %v1557 = vpack.c.b16 %v1323, %v1317
  %v1558 = vpack.c.b16 %v1324, %v1318
  %v1559 = vpack.c.b16 %v1325, %v1319
  %v1560 = vpack.c.b16 %v1332, %v1326
  %v1561 = vpack.c.b16 %v1333, %v1327
  %v1562 = vpack.c.b16 %v1334, %v1328
  %v1563 = vpack.c.b16 %v1335, %v1329
  %v1564 = vpack.c.b16 %v1336, %v1330
  %v1565 = vpack.c.b16 %v1337, %v1331
  %v1566 = vpack.c.b16 %v1344, %v1338
  %v1567 = vpack.c.b16 %v1345, %v1339
  %v1568 = vpack.c.b16 %v1346, %v1340
  %v1569 = vpack.c.b16 %v1347, %v1341
  %v1570 = vpack.c.b16 %v1348, %v1342
  %v1571 = vpack.c.b16 %v1349, %v1343
  %v1572 = vpack.c.b16 %v1356, %v1350
  %v1573 = vpack.c.b16 %v1357, %v1351
  %v1574 = vpack.c.b16 %v1358, %v1352
  %v1575 = vpack.c.b16 %v1359, %v1353
  %v1576 = vpack.c.b16 %v1360, %v1354
  %v1577 = vpack.c.b16 %v1361, %v1355
  %v1578 = vpack.c.b16 %v1368, %v1362
  %v1579 = vpack.c.b16 %v1369, %v1363
  %v1580 = vpack.c.b16 %v1370, %v1364
  %v1581 = vpack.c.b16 %v1371, %v1365
  %v1582 = vpack.c.b16 %v1372, %v1366
  %v1583 = vpack.c.b16 %v1373, %v1367
  %v1584 = vpack.c.b16 %v1380, %v1374
  %v1585 = vpack.c.b16 %v1381, %v1375
  %v1586 = vpack.c.b16 %v1382, %v1376
  %v1587 = vpack.c.b16 %v1383, %v1377
  %v1588 = vpack.c.b16 %v1384, %v1378
  %v1589 = vpack.c.b16 %v1385, %v1379
  %v1590 = vpack.c.b16 %v1392, %v1386
  %v1591 = vpack.c.b16 %v1393, %v1387
  %v1592 = vpack.c.b16 %v1394, %v1388
  %v1593 = vpack.c.b16 %v1395, %v1389
  %v1594 = vpack.c.b16 %v1396, %v1390
  %v1595 = vpack.c.b16 %v1397, %v1391
  %v1596 = vpack.c.b16 %v1404, %v1398
  %v1597 = vpack.c.b16 %v1405, %v1399
  %v1598 = vpack.c.b16 %v1406, %v1400
  %v1599 = vpack.c.b16 %v1407, %v1401
  %v1600 = vpack.c.b16 %v1408, %v1402
  %v1601 = vpack.c.b16 %v1409, %v1403
  %v1602 = vpack.c.b16 %v1416, %v1410
  %v1603 = vpack.c.b16 %v1417, %v1411
  %v1604 = vpack.c.b16 %v1418, %v1412
  %v1605 = vpack.c.b16 %v1419, %v1413
  %v1606 = vpack.c.b16 %v1420, %v1414
  %v1607 = vpack.c.b16 %v1421, %v1415
  %v1608 = vpack.c.b16 %v1428, %v1422
  %v1609 = vpack.c.b16 %v1429, %v1423
  %v1610 = vpack.c.b16 %v1430, %v1424
  %v1611 = vpack.c.b16 %v1431, %v1425
  %v1612 = vpack.c.b16 %v1432, %v1426
  %v1613 = vpack.c.b16 %v1433, %v1427
  %v1614 = vpack.c.b16 %v1440, %v1434
  %v1615 = vpack.c.b16 %v1441, %v1435
  %v1616 = vpack.c.b16 %v1442, %v1436
  %v1617 = vpack.c.b16 %v1443, %v1437
  %v1618 = vpack.c.b16 %v1444, %v1438
  %v1619 = vpack.c.b16 %v1445, %v1439
  %v1620 = vpack.c.b16 %v1452, %v1446
  %v1621 = vpack.c.b16 %v1453, %v1447
  %v1622 = vpack.c.b16 %v1454, %v1448
  %v1623 = vpack.c.b16 %v1455, %v1449
  %v1624 = vpack.c.b16 %v1456, %v1450
  %v1625 = vpack.c.b16 %v1457, %v1451
  %v1626 = vpack.c.b16 %v1464, %v1458
  %v1627 = vpack.c.b16 %v1465, %v1459
  %v1628 = vpack.c.b16 %v1466, %v1460
  %v1629 = vpack.c.b16 %v1467, %v1461
  %v1630 = vpack.c.b16 %v1468, %v1462
  %v1631 = vpack.c.b16 %v1469, %v1463
  %v1632 = vpack.c.b16 %v1476, %v1470
  %v1633 = vpack.c.b16 %v1477, %v1471
  %v1634 = vpack.c.b16 %v1478, %v1472
  %v1635 = vpack.c.b16 %v1479, %v1473
  %v1636 = vpack.c.b16 %v1480, %v1474
  %v1637 = vpack.c.b16 %v1481, %v1475
  %v1638 = vpack.c.b16 %v1488, %v1482
  %v1639 = vpack.c.b16 %v1489, %v1483
  %v1640 = vpack.c.b16 %v1490, %v1484
  %v1641 = vpack.c.b16 %v1491, %v1485
  %v1642 = vpack.c.b16 %v1492, %v1486
  %v1643 = vpack.c.b16 %v1493, %v1487
  %v1644 = vpack.c.b16 %v1500, %v1494
  %v1645 = vpack.c.b16 %v1501, %v1495
  %v1646 = vpack.c.b16 %v1502, %v1496
  %v1647 = vpack.c.b16 %v1503, %v1497
  %v1648 = vpack.c.b16 %v1504, %v1498
  %v1649 = vpack.c.b16 %v1505, %v1499
  %v1650 = vpack.c.b16 %v1512, %v1506
  %v1651 = vpack.c.b16 %v1513, %v1507
  %v1652 = vpack.c.b16 %v1514, %v1508
  %v1653 = vpack.c.b16 %v1515, %v1509
  %v1654 = vpack.c.b16 %v1516, %v1510
  %v1655 = vpack.c.b16 %v1517, %v1511
  %v1656 = vpack.c.b16 %v1524, %v1518
  %v1657 = vpack.c.b16 %v1525, %v1519
  %v1658 = vpack.c.b16 %v1526, %v1520
  %v1659 = vpack.c.b16 %v1527, %v1521
  %v1660 = vpack.c.b16 %v1528, %v1522
  %v1661 = vpack.c.b16 %v1529, %v1523
  %v1662 = vpack.c.b16 %v1536, %v1530
  %v1663 = vpack.c.b16 %v1537, %v1531
  %v1664 = vpack.c.b16 %v1538, %v1532
  %v1665 = vpack.c.b16 %v1539, %v1533
  %v1666 = vpack.c.b16 %v1540, %v1534
  %v1667 = vpack.c.b16 %v1541, %v1535
  %v1668 = vpack.c.b16 %v1548, %v1542
  %v1669 = vpack.c.b16 %v1549, %v1543
  %v1670 = vpack.c.b16 %v1550, %v1544
  %v1671 = vpack.c.b16 %v1551, %v1545
  %v1672 = vpack.c.b16 %v1552, %v1546
  %v1673 = vpack.c.b16 %v1553, %v1547
  %vm1774 = vcmask 261120
  %v1776 = vsel %vm1774, %v1559, 0
  %v1779 = vsel %vm1774, %v1565, 0
  %v1782 = vsel %vm1774, %v1571, 0
  %v1785 = vsel %vm1774, %v1577, 0
  %v1788 = vsel %vm1774, %v1583, 0
  %v1791 = vsel %vm1774, %v1589, 0
  %v1794 = vsel %vm1774, %v1595, 0
  %v1797 = vsel %vm1774, %v1601, 0
  %v1800 = vsel %vm1774, %v1607, 0
  %v1803 = vsel %vm1774, %v1613, 0
  %v1806 = vsel %vm1774, %v1619, 0
  %v1809 = vsel %vm1774, %v1625, 0
  %v1812 = vsel %vm1774, %v1631, 0
  %v1815 = vsel %vm1774, %v1637, 0
  %v1818 = vsel %vm1774, %v1643, 0
  %v1821 = vsel %vm1774, %v1649, 0
  %v1824 = vsel %vm1774, %v1655, 0
  %v1827 = vsel %vm1774, %v1661, 0
  %v1830 = vsel %vm1774, %v1667, 0
  %v1833 = vsel %vm1774, %v1673, 0
  %1835 = vmatprep.subr.bf16.mxu0 0
  %1836 = vmatpush1.bf16.msra.mxu0 %v1152
  %1837 = vmatprep.subr.bf16.mxu0 0
  %1838 = vmatpush1.bf16.msra.mxu0 %v1153
  %1839 = vmatprep.subr.bf16.mxu0 0
  %1840 = vmatpush1.bf16.msra.mxu0 %v1154
  %1841 = vmatprep.subr.bf16.mxu0 0
  %1842 = vmatpush1.bf16.msra.mxu0 %v1155
  %1843 = vmatprep.subr.bf16.mxu0 0
  %1844 = vmatpush1.bf16.msra.mxu0 %v1156
  %1845 = vmatprep.subr.bf16.mxu0 0
  %1846 = vmatpush1.bf16.msra.mxu0 %v1157
  %1847 = vmatprep.subr.bf16.mxu0 0
  %1848 = vmatpush1.bf16.msra.mxu0 %v1158
  %1849 = vmatprep.subr.bf16.mxu0 0
  %1850 = vmatpush1.bf16.msra.mxu0 %v1159
  %1851 = vmatprep.subr.bf16.mxu0 0
  %1852 = vmatpush1.bf16.msra.mxu0 %v1160
  %1853 = vmatprep.subr.bf16.mxu0 0
  %1854 = vmatpush1.bf16.msra.mxu0 %v1161
  %1855 = vmatprep.subr.bf16.mxu0 0
  %1856 = vmatpush1.bf16.msra.mxu0 %v1162
  %1857 = vmatprep.subr.bf16.mxu0 0
  %1858 = vmatpush1.bf16.msra.mxu0 %v1163
  %1859 = vmatprep.subr.bf16.mxu0 0
  %1860 = vmatpush1.bf16.msra.mxu0 %v1164
  %1861 = vmatprep.subr.bf16.mxu0 0
  %1862 = vmatpush1.bf16.msra.mxu0 %v1165
  %1863 = vmatprep.subr.bf16.mxu0 0
  %1864 = vmatpush1.bf16.msra.mxu0 %v1166
  %1865 = vmatprep.subr.bf16.mxu0 0
  %1866 = vmatpush1.bf16.msra.mxu0 %v1167
  %1867 = vmatprep.mubr.bf16.mxu0 %v1555
  %1868 = vmatmul.mubr.bf16.gmra.mrb[0].mxu0 %v1554
  %v1869 = vpop.f32.mrb[0].mxu0
  %v1870 = vadd.f32 0.0, %v1869
  %v1871 = vpop.f32.mrb[0].mxu0
  %v1872 = vpop.f32.mrb[0].mxu0
  %v1873 = vadd.f32 0.0, %v1872
  %v1874 = vpop.f32.mrb[0].mxu0
  %1875 = vmatprep.mubr.bf16.mxu0 %v1561
  %1876 = vmatmul.mubr.bf16.gmra.mrb[0].mxu0 %v1560
  %v1877 = vpop.f32.mrb[0].mxu0
  %v1878 = vadd.f32 0.0, %v1877
  %v1879 = vpop.f32.mrb[0].mxu0
  %v1880 = vpop.f32.mrb[0].mxu0
  %v1881 = vadd.f32 0.0, %v1880
  %v1882 = vpop.f32.mrb[0].mxu0
  %1883 = vmatprep.mubr.bf16.mxu0 %v1567
  %1884 = vmatmul.mubr.bf16.gmra.mrb[0].mxu0 %v1566
  %v1885 = vpop.f32.mrb[0].mxu0
  %v1886 = vadd.f32 0.0, %v1885
  %v1887 = vpop.f32.mrb[0].mxu0
  %v1888 = vpop.f32.mrb[0].mxu0
  %v1889 = vadd.f32 0.0, %v1888
  %v1890 = vpop.f32.mrb[0].mxu0
  %1891 = vmatprep.mubr.bf16.mxu0 %v1573
  %1892 = vmatmul.mubr.bf16.gmra.mrb[0].mxu0 %v1572
  %v1893 = vpop.f32.mrb[0].mxu0
  %v1894 = vadd.f32 0.0, %v1893
  %v1895 = vpop.f32.mrb[0].mxu0
  %v1896 = vpop.f32.mrb[0].mxu0
  %v1897 = vadd.f32 0.0, %v1896
  %v1898 = vpop.f32.mrb[0].mxu0
  %1899 = vmatprep.mubr.bf16.mxu0 %v1579
  %1900 = vmatmul.mubr.bf16.gmra.mrb[0].mxu0 %v1578
  %v1901 = vpop.f32.mrb[0].mxu0
  %v1902 = vadd.f32 0.0, %v1901
  %v1903 = vpop.f32.mrb[0].mxu0
  %v1904 = vpop.f32.mrb[0].mxu0
  %v1905 = vadd.f32 0.0, %v1904
  %v1906 = vpop.f32.mrb[0].mxu0
  %1907 = vmatprep.mubr.bf16.mxu0 %v1585
  %1908 = vmatmul.mubr.bf16.gmra.mrb[0].mxu0 %v1584
  %v1909 = vpop.f32.mrb[0].mxu0
  %v1910 = vadd.f32 0.0, %v1909
  %v1911 = vpop.f32.mrb[0].mxu0
  %v1912 = vpop.f32.mrb[0].mxu0
  %v1913 = vadd.f32 0.0, %v1912
  %v1914 = vpop.f32.mrb[0].mxu0
  %1915 = vmatprep.mubr.bf16.mxu0 %v1591
  %1916 = vmatmul.mubr.bf16.gmra.mrb[0].mxu0 %v1590
  %v1917 = vpop.f32.mrb[0].mxu0
  %v1918 = vadd.f32 0.0, %v1917
  %v1919 = vpop.f32.mrb[0].mxu0
  %v1920 = vpop.f32.mrb[0].mxu0
  %v1921 = vadd.f32 0.0, %v1920
  %v1922 = vpop.f32.mrb[0].mxu0
  %1923 = vmatprep.mubr.bf16.mxu0 %v1597
  %1924 = vmatmul.mubr.bf16.gmra.mrb[0].mxu0 %v1596
  %v1925 = vpop.f32.mrb[0].mxu0
  %v1926 = vadd.f32 0.0, %v1925
  %v1927 = vpop.f32.mrb[0].mxu0
  %v1928 = vpop.f32.mrb[0].mxu0
  %v1929 = vadd.f32 0.0, %v1928
  %v1930 = vpop.f32.mrb[0].mxu0
  %1931 = vmatprep.mubr.bf16.mxu0 %v1603
  %1932 = vmatmul.mubr.bf16.gmra.mrb[0].mxu0 %v1602
  %v1933 = vpop.f32.mrb[0].mxu0
  %v1934 = vadd.f32 0.0, %v1933
  %v1935 = vpop.f32.mrb[0].mxu0
  %v1936 = vpop.f32.mrb[0].mxu0
  %v1937 = vadd.f32 0.0, %v1936
  %v1938 = vpop.f32.mrb[0].mxu0
  %1939 = vmatprep.mubr.bf16.mxu0 %v1609
  %1940 = vmatmul.mubr.bf16.gmra.mrb[0].mxu0 %v1608
  %v1941 = vpop.f32.mrb[0].mxu0
  %v1942 = vadd.f32 0.0, %v1941
  %v1943 = vpop.f32.mrb[0].mxu0
  %v1944 = vpop.f32.mrb[0].mxu0
  %v1945 = vadd.f32 0.0, %v1944
  %v1946 = vpop.f32.mrb[0].mxu0
  %1947 = vmatprep.mubr.bf16.mxu0 %v1615
  %1948 = vmatmul.mubr.bf16.gmra.mrb[0].mxu0 %v1614
  %v1949 = vpop.f32.mrb[0].mxu0
  %v1950 = vadd.f32 0.0, %v1949
  %v1951 = vpop.f32.mrb[0].mxu0
  %v1952 = vpop.f32.mrb[0].mxu0
  %v1953 = vadd.f32 0.0, %v1952
  %v1954 = vpop.f32.mrb[0].mxu0
  %1955 = vmatprep.mubr.bf16.mxu0 %v1621
  %1956 = vmatmul.mubr.bf16.gmra.mrb[0].mxu0 %v1620
  %v1957 = vpop.f32.mrb[0].mxu0
  %v1958 = vadd.f32 0.0, %v1957
  %v1959 = vpop.f32.mrb[0].mxu0
  %v1960 = vpop.f32.mrb[0].mxu0
  %v1961 = vadd.f32 0.0, %v1960
  %v1962 = vpop.f32.mrb[0].mxu0
  %1963 = vmatprep.mubr.bf16.mxu0 %v1627
  %1964 = vmatmul.mubr.bf16.gmra.mrb[0].mxu0 %v1626
  %v1965 = vpop.f32.mrb[0].mxu0
  %v1966 = vadd.f32 0.0, %v1965
  %v1967 = vpop.f32.mrb[0].mxu0
  %v1968 = vpop.f32.mrb[0].mxu0
  %v1969 = vadd.f32 0.0, %v1968
  %v1970 = vpop.f32.mrb[0].mxu0
  %1971 = vmatprep.mubr.bf16.mxu0 %v1633
  %1972 = vmatmul.mubr.bf16.gmra.mrb[0].mxu0 %v1632
  %v1973 = vpop.f32.mrb[0].mxu0
  %v1974 = vadd.f32 0.0, %v1973
  %v1975 = vpop.f32.mrb[0].mxu0
  %v1976 = vpop.f32.mrb[0].mxu0
  %v1977 = vadd.f32 0.0, %v1976
  %v1978 = vpop.f32.mrb[0].mxu0
  %1979 = vmatprep.mubr.bf16.mxu0 %v1639
  %1980 = vmatmul.mubr.bf16.gmra.mrb[0].mxu0 %v1638
  %v1981 = vpop.f32.mrb[0].mxu0
  %v1982 = vadd.f32 0.0, %v1981
  %v1983 = vpop.f32.mrb[0].mxu0
  %v1984 = vpop.f32.mrb[0].mxu0
  %v1985 = vadd.f32 0.0, %v1984
  %v1986 = vpop.f32.mrb[0].mxu0
  %1987 = vmatprep.mubr.bf16.mxu0 %v1645
  %1988 = vmatmul.mubr.bf16.gmra.mrb[0].mxu0 %v1644
  %v1989 = vpop.f32.mrb[0].mxu0
  %v1990 = vadd.f32 0.0, %v1989
  %v1991 = vpop.f32.mrb[0].mxu0
  %v1992 = vpop.f32.mrb[0].mxu0
  %v1993 = vadd.f32 0.0, %v1992
  %v1994 = vpop.f32.mrb[0].mxu0
  %1995 = vmatprep.mubr.bf16.mxu0 %v1651
  %1996 = vmatmul.mubr.bf16.gmra.mrb[0].mxu0 %v1650
  %v1997 = vpop.f32.mrb[0].mxu0
  %v1998 = vadd.f32 0.0, %v1997
  %v1999 = vpop.f32.mrb[0].mxu0
  %v2000 = vpop.f32.mrb[0].mxu0
  %v2001 = vadd.f32 0.0, %v2000
  %v2002 = vpop.f32.mrb[0].mxu0
  %2003 = vmatprep.mubr.bf16.mxu0 %v1657
  %2004 = vmatmul.mubr.bf16.gmra.mrb[0].mxu0 %v1656
  %v2005 = vpop.f32.mrb[0].mxu0
  %v2006 = vadd.f32 0.0, %v2005
  %v2007 = vpop.f32.mrb[0].mxu0
  %v2008 = vpop.f32.mrb[0].mxu0
  %v2009 = vadd.f32 0.0, %v2008
  %v2010 = vpop.f32.mrb[0].mxu0
  %2011 = vmatprep.mubr.bf16.mxu0 %v1663
  %2012 = vmatmul.mubr.bf16.gmra.mrb[0].mxu0 %v1662
  %v2013 = vpop.f32.mrb[0].mxu0
  %v2014 = vadd.f32 0.0, %v2013
  %v2015 = vpop.f32.mrb[0].mxu0
  %v2016 = vpop.f32.mrb[0].mxu0
  %v2017 = vadd.f32 0.0, %v2016
  %v2018 = vpop.f32.mrb[0].mxu0
  %2019 = vmatprep.mubr.bf16.mxu0 %v1669
  %2020 = vmatmul.mubr.bf16.gmra.mrb[0].mxu0 %v1668
  %v2021 = vpop.f32.mrb[0].mxu0
  %v2022 = vadd.f32 0.0, %v2021
  %v2023 = vpop.f32.mrb[0].mxu0
  %v2024 = vpop.f32.mrb[0].mxu0
  %v2025 = vadd.f32 0.0, %v2024
  %v2026 = vpop.f32.mrb[0].mxu0
  %2027 = vdwg.mxu0
  %2028 = vmatprep.subr.bf16.mxu0 0
  %2029 = vmatpush1.bf16.msra.mxu0 %v1168
  %2030 = vmatprep.subr.bf16.mxu0 0
  %2031 = vmatpush1.bf16.msra.mxu0 %v1169
  %2032 = vmatprep.subr.bf16.mxu0 0
  %2033 = vmatpush1.bf16.msra.mxu0 %v1170
  %2034 = vmatprep.subr.bf16.mxu0 0
  %2035 = vmatpush1.bf16.msra.mxu0 %v1171
  %2036 = vmatprep.subr.bf16.mxu0 0
  %2037 = vmatpush1.bf16.msra.mxu0 %v1172
  %2038 = vmatprep.subr.bf16.mxu0 0
  %2039 = vmatpush1.bf16.msra.mxu0 %v1173
  %2040 = vmatprep.subr.bf16.mxu0 0
  %2041 = vmatpush1.bf16.msra.mxu0 %v1174
  %2042 = vmatprep.subr.bf16.mxu0 0
  %2043 = vmatpush1.bf16.msra.mxu0 %v1175
  %2044 = vmatprep.subr.bf16.mxu0 0
  %2045 = vmatpush1.bf16.msra.mxu0 %v1176
  %2046 = vmatprep.subr.bf16.mxu0 0
  %2047 = vmatpush1.bf16.msra.mxu0 %v1177
  %2048 = vmatprep.subr.bf16.mxu0 0
  %2049 = vmatpush1.bf16.msra.mxu0 %v1178
  %2050 = vmatprep.subr.bf16.mxu0 0
  %2051 = vmatpush1.bf16.msra.mxu0 %v1179
  %2052 = vmatprep.subr.bf16.mxu0 0
  %2053 = vmatpush1.bf16.msra.mxu0 %v1180
  %2054 = vmatprep.subr.bf16.mxu0 0
  %2055 = vmatpush1.bf16.msra.mxu0 %v1181
  %2056 = vmatprep.subr.bf16.mxu0 0
  %2057 = vmatpush1.bf16.msra.mxu0 %v1182
  %2058 = vmatprep.subr.bf16.mxu0 0
  %2059 = vmatpush1.bf16.msra.mxu0 %v1183
  %2060 = vmatprep.mubr.bf16.mxu0 %v1557
  %2061 = vmatmul.mubr.bf16.gmra.mrb[0].mxu0 %v1556
  %v2062 = vpop.f32.mrb[0].mxu0
  %v2063 = vadd.f32 %v1870, %v2062
  %v2064 = vpop.f32.mrb[0].mxu0
  %v2065 = vpop.f32.mrb[0].mxu0
  %v2066 = vadd.f32 %v1873, %v2065
  %v2067 = vpop.f32.mrb[0].mxu0
  %2068 = vmatprep.mubr.bf16.mxu0 %v1563
  %2069 = vmatmul.mubr.bf16.gmra.mrb[0].mxu0 %v1562
  %v2070 = vpop.f32.mrb[0].mxu0
  %v2071 = vadd.f32 %v1878, %v2070
  %v2072 = vpop.f32.mrb[0].mxu0
  %v2073 = vpop.f32.mrb[0].mxu0
  %v2074 = vadd.f32 %v1881, %v2073
  %v2075 = vpop.f32.mrb[0].mxu0
  %2076 = vmatprep.mubr.bf16.mxu0 %v1569
  %2077 = vmatmul.mubr.bf16.gmra.mrb[0].mxu0 %v1568
  %v2078 = vpop.f32.mrb[0].mxu0
  %v2079 = vadd.f32 %v1886, %v2078
  %v2080 = vpop.f32.mrb[0].mxu0
  %v2081 = vpop.f32.mrb[0].mxu0
  %v2082 = vadd.f32 %v1889, %v2081
  %v2083 = vpop.f32.mrb[0].mxu0
  %2084 = vmatprep.mubr.bf16.mxu0 %v1575
  %2085 = vmatmul.mubr.bf16.gmra.mrb[0].mxu0 %v1574
  %v2086 = vpop.f32.mrb[0].mxu0
  %v2087 = vadd.f32 %v1894, %v2086
  %v2088 = vpop.f32.mrb[0].mxu0
  %v2089 = vpop.f32.mrb[0].mxu0
  %v2090 = vadd.f32 %v1897, %v2089
  %v2091 = vpop.f32.mrb[0].mxu0
  %2092 = vmatprep.mubr.bf16.mxu0 %v1581
  %2093 = vmatmul.mubr.bf16.gmra.mrb[0].mxu0 %v1580
  %v2094 = vpop.f32.mrb[0].mxu0
  %v2095 = vadd.f32 %v1902, %v2094
  %v2096 = vpop.f32.mrb[0].mxu0
  %v2097 = vpop.f32.mrb[0].mxu0
  %v2098 = vadd.f32 %v1905, %v2097
  %v2099 = vpop.f32.mrb[0].mxu0
  %2100 = vmatprep.mubr.bf16.mxu0 %v1587
  %2101 = vmatmul.mubr.bf16.gmra.mrb[0].mxu0 %v1586
  %v2102 = vpop.f32.mrb[0].mxu0
  %v2103 = vadd.f32 %v1910, %v2102
  %v2104 = vpop.f32.mrb[0].mxu0
  %v2105 = vpop.f32.mrb[0].mxu0
  %v2106 = vadd.f32 %v1913, %v2105
  %v2107 = vpop.f32.mrb[0].mxu0
  %2108 = vmatprep.mubr.bf16.mxu0 %v1593
  %2109 = vmatmul.mubr.bf16.gmra.mrb[0].mxu0 %v1592
  %v2110 = vpop.f32.mrb[0].mxu0
  %v2111 = vadd.f32 %v1918, %v2110
  %v2112 = vpop.f32.mrb[0].mxu0
  %v2113 = vpop.f32.mrb[0].mxu0
  %v2114 = vadd.f32 %v1921, %v2113
  %v2115 = vpop.f32.mrb[0].mxu0
  %2116 = vmatprep.mubr.bf16.mxu0 %v1599
  %2117 = vmatmul.mubr.bf16.gmra.mrb[0].mxu0 %v1598
  %v2118 = vpop.f32.mrb[0].mxu0
  %v2119 = vadd.f32 %v1926, %v2118
  %v2120 = vpop.f32.mrb[0].mxu0
  %v2121 = vpop.f32.mrb[0].mxu0
  %v2122 = vadd.f32 %v1929, %v2121
  %v2123 = vpop.f32.mrb[0].mxu0
  %2124 = vmatprep.mubr.bf16.mxu0 %v1605
  %2125 = vmatmul.mubr.bf16.gmra.mrb[0].mxu0 %v1604
  %v2126 = vpop.f32.mrb[0].mxu0
  %v2127 = vadd.f32 %v1934, %v2126
  %v2128 = vpop.f32.mrb[0].mxu0
  %v2129 = vpop.f32.mrb[0].mxu0
  %v2130 = vadd.f32 %v1937, %v2129
  %v2131 = vpop.f32.mrb[0].mxu0
  %2132 = vmatprep.mubr.bf16.mxu0 %v1611
  %2133 = vmatmul.mubr.bf16.gmra.mrb[0].mxu0 %v1610
  %v2134 = vpop.f32.mrb[0].mxu0
  %v2135 = vadd.f32 %v1942, %v2134
  %v2136 = vpop.f32.mrb[0].mxu0
  %v2137 = vpop.f32.mrb[0].mxu0
  %v2138 = vadd.f32 %v1945, %v2137
  %v2139 = vpop.f32.mrb[0].mxu0
  %2140 = vmatprep.mubr.bf16.mxu0 %v1617
  %2141 = vmatmul.mubr.bf16.gmra.mrb[0].mxu0 %v1616
  %v2142 = vpop.f32.mrb[0].mxu0
  %v2143 = vadd.f32 %v1950, %v2142
  %v2144 = vpop.f32.mrb[0].mxu0
  %v2145 = vpop.f32.mrb[0].mxu0
  %v2146 = vadd.f32 %v1953, %v2145
  %v2147 = vpop.f32.mrb[0].mxu0
  %2148 = vmatprep.mubr.bf16.mxu0 %v1623
  %2149 = vmatmul.mubr.bf16.gmra.mrb[0].mxu0 %v1622
  %v2150 = vpop.f32.mrb[0].mxu0
  %v2151 = vadd.f32 %v1958, %v2150
  %v2152 = vpop.f32.mrb[0].mxu0
  %v2153 = vpop.f32.mrb[0].mxu0
  %v2154 = vadd.f32 %v1961, %v2153
  %v2155 = vpop.f32.mrb[0].mxu0
  %2156 = vmatprep.mubr.bf16.mxu0 %v1629
  %2157 = vmatmul.mubr.bf16.gmra.mrb[0].mxu0 %v1628
  %v2158 = vpop.f32.mrb[0].mxu0
  %v2159 = vadd.f32 %v1966, %v2158
  %v2160 = vpop.f32.mrb[0].mxu0
  %v2161 = vpop.f32.mrb[0].mxu0
  %v2162 = vadd.f32 %v1969, %v2161
  %v2163 = vpop.f32.mrb[0].mxu0
  %2164 = vmatprep.mubr.bf16.mxu0 %v1635
  %2165 = vmatmul.mubr.bf16.gmra.mrb[0].mxu0 %v1634
  %v2166 = vpop.f32.mrb[0].mxu0
  %v2167 = vadd.f32 %v1974, %v2166
  %v2168 = vpop.f32.mrb[0].mxu0
  %v2169 = vpop.f32.mrb[0].mxu0
  %v2170 = vadd.f32 %v1977, %v2169
  %v2171 = vpop.f32.mrb[0].mxu0
  %2172 = vmatprep.mubr.bf16.mxu0 %v1641
  %2173 = vmatmul.mubr.bf16.gmra.mrb[0].mxu0 %v1640
  %v2174 = vpop.f32.mrb[0].mxu0
  %v2175 = vadd.f32 %v1982, %v2174
  %v2176 = vpop.f32.mrb[0].mxu0
  %v2177 = vpop.f32.mrb[0].mxu0
  %v2178 = vadd.f32 %v1985, %v2177
  %v2179 = vpop.f32.mrb[0].mxu0
  %2180 = vmatprep.mubr.bf16.mxu0 %v1647
  %2181 = vmatmul.mubr.bf16.gmra.mrb[0].mxu0 %v1646
  %v2182 = vpop.f32.mrb[0].mxu0
  %v2183 = vadd.f32 %v1990, %v2182
  %v2184 = vpop.f32.mrb[0].mxu0
  %v2185 = vpop.f32.mrb[0].mxu0
  %v2186 = vadd.f32 %v1993, %v2185
  %v2187 = vpop.f32.mrb[0].mxu0
  %2188 = vmatprep.mubr.bf16.mxu0 %v1653
  %2189 = vmatmul.mubr.bf16.gmra.mrb[0].mxu0 %v1652
  %v2190 = vpop.f32.mrb[0].mxu0
  %v2191 = vadd.f32 %v1998, %v2190
  %v2192 = vpop.f32.mrb[0].mxu0
  %v2193 = vpop.f32.mrb[0].mxu0
  %v2194 = vadd.f32 %v2001, %v2193
  %v2195 = vpop.f32.mrb[0].mxu0
  %2196 = vmatprep.mubr.bf16.mxu0 %v1659
  %2197 = vmatmul.mubr.bf16.gmra.mrb[0].mxu0 %v1658
  %v2198 = vpop.f32.mrb[0].mxu0
  %v2199 = vadd.f32 %v2006, %v2198
  %v2200 = vpop.f32.mrb[0].mxu0
  %v2201 = vpop.f32.mrb[0].mxu0
  %v2202 = vadd.f32 %v2009, %v2201
  %v2203 = vpop.f32.mrb[0].mxu0
  %2204 = vmatprep.mubr.bf16.mxu0 %v1665
  %2205 = vmatmul.mubr.bf16.gmra.mrb[0].mxu0 %v1664
  %v2206 = vpop.f32.mrb[0].mxu0
  %v2207 = vadd.f32 %v2014, %v2206
  %v2208 = vpop.f32.mrb[0].mxu0
  %v2209 = vpop.f32.mrb[0].mxu0
  %v2210 = vadd.f32 %v2017, %v2209
  %v2211 = vpop.f32.mrb[0].mxu0
  %2212 = vmatprep.mubr.bf16.mxu0 %v1671
  %2213 = vmatmul.mubr.bf16.gmra.mrb[0].mxu0 %v1670
  %v2214 = vpop.f32.mrb[0].mxu0
  %v2215 = vadd.f32 %v2022, %v2214
  %v2216 = vpop.f32.mrb[0].mxu0
  %v2217 = vpop.f32.mrb[0].mxu0
  %v2218 = vadd.f32 %v2025, %v2217
  %v2219 = vpop.f32.mrb[0].mxu0
  %2220 = vdwg.mxu0
  %2221 = vmatprep.subr.bf16.mxu0 0
  %2222 = vmatpush1.bf16.msra.mxu0 %v1184
  %2223 = vmatprep.subr.bf16.mxu0 0
  %2224 = vmatpush1.bf16.msra.mxu0 %v1185
  %2225 = vmatprep.subr.bf16.mxu0 0
  %2226 = vmatpush1.bf16.msra.mxu0 %v1186
  %2227 = vmatprep.subr.bf16.mxu0 0
  %2228 = vmatpush1.bf16.msra.mxu0 %v1187
  %2229 = vmatprep.subr.bf16.mxu0 0
  %2230 = vmatpush1.bf16.msra.mxu0 %v1188
  %2231 = vmatprep.subr.bf16.mxu0 0
  %2232 = vmatpush1.bf16.msra.mxu0 %v1189
  %2233 = vmatprep.subr.bf16.mxu0 0
  %2234 = vmatpush1.bf16.msra.mxu0 %v1190
  %2235 = vmatprep.subr.bf16.mxu0 0
  %2236 = vmatpush1.bf16.msra.mxu0 %v1191
  %2237 = vmatprep.subr.bf16.mxu0 0
  %2238 = vmatpush1.bf16.msra.mxu0 %v1192
  %2239 = vmatprep.subr.bf16.mxu0 0
  %2240 = vmatpush1.bf16.msra.mxu0 %v1193
  %2241 = vmatprep.subr.bf16.mxu0 0
  %2242 = vmatpush1.bf16.msra.mxu0 0
  %2243 = vmatprep.subr.bf16.mxu0 0
  %2244 = vmatpush1.bf16.msra.mxu0 0
  %2245 = vmatprep.subr.bf16.mxu0 0
  %2246 = vmatpush1.bf16.msra.mxu0 0
  %2247 = vmatprep.subr.bf16.mxu0 0
  %2248 = vmatpush1.bf16.msra.mxu0 0
  %2249 = vmatprep.subr.bf16.mxu0 0
  %2250 = vmatpush1.bf16.msra.mxu0 0
  %2251 = vmatprep.subr.bf16.mxu0 0
  %2252 = vmatpush1.bf16.msra.mxu0 0
  %2253 = vmatprep.mubr.bf16.mxu0 %v1776
  %2254 = vmatmul.mubr.bf16.gmra.mrb[0].mxu0 %v1558
  %v2255 = vpop.f32.mrb[0].mxu0
  %v2256 = vadd.f32 %v2063, %v2255
  %v2257 = vpop.f32.mrb[0].mxu0
  %v2258 = vpop.f32.mrb[0].mxu0
  %v2259 = vadd.f32 %v2066, %v2258
  %v2260 = vpop.f32.mrb[0].mxu0
  %2261 = vmatprep.mubr.bf16.mxu0 %v1779
  %2262 = vmatmul.mubr.bf16.gmra.mrb[0].mxu0 %v1564
  %v2263 = vpop.f32.mrb[0].mxu0
  %v2264 = vadd.f32 %v2071, %v2263
  %v2265 = vpop.f32.mrb[0].mxu0
  %v2266 = vpop.f32.mrb[0].mxu0
  %v2267 = vadd.f32 %v2074, %v2266
  %v2268 = vpop.f32.mrb[0].mxu0
  %2269 = vmatprep.mubr.bf16.mxu0 %v1782
  %2270 = vmatmul.mubr.bf16.gmra.mrb[0].mxu0 %v1570
  %v2271 = vpop.f32.mrb[0].mxu0
  %v2272 = vadd.f32 %v2079, %v2271
  %v2273 = vpop.f32.mrb[0].mxu0
  %v2274 = vpop.f32.mrb[0].mxu0
  %v2275 = vadd.f32 %v2082, %v2274
  %v2276 = vpop.f32.mrb[0].mxu0
  %2277 = vmatprep.mubr.bf16.mxu0 %v1785
  %2278 = vmatmul.mubr.bf16.gmra.mrb[0].mxu0 %v1576
  %v2279 = vpop.f32.mrb[0].mxu0
  %v2280 = vadd.f32 %v2087, %v2279
  %v2281 = vpop.f32.mrb[0].mxu0
  %v2282 = vpop.f32.mrb[0].mxu0
  %v2283 = vadd.f32 %v2090, %v2282
  %v2284 = vpop.f32.mrb[0].mxu0
  %2285 = vmatprep.mubr.bf16.mxu0 %v1788
  %2286 = vmatmul.mubr.bf16.gmra.mrb[0].mxu0 %v1582
  %v2287 = vpop.f32.mrb[0].mxu0
  %v2288 = vadd.f32 %v2095, %v2287
  %v2289 = vpop.f32.mrb[0].mxu0
  %v2290 = vpop.f32.mrb[0].mxu0
  %v2291 = vadd.f32 %v2098, %v2290
  %v2292 = vpop.f32.mrb[0].mxu0
  %2293 = vmatprep.mubr.bf16.mxu0 %v1791
  %2294 = vmatmul.mubr.bf16.gmra.mrb[0].mxu0 %v1588
  %v2295 = vpop.f32.mrb[0].mxu0
  %v2296 = vadd.f32 %v2103, %v2295
  %v2297 = vpop.f32.mrb[0].mxu0
  %v2298 = vpop.f32.mrb[0].mxu0
  %v2299 = vadd.f32 %v2106, %v2298
  %v2300 = vpop.f32.mrb[0].mxu0
  %2301 = vmatprep.mubr.bf16.mxu0 %v1794
  %2302 = vmatmul.mubr.bf16.gmra.mrb[0].mxu0 %v1594
  %v2303 = vpop.f32.mrb[0].mxu0
  %v2304 = vadd.f32 %v2111, %v2303
  %v2305 = vpop.f32.mrb[0].mxu0
  %v2306 = vpop.f32.mrb[0].mxu0
  %v2307 = vadd.f32 %v2114, %v2306
  %v2308 = vpop.f32.mrb[0].mxu0
  %2309 = vmatprep.mubr.bf16.mxu0 %v1797
  %2310 = vmatmul.mubr.bf16.gmra.mrb[0].mxu0 %v1600
  %v2311 = vpop.f32.mrb[0].mxu0
  %v2312 = vadd.f32 %v2119, %v2311
  %v2313 = vpop.f32.mrb[0].mxu0
  %v2314 = vpop.f32.mrb[0].mxu0
  %v2315 = vadd.f32 %v2122, %v2314
  %v2316 = vpop.f32.mrb[0].mxu0
  %2317 = vmatprep.mubr.bf16.mxu0 %v1800
  %2318 = vmatmul.mubr.bf16.gmra.mrb[0].mxu0 %v1606
  %v2319 = vpop.f32.mrb[0].mxu0
  %v2320 = vadd.f32 %v2127, %v2319
  %v2321 = vpop.f32.mrb[0].mxu0
  %v2322 = vpop.f32.mrb[0].mxu0
  %v2323 = vadd.f32 %v2130, %v2322
  %v2324 = vpop.f32.mrb[0].mxu0
  %2325 = vmatprep.mubr.bf16.mxu0 %v1803
  %2326 = vmatmul.mubr.bf16.gmra.mrb[0].mxu0 %v1612
  %v2327 = vpop.f32.mrb[0].mxu0
  %v2328 = vadd.f32 %v2135, %v2327
  %v2329 = vpop.f32.mrb[0].mxu0
  %v2330 = vpop.f32.mrb[0].mxu0
  %v2331 = vadd.f32 %v2138, %v2330
  %v2332 = vpop.f32.mrb[0].mxu0
  %2333 = vmatprep.mubr.bf16.mxu0 %v1806
  %2334 = vmatmul.mubr.bf16.gmra.mrb[0].mxu0 %v1618
  %v2335 = vpop.f32.mrb[0].mxu0
  %v2336 = vadd.f32 %v2143, %v2335
  %v2337 = vpop.f32.mrb[0].mxu0
  %v2338 = vpop.f32.mrb[0].mxu0
  %v2339 = vadd.f32 %v2146, %v2338
  %v2340 = vpop.f32.mrb[0].mxu0
  %2341 = vmatprep.mubr.bf16.mxu0 %v1809
  %2342 = vmatmul.mubr.bf16.gmra.mrb[0].mxu0 %v1624
  %v2343 = vpop.f32.mrb[0].mxu0
  %v2344 = vadd.f32 %v2151, %v2343
  %v2345 = vpop.f32.mrb[0].mxu0
  %v2346 = vpop.f32.mrb[0].mxu0
  %v2347 = vadd.f32 %v2154, %v2346
  %v2348 = vpop.f32.mrb[0].mxu0
  %2349 = vmatprep.mubr.bf16.mxu0 %v1812
  %2350 = vmatmul.mubr.bf16.gmra.mrb[0].mxu0 %v1630
  %v2351 = vpop.f32.mrb[0].mxu0
  %v2352 = vadd.f32 %v2159, %v2351
  %v2353 = vpop.f32.mrb[0].mxu0
  %v2354 = vpop.f32.mrb[0].mxu0
  %v2355 = vadd.f32 %v2162, %v2354
  %v2356 = vpop.f32.mrb[0].mxu0
  %2357 = vmatprep.mubr.bf16.mxu0 %v1815
  %2358 = vmatmul.mubr.bf16.gmra.mrb[0].mxu0 %v1636
  %v2359 = vpop.f32.mrb[0].mxu0
  %v2360 = vadd.f32 %v2167, %v2359
  %v2361 = vpop.f32.mrb[0].mxu0
  %v2362 = vpop.f32.mrb[0].mxu0
  %v2363 = vadd.f32 %v2170, %v2362
  %v2364 = vpop.f32.mrb[0].mxu0
  %2365 = vmatprep.mubr.bf16.mxu0 %v1818
  %2366 = vmatmul.mubr.bf16.gmra.mrb[0].mxu0 %v1642
  %v2367 = vpop.f32.mrb[0].mxu0
  %v2368 = vadd.f32 %v2175, %v2367
  %v2369 = vpop.f32.mrb[0].mxu0
  %v2370 = vpop.f32.mrb[0].mxu0
  %v2371 = vadd.f32 %v2178, %v2370
  %v2372 = vpop.f32.mrb[0].mxu0
  %2373 = vmatprep.mubr.bf16.mxu0 %v1821
  %2374 = vmatmul.mubr.bf16.gmra.mrb[0].mxu0 %v1648
  %v2375 = vpop.f32.mrb[0].mxu0
  %v2376 = vadd.f32 %v2183, %v2375
  %v2377 = vpop.f32.mrb[0].mxu0
  %v2378 = vpop.f32.mrb[0].mxu0
  %v2379 = vadd.f32 %v2186, %v2378
  %v2380 = vpop.f32.mrb[0].mxu0
  %2381 = vmatprep.mubr.bf16.mxu0 %v1824
  %2382 = vmatmul.mubr.bf16.gmra.mrb[0].mxu0 %v1654
  %v2383 = vpop.f32.mrb[0].mxu0
  %v2384 = vadd.f32 %v2191, %v2383
  %v2385 = vpop.f32.mrb[0].mxu0
  %v2386 = vpop.f32.mrb[0].mxu0
  %v2387 = vadd.f32 %v2194, %v2386
  %v2388 = vpop.f32.mrb[0].mxu0
  %2389 = vmatprep.mubr.bf16.mxu0 %v1827
  %2390 = vmatmul.mubr.bf16.gmra.mrb[0].mxu0 %v1660
  %v2391 = vpop.f32.mrb[0].mxu0
  %v2392 = vadd.f32 %v2199, %v2391
  %v2393 = vpop.f32.mrb[0].mxu0
  %v2394 = vpop.f32.mrb[0].mxu0
  %v2395 = vadd.f32 %v2202, %v2394
  %v2396 = vpop.f32.mrb[0].mxu0
  %2397 = vmatprep.mubr.bf16.mxu0 %v1830
  %2398 = vmatmul.mubr.bf16.gmra.mrb[0].mxu0 %v1666
  %v2399 = vpop.f32.mrb[0].mxu0
  %v2400 = vadd.f32 %v2207, %v2399
  %v2401 = vpop.f32.mrb[0].mxu0
  %v2402 = vpop.f32.mrb[0].mxu0
  %v2403 = vadd.f32 %v2210, %v2402
  %v2404 = vpop.f32.mrb[0].mxu0
  %2405 = vmatprep.mubr.bf16.mxu0 %v1833
  %2406 = vmatmul.mubr.bf16.gmra.mrb[0].mxu0 %v1672
  %v2407 = vpop.f32.mrb[0].mxu0
  %v2408 = vadd.f32 %v2215, %v2407
  %v2409 = vpop.f32.mrb[0].mxu0
  %v2410 = vpop.f32.mrb[0].mxu0
  %v2411 = vadd.f32 %v2218, %v2410
  %v2412 = vpop.f32.mrb[0].mxu0
  %2413 = vdwg.mxu0
  %v2414 = vmax.f32 %v2256, %v2336
  %v2415 = vmax.f32 %v2259, %v2339
  %v2416 = vmax.f32 %v2264, %v2344
  %v2417 = vmax.f32 %v2267, %v2347
  %v2418 = vmax.f32 %v2272, %v2352
  %v2419 = vmax.f32 %v2275, %v2355
  %v2420 = vmax.f32 %v2280, %v2360
  %v2421 = vmax.f32 %v2283, %v2363
  %v2422 = vmax.f32 %v2288, %v2368
  %v2423 = vmax.f32 %v2291, %v2371
  %v2424 = vmax.f32 %v2296, %v2376
  %v2425 = vmax.f32 %v2299, %v2379
  %v2426 = vmax.f32 %v2304, %v2384
  %v2427 = vmax.f32 %v2307, %v2387
  %v2428 = vmax.f32 %v2312, %v2392
  %v2429 = vmax.f32 %v2315, %v2395
  %v2430 = vmax.f32 %v2320, %v2400
  %v2431 = vmax.f32 %v2323, %v2403
  %v2432 = vmax.f32 %v2328, %v2408
  %v2433 = vmax.f32 %v2331, %v2411
  %v2434 = vmax.f32 %v2414, %v2416
  %v2435 = vmax.f32 %v2415, %v2417
  %v2436 = vmax.f32 %v2418, %v2420
  %v2437 = vmax.f32 %v2419, %v2421
  %v2438 = vmax.f32 %v2422, %v2424
  %v2439 = vmax.f32 %v2423, %v2425
  %v2440 = vmax.f32 %v2426, %v2428
  %v2441 = vmax.f32 %v2427, %v2429
  %v2442 = vmax.f32 %v2430, %v2432
  %v2443 = vmax.f32 %v2431, %v2433
  %v2444 = vadd.f32 %v2434, %v318
  %v2445 = vadd.f32 %v2435, %v323
  %v2446 = vadd.f32 %v2436, %v328
  %v2447 = vadd.f32 %v2437, %v333
  %v2448 = vadd.f32 %v2438, %v338
  %v2449 = vadd.f32 %v2439, %v343
  %v2450 = vadd.f32 %v2440, %v348
  %v2451 = vadd.f32 %v2441, %v353
  %v2452 = vadd.f32 %v2442, %v358
  %v2453 = vadd.f32 %v2443, %v363
  %v2454 = vmax.f32 %v2444, 0.0
  %v2455 = vmax.f32 %v2445, 0.0
  %v2456 = vmax.f32 %v2446, 0.0
  %v2457 = vmax.f32 %v2447, 0.0
  %v2458 = vmax.f32 %v2448, 0.0
  %v2459 = vmax.f32 %v2449, 0.0
  %v2460 = vmax.f32 %v2450, 0.0
  %v2461 = vmax.f32 %v2451, 0.0
  %v2462 = vmax.f32 %v2452, 0.0
  %v2463 = vmax.f32 %v2453, 0.0
  %v2464 = vpack.c.bf16 %v2455, %v2454
  %v2465 = vpack.c.bf16 %v2457, %v2456
  %v2466 = vpack.c.bf16 %v2459, %v2458
  %v2467 = vpack.c.bf16 %v2461, %v2460
  %v2468 = vpack.c.bf16 %v2463, %v2462
  %2469 = vst [vmem:[#allocation3] sm:$0xff] %v2464
  %2470 = vst [vmem:[#allocation3 + $0x8] sm:$0xff] %v2465
  %2471 = vst [vmem:[#allocation3 + $0x10] sm:$0xff] %v2466
  %2472 = vst [vmem:[#allocation3 + $0x18] sm:$0xff] %v2467
  %2473 = vst [vmem:[#allocation3 + $0x20] sm:$0xff] %v2468
  %s2474 = scalar_lea.vmem [#allocation2], 112
  %v2475 = vld [vmem:[%s2474] sm:$0xff]
  %v2476 = vld [vmem:[%s2474 + $0x8] sm:$0xff]
  %v2477 = vld [vmem:[%s2474 + $0x10] sm:$0xff]
  %v2478 = vld [vmem:[%s2474 + $0x18] sm:$0xff]
  %v2479 = vld [vmem:[%s2474 + $0x20] sm:$0xff]
  %v2480 = vld [vmem:[%s2474 + $0x28] sm:$0xff]
  %v2481 = vld [vmem:[%s2474 + $0x30] sm:$0xff]
  %v2482 = vld [vmem:[%s2474 + $0x38] sm:$0xff]
  %v2483 = vld [vmem:[%s2474 + $0x40] sm:$0xff]
  %v2484 = vld [vmem:[%s2474 + $0x48] sm:$0xff]
  %v2485 = vld [vmem:[%s2474 + $0x50] sm:$0xff]
  %v2486 = vld [vmem:[%s2474 + $0x58] sm:$0xff]
  %v2487 = vld [vmem:[%s2474 + $0x60] sm:$0xff]
  %v2488 = vld [vmem:[%s2474 + $0x68] sm:$0xff]
  %v2489 = vld [vmem:[%s2474 + $0x70] sm:$0xff]
  %v2490 = vld [vmem:[%s2474 + $0x78] sm:$0xff]
  %v2491 = vld [vmem:[%s2474 + $0x80] sm:$0xff]
  %v2492 = vld [vmem:[%s2474 + $0x88] sm:$0xff]
  %v2493 = vld [vmem:[%s2474 + $0x90] sm:$0xff]
  %v2494 = vld [vmem:[%s2474 + $0x98] sm:$0xff]
  %v2495 = vld [vmem:[%s2474 + $0xa0] sm:$0xff]
  %v2496 = vld [vmem:[%s2474 + $0xa8] sm:$0xff]
  %v2497 = vld [vmem:[%s2474 + $0xb0] sm:$0xff]
  %v2498 = vld [vmem:[%s2474 + $0xb8] sm:$0xff]
  %v2499 = vld [vmem:[%s2474 + $0xc0] sm:$0xff]
  %v2500 = vld [vmem:[%s2474 + $0xc8] sm:$0xff]
  %v2501 = vld [vmem:[%s2474 + $0xd0] sm:$0xff]
  %v2502 = vld [vmem:[%s2474 + $0xd8] sm:$0xff]
  %v2503 = vld [vmem:[%s2474 + $0xe0] sm:$0xff]
  %v2504 = vld [vmem:[%s2474 + $0xe8] sm:$0xff]
  %v2505 = vld [vmem:[%s2474 + $0xf0] sm:$0xff]
  %v2506 = vld [vmem:[%s2474 + $0xf8] sm:$0xff]
  %v2507 = vld [vmem:[%s2474 + $0x100] sm:$0xff]
  %v2508 = vld [vmem:[%s2474 + $0x108] sm:$0xff]
  %v2509 = vld [vmem:[%s2474 + $0x110] sm:$0xff]
  %v2510 = vld [vmem:[%s2474 + $0x118] sm:$0xff]
  %v2511 = vld [vmem:[%s2474 + $0x120] sm:$0xff]
  %v2512 = vld [vmem:[%s2474 + $0x128] sm:$0xff]
  %v2513 = vld [vmem:[%s2474 + $0x130] sm:$0xff]
  %v2514 = vld [vmem:[%s2474 + $0x138] sm:$0xff]
  %v2515 = vld [vmem:[%s2474 + $0x140] sm:$0xff]
  %v2516 = vld [vmem:[%s2474 + $0x148] sm:$0xff]
  %2517 = vmatprep.subr.bf16.mxu0 0
  %2518 = vmatpush1.bf16.msra.mxu0 %v2475
  %2519 = vmatprep.subr.bf16.mxu0 0
  %2520 = vmatpush1.bf16.msra.mxu0 %v2476
  %2521 = vmatprep.subr.bf16.mxu0 0
  %2522 = vmatpush1.bf16.msra.mxu0 %v2477
  %2523 = vmatprep.subr.bf16.mxu0 0
  %2524 = vmatpush1.bf16.msra.mxu0 %v2478
  %2525 = vmatprep.subr.bf16.mxu0 0
  %2526 = vmatpush1.bf16.msra.mxu0 %v2479
  %2527 = vmatprep.subr.bf16.mxu0 0
  %2528 = vmatpush1.bf16.msra.mxu0 %v2480
  %2529 = vmatprep.subr.bf16.mxu0 0
  %2530 = vmatpush1.bf16.msra.mxu0 %v2481
  %2531 = vmatprep.subr.bf16.mxu0 0
  %2532 = vmatpush1.bf16.msra.mxu0 %v2482
  %2533 = vmatprep.subr.bf16.mxu0 0
  %2534 = vmatpush1.bf16.msra.mxu0 %v2483
  %2535 = vmatprep.subr.bf16.mxu0 0
  %2536 = vmatpush1.bf16.msra.mxu0 %v2484
  %2537 = vmatprep.subr.bf16.mxu0 0
  %2538 = vmatpush1.bf16.msra.mxu0 %v2485
  %2539 = vmatprep.subr.bf16.mxu0 0
  %2540 = vmatpush1.bf16.msra.mxu0 %v2486
  %2541 = vmatprep.subr.bf16.mxu0 0
  %2542 = vmatpush1.bf16.msra.mxu0 %v2487
  %2543 = vmatprep.subr.bf16.mxu0 0
  %2544 = vmatpush1.bf16.msra.mxu0 %v2488
  %2545 = vmatprep.subr.bf16.mxu0 0
  %2546 = vmatpush1.bf16.msra.mxu0 %v2489
  %2547 = vmatprep.subr.bf16.mxu0 0
  %2548 = vmatpush1.bf16.msra.mxu0 %v2490
  %2549 = vmatprep.mubr.bf16.mxu0 %v1555
  %2550 = vmatmul.mubr.bf16.gmra.mrb[0].mxu0 %v1554
  %v2551 = vpop.f32.mrb[0].mxu0
  %v2552 = vadd.f32 0.0, %v2551
  %v2553 = vpop.f32.mrb[0].mxu0
  %v2554 = vpop.f32.mrb[0].mxu0
  %v2555 = vadd.f32 0.0, %v2554
  %v2556 = vpop.f32.mrb[0].mxu0
  %2557 = vmatprep.mubr.bf16.mxu0 %v1561
  %2558 = vmatmul.mubr.bf16.gmra.mrb[0].mxu0 %v1560
  %v2559 = vpop.f32.mrb[0].mxu0
  %v2560 = vadd.f32 0.0, %v2559
  %v2561 = vpop.f32.mrb[0].mxu0
  %v2562 = vpop.f32.mrb[0].mxu0
  %v2563 = vadd.f32 0.0, %v2562
  %v2564 = vpop.f32.mrb[0].mxu0
  %2565 = vmatprep.mubr.bf16.mxu0 %v1567
  %2566 = vmatmul.mubr.bf16.gmra.mrb[0].mxu0 %v1566
  %v2567 = vpop.f32.mrb[0].mxu0
  %v2568 = vadd.f32 0.0, %v2567
  %v2569 = vpop.f32.mrb[0].mxu0
  %v2570 = vpop.f32.mrb[0].mxu0
  %v2571 = vadd.f32 0.0, %v2570
  %v2572 = vpop.f32.mrb[0].mxu0
  %2573 = vmatprep.mubr.bf16.mxu0 %v1573
  %2574 = vmatmul.mubr.bf16.gmra.mrb[0].mxu0 %v1572
  %v2575 = vpop.f32.mrb[0].mxu0
  %v2576 = vadd.f32 0.0, %v2575
  %v2577 = vpop.f32.mrb[0].mxu0
  %v2578 = vpop.f32.mrb[0].mxu0
  %v2579 = vadd.f32 0.0, %v2578
  %v2580 = vpop.f32.mrb[0].mxu0
  %2581 = vmatprep.mubr.bf16.mxu0 %v1579
  %2582 = vmatmul.mubr.bf16.gmra.mrb[0].mxu0 %v1578
  %v2583 = vpop.f32.mrb[0].mxu0
  %v2584 = vadd.f32 0.0, %v2583
  %v2585 = vpop.f32.mrb[0].mxu0
  %v2586 = vpop.f32.mrb[0].mxu0
  %v2587 = vadd.f32 0.0, %v2586
  %v2588 = vpop.f32.mrb[0].mxu0
  %2589 = vmatprep.mubr.bf16.mxu0 %v1585
  %2590 = vmatmul.mubr.bf16.gmra.mrb[0].mxu0 %v1584
  %v2591 = vpop.f32.mrb[0].mxu0
  %v2592 = vadd.f32 0.0, %v2591
  %v2593 = vpop.f32.mrb[0].mxu0
  %v2594 = vpop.f32.mrb[0].mxu0
  %v2595 = vadd.f32 0.0, %v2594
  %v2596 = vpop.f32.mrb[0].mxu0
  %2597 = vmatprep.mubr.bf16.mxu0 %v1591
  %2598 = vmatmul.mubr.bf16.gmra.mrb[0].mxu0 %v1590
  %v2599 = vpop.f32.mrb[0].mxu0
  %v2600 = vadd.f32 0.0, %v2599
  %v2601 = vpop.f32.mrb[0].mxu0
  %v2602 = vpop.f32.mrb[0].mxu0
  %v2603 = vadd.f32 0.0, %v2602
  %v2604 = vpop.f32.mrb[0].mxu0
  %2605 = vmatprep.mubr.bf16.mxu0 %v1597
  %2606 = vmatmul.mubr.bf16.gmra.mrb[0].mxu0 %v1596
  %v2607 = vpop.f32.mrb[0].mxu0
  %v2608 = vadd.f32 0.0, %v2607
  %v2609 = vpop.f32.mrb[0].mxu0
  %v2610 = vpop.f32.mrb[0].mxu0
  %v2611 = vadd.f32 0.0, %v2610
  %v2612 = vpop.f32.mrb[0].mxu0
  %2613 = vmatprep.mubr.bf16.mxu0 %v1603
  %2614 = vmatmul.mubr.bf16.gmra.mrb[0].mxu0 %v1602
  %v2615 = vpop.f32.mrb[0].mxu0
  %v2616 = vadd.f32 0.0, %v2615
  %v2617 = vpop.f32.mrb[0].mxu0
  %v2618 = vpop.f32.mrb[0].mxu0
  %v2619 = vadd.f32 0.0, %v2618
  %v2620 = vpop.f32.mrb[0].mxu0
  %2621 = vmatprep.mubr.bf16.mxu0 %v1609
  %2622 = vmatmul.mubr.bf16.gmra.mrb[0].mxu0 %v1608
  %v2623 = vpop.f32.mrb[0].mxu0
  %v2624 = vadd.f32 0.0, %v2623
  %v2625 = vpop.f32.mrb[0].mxu0
  %v2626 = vpop.f32.mrb[0].mxu0
  %v2627 = vadd.f32 0.0, %v2626
  %v2628 = vpop.f32.mrb[0].mxu0
  %2629 = vmatprep.mubr.bf16.mxu0 %v1615
  %2630 = vmatmul.mubr.bf16.gmra.mrb[0].mxu0 %v1614
  %v2631 = vpop.f32.mrb[0].mxu0
  %v2632 = vadd.f32 0.0, %v2631
  %v2633 = vpop.f32.mrb[0].mxu0
  %v2634 = vpop.f32.mrb[0].mxu0
  %v2635 = vadd.f32 0.0, %v2634
  %v2636 = vpop.f32.mrb[0].mxu0
  %2637 = vmatprep.mubr.bf16.mxu0 %v1621
  %2638 = vmatmul.mubr.bf16.gmra.mrb[0].mxu0 %v1620
  %v2639 = vpop.f32.mrb[0].mxu0
  %v2640 = vadd.f32 0.0, %v2639
  %v2641 = vpop.f32.mrb[0].mxu0
  %v2642 = vpop.f32.mrb[0].mxu0
  %v2643 = vadd.f32 0.0, %v2642
  %v2644 = vpop.f32.mrb[0].mxu0
  %2645 = vmatprep.mubr.bf16.mxu0 %v1627
  %2646 = vmatmul.mubr.bf16.gmra.mrb[0].mxu0 %v1626
  %v2647 = vpop.f32.mrb[0].mxu0
  %v2648 = vadd.f32 0.0, %v2647
  %v2649 = vpop.f32.mrb[0].mxu0
  %v2650 = vpop.f32.mrb[0].mxu0
  %v2651 = vadd.f32 0.0, %v2650
  %v2652 = vpop.f32.mrb[0].mxu0
  %2653 = vmatprep.mubr.bf16.mxu0 %v1633
  %2654 = vmatmul.mubr.bf16.gmra.mrb[0].mxu0 %v1632
  %v2655 = vpop.f32.mrb[0].mxu0
  %v2656 = vadd.f32 0.0, %v2655
  %v2657 = vpop.f32.mrb[0].mxu0
  %v2658 = vpop.f32.mrb[0].mxu0
  %v2659 = vadd.f32 0.0, %v2658
  %v2660 = vpop.f32.mrb[0].mxu0
  %2661 = vmatprep.mubr.bf16.mxu0 %v1639
  %2662 = vmatmul.mubr.bf16.gmra.mrb[0].mxu0 %v1638
  %v2663 = vpop.f32.mrb[0].mxu0
  %v2664 = vadd.f32 0.0, %v2663
  %v2665 = vpop.f32.mrb[0].mxu0
  %v2666 = vpop.f32.mrb[0].mxu0
  %v2667 = vadd.f32 0.0, %v2666
  %v2668 = vpop.f32.mrb[0].mxu0
  %2669 = vmatprep.mubr.bf16.mxu0 %v1645
  %2670 = vmatmul.mubr.bf16.gmra.mrb[0].mxu0 %v1644
  %v2671 = vpop.f32.mrb[0].mxu0
  %v2672 = vadd.f32 0.0, %v2671
  %v2673 = vpop.f32.mrb[0].mxu0
  %v2674 = vpop.f32.mrb[0].mxu0
  %v2675 = vadd.f32 0.0, %v2674
  %v2676 = vpop.f32.mrb[0].mxu0
  %2677 = vmatprep.mubr.bf16.mxu0 %v1651
  %2678 = vmatmul.mubr.bf16.gmra.mrb[0].mxu0 %v1650
  %v2679 = vpop.f32.mrb[0].mxu0
  %v2680 = vadd.f32 0.0, %v2679
  %v2681 = vpop.f32.mrb[0].mxu0
  %v2682 = vpop.f32.mrb[0].mxu0
  %v2683 = vadd.f32 0.0, %v2682
  %v2684 = vpop.f32.mrb[0].mxu0
  %2685 = vmatprep.mubr.bf16.mxu0 %v1657
  %2686 = vmatmul.mubr.bf16.gmra.mrb[0].mxu0 %v1656
  %v2687 = vpop.f32.mrb[0].mxu0
  %v2688 = vadd.f32 0.0, %v2687
  %v2689 = vpop.f32.mrb[0].mxu0
  %v2690 = vpop.f32.mrb[0].mxu0
  %v2691 = vadd.f32 0.0, %v2690
  %v2692 = vpop.f32.mrb[0].mxu0
  %2693 = vmatprep.mubr.bf16.mxu0 %v1663
  %2694 = vmatmul.mubr.bf16.gmra.mrb[0].mxu0 %v1662
  %v2695 = vpop.f32.mrb[0].mxu0
  %v2696 = vadd.f32 0.0, %v2695
  %v2697 = vpop.f32.mrb[0].mxu0
  %v2698 = vpop.f32.mrb[0].mxu0
  %v2699 = vadd.f32 0.0, %v2698
  %v2700 = vpop.f32.mrb[0].mxu0
  %2701 = vmatprep.mubr.bf16.mxu0 %v1669
  %2702 = vmatmul.mubr.bf16.gmra.mrb[0].mxu0 %v1668
  %v2703 = vpop.f32.mrb[0].mxu0
  %v2704 = vadd.f32 0.0, %v2703
  %v2705 = vpop.f32.mrb[0].mxu0
  %v2706 = vpop.f32.mrb[0].mxu0
  %v2707 = vadd.f32 0.0, %v2706
  %v2708 = vpop.f32.mrb[0].mxu0
  %2709 = vdwg.mxu0
  %2710 = vmatprep.subr.bf16.mxu0 0
  %2711 = vmatpush1.bf16.msra.mxu0 %v2491
  %2712 = vmatprep.subr.bf16.mxu0 0
  %2713 = vmatpush1.bf16.msra.mxu0 %v2492
  %2714 = vmatprep.subr.bf16.mxu0 0
  %2715 = vmatpush1.bf16.msra.mxu0 %v2493
  %2716 = vmatprep.subr.bf16.mxu0 0
  %2717 = vmatpush1.bf16.msra.mxu0 %v2494
  %2718 = vmatprep.subr.bf16.mxu0 0
  %2719 = vmatpush1.bf16.msra.mxu0 %v2495
  %2720 = vmatprep.subr.bf16.mxu0 0
  %2721 = vmatpush1.bf16.msra.mxu0 %v2496
  %2722 = vmatprep.subr.bf16.mxu0 0
  %2723 = vmatpush1.bf16.msra.mxu0 %v2497
  %2724 = vmatprep.subr.bf16.mxu0 0
  %2725 = vmatpush1.bf16.msra.mxu0 %v2498
  %2726 = vmatprep.subr.bf16.mxu0 0
  %2727 = vmatpush1.bf16.msra.mxu0 %v2499
  %2728 = vmatprep.subr.bf16.mxu0 0
  %2729 = vmatpush1.bf16.msra.mxu0 %v2500
  %2730 = vmatprep.subr.bf16.mxu0 0
  %2731 = vmatpush1.bf16.msra.mxu0 %v2501
  %2732 = vmatprep.subr.bf16.mxu0 0
  %2733 = vmatpush1.bf16.msra.mxu0 %v2502
  %2734 = vmatprep.subr.bf16.mxu0 0
  %2735 = vmatpush1.bf16.msra.mxu0 %v2503
  %2736 = vmatprep.subr.bf16.mxu0 0
  %2737 = vmatpush1.bf16.msra.mxu0 %v2504
  %2738 = vmatprep.subr.bf16.mxu0 0
  %2739 = vmatpush1.bf16.msra.mxu0 %v2505
  %2740 = vmatprep.subr.bf16.mxu0 0
  %2741 = vmatpush1.bf16.msra.mxu0 %v2506
  %2742 = vmatprep.mubr.bf16.mxu0 %v1557
  %2743 = vmatmul.mubr.bf16.gmra.mrb[0].mxu0 %v1556
  %v2744 = vpop.f32.mrb[0].mxu0
  %v2745 = vadd.f32 %v2552, %v2744
  %v2746 = vpop.f32.mrb[0].mxu0
  %v2747 = vpop.f32.mrb[0].mxu0
  %v2748 = vadd.f32 %v2555, %v2747
  %v2749 = vpop.f32.mrb[0].mxu0
  %2750 = vmatprep.mubr.bf16.mxu0 %v1563
  %2751 = vmatmul.mubr.bf16.gmra.mrb[0].mxu0 %v1562
  %v2752 = vpop.f32.mrb[0].mxu0
  %v2753 = vadd.f32 %v2560, %v2752
  %v2754 = vpop.f32.mrb[0].mxu0
  %v2755 = vpop.f32.mrb[0].mxu0
  %v2756 = vadd.f32 %v2563, %v2755
  %v2757 = vpop.f32.mrb[0].mxu0
  %2758 = vmatprep.mubr.bf16.mxu0 %v1569
  %2759 = vmatmul.mubr.bf16.gmra.mrb[0].mxu0 %v1568
  %v2760 = vpop.f32.mrb[0].mxu0
  %v2761 = vadd.f32 %v2568, %v2760
  %v2762 = vpop.f32.mrb[0].mxu0
  %v2763 = vpop.f32.mrb[0].mxu0
  %v2764 = vadd.f32 %v2571, %v2763
  %v2765 = vpop.f32.mrb[0].mxu0
  %2766 = vmatprep.mubr.bf16.mxu0 %v1575
  %2767 = vmatmul.mubr.bf16.gmra.mrb[0].mxu0 %v1574
  %v2768 = vpop.f32.mrb[0].mxu0
  %v2769 = vadd.f32 %v2576, %v2768
  %v2770 = vpop.f32.mrb[0].mxu0
  %v2771 = vpop.f32.mrb[0].mxu0
  %v2772 = vadd.f32 %v2579, %v2771
  %v2773 = vpop.f32.mrb[0].mxu0
  %2774 = vmatprep.mubr.bf16.mxu0 %v1581
  %2775 = vmatmul.mubr.bf16.gmra.mrb[0].mxu0 %v1580
  %v2776 = vpop.f32.mrb[0].mxu0
  %v2777 = vadd.f32 %v2584, %v2776
  %v2778 = vpop.f32.mrb[0].mxu0
  %v2779 = vpop.f32.mrb[0].mxu0
  %v2780 = vadd.f32 %v2587, %v2779
  %v2781 = vpop.f32.mrb[0].mxu0
  %2782 = vmatprep.mubr.bf16.mxu0 %v1587
  %2783 = vmatmul.mubr.bf16.gmra.mrb[0].mxu0 %v1586
  %v2784 = vpop.f32.mrb[0].mxu0
  %v2785 = vadd.f32 %v2592, %v2784
  %v2786 = vpop.f32.mrb[0].mxu0
  %v2787 = vpop.f32.mrb[0].mxu0
  %v2788 = vadd.f32 %v2595, %v2787
  %v2789 = vpop.f32.mrb[0].mxu0
  %2790 = vmatprep.mubr.bf16.mxu0 %v1593
  %2791 = vmatmul.mubr.bf16.gmra.mrb[0].mxu0 %v1592
  %v2792 = vpop.f32.mrb[0].mxu0
  %v2793 = vadd.f32 %v2600, %v2792
  %v2794 = vpop.f32.mrb[0].mxu0
  %v2795 = vpop.f32.mrb[0].mxu0
  %v2796 = vadd.f32 %v2603, %v2795
  %v2797 = vpop.f32.mrb[0].mxu0
  %2798 = vmatprep.mubr.bf16.mxu0 %v1599
  %2799 = vmatmul.mubr.bf16.gmra.mrb[0].mxu0 %v1598
  %v2800 = vpop.f32.mrb[0].mxu0
  %v2801 = vadd.f32 %v2608, %v2800
  %v2802 = vpop.f32.mrb[0].mxu0
  %v2803 = vpop.f32.mrb[0].mxu0
  %v2804 = vadd.f32 %v2611, %v2803
  %v2805 = vpop.f32.mrb[0].mxu0
  %2806 = vmatprep.mubr.bf16.mxu0 %v1605
  %2807 = vmatmul.mubr.bf16.gmra.mrb[0].mxu0 %v1604
  %v2808 = vpop.f32.mrb[0].mxu0
  %v2809 = vadd.f32 %v2616, %v2808
  %v2810 = vpop.f32.mrb[0].mxu0
  %v2811 = vpop.f32.mrb[0].mxu0
  %v2812 = vadd.f32 %v2619, %v2811
  %v2813 = vpop.f32.mrb[0].mxu0
  %2814 = vmatprep.mubr.bf16.mxu0 %v1611
  %2815 = vmatmul.mubr.bf16.gmra.mrb[0].mxu0 %v1610
  %v2816 = vpop.f32.mrb[0].mxu0
  %v2817 = vadd.f32 %v2624, %v2816
  %v2818 = vpop.f32.mrb[0].mxu0
  %v2819 = vpop.f32.mrb[0].mxu0
  %v2820 = vadd.f32 %v2627, %v2819
  %v2821 = vpop.f32.mrb[0].mxu0
  %2822 = vmatprep.mubr.bf16.mxu0 %v1617
  %2823 = vmatmul.mubr.bf16.gmra.mrb[0].mxu0 %v1616
  %v2824 = vpop.f32.mrb[0].mxu0
  %v2825 = vadd.f32 %v2632, %v2824
  %v2826 = vpop.f32.mrb[0].mxu0
  %v2827 = vpop.f32.mrb[0].mxu0
  %v2828 = vadd.f32 %v2635, %v2827
  %v2829 = vpop.f32.mrb[0].mxu0
  %2830 = vmatprep.mubr.bf16.mxu0 %v1623
  %2831 = vmatmul.mubr.bf16.gmra.mrb[0].mxu0 %v1622
  %v2832 = vpop.f32.mrb[0].mxu0
  %v2833 = vadd.f32 %v2640, %v2832
  %v2834 = vpop.f32.mrb[0].mxu0
  %v2835 = vpop.f32.mrb[0].mxu0
  %v2836 = vadd.f32 %v2643, %v2835
  %v2837 = vpop.f32.mrb[0].mxu0
  %2838 = vmatprep.mubr.bf16.mxu0 %v1629
  %2839 = vmatmul.mubr.bf16.gmra.mrb[0].mxu0 %v1628
  %v2840 = vpop.f32.mrb[0].mxu0
  %v2841 = vadd.f32 %v2648, %v2840
  %v2842 = vpop.f32.mrb[0].mxu0
  %v2843 = vpop.f32.mrb[0].mxu0
  %v2844 = vadd.f32 %v2651, %v2843
  %v2845 = vpop.f32.mrb[0].mxu0
  %2846 = vmatprep.mubr.bf16.mxu0 %v1635
  %2847 = vmatmul.mubr.bf16.gmra.mrb[0].mxu0 %v1634
  %v2848 = vpop.f32.mrb[0].mxu0
  %v2849 = vadd.f32 %v2656, %v2848
  %v2850 = vpop.f32.mrb[0].mxu0
  %v2851 = vpop.f32.mrb[0].mxu0
  %v2852 = vadd.f32 %v2659, %v2851
  %v2853 = vpop.f32.mrb[0].mxu0
  %2854 = vmatprep.mubr.bf16.mxu0 %v1641
  %2855 = vmatmul.mubr.bf16.gmra.mrb[0].mxu0 %v1640
  %v2856 = vpop.f32.mrb[0].mxu0
  %v2857 = vadd.f32 %v2664, %v2856
  %v2858 = vpop.f32.mrb[0].mxu0
  %v2859 = vpop.f32.mrb[0].mxu0
  %v2860 = vadd.f32 %v2667, %v2859
  %v2861 = vpop.f32.mrb[0].mxu0
  %2862 = vmatprep.mubr.bf16.mxu0 %v1647
  %2863 = vmatmul.mubr.bf16.gmra.mrb[0].mxu0 %v1646
  %v2864 = vpop.f32.mrb[0].mxu0
  %v2865 = vadd.f32 %v2672, %v2864
  %v2866 = vpop.f32.mrb[0].mxu0
  %v2867 = vpop.f32.mrb[0].mxu0
  %v2868 = vadd.f32 %v2675, %v2867
  %v2869 = vpop.f32.mrb[0].mxu0
  %2870 = vmatprep.mubr.bf16.mxu0 %v1653
  %2871 = vmatmul.mubr.bf16.gmra.mrb[0].mxu0 %v1652
  %v2872 = vpop.f32.mrb[0].mxu0
  %v2873 = vadd.f32 %v2680, %v2872
  %v2874 = vpop.f32.mrb[0].mxu0
  %v2875 = vpop.f32.mrb[0].mxu0
  %v2876 = vadd.f32 %v2683, %v2875
  %v2877 = vpop.f32.mrb[0].mxu0
  %2878 = vmatprep.mubr.bf16.mxu0 %v1659
  %2879 = vmatmul.mubr.bf16.gmra.mrb[0].mxu0 %v1658
  %v2880 = vpop.f32.mrb[0].mxu0
  %v2881 = vadd.f32 %v2688, %v2880
  %v2882 = vpop.f32.mrb[0].mxu0
  %v2883 = vpop.f32.mrb[0].mxu0
  %v2884 = vadd.f32 %v2691, %v2883
  %v2885 = vpop.f32.mrb[0].mxu0
  %2886 = vmatprep.mubr.bf16.mxu0 %v1665
  %2887 = vmatmul.mubr.bf16.gmra.mrb[0].mxu0 %v1664
  %v2888 = vpop.f32.mrb[0].mxu0
  %v2889 = vadd.f32 %v2696, %v2888
  %v2890 = vpop.f32.mrb[0].mxu0
  %v2891 = vpop.f32.mrb[0].mxu0
  %v2892 = vadd.f32 %v2699, %v2891
  %v2893 = vpop.f32.mrb[0].mxu0
  %2894 = vmatprep.mubr.bf16.mxu0 %v1671
  %2895 = vmatmul.mubr.bf16.gmra.mrb[0].mxu0 %v1670
  %v2896 = vpop.f32.mrb[0].mxu0
  %v2897 = vadd.f32 %v2704, %v2896
  %v2898 = vpop.f32.mrb[0].mxu0
  %v2899 = vpop.f32.mrb[0].mxu0
  %v2900 = vadd.f32 %v2707, %v2899
  %v2901 = vpop.f32.mrb[0].mxu0
  %2902 = vdwg.mxu0
  %2903 = vmatprep.subr.bf16.mxu0 0
  %2904 = vmatpush1.bf16.msra.mxu0 %v2507
  %2905 = vmatprep.subr.bf16.mxu0 0
  %2906 = vmatpush1.bf16.msra.mxu0 %v2508
  %2907 = vmatprep.subr.bf16.mxu0 0
  %2908 = vmatpush1.bf16.msra.mxu0 %v2509
  %2909 = vmatprep.subr.bf16.mxu0 0
  %2910 = vmatpush1.bf16.msra.mxu0 %v2510
  %2911 = vmatprep.subr.bf16.mxu0 0
  %2912 = vmatpush1.bf16.msra.mxu0 %v2511
  %2913 = vmatprep.subr.bf16.mxu0 0
  %2914 = vmatpush1.bf16.msra.mxu0 %v2512
  %2915 = vmatprep.subr.bf16.mxu0 0
  %2916 = vmatpush1.bf16.msra.mxu0 %v2513
  %2917 = vmatprep.subr.bf16.mxu0 0
  %2918 = vmatpush1.bf16.msra.mxu0 %v2514
  %2919 = vmatprep.subr.bf16.mxu0 0
  %2920 = vmatpush1.bf16.msra.mxu0 %v2515
  %2921 = vmatprep.subr.bf16.mxu0 0
  %2922 = vmatpush1.bf16.msra.mxu0 %v2516
  %2923 = vmatprep.subr.bf16.mxu0 0
  %2924 = vmatpush1.bf16.msra.mxu0 0
  %2925 = vmatprep.subr.bf16.mxu0 0
  %2926 = vmatpush1.bf16.msra.mxu0 0
  %2927 = vmatprep.subr.bf16.mxu0 0
  %2928 = vmatpush1.bf16.msra.mxu0 0
  %2929 = vmatprep.subr.bf16.mxu0 0
  %2930 = vmatpush1.bf16.msra.mxu0 0
  %2931 = vmatprep.subr.bf16.mxu0 0
  %2932 = vmatpush1.bf16.msra.mxu0 0
  %2933 = vmatprep.subr.bf16.mxu0 0
  %2934 = vmatpush1.bf16.msra.mxu0 0
  %2935 = vmatprep.mubr.bf16.mxu0 %v1776
  %2936 = vmatmul.mubr.bf16.gmra.mrb[0].mxu0 %v1558
  %v2937 = vpop.f32.mrb[0].mxu0
  %v2938 = vadd.f32 %v2745, %v2937
  %v2939 = vpop.f32.mrb[0].mxu0
  %v2940 = vpop.f32.mrb[0].mxu0
  %v2941 = vadd.f32 %v2748, %v2940
  %v2942 = vpop.f32.mrb[0].mxu0
  %2943 = vmatprep.mubr.bf16.mxu0 %v1779
  %2944 = vmatmul.mubr.bf16.gmra.mrb[0].mxu0 %v1564
  %v2945 = vpop.f32.mrb[0].mxu0
  %v2946 = vadd.f32 %v2753, %v2945
  %v2947 = vpop.f32.mrb[0].mxu0
  %v2948 = vpop.f32.mrb[0].mxu0
  %v2949 = vadd.f32 %v2756, %v2948
  %v2950 = vpop.f32.mrb[0].mxu0
  %2951 = vmatprep.mubr.bf16.mxu0 %v1782
  %2952 = vmatmul.mubr.bf16.gmra.mrb[0].mxu0 %v1570
  %v2953 = vpop.f32.mrb[0].mxu0
  %v2954 = vadd.f32 %v2761, %v2953
  %v2955 = vpop.f32.mrb[0].mxu0
  %v2956 = vpop.f32.mrb[0].mxu0
  %v2957 = vadd.f32 %v2764, %v2956
  %v2958 = vpop.f32.mrb[0].mxu0
  %2959 = vmatprep.mubr.bf16.mxu0 %v1785
  %2960 = vmatmul.mubr.bf16.gmra.mrb[0].mxu0 %v1576
  %v2961 = vpop.f32.mrb[0].mxu0
  %v2962 = vadd.f32 %v2769, %v2961
  %v2963 = vpop.f32.mrb[0].mxu0
  %v2964 = vpop.f32.mrb[0].mxu0
  %v2965 = vadd.f32 %v2772, %v2964
  %v2966 = vpop.f32.mrb[0].mxu0
  %2967 = vmatprep.mubr.bf16.mxu0 %v1788
  %2968 = vmatmul.mubr.bf16.gmra.mrb[0].mxu0 %v1582
  %v2969 = vpop.f32.mrb[0].mxu0
  %v2970 = vadd.f32 %v2777, %v2969
  %v2971 = vpop.f32.mrb[0].mxu0
  %v2972 = vpop.f32.mrb[0].mxu0
  %v2973 = vadd.f32 %v2780, %v2972
  %v2974 = vpop.f32.mrb[0].mxu0
  %2975 = vmatprep.mubr.bf16.mxu0 %v1791
  %2976 = vmatmul.mubr.bf16.gmra.mrb[0].mxu0 %v1588
  %v2977 = vpop.f32.mrb[0].mxu0
  %v2978 = vadd.f32 %v2785, %v2977
  %v2979 = vpop.f32.mrb[0].mxu0
  %v2980 = vpop.f32.mrb[0].mxu0
  %v2981 = vadd.f32 %v2788, %v2980
  %v2982 = vpop.f32.mrb[0].mxu0
  %2983 = vmatprep.mubr.bf16.mxu0 %v1794
  %2984 = vmatmul.mubr.bf16.gmra.mrb[0].mxu0 %v1594
  %v2985 = vpop.f32.mrb[0].mxu0
  %v2986 = vadd.f32 %v2793, %v2985
  %v2987 = vpop.f32.mrb[0].mxu0
  %v2988 = vpop.f32.mrb[0].mxu0
  %v2989 = vadd.f32 %v2796, %v2988
  %v2990 = vpop.f32.mrb[0].mxu0
  %2991 = vmatprep.mubr.bf16.mxu0 %v1797
  %2992 = vmatmul.mubr.bf16.gmra.mrb[0].mxu0 %v1600
  %v2993 = vpop.f32.mrb[0].mxu0
  %v2994 = vadd.f32 %v2801, %v2993
  %v2995 = vpop.f32.mrb[0].mxu0
  %v2996 = vpop.f32.mrb[0].mxu0
  %v2997 = vadd.f32 %v2804, %v2996
  %v2998 = vpop.f32.mrb[0].mxu0
  %2999 = vmatprep.mubr.bf16.mxu0 %v1800
  %3000 = vmatmul.mubr.bf16.gmra.mrb[0].mxu0 %v1606
  %v3001 = vpop.f32.mrb[0].mxu0
  %v3002 = vadd.f32 %v2809, %v3001
  %v3003 = vpop.f32.mrb[0].mxu0
  %v3004 = vpop.f32.mrb[0].mxu0
  %v3005 = vadd.f32 %v2812, %v3004
  %v3006 = vpop.f32.mrb[0].mxu0
  %3007 = vmatprep.mubr.bf16.mxu0 %v1803
  %3008 = vmatmul.mubr.bf16.gmra.mrb[0].mxu0 %v1612
  %v3009 = vpop.f32.mrb[0].mxu0
  %v3010 = vadd.f32 %v2817, %v3009
  %v3011 = vpop.f32.mrb[0].mxu0
  %v3012 = vpop.f32.mrb[0].mxu0
  %v3013 = vadd.f32 %v2820, %v3012
  %v3014 = vpop.f32.mrb[0].mxu0
  %3015 = vmatprep.mubr.bf16.mxu0 %v1806
  %3016 = vmatmul.mubr.bf16.gmra.mrb[0].mxu0 %v1618
  %v3017 = vpop.f32.mrb[0].mxu0
  %v3018 = vadd.f32 %v2825, %v3017
  %v3019 = vpop.f32.mrb[0].mxu0
  %v3020 = vpop.f32.mrb[0].mxu0
  %v3021 = vadd.f32 %v2828, %v3020
  %v3022 = vpop.f32.mrb[0].mxu0
  %3023 = vmatprep.mubr.bf16.mxu0 %v1809
  %3024 = vmatmul.mubr.bf16.gmra.mrb[0].mxu0 %v1624
  %v3025 = vpop.f32.mrb[0].mxu0
  %v3026 = vadd.f32 %v2833, %v3025
  %v3027 = vpop.f32.mrb[0].mxu0
  %v3028 = vpop.f32.mrb[0].mxu0
  %v3029 = vadd.f32 %v2836, %v3028
  %v3030 = vpop.f32.mrb[0].mxu0
  %3031 = vmatprep.mubr.bf16.mxu0 %v1812
  %3032 = vmatmul.mubr.bf16.gmra.mrb[0].mxu0 %v1630
  %v3033 = vpop.f32.mrb[0].mxu0
  %v3034 = vadd.f32 %v2841, %v3033
  %v3035 = vpop.f32.mrb[0].mxu0
  %v3036 = vpop.f32.mrb[0].mxu0
  %v3037 = vadd.f32 %v2844, %v3036
  %v3038 = vpop.f32.mrb[0].mxu0
  %3039 = vmatprep.mubr.bf16.mxu0 %v1815
  %3040 = vmatmul.mubr.bf16.gmra.mrb[0].mxu0 %v1636
  %v3041 = vpop.f32.mrb[0].mxu0
  %v3042 = vadd.f32 %v2849, %v3041
  %v3043 = vpop.f32.mrb[0].mxu0
  %v3044 = vpop.f32.mrb[0].mxu0
  %v3045 = vadd.f32 %v2852, %v3044
  %v3046 = vpop.f32.mrb[0].mxu0
  %3047 = vmatprep.mubr.bf16.mxu0 %v1818
  %3048 = vmatmul.mubr.bf16.gmra.mrb[0].mxu0 %v1642
  %v3049 = vpop.f32.mrb[0].mxu0
  %v3050 = vadd.f32 %v2857, %v3049
  %v3051 = vpop.f32.mrb[0].mxu0
  %v3052 = vpop.f32.mrb[0].mxu0
  %v3053 = vadd.f32 %v2860, %v3052
  %v3054 = vpop.f32.mrb[0].mxu0
  %3055 = vmatprep.mubr.bf16.mxu0 %v1821
  %3056 = vmatmul.mubr.bf16.gmra.mrb[0].mxu0 %v1648
  %v3057 = vpop.f32.mrb[0].mxu0
  %v3058 = vadd.f32 %v2865, %v3057
  %v3059 = vpop.f32.mrb[0].mxu0
  %v3060 = vpop.f32.mrb[0].mxu0
  %v3061 = vadd.f32 %v2868, %v3060
  %v3062 = vpop.f32.mrb[0].mxu0
  %3063 = vmatprep.mubr.bf16.mxu0 %v1824
  %3064 = vmatmul.mubr.bf16.gmra.mrb[0].mxu0 %v1654
  %v3065 = vpop.f32.mrb[0].mxu0
  %v3066 = vadd.f32 %v2873, %v3065
  %v3067 = vpop.f32.mrb[0].mxu0
  %v3068 = vpop.f32.mrb[0].mxu0
  %v3069 = vadd.f32 %v2876, %v3068
  %v3070 = vpop.f32.mrb[0].mxu0
  %3071 = vmatprep.mubr.bf16.mxu0 %v1827
  %3072 = vmatmul.mubr.bf16.gmra.mrb[0].mxu0 %v1660
  %v3073 = vpop.f32.mrb[0].mxu0
  %v3074 = vadd.f32 %v2881, %v3073
  %v3075 = vpop.f32.mrb[0].mxu0
  %v3076 = vpop.f32.mrb[0].mxu0
  %v3077 = vadd.f32 %v2884, %v3076
  %v3078 = vpop.f32.mrb[0].mxu0
  %3079 = vmatprep.mubr.bf16.mxu0 %v1830
  %3080 = vmatmul.mubr.bf16.gmra.mrb[0].mxu0 %v1666
  %v3081 = vpop.f32.mrb[0].mxu0
  %v3082 = vadd.f32 %v2889, %v3081
  %v3083 = vpop.f32.mrb[0].mxu0
  %v3084 = vpop.f32.mrb[0].mxu0
  %v3085 = vadd.f32 %v2892, %v3084
  %v3086 = vpop.f32.mrb[0].mxu0
  %3087 = vmatprep.mubr.bf16.mxu0 %v1833
  %3088 = vmatmul.mubr.bf16.gmra.mrb[0].mxu0 %v1672
  %v3089 = vpop.f32.mrb[0].mxu0
  %v3090 = vadd.f32 %v2897, %v3089
  %v3091 = vpop.f32.mrb[0].mxu0
  %v3092 = vpop.f32.mrb[0].mxu0
  %v3093 = vadd.f32 %v2900, %v3092
  %v3094 = vpop.f32.mrb[0].mxu0
  %3095 = vdwg.mxu0
  %v3096 = vmax.f32 %v2938, %v3018
  %v3097 = vmax.f32 %v2941, %v3021
  %v3098 = vmax.f32 %v2946, %v3026
  %v3099 = vmax.f32 %v2949, %v3029
  %v3100 = vmax.f32 %v2954, %v3034
  %v3101 = vmax.f32 %v2957, %v3037
  %v3102 = vmax.f32 %v2962, %v3042
  %v3103 = vmax.f32 %v2965, %v3045
  %v3104 = vmax.f32 %v2970, %v3050
  %v3105 = vmax.f32 %v2973, %v3053
  %v3106 = vmax.f32 %v2978, %v3058
  %v3107 = vmax.f32 %v2981, %v3061
  %v3108 = vmax.f32 %v2986, %v3066
  %v3109 = vmax.f32 %v2989, %v3069
  %v3110 = vmax.f32 %v2994, %v3074
  %v3111 = vmax.f32 %v2997, %v3077
  %v3112 = vmax.f32 %v3002, %v3082
  %v3113 = vmax.f32 %v3005, %v3085
  %v3114 = vmax.f32 %v3010, %v3090
  %v3115 = vmax.f32 %v3013, %v3093
  %v3116 = vmax.f32 %v3096, %v3098
  %v3117 = vmax.f32 %v3097, %v3099
  %v3118 = vmax.f32 %v3100, %v3102
  %v3119 = vmax.f32 %v3101, %v3103
  %v3120 = vmax.f32 %v3104, %v3106
  %v3121 = vmax.f32 %v3105, %v3107
  %v3122 = vmax.f32 %v3108, %v3110
  %v3123 = vmax.f32 %v3109, %v3111
  %v3124 = vmax.f32 %v3112, %v3114
  %v3125 = vmax.f32 %v3113, %v3115
  %v3126 = vadd.f32 %v3116, %v318
  %v3127 = vadd.f32 %v3117, %v323
  %v3128 = vadd.f32 %v3118, %v328
  %v3129 = vadd.f32 %v3119, %v333
  %v3130 = vadd.f32 %v3120, %v338
  %v3131 = vadd.f32 %v3121, %v343
  %v3132 = vadd.f32 %v3122, %v348
  %v3133 = vadd.f32 %v3123, %v353
  %v3134 = vadd.f32 %v3124, %v358
  %v3135 = vadd.f32 %v3125, %v363
  %v3136 = vmax.f32 %v3126, 0.0
  %v3137 = vmax.f32 %v3127, 0.0
  %v3138 = vmax.f32 %v3128, 0.0
  %v3139 = vmax.f32 %v3129, 0.0
  %v3140 = vmax.f32 %v3130, 0.0
  %v3141 = vmax.f32 %v3131, 0.0
  %v3142 = vmax.f32 %v3132, 0.0
  %v3143 = vmax.f32 %v3133, 0.0
  %v3144 = vmax.f32 %v3134, 0.0
  %v3145 = vmax.f32 %v3135, 0.0
  %v3146 = vpack.c.bf16 %v3137, %v3136
  %v3147 = vpack.c.bf16 %v3139, %v3138
  %v3148 = vpack.c.bf16 %v3141, %v3140
  %v3149 = vpack.c.bf16 %v3143, %v3142
  %v3150 = vpack.c.bf16 %v3145, %v3144
  %s3151 = scalar_lea.vmem [#allocation3], 40
  %3152 = vst [vmem:[%s3151] sm:$0xff] %v3146
  %3153 = vst [vmem:[%s3151 + $0x8] sm:$0xff] %v3147
  %3154 = vst [vmem:[%s3151 + $0x10] sm:$0xff] %v3148
  %3155 = vst [vmem:[%s3151 + $0x18] sm:$0xff] %v3149
  %3156 = vst [vmem:[%s3151 + $0x20] sm:$0xff] %v3150
  %s3157 = scalar_lea.vmem [#allocation2], 224
  %v3158 = vld [vmem:[%s3157] sm:$0xff]
  %v3159 = vld [vmem:[%s3157 + $0x8] sm:$0xff]
  %v3160 = vld [vmem:[%s3157 + $0x10] sm:$0xff]
  %v3161 = vld [vmem:[%s3157 + $0x18] sm:$0xff]
  %v3162 = vld [vmem:[%s3157 + $0x20] sm:$0xff]
  %v3163 = vld [vmem:[%s3157 + $0x28] sm:$0xff]
  %v3164 = vld [vmem:[%s3157 + $0x30] sm:$0xff]
  %v3165 = vld [vmem:[%s3157 + $0x38] sm:$0xff]
  %v3166 = vld [vmem:[%s3157 + $0x40] sm:$0xff]
  %v3167 = vld [vmem:[%s3157 + $0x48] sm:$0xff]
  %v3168 = vld [vmem:[%s3157 + $0x50] sm:$0xff]
  %v3169 = vld [vmem:[%s3157 + $0x58] sm:$0xff]
  %v3170 = vld [vmem:[%s3157 + $0x60] sm:$0xff]
  %v3171 = vld [vmem:[%s3157 + $0x68] sm:$0xff]
  %v3172 = vld [vmem:[%s3157 + $0x70] sm:$0xff]
  %v3173 = vld [vmem:[%s3157 + $0x78] sm:$0xff]
  %v3174 = vld [vmem:[%s3157 + $0x80] sm:$0xff]
  %v3175 = vld [vmem:[%s3157 + $0x88] sm:$0xff]
  %v3176 = vld [vmem:[%s3157 + $0x90] sm:$0xff]
  %v3177 = vld [vmem:[%s3157 + $0x98] sm:$0xff]
  %v3178 = vld [vmem:[%s3157 + $0xa0] sm:$0xff]
  %v3179 = vld [vmem:[%s3157 + $0xa8] sm:$0xff]
  %v3180 = vld [vmem:[%s3157 + $0xb0] sm:$0xff]
  %v3181 = vld [vmem:[%s3157 + $0xb8] sm:$0xff]
  %v3182 = vld [vmem:[%s3157 + $0xc0] sm:$0xff]
  %v3183 = vld [vmem:[%s3157 + $0xc8] sm:$0xff]
  %v3184 = vld [vmem:[%s3157 + $0xd0] sm:$0xff]
  %v3185 = vld [vmem:[%s3157 + $0xd8] sm:$0xff]
  %v3186 = vld [vmem:[%s3157 + $0xe0] sm:$0xff]
  %v3187 = vld [vmem:[%s3157 + $0xe8] sm:$0xff]
  %v3188 = vld [vmem:[%s3157 + $0xf0] sm:$0xff]
  %v3189 = vld [vmem:[%s3157 + $0xf8] sm:$0xff]
  %v3190 = vld [vmem:[%s3157 + $0x100] sm:$0xff]
  %v3191 = vld [vmem:[%s3157 + $0x108] sm:$0xff]
  %v3192 = vld [vmem:[%s3157 + $0x110] sm:$0xff]
  %v3193 = vld [vmem:[%s3157 + $0x118] sm:$0xff]
  %v3194 = vld [vmem:[%s3157 + $0x120] sm:$0xff]
  %v3195 = vld [vmem:[%s3157 + $0x128] sm:$0xff]
  %v3196 = vld [vmem:[%s3157 + $0x130] sm:$0xff]
  %v3197 = vld [vmem:[%s3157 + $0x138] sm:$0xff]
  %v3198 = vld [vmem:[%s3157 + $0x140] sm:$0xff]
  %v3199 = vld [vmem:[%s3157 + $0x148] sm:$0xff]
  %3200 = vmatprep.subr.bf16.mxu0 0
  %3201 = vmatpush1.bf16.msra.mxu0 %v3158
  %3202 = vmatprep.subr.bf16.mxu0 0
  %3203 = vmatpush1.bf16.msra.mxu0 %v3159
  %3204 = vmatprep.subr.bf16.mxu0 0
  %3205 = vmatpush1.bf16.msra.mxu0 %v3160
  %3206 = vmatprep.subr.bf16.mxu0 0
  %3207 = vmatpush1.bf16.msra.mxu0 %v3161
  %3208 = vmatprep.subr.bf16.mxu0 0
  %3209 = vmatpush1.bf16.msra.mxu0 %v3162
  %3210 = vmatprep.subr.bf16.mxu0 0
  %3211 = vmatpush1.bf16.msra.mxu0 %v3163
  %3212 = vmatprep.subr.bf16.mxu0 0
  %3213 = vmatpush1.bf16.msra.mxu0 %v3164
  %3214 = vmatprep.subr.bf16.mxu0 0
  %3215 = vmatpush1.bf16.msra.mxu0 %v3165
  %3216 = vmatprep.subr.bf16.mxu0 0
  %3217 = vmatpush1.bf16.msra.mxu0 %v3166
  %3218 = vmatprep.subr.bf16.mxu0 0
  %3219 = vmatpush1.bf16.msra.mxu0 %v3167
  %3220 = vmatprep.subr.bf16.mxu0 0
  %3221 = vmatpush1.bf16.msra.mxu0 %v3168
  %3222 = vmatprep.subr.bf16.mxu0 0
  %3223 = vmatpush1.bf16.msra.mxu0 %v3169
  %3224 = vmatprep.subr.bf16.mxu0 0
  %3225 = vmatpush1.bf16.msra.mxu0 %v3170
  %3226 = vmatprep.subr.bf16.mxu0 0
  %3227 = vmatpush1.bf16.msra.mxu0 %v3171
  %3228 = vmatprep.subr.bf16.mxu0 0
  %3229 = vmatpush1.bf16.msra.mxu0 %v3172
  %3230 = vmatprep.subr.bf16.mxu0 0
  %3231 = vmatpush1.bf16.msra.mxu0 %v3173
  %3232 = vmatprep.mubr.bf16.mxu0 %v1555
  %3233 = vmatmul.mubr.bf16.gmra.mrb[0].mxu0 %v1554
  %v3234 = vpop.f32.mrb[0].mxu0
  %v3235 = vadd.f32 0.0, %v3234
  %v3236 = vpop.f32.mrb[0].mxu0
  %v3237 = vpop.f32.mrb[0].mxu0
  %v3238 = vadd.f32 0.0, %v3237
  %v3239 = vpop.f32.mrb[0].mxu0
  %3240 = vmatprep.mubr.bf16.mxu0 %v1561
  %3241 = vmatmul.mubr.bf16.gmra.mrb[0].mxu0 %v1560
  %v3242 = vpop.f32.mrb[0].mxu0
  %v3243 = vadd.f32 0.0, %v3242
  %v3244 = vpop.f32.mrb[0].mxu0
  %v3245 = vpop.f32.mrb[0].mxu0
  %v3246 = vadd.f32 0.0, %v3245
  %v3247 = vpop.f32.mrb[0].mxu0
  %3248 = vmatprep.mubr.bf16.mxu0 %v1567
  %3249 = vmatmul.mubr.bf16.gmra.mrb[0].mxu0 %v1566
  %v3250 = vpop.f32.mrb[0].mxu0
  %v3251 = vadd.f32 0.0, %v3250
  %v3252 = vpop.f32.mrb[0].mxu0
  %v3253 = vpop.f32.mrb[0].mxu0
  %v3254 = vadd.f32 0.0, %v3253
  %v3255 = vpop.f32.mrb[0].mxu0
  %3256 = vmatprep.mubr.bf16.mxu0 %v1573
  %3257 = vmatmul.mubr.bf16.gmra.mrb[0].mxu0 %v1572
  %v3258 = vpop.f32.mrb[0].mxu0
  %v3259 = vadd.f32 0.0, %v3258
  %v3260 = vpop.f32.mrb[0].mxu0
  %v3261 = vpop.f32.mrb[0].mxu0
  %v3262 = vadd.f32 0.0, %v3261
  %v3263 = vpop.f32.mrb[0].mxu0
  %3264 = vmatprep.mubr.bf16.mxu0 %v1579
  %3265 = vmatmul.mubr.bf16.gmra.mrb[0].mxu0 %v1578
  %v3266 = vpop.f32.mrb[0].mxu0
  %v3267 = vadd.f32 0.0, %v3266
  %v3268 = vpop.f32.mrb[0].mxu0
  %v3269 = vpop.f32.mrb[0].mxu0
  %v3270 = vadd.f32 0.0, %v3269
  %v3271 = vpop.f32.mrb[0].mxu0
  %3272 = vmatprep.mubr.bf16.mxu0 %v1585
  %3273 = vmatmul.mubr.bf16.gmra.mrb[0].mxu0 %v1584
  %v3274 = vpop.f32.mrb[0].mxu0
  %v3275 = vadd.f32 0.0, %v3274
  %v3276 = vpop.f32.mrb[0].mxu0
  %v3277 = vpop.f32.mrb[0].mxu0
  %v3278 = vadd.f32 0.0, %v3277
  %v3279 = vpop.f32.mrb[0].mxu0
  %3280 = vmatprep.mubr.bf16.mxu0 %v1591
  %3281 = vmatmul.mubr.bf16.gmra.mrb[0].mxu0 %v1590
  %v3282 = vpop.f32.mrb[0].mxu0
  %v3283 = vadd.f32 0.0, %v3282
  %v3284 = vpop.f32.mrb[0].mxu0
  %v3285 = vpop.f32.mrb[0].mxu0
  %v3286 = vadd.f32 0.0, %v3285
  %v3287 = vpop.f32.mrb[0].mxu0
  %3288 = vmatprep.mubr.bf16.mxu0 %v1597
  %3289 = vmatmul.mubr.bf16.gmra.mrb[0].mxu0 %v1596
  %v3290 = vpop.f32.mrb[0].mxu0
  %v3291 = vadd.f32 0.0, %v3290
  %v3292 = vpop.f32.mrb[0].mxu0
  %v3293 = vpop.f32.mrb[0].mxu0
  %v3294 = vadd.f32 0.0, %v3293
  %v3295 = vpop.f32.mrb[0].mxu0
  %3296 = vmatprep.mubr.bf16.mxu0 %v1603
  %3297 = vmatmul.mubr.bf16.gmra.mrb[0].mxu0 %v1602
  %v3298 = vpop.f32.mrb[0].mxu0
  %v3299 = vadd.f32 0.0, %v3298
  %v3300 = vpop.f32.mrb[0].mxu0
  %v3301 = vpop.f32.mrb[0].mxu0
  %v3302 = vadd.f32 0.0, %v3301
  %v3303 = vpop.f32.mrb[0].mxu0
  %3304 = vmatprep.mubr.bf16.mxu0 %v1609
  %3305 = vmatmul.mubr.bf16.gmra.mrb[0].mxu0 %v1608
  %v3306 = vpop.f32.mrb[0].mxu0
  %v3307 = vadd.f32 0.0, %v3306
  %v3308 = vpop.f32.mrb[0].mxu0
  %v3309 = vpop.f32.mrb[0].mxu0
  %v3310 = vadd.f32 0.0, %v3309
  %v3311 = vpop.f32.mrb[0].mxu0
  %3312 = vmatprep.mubr.bf16.mxu0 %v1615
  %3313 = vmatmul.mubr.bf16.gmra.mrb[0].mxu0 %v1614
  %v3314 = vpop.f32.mrb[0].mxu0
  %v3315 = vadd.f32 0.0, %v3314
  %v3316 = vpop.f32.mrb[0].mxu0
  %v3317 = vpop.f32.mrb[0].mxu0
  %v3318 = vadd.f32 0.0, %v3317
  %v3319 = vpop.f32.mrb[0].mxu0
  %3320 = vmatprep.mubr.bf16.mxu0 %v1621
  %3321 = vmatmul.mubr.bf16.gmra.mrb[0].mxu0 %v1620
  %v3322 = vpop.f32.mrb[0].mxu0
  %v3323 = vadd.f32 0.0, %v3322
  %v3324 = vpop.f32.mrb[0].mxu0
  %v3325 = vpop.f32.mrb[0].mxu0
  %v3326 = vadd.f32 0.0, %v3325
  %v3327 = vpop.f32.mrb[0].mxu0
  %3328 = vmatprep.mubr.bf16.mxu0 %v1627
  %3329 = vmatmul.mubr.bf16.gmra.mrb[0].mxu0 %v1626
  %v3330 = vpop.f32.mrb[0].mxu0
  %v3331 = vadd.f32 0.0, %v3330
  %v3332 = vpop.f32.mrb[0].mxu0
  %v3333 = vpop.f32.mrb[0].mxu0
  %v3334 = vadd.f32 0.0, %v3333
  %v3335 = vpop.f32.mrb[0].mxu0
  %3336 = vmatprep.mubr.bf16.mxu0 %v1633
  %3337 = vmatmul.mubr.bf16.gmra.mrb[0].mxu0 %v1632
  %v3338 = vpop.f32.mrb[0].mxu0
  %v3339 = vadd.f32 0.0, %v3338
  %v3340 = vpop.f32.mrb[0].mxu0
  %v3341 = vpop.f32.mrb[0].mxu0
  %v3342 = vadd.f32 0.0, %v3341
  %v3343 = vpop.f32.mrb[0].mxu0
  %3344 = vmatprep.mubr.bf16.mxu0 %v1639
  %3345 = vmatmul.mubr.bf16.gmra.mrb[0].mxu0 %v1638
  %v3346 = vpop.f32.mrb[0].mxu0
  %v3347 = vadd.f32 0.0, %v3346
  %v3348 = vpop.f32.mrb[0].mxu0
  %v3349 = vpop.f32.mrb[0].mxu0
  %v3350 = vadd.f32 0.0, %v3349
  %v3351 = vpop.f32.mrb[0].mxu0
  %3352 = vmatprep.mubr.bf16.mxu0 %v1645
  %3353 = vmatmul.mubr.bf16.gmra.mrb[0].mxu0 %v1644
  %v3354 = vpop.f32.mrb[0].mxu0
  %v3355 = vadd.f32 0.0, %v3354
  %v3356 = vpop.f32.mrb[0].mxu0
  %v3357 = vpop.f32.mrb[0].mxu0
  %v3358 = vadd.f32 0.0, %v3357
  %v3359 = vpop.f32.mrb[0].mxu0
  %3360 = vmatprep.mubr.bf16.mxu0 %v1651
  %3361 = vmatmul.mubr.bf16.gmra.mrb[0].mxu0 %v1650
  %v3362 = vpop.f32.mrb[0].mxu0
  %v3363 = vadd.f32 0.0, %v3362
  %v3364 = vpop.f32.mrb[0].mxu0
  %v3365 = vpop.f32.mrb[0].mxu0
  %v3366 = vadd.f32 0.0, %v3365
  %v3367 = vpop.f32.mrb[0].mxu0
  %3368 = vmatprep.mubr.bf16.mxu0 %v1657
  %3369 = vmatmul.mubr.bf16.gmra.mrb[0].mxu0 %v1656
  %v3370 = vpop.f32.mrb[0].mxu0
  %v3371 = vadd.f32 0.0, %v3370
  %v3372 = vpop.f32.mrb[0].mxu0
  %v3373 = vpop.f32.mrb[0].mxu0
  %v3374 = vadd.f32 0.0, %v3373
  %v3375 = vpop.f32.mrb[0].mxu0
  %3376 = vmatprep.mubr.bf16.mxu0 %v1663
  %3377 = vmatmul.mubr.bf16.gmra.mrb[0].mxu0 %v1662
  %v3378 = vpop.f32.mrb[0].mxu0
  %v3379 = vadd.f32 0.0, %v3378
  %v3380 = vpop.f32.mrb[0].mxu0
  %v3381 = vpop.f32.mrb[0].mxu0
  %v3382 = vadd.f32 0.0, %v3381
  %v3383 = vpop.f32.mrb[0].mxu0
  %3384 = vmatprep.mubr.bf16.mxu0 %v1669
  %3385 = vmatmul.mubr.bf16.gmra.mrb[0].mxu0 %v1668
  %v3386 = vpop.f32.mrb[0].mxu0
  %v3387 = vadd.f32 0.0, %v3386
  %v3388 = vpop.f32.mrb[0].mxu0
  %v3389 = vpop.f32.mrb[0].mxu0
  %v3390 = vadd.f32 0.0, %v3389
  %v3391 = vpop.f32.mrb[0].mxu0
  %3392 = vdwg.mxu0
  %3393 = vmatprep.subr.bf16.mxu0 0
  %3394 = vmatpush1.bf16.msra.mxu0 %v3174
  %3395 = vmatprep.subr.bf16.mxu0 0
  %3396 = vmatpush1.bf16.msra.mxu0 %v3175
  %3397 = vmatprep.subr.bf16.mxu0 0
  %3398 = vmatpush1.bf16.msra.mxu0 %v3176
  %3399 = vmatprep.subr.bf16.mxu0 0
  %3400 = vmatpush1.bf16.msra.mxu0 %v3177
  %3401 = vmatprep.subr.bf16.mxu0 0
  %3402 = vmatpush1.bf16.msra.mxu0 %v3178
  %3403 = vmatprep.subr.bf16.mxu0 0
  %3404 = vmatpush1.bf16.msra.mxu0 %v3179
  %3405 = vmatprep.subr.bf16.mxu0 0
  %3406 = vmatpush1.bf16.msra.mxu0 %v3180
  %3407 = vmatprep.subr.bf16.mxu0 0
  %3408 = vmatpush1.bf16.msra.mxu0 %v3181
  %3409 = vmatprep.subr.bf16.mxu0 0
  %3410 = vmatpush1.bf16.msra.mxu0 %v3182
  %3411 = vmatprep.subr.bf16.mxu0 0
  %3412 = vmatpush1.bf16.msra.mxu0 %v3183
  %3413 = vmatprep.subr.bf16.mxu0 0
  %3414 = vmatpush1.bf16.msra.mxu0 %v3184
  %3415 = vmatprep.subr.bf16.mxu0 0
  %3416 = vmatpush1.bf16.msra.mxu0 %v3185
  %3417 = vmatprep.subr.bf16.mxu0 0
  %3418 = vmatpush1.bf16.msra.mxu0 %v3186
  %3419 = vmatprep.subr.bf16.mxu0 0
  %3420 = vmatpush1.bf16.msra.mxu0 %v3187
  %3421 = vmatprep.subr.bf16.mxu0 0
  %3422 = vmatpush1.bf16.msra.mxu0 %v3188
  %3423 = vmatprep.subr.bf16.mxu0 0
  %3424 = vmatpush1.bf16.msra.mxu0 %v3189
  %3425 = vmatprep.mubr.bf16.mxu0 %v1557
  %3426 = vmatmul.mubr.bf16.gmra.mrb[0].mxu0 %v1556
  %v3427 = vpop.f32.mrb[0].mxu0
  %v3428 = vadd.f32 %v3235, %v3427
  %v3429 = vpop.f32.mrb[0].mxu0
  %v3430 = vpop.f32.mrb[0].mxu0
  %v3431 = vadd.f32 %v3238, %v3430
  %v3432 = vpop.f32.mrb[0].mxu0
  %3433 = vmatprep.mubr.bf16.mxu0 %v1563
  %3434 = vmatmul.mubr.bf16.gmra.mrb[0].mxu0 %v1562
  %v3435 = vpop.f32.mrb[0].mxu0
  %v3436 = vadd.f32 %v3243, %v3435
  %v3437 = vpop.f32.mrb[0].mxu0
  %v3438 = vpop.f32.mrb[0].mxu0
  %v3439 = vadd.f32 %v3246, %v3438
  %v3440 = vpop.f32.mrb[0].mxu0
  %3441 = vmatprep.mubr.bf16.mxu0 %v1569
  %3442 = vmatmul.mubr.bf16.gmra.mrb[0].mxu0 %v1568
  %v3443 = vpop.f32.mrb[0].mxu0
  %v3444 = vadd.f32 %v3251, %v3443
  %v3445 = vpop.f32.mrb[0].mxu0
  %v3446 = vpop.f32.mrb[0].mxu0
  %v3447 = vadd.f32 %v3254, %v3446
  %v3448 = vpop.f32.mrb[0].mxu0
  %3449 = vmatprep.mubr.bf16.mxu0 %v1575
  %3450 = vmatmul.mubr.bf16.gmra.mrb[0].mxu0 %v1574
  %v3451 = vpop.f32.mrb[0].mxu0
  %v3452 = vadd.f32 %v3259, %v3451
  %v3453 = vpop.f32.mrb[0].mxu0
  %v3454 = vpop.f32.mrb[0].mxu0
  %v3455 = vadd.f32 %v3262, %v3454
  %v3456 = vpop.f32.mrb[0].mxu0
  %3457 = vmatprep.mubr.bf16.mxu0 %v1581
  %3458 = vmatmul.mubr.bf16.gmra.mrb[0].mxu0 %v1580
  %v3459 = vpop.f32.mrb[0].mxu0
  %v3460 = vadd.f32 %v3267, %v3459
  %v3461 = vpop.f32.mrb[0].mxu0
  %v3462 = vpop.f32.mrb[0].mxu0
  %v3463 = vadd.f32 %v3270, %v3462
  %v3464 = vpop.f32.mrb[0].mxu0
  %3465 = vmatprep.mubr.bf16.mxu0 %v1587
  %3466 = vmatmul.mubr.bf16.gmra.mrb[0].mxu0 %v1586
  %v3467 = vpop.f32.mrb[0].mxu0
  %v3468 = vadd.f32 %v3275, %v3467
  %v3469 = vpop.f32.mrb[0].mxu0
  %v3470 = vpop.f32.mrb[0].mxu0
  %v3471 = vadd.f32 %v3278, %v3470
  %v3472 = vpop.f32.mrb[0].mxu0
  %3473 = vmatprep.mubr.bf16.mxu0 %v1593
  %3474 = vmatmul.mubr.bf16.gmra.mrb[0].mxu0 %v1592
  %v3475 = vpop.f32.mrb[0].mxu0
  %v3476 = vadd.f32 %v3283, %v3475
  %v3477 = vpop.f32.mrb[0].mxu0
  %v3478 = vpop.f32.mrb[0].mxu0
  %v3479 = vadd.f32 %v3286, %v3478
  %v3480 = vpop.f32.mrb[0].mxu0
  %3481 = vmatprep.mubr.bf16.mxu0 %v1599
  %3482 = vmatmul.mubr.bf16.gmra.mrb[0].mxu0 %v1598
  %v3483 = vpop.f32.mrb[0].mxu0
  %v3484 = vadd.f32 %v3291, %v3483
  %v3485 = vpop.f32.mrb[0].mxu0
  %v3486 = vpop.f32.mrb[0].mxu0
  %v3487 = vadd.f32 %v3294, %v3486
  %v3488 = vpop.f32.mrb[0].mxu0
  %3489 = vmatprep.mubr.bf16.mxu0 %v1605
  %3490 = vmatmul.mubr.bf16.gmra.mrb[0].mxu0 %v1604
  %v3491 = vpop.f32.mrb[0].mxu0
  %v3492 = vadd.f32 %v3299, %v3491
  %v3493 = vpop.f32.mrb[0].mxu0
  %v3494 = vpop.f32.mrb[0].mxu0
  %v3495 = vadd.f32 %v3302, %v3494
  %v3496 = vpop.f32.mrb[0].mxu0
  %3497 = vmatprep.mubr.bf16.mxu0 %v1611
  %3498 = vmatmul.mubr.bf16.gmra.mrb[0].mxu0 %v1610
  %v3499 = vpop.f32.mrb[0].mxu0
  %v3500 = vadd.f32 %v3307, %v3499
  %v3501 = vpop.f32.mrb[0].mxu0
  %v3502 = vpop.f32.mrb[0].mxu0
  %v3503 = vadd.f32 %v3310, %v3502
  %v3504 = vpop.f32.mrb[0].mxu0
  %3505 = vmatprep.mubr.bf16.mxu0 %v1617
  %3506 = vmatmul.mubr.bf16.gmra.mrb[0].mxu0 %v1616
  %v3507 = vpop.f32.mrb[0].mxu0
  %v3508 = vadd.f32 %v3315, %v3507
  %v3509 = vpop.f32.mrb[0].mxu0
  %v3510 = vpop.f32.mrb[0].mxu0
  %v3511 = vadd.f32 %v3318, %v3510
  %v3512 = vpop.f32.mrb[0].mxu0
  %3513 = vmatprep.mubr.bf16.mxu0 %v1623
  %3514 = vmatmul.mubr.bf16.gmra.mrb[0].mxu0 %v1622
  %v3515 = vpop.f32.mrb[0].mxu0
  %v3516 = vadd.f32 %v3323, %v3515
  %v3517 = vpop.f32.mrb[0].mxu0
  %v3518 = vpop.f32.mrb[0].mxu0
  %v3519 = vadd.f32 %v3326, %v3518
  %v3520 = vpop.f32.mrb[0].mxu0
  %3521 = vmatprep.mubr.bf16.mxu0 %v1629
  %3522 = vmatmul.mubr.bf16.gmra.mrb[0].mxu0 %v1628
  %v3523 = vpop.f32.mrb[0].mxu0
  %v3524 = vadd.f32 %v3331, %v3523
  %v3525 = vpop.f32.mrb[0].mxu0
  %v3526 = vpop.f32.mrb[0].mxu0
  %v3527 = vadd.f32 %v3334, %v3526
  %v3528 = vpop.f32.mrb[0].mxu0
  %3529 = vmatprep.mubr.bf16.mxu0 %v1635
  %3530 = vmatmul.mubr.bf16.gmra.mrb[0].mxu0 %v1634
  %v3531 = vpop.f32.mrb[0].mxu0
  %v3532 = vadd.f32 %v3339, %v3531
  %v3533 = vpop.f32.mrb[0].mxu0
  %v3534 = vpop.f32.mrb[0].mxu0
  %v3535 = vadd.f32 %v3342, %v3534
  %v3536 = vpop.f32.mrb[0].mxu0
  %3537 = vmatprep.mubr.bf16.mxu0 %v1641
  %3538 = vmatmul.mubr.bf16.gmra.mrb[0].mxu0 %v1640
  %v3539 = vpop.f32.mrb[0].mxu0
  %v3540 = vadd.f32 %v3347, %v3539
  %v3541 = vpop.f32.mrb[0].mxu0
  %v3542 = vpop.f32.mrb[0].mxu0
  %v3543 = vadd.f32 %v3350, %v3542
  %v3544 = vpop.f32.mrb[0].mxu0
  %3545 = vmatprep.mubr.bf16.mxu0 %v1647
  %3546 = vmatmul.mubr.bf16.gmra.mrb[0].mxu0 %v1646
  %v3547 = vpop.f32.mrb[0].mxu0
  %v3548 = vadd.f32 %v3355, %v3547
  %v3549 = vpop.f32.mrb[0].mxu0
  %v3550 = vpop.f32.mrb[0].mxu0
  %v3551 = vadd.f32 %v3358, %v3550
  %v3552 = vpop.f32.mrb[0].mxu0
  %3553 = vmatprep.mubr.bf16.mxu0 %v1653
  %3554 = vmatmul.mubr.bf16.gmra.mrb[0].mxu0 %v1652
  %v3555 = vpop.f32.mrb[0].mxu0
  %v3556 = vadd.f32 %v3363, %v3555
  %v3557 = vpop.f32.mrb[0].mxu0
  %v3558 = vpop.f32.mrb[0].mxu0
  %v3559 = vadd.f32 %v3366, %v3558
  %v3560 = vpop.f32.mrb[0].mxu0
  %3561 = vmatprep.mubr.bf16.mxu0 %v1659
  %3562 = vmatmul.mubr.bf16.gmra.mrb[0].mxu0 %v1658
  %v3563 = vpop.f32.mrb[0].mxu0
  %v3564 = vadd.f32 %v3371, %v3563
  %v3565 = vpop.f32.mrb[0].mxu0
  %v3566 = vpop.f32.mrb[0].mxu0
  %v3567 = vadd.f32 %v3374, %v3566
  %v3568 = vpop.f32.mrb[0].mxu0
  %3569 = vmatprep.mubr.bf16.mxu0 %v1665
  %3570 = vmatmul.mubr.bf16.gmra.mrb[0].mxu0 %v1664
  %v3571 = vpop.f32.mrb[0].mxu0
  %v3572 = vadd.f32 %v3379, %v3571
  %v3573 = vpop.f32.mrb[0].mxu0
  %v3574 = vpop.f32.mrb[0].mxu0
  %v3575 = vadd.f32 %v3382, %v3574
  %v3576 = vpop.f32.mrb[0].mxu0
  %3577 = vmatprep.mubr.bf16.mxu0 %v1671
  %3578 = vmatmul.mubr.bf16.gmra.mrb[0].mxu0 %v1670
  %v3579 = vpop.f32.mrb[0].mxu0
  %v3580 = vadd.f32 %v3387, %v3579
  %v3581 = vpop.f32.mrb[0].mxu0
  %v3582 = vpop.f32.mrb[0].mxu0
  %v3583 = vadd.f32 %v3390, %v3582
  %v3584 = vpop.f32.mrb[0].mxu0
  %3585 = vdwg.mxu0
  %3586 = vmatprep.subr.bf16.mxu0 0
  %3587 = vmatpush1.bf16.msra.mxu0 %v3190
  %3588 = vmatprep.subr.bf16.mxu0 0
  %3589 = vmatpush1.bf16.msra.mxu0 %v3191
  %3590 = vmatprep.subr.bf16.mxu0 0
  %3591 = vmatpush1.bf16.msra.mxu0 %v3192
  %3592 = vmatprep.subr.bf16.mxu0 0
  %3593 = vmatpush1.bf16.msra.mxu0 %v3193
  %3594 = vmatprep.subr.bf16.mxu0 0
  %3595 = vmatpush1.bf16.msra.mxu0 %v3194
  %3596 = vmatprep.subr.bf16.mxu0 0
  %3597 = vmatpush1.bf16.msra.mxu0 %v3195
  %3598 = vmatprep.subr.bf16.mxu0 0
  %3599 = vmatpush1.bf16.msra.mxu0 %v3196
  %3600 = vmatprep.subr.bf16.mxu0 0
  %3601 = vmatpush1.bf16.msra.mxu0 %v3197
  %3602 = vmatprep.subr.bf16.mxu0 0
  %3603 = vmatpush1.bf16.msra.mxu0 %v3198
  %3604 = vmatprep.subr.bf16.mxu0 0
  %3605 = vmatpush1.bf16.msra.mxu0 %v3199
  %3606 = vmatprep.subr.bf16.mxu0 0
  %3607 = vmatpush1.bf16.msra.mxu0 0
  %3608 = vmatprep.subr.bf16.mxu0 0
  %3609 = vmatpush1.bf16.msra.mxu0 0
  %3610 = vmatprep.subr.bf16.mxu0 0
  %3611 = vmatpush1.bf16.msra.mxu0 0
  %3612 = vmatprep.subr.bf16.mxu0 0
  %3613 = vmatpush1.bf16.msra.mxu0 0
  %3614 = vmatprep.subr.bf16.mxu0 0
  %3615 = vmatpush1.bf16.msra.mxu0 0
  %3616 = vmatprep.subr.bf16.mxu0 0
  %3617 = vmatpush1.bf16.msra.mxu0 0
  %3618 = vmatprep.mubr.bf16.mxu0 %v1776
  %3619 = vmatmul.mubr.bf16.gmra.mrb[0].mxu0 %v1558
  %v3620 = vpop.f32.mrb[0].mxu0
  %v3621 = vadd.f32 %v3428, %v3620
  %v3622 = vpop.f32.mrb[0].mxu0
  %v3623 = vpop.f32.mrb[0].mxu0
  %v3624 = vadd.f32 %v3431, %v3623
  %v3625 = vpop.f32.mrb[0].mxu0
  %3626 = vmatprep.mubr.bf16.mxu0 %v1779
  %3627 = vmatmul.mubr.bf16.gmra.mrb[0].mxu0 %v1564
  %v3628 = vpop.f32.mrb[0].mxu0
  %v3629 = vadd.f32 %v3436, %v3628
  %v3630 = vpop.f32.mrb[0].mxu0
  %v3631 = vpop.f32.mrb[0].mxu0
  %v3632 = vadd.f32 %v3439, %v3631
  %v3633 = vpop.f32.mrb[0].mxu0
  %3634 = vmatprep.mubr.bf16.mxu0 %v1782
  %3635 = vmatmul.mubr.bf16.gmra.mrb[0].mxu0 %v1570
  %v3636 = vpop.f32.mrb[0].mxu0
  %v3637 = vadd.f32 %v3444, %v3636
  %v3638 = vpop.f32.mrb[0].mxu0
  %v3639 = vpop.f32.mrb[0].mxu0
  %v3640 = vadd.f32 %v3447, %v3639
  %v3641 = vpop.f32.mrb[0].mxu0
  %3642 = vmatprep.mubr.bf16.mxu0 %v1785
  %3643 = vmatmul.mubr.bf16.gmra.mrb[0].mxu0 %v1576
  %v3644 = vpop.f32.mrb[0].mxu0
  %v3645 = vadd.f32 %v3452, %v3644
  %v3646 = vpop.f32.mrb[0].mxu0
  %v3647 = vpop.f32.mrb[0].mxu0
  %v3648 = vadd.f32 %v3455, %v3647
  %v3649 = vpop.f32.mrb[0].mxu0
  %3650 = vmatprep.mubr.bf16.mxu0 %v1788
  %3651 = vmatmul.mubr.bf16.gmra.mrb[0].mxu0 %v1582
  %v3652 = vpop.f32.mrb[0].mxu0
  %v3653 = vadd.f32 %v3460, %v3652
  %v3654 = vpop.f32.mrb[0].mxu0
  %v3655 = vpop.f32.mrb[0].mxu0
  %v3656 = vadd.f32 %v3463, %v3655
  %v3657 = vpop.f32.mrb[0].mxu0
  %3658 = vmatprep.mubr.bf16.mxu0 %v1791
  %3659 = vmatmul.mubr.bf16.gmra.mrb[0].mxu0 %v1588
  %v3660 = vpop.f32.mrb[0].mxu0
  %v3661 = vadd.f32 %v3468, %v3660
  %v3662 = vpop.f32.mrb[0].mxu0
  %v3663 = vpop.f32.mrb[0].mxu0
  %v3664 = vadd.f32 %v3471, %v3663
  %v3665 = vpop.f32.mrb[0].mxu0
  %3666 = vmatprep.mubr.bf16.mxu0 %v1794
  %3667 = vmatmul.mubr.bf16.gmra.mrb[0].mxu0 %v1594
  %v3668 = vpop.f32.mrb[0].mxu0
  %v3669 = vadd.f32 %v3476, %v3668
  %v3670 = vpop.f32.mrb[0].mxu0
  %v3671 = vpop.f32.mrb[0].mxu0
  %v3672 = vadd.f32 %v3479, %v3671
  %v3673 = vpop.f32.mrb[0].mxu0
  %3674 = vmatprep.mubr.bf16.mxu0 %v1797
  %3675 = vmatmul.mubr.bf16.gmra.mrb[0].mxu0 %v1600
  %v3676 = vpop.f32.mrb[0].mxu0
  %v3677 = vadd.f32 %v3484, %v3676
  %v3678 = vpop.f32.mrb[0].mxu0
  %v3679 = vpop.f32.mrb[0].mxu0
  %v3680 = vadd.f32 %v3487, %v3679
  %v3681 = vpop.f32.mrb[0].mxu0
  %3682 = vmatprep.mubr.bf16.mxu0 %v1800
  %3683 = vmatmul.mubr.bf16.gmra.mrb[0].mxu0 %v1606
  %v3684 = vpop.f32.mrb[0].mxu0
  %v3685 = vadd.f32 %v3492, %v3684
  %v3686 = vpop.f32.mrb[0].mxu0
  %v3687 = vpop.f32.mrb[0].mxu0
  %v3688 = vadd.f32 %v3495, %v3687
  %v3689 = vpop.f32.mrb[0].mxu0
  %3690 = vmatprep.mubr.bf16.mxu0 %v1803
  %3691 = vmatmul.mubr.bf16.gmra.mrb[0].mxu0 %v1612
  %v3692 = vpop.f32.mrb[0].mxu0
  %v3693 = vadd.f32 %v3500, %v3692
  %v3694 = vpop.f32.mrb[0].mxu0
  %v3695 = vpop.f32.mrb[0].mxu0
  %v3696 = vadd.f32 %v3503, %v3695
  %v3697 = vpop.f32.mrb[0].mxu0
  %3698 = vmatprep.mubr.bf16.mxu0 %v1806
  %3699 = vmatmul.mubr.bf16.gmra.mrb[0].mxu0 %v1618
  %v3700 = vpop.f32.mrb[0].mxu0
  %v3701 = vadd.f32 %v3508, %v3700
  %v3702 = vpop.f32.mrb[0].mxu0
  %v3703 = vpop.f32.mrb[0].mxu0
  %v3704 = vadd.f32 %v3511, %v3703
  %v3705 = vpop.f32.mrb[0].mxu0
  %3706 = vmatprep.mubr.bf16.mxu0 %v1809
  %3707 = vmatmul.mubr.bf16.gmra.mrb[0].mxu0 %v1624
  %v3708 = vpop.f32.mrb[0].mxu0
  %v3709 = vadd.f32 %v3516, %v3708
  %v3710 = vpop.f32.mrb[0].mxu0
  %v3711 = vpop.f32.mrb[0].mxu0
  %v3712 = vadd.f32 %v3519, %v3711
  %v3713 = vpop.f32.mrb[0].mxu0
  %3714 = vmatprep.mubr.bf16.mxu0 %v1812
  %3715 = vmatmul.mubr.bf16.gmra.mrb[0].mxu0 %v1630
  %v3716 = vpop.f32.mrb[0].mxu0
  %v3717 = vadd.f32 %v3524, %v3716
  %v3718 = vpop.f32.mrb[0].mxu0
  %v3719 = vpop.f32.mrb[0].mxu0
  %v3720 = vadd.f32 %v3527, %v3719
  %v3721 = vpop.f32.mrb[0].mxu0
  %3722 = vmatprep.mubr.bf16.mxu0 %v1815
  %3723 = vmatmul.mubr.bf16.gmra.mrb[0].mxu0 %v1636
  %v3724 = vpop.f32.mrb[0].mxu0
  %v3725 = vadd.f32 %v3532, %v3724
  %v3726 = vpop.f32.mrb[0].mxu0
  %v3727 = vpop.f32.mrb[0].mxu0
  %v3728 = vadd.f32 %v3535, %v3727
  %v3729 = vpop.f32.mrb[0].mxu0
  %3730 = vmatprep.mubr.bf16.mxu0 %v1818
  %3731 = vmatmul.mubr.bf16.gmra.mrb[0].mxu0 %v1642
  %v3732 = vpop.f32.mrb[0].mxu0
  %v3733 = vadd.f32 %v3540, %v3732
  %v3734 = vpop.f32.mrb[0].mxu0
  %v3735 = vpop.f32.mrb[0].mxu0
  %v3736 = vadd.f32 %v3543, %v3735
  %v3737 = vpop.f32.mrb[0].mxu0
  %3738 = vmatprep.mubr.bf16.mxu0 %v1821
  %3739 = vmatmul.mubr.bf16.gmra.mrb[0].mxu0 %v1648
  %v3740 = vpop.f32.mrb[0].mxu0
  %v3741 = vadd.f32 %v3548, %v3740
  %v3742 = vpop.f32.mrb[0].mxu0
  %v3743 = vpop.f32.mrb[0].mxu0
  %v3744 = vadd.f32 %v3551, %v3743
  %v3745 = vpop.f32.mrb[0].mxu0
  %3746 = vmatprep.mubr.bf16.mxu0 %v1824
  %3747 = vmatmul.mubr.bf16.gmra.mrb[0].mxu0 %v1654
  %v3748 = vpop.f32.mrb[0].mxu0
  %v3749 = vadd.f32 %v3556, %v3748
  %v3750 = vpop.f32.mrb[0].mxu0
  %v3751 = vpop.f32.mrb[0].mxu0
  %v3752 = vadd.f32 %v3559, %v3751
  %v3753 = vpop.f32.mrb[0].mxu0
  %3754 = vmatprep.mubr.bf16.mxu0 %v1827
  %3755 = vmatmul.mubr.bf16.gmra.mrb[0].mxu0 %v1660
  %v3756 = vpop.f32.mrb[0].mxu0
  %v3757 = vadd.f32 %v3564, %v3756
  %v3758 = vpop.f32.mrb[0].mxu0
  %v3759 = vpop.f32.mrb[0].mxu0
  %v3760 = vadd.f32 %v3567, %v3759
  %v3761 = vpop.f32.mrb[0].mxu0
  %3762 = vmatprep.mubr.bf16.mxu0 %v1830
  %3763 = vmatmul.mubr.bf16.gmra.mrb[0].mxu0 %v1666
  %v3764 = vpop.f32.mrb[0].mxu0
  %v3765 = vadd.f32 %v3572, %v3764
  %v3766 = vpop.f32.mrb[0].mxu0
  %v3767 = vpop.f32.mrb[0].mxu0
  %v3768 = vadd.f32 %v3575, %v3767
  %v3769 = vpop.f32.mrb[0].mxu0
  %3770 = vmatprep.mubr.bf16.mxu0 %v1833
  %3771 = vmatmul.mubr.bf16.gmra.mrb[0].mxu0 %v1672
  %v3772 = vpop.f32.mrb[0].mxu0
  %v3773 = vadd.f32 %v3580, %v3772
  %v3774 = vpop.f32.mrb[0].mxu0
  %v3775 = vpop.f32.mrb[0].mxu0
  %v3776 = vadd.f32 %v3583, %v3775
  %v3777 = vpop.f32.mrb[0].mxu0
  %3778 = vdwg.mxu0
  %v3779 = vmax.f32 %v3621, %v3701
  %v3780 = vmax.f32 %v3624, %v3704
  %v3781 = vmax.f32 %v3629, %v3709
  %v3782 = vmax.f32 %v3632, %v3712
  %v3783 = vmax.f32 %v3637, %v3717
  %v3784 = vmax.f32 %v3640, %v3720
  %v3785 = vmax.f32 %v3645, %v3725
  %v3786 = vmax.f32 %v3648, %v3728
  %v3787 = vmax.f32 %v3653, %v3733
  %v3788 = vmax.f32 %v3656, %v3736
  %v3789 = vmax.f32 %v3661, %v3741
  %v3790 = vmax.f32 %v3664, %v3744
  %v3791 = vmax.f32 %v3669, %v3749
  %v3792 = vmax.f32 %v3672, %v3752
  %v3793 = vmax.f32 %v3677, %v3757
  %v3794 = vmax.f32 %v3680, %v3760
  %v3795 = vmax.f32 %v3685, %v3765
  %v3796 = vmax.f32 %v3688, %v3768
  %v3797 = vmax.f32 %v3693, %v3773
  %v3798 = vmax.f32 %v3696, %v3776
  %v3799 = vmax.f32 %v3779, %v3781
  %v3800 = vmax.f32 %v3780, %v3782
  %v3801 = vmax.f32 %v3783, %v3785
  %v3802 = vmax.f32 %v3784, %v3786
  %v3803 = vmax.f32 %v3787, %v3789
  %v3804 = vmax.f32 %v3788, %v3790
  %v3805 = vmax.f32 %v3791, %v3793
  %v3806 = vmax.f32 %v3792, %v3794
  %v3807 = vmax.f32 %v3795, %v3797
  %v3808 = vmax.f32 %v3796, %v3798
  %v3809 = vadd.f32 %v3799, %v318
  %v3810 = vadd.f32 %v3800, %v323
  %v3811 = vadd.f32 %v3801, %v328
  %v3812 = vadd.f32 %v3802, %v333
  %v3813 = vadd.f32 %v3803, %v338
  %v3814 = vadd.f32 %v3804, %v343
  %v3815 = vadd.f32 %v3805, %v348
  %v3816 = vadd.f32 %v3806, %v353
  %v3817 = vadd.f32 %v3807, %v358
  %v3818 = vadd.f32 %v3808, %v363
  %v3819 = vmax.f32 %v3809, 0.0
  %v3820 = vmax.f32 %v3810, 0.0
  %v3821 = vmax.f32 %v3811, 0.0
  %v3822 = vmax.f32 %v3812, 0.0
  %v3823 = vmax.f32 %v3813, 0.0
  %v3824 = vmax.f32 %v3814, 0.0
  %v3825 = vmax.f32 %v3815, 0.0
  %v3826 = vmax.f32 %v3816, 0.0
  %v3827 = vmax.f32 %v3817, 0.0
  %v3828 = vmax.f32 %v3818, 0.0
  %v3829 = vpack.c.bf16 %v3820, %v3819
  %v3830 = vpack.c.bf16 %v3822, %v3821
  %v3831 = vpack.c.bf16 %v3824, %v3823
  %v3832 = vpack.c.bf16 %v3826, %v3825
  %v3833 = vpack.c.bf16 %v3828, %v3827
  %s3834 = scalar_lea.vmem [#allocation3], 80
  %3835 = vst [vmem:[%s3834] sm:$0xff] %v3829
  %3836 = vst [vmem:[%s3834 + $0x8] sm:$0xff] %v3830
  %3837 = vst [vmem:[%s3834 + $0x10] sm:$0xff] %v3831
  %3838 = vst [vmem:[%s3834 + $0x18] sm:$0xff] %v3832
  %3839 = vst [vmem:[%s3834 + $0x20] sm:$0xff] %v3833
  %s3840 = scalar_lea.vmem [#allocation2], 336
  %v3841 = vld [vmem:[%s3840] sm:$0xff]
  %v3842 = vld [vmem:[%s3840 + $0x8] sm:$0xff]
  %v3843 = vld [vmem:[%s3840 + $0x10] sm:$0xff]
  %v3844 = vld [vmem:[%s3840 + $0x18] sm:$0xff]
  %v3845 = vld [vmem:[%s3840 + $0x20] sm:$0xff]
  %v3846 = vld [vmem:[%s3840 + $0x28] sm:$0xff]
  %v3847 = vld [vmem:[%s3840 + $0x30] sm:$0xff]
  %v3848 = vld [vmem:[%s3840 + $0x38] sm:$0xff]
  %v3849 = vld [vmem:[%s3840 + $0x40] sm:$0xff]
  %v3850 = vld [vmem:[%s3840 + $0x48] sm:$0xff]
  %v3851 = vld [vmem:[%s3840 + $0x50] sm:$0xff]
  %v3852 = vld [vmem:[%s3840 + $0x58] sm:$0xff]
  %v3853 = vld [vmem:[%s3840 + $0x60] sm:$0xff]
  %v3854 = vld [vmem:[%s3840 + $0x68] sm:$0xff]
  %v3855 = vld [vmem:[%s3840 + $0x70] sm:$0xff]
  %v3856 = vld [vmem:[%s3840 + $0x78] sm:$0xff]
  %v3857 = vld [vmem:[%s3840 + $0x80] sm:$0xff]
  %v3858 = vld [vmem:[%s3840 + $0x88] sm:$0xff]
  %v3859 = vld [vmem:[%s3840 + $0x90] sm:$0xff]
  %v3860 = vld [vmem:[%s3840 + $0x98] sm:$0xff]
  %v3861 = vld [vmem:[%s3840 + $0xa0] sm:$0xff]
  %v3862 = vld [vmem:[%s3840 + $0xa8] sm:$0xff]
  %v3863 = vld [vmem:[%s3840 + $0xb0] sm:$0xff]
  %v3864 = vld [vmem:[%s3840 + $0xb8] sm:$0xff]
  %v3865 = vld [vmem:[%s3840 + $0xc0] sm:$0xff]
  %v3866 = vld [vmem:[%s3840 + $0xc8] sm:$0xff]
  %v3867 = vld [vmem:[%s3840 + $0xd0] sm:$0xff]
  %v3868 = vld [vmem:[%s3840 + $0xd8] sm:$0xff]
  %v3869 = vld [vmem:[%s3840 + $0xe0] sm:$0xff]
  %v3870 = vld [vmem:[%s3840 + $0xe8] sm:$0xff]
  %v3871 = vld [vmem:[%s3840 + $0xf0] sm:$0xff]
  %v3872 = vld [vmem:[%s3840 + $0xf8] sm:$0xff]
  %v3873 = vld [vmem:[%s3840 + $0x100] sm:$0xff]
  %v3874 = vld [vmem:[%s3840 + $0x108] sm:$0xff]
  %v3875 = vld [vmem:[%s3840 + $0x110] sm:$0xff]
  %v3876 = vld [vmem:[%s3840 + $0x118] sm:$0xff]
  %v3877 = vld [vmem:[%s3840 + $0x120] sm:$0xff]
  %v3878 = vld [vmem:[%s3840 + $0x128] sm:$0xff]
  %v3879 = vld [vmem:[%s3840 + $0x130] sm:$0xff]
  %v3880 = vld [vmem:[%s3840 + $0x138] sm:$0xff]
  %v3881 = vld [vmem:[%s3840 + $0x140] sm:$0xff]
  %v3882 = vld [vmem:[%s3840 + $0x148] sm:$0xff]
  %3883 = vmatprep.subr.bf16.mxu0 0
  %3884 = vmatpush1.bf16.msra.mxu0 %v3841
  %3885 = vmatprep.subr.bf16.mxu0 0
  %3886 = vmatpush1.bf16.msra.mxu0 %v3842
  %3887 = vmatprep.subr.bf16.mxu0 0
  %3888 = vmatpush1.bf16.msra.mxu0 %v3843
  %3889 = vmatprep.subr.bf16.mxu0 0
  %3890 = vmatpush1.bf16.msra.mxu0 %v3844
  %3891 = vmatprep.subr.bf16.mxu0 0
  %3892 = vmatpush1.bf16.msra.mxu0 %v3845
  %3893 = vmatprep.subr.bf16.mxu0 0
  %3894 = vmatpush1.bf16.msra.mxu0 %v3846
  %3895 = vmatprep.subr.bf16.mxu0 0
  %3896 = vmatpush1.bf16.msra.mxu0 %v3847
  %3897 = vmatprep.subr.bf16.mxu0 0
  %3898 = vmatpush1.bf16.msra.mxu0 %v3848
  %3899 = vmatprep.subr.bf16.mxu0 0
  %3900 = vmatpush1.bf16.msra.mxu0 %v3849
  %3901 = vmatprep.subr.bf16.mxu0 0
  %3902 = vmatpush1.bf16.msra.mxu0 %v3850
  %3903 = vmatprep.subr.bf16.mxu0 0
  %3904 = vmatpush1.bf16.msra.mxu0 %v3851
  %3905 = vmatprep.subr.bf16.mxu0 0
  %3906 = vmatpush1.bf16.msra.mxu0 %v3852
  %3907 = vmatprep.subr.bf16.mxu0 0
  %3908 = vmatpush1.bf16.msra.mxu0 %v3853
  %3909 = vmatprep.subr.bf16.mxu0 0
  %3910 = vmatpush1.bf16.msra.mxu0 %v3854
  %3911 = vmatprep.subr.bf16.mxu0 0
  %3912 = vmatpush1.bf16.msra.mxu0 %v3855
  %3913 = vmatprep.subr.bf16.mxu0 0
  %3914 = vmatpush1.bf16.msra.mxu0 %v3856
  %3915 = vmatprep.mubr.bf16.mxu0 %v1555
  %3916 = vmatmul.mubr.bf16.gmra.mrb[0].mxu0 %v1554
  %v3917 = vpop.f32.mrb[0].mxu0
  %v3918 = vadd.f32 0.0, %v3917
  %v3919 = vpop.f32.mrb[0].mxu0
  %v3920 = vpop.f32.mrb[0].mxu0
  %v3921 = vadd.f32 0.0, %v3920
  %v3922 = vpop.f32.mrb[0].mxu0
  %3923 = vmatprep.mubr.bf16.mxu0 %v1561
  %3924 = vmatmul.mubr.bf16.gmra.mrb[0].mxu0 %v1560
  %v3925 = vpop.f32.mrb[0].mxu0
  %v3926 = vadd.f32 0.0, %v3925
  %v3927 = vpop.f32.mrb[0].mxu0
  %v3928 = vpop.f32.mrb[0].mxu0
  %v3929 = vadd.f32 0.0, %v3928
  %v3930 = vpop.f32.mrb[0].mxu0
  %3931 = vmatprep.mubr.bf16.mxu0 %v1567
  %3932 = vmatmul.mubr.bf16.gmra.mrb[0].mxu0 %v1566
  %v3933 = vpop.f32.mrb[0].mxu0
  %v3934 = vadd.f32 0.0, %v3933
  %v3935 = vpop.f32.mrb[0].mxu0
  %v3936 = vpop.f32.mrb[0].mxu0
  %v3937 = vadd.f32 0.0, %v3936
  %v3938 = vpop.f32.mrb[0].mxu0
  %3939 = vmatprep.mubr.bf16.mxu0 %v1573
  %3940 = vmatmul.mubr.bf16.gmra.mrb[0].mxu0 %v1572
  %v3941 = vpop.f32.mrb[0].mxu0
  %v3942 = vadd.f32 0.0, %v3941
  %v3943 = vpop.f32.mrb[0].mxu0
  %v3944 = vpop.f32.mrb[0].mxu0
  %v3945 = vadd.f32 0.0, %v3944
  %v3946 = vpop.f32.mrb[0].mxu0
  %3947 = vmatprep.mubr.bf16.mxu0 %v1579
  %3948 = vmatmul.mubr.bf16.gmra.mrb[0].mxu0 %v1578
  %v3949 = vpop.f32.mrb[0].mxu0
  %v3950 = vadd.f32 0.0, %v3949
  %v3951 = vpop.f32.mrb[0].mxu0
  %v3952 = vpop.f32.mrb[0].mxu0
  %v3953 = vadd.f32 0.0, %v3952
  %v3954 = vpop.f32.mrb[0].mxu0
  %3955 = vmatprep.mubr.bf16.mxu0 %v1585
  %3956 = vmatmul.mubr.bf16.gmra.mrb[0].mxu0 %v1584
  %v3957 = vpop.f32.mrb[0].mxu0
  %v3958 = vadd.f32 0.0, %v3957
  %v3959 = vpop.f32.mrb[0].mxu0
  %v3960 = vpop.f32.mrb[0].mxu0
  %v3961 = vadd.f32 0.0, %v3960
  %v3962 = vpop.f32.mrb[0].mxu0
  %3963 = vmatprep.mubr.bf16.mxu0 %v1591
  %3964 = vmatmul.mubr.bf16.gmra.mrb[0].mxu0 %v1590
  %v3965 = vpop.f32.mrb[0].mxu0
  %v3966 = vadd.f32 0.0, %v3965
  %v3967 = vpop.f32.mrb[0].mxu0
  %v3968 = vpop.f32.mrb[0].mxu0
  %v3969 = vadd.f32 0.0, %v3968
  %v3970 = vpop.f32.mrb[0].mxu0
  %3971 = vmatprep.mubr.bf16.mxu0 %v1597
  %3972 = vmatmul.mubr.bf16.gmra.mrb[0].mxu0 %v1596
  %v3973 = vpop.f32.mrb[0].mxu0
  %v3974 = vadd.f32 0.0, %v3973
  %v3975 = vpop.f32.mrb[0].mxu0
  %v3976 = vpop.f32.mrb[0].mxu0
  %v3977 = vadd.f32 0.0, %v3976
  %v3978 = vpop.f32.mrb[0].mxu0
  %3979 = vmatprep.mubr.bf16.mxu0 %v1603
  %3980 = vmatmul.mubr.bf16.gmra.mrb[0].mxu0 %v1602
  %v3981 = vpop.f32.mrb[0].mxu0
  %v3982 = vadd.f32 0.0, %v3981
  %v3983 = vpop.f32.mrb[0].mxu0
  %v3984 = vpop.f32.mrb[0].mxu0
  %v3985 = vadd.f32 0.0, %v3984
  %v3986 = vpop.f32.mrb[0].mxu0
  %3987 = vmatprep.mubr.bf16.mxu0 %v1609
  %3988 = vmatmul.mubr.bf16.gmra.mrb[0].mxu0 %v1608
  %v3989 = vpop.f32.mrb[0].mxu0
  %v3990 = vadd.f32 0.0, %v3989
  %v3991 = vpop.f32.mrb[0].mxu0
  %v3992 = vpop.f32.mrb[0].mxu0
  %v3993 = vadd.f32 0.0, %v3992
  %v3994 = vpop.f32.mrb[0].mxu0
  %3995 = vmatprep.mubr.bf16.mxu0 %v1615
  %3996 = vmatmul.mubr.bf16.gmra.mrb[0].mxu0 %v1614
  %v3997 = vpop.f32.mrb[0].mxu0
  %v3998 = vadd.f32 0.0, %v3997
  %v3999 = vpop.f32.mrb[0].mxu0
  %v4000 = vpop.f32.mrb[0].mxu0
  %v4001 = vadd.f32 0.0, %v4000
  %v4002 = vpop.f32.mrb[0].mxu0
  %4003 = vmatprep.mubr.bf16.mxu0 %v1621
  %4004 = vmatmul.mubr.bf16.gmra.mrb[0].mxu0 %v1620
  %v4005 = vpop.f32.mrb[0].mxu0
  %v4006 = vadd.f32 0.0, %v4005
  %v4007 = vpop.f32.mrb[0].mxu0
  %v4008 = vpop.f32.mrb[0].mxu0
  %v4009 = vadd.f32 0.0, %v4008
  %v4010 = vpop.f32.mrb[0].mxu0
  %4011 = vmatprep.mubr.bf16.mxu0 %v1627
  %4012 = vmatmul.mubr.bf16.gmra.mrb[0].mxu0 %v1626
  %v4013 = vpop.f32.mrb[0].mxu0
  %v4014 = vadd.f32 0.0, %v4013
  %v4015 = vpop.f32.mrb[0].mxu0
  %v4016 = vpop.f32.mrb[0].mxu0
  %v4017 = vadd.f32 0.0, %v4016
  %v4018 = vpop.f32.mrb[0].mxu0
  %4019 = vmatprep.mubr.bf16.mxu0 %v1633
  %4020 = vmatmul.mubr.bf16.gmra.mrb[0].mxu0 %v1632
  %v4021 = vpop.f32.mrb[0].mxu0
  %v4022 = vadd.f32 0.0, %v4021
  %v4023 = vpop.f32.mrb[0].mxu0
  %v4024 = vpop.f32.mrb[0].mxu0
  %v4025 = vadd.f32 0.0, %v4024
  %v4026 = vpop.f32.mrb[0].mxu0
  %4027 = vmatprep.mubr.bf16.mxu0 %v1639
  %4028 = vmatmul.mubr.bf16.gmra.mrb[0].mxu0 %v1638
  %v4029 = vpop.f32.mrb[0].mxu0
  %v4030 = vadd.f32 0.0, %v4029
  %v4031 = vpop.f32.mrb[0].mxu0
  %v4032 = vpop.f32.mrb[0].mxu0
  %v4033 = vadd.f32 0.0, %v4032
  %v4034 = vpop.f32.mrb[0].mxu0
  %4035 = vmatprep.mubr.bf16.mxu0 %v1645
  %4036 = vmatmul.mubr.bf16.gmra.mrb[0].mxu0 %v1644
  %v4037 = vpop.f32.mrb[0].mxu0
  %v4038 = vadd.f32 0.0, %v4037
  %v4039 = vpop.f32.mrb[0].mxu0
  %v4040 = vpop.f32.mrb[0].mxu0
  %v4041 = vadd.f32 0.0, %v4040
  %v4042 = vpop.f32.mrb[0].mxu0
  %4043 = vmatprep.mubr.bf16.mxu0 %v1651
  %4044 = vmatmul.mubr.bf16.gmra.mrb[0].mxu0 %v1650
  %v4045 = vpop.f32.mrb[0].mxu0
  %v4046 = vadd.f32 0.0, %v4045
  %v4047 = vpop.f32.mrb[0].mxu0
  %v4048 = vpop.f32.mrb[0].mxu0
  %v4049 = vadd.f32 0.0, %v4048
  %v4050 = vpop.f32.mrb[0].mxu0
  %4051 = vmatprep.mubr.bf16.mxu0 %v1657
  %4052 = vmatmul.mubr.bf16.gmra.mrb[0].mxu0 %v1656
  %v4053 = vpop.f32.mrb[0].mxu0
  %v4054 = vadd.f32 0.0, %v4053
  %v4055 = vpop.f32.mrb[0].mxu0
  %v4056 = vpop.f32.mrb[0].mxu0
  %v4057 = vadd.f32 0.0, %v4056
  %v4058 = vpop.f32.mrb[0].mxu0
  %4059 = vmatprep.mubr.bf16.mxu0 %v1663
  %4060 = vmatmul.mubr.bf16.gmra.mrb[0].mxu0 %v1662
  %v4061 = vpop.f32.mrb[0].mxu0
  %v4062 = vadd.f32 0.0, %v4061
  %v4063 = vpop.f32.mrb[0].mxu0
  %v4064 = vpop.f32.mrb[0].mxu0
  %v4065 = vadd.f32 0.0, %v4064
  %v4066 = vpop.f32.mrb[0].mxu0
  %4067 = vmatprep.mubr.bf16.mxu0 %v1669
  %4068 = vmatmul.mubr.bf16.gmra.mrb[0].mxu0 %v1668
  %v4069 = vpop.f32.mrb[0].mxu0
  %v4070 = vadd.f32 0.0, %v4069
  %v4071 = vpop.f32.mrb[0].mxu0
  %v4072 = vpop.f32.mrb[0].mxu0
  %v4073 = vadd.f32 0.0, %v4072
  %v4074 = vpop.f32.mrb[0].mxu0
  %4075 = vdwg.mxu0
  %4076 = vmatprep.subr.bf16.mxu0 0
  %4077 = vmatpush1.bf16.msra.mxu0 %v3857
  %4078 = vmatprep.subr.bf16.mxu0 0
  %4079 = vmatpush1.bf16.msra.mxu0 %v3858
  %4080 = vmatprep.subr.bf16.mxu0 0
  %4081 = vmatpush1.bf16.msra.mxu0 %v3859
  %4082 = vmatprep.subr.bf16.mxu0 0
  %4083 = vmatpush1.bf16.msra.mxu0 %v3860
  %4084 = vmatprep.subr.bf16.mxu0 0
  %4085 = vmatpush1.bf16.msra.mxu0 %v3861
  %4086 = vmatprep.subr.bf16.mxu0 0
  %4087 = vmatpush1.bf16.msra.mxu0 %v3862
  %4088 = vmatprep.subr.bf16.mxu0 0
  %4089 = vmatpush1.bf16.msra.mxu0 %v3863
  %4090 = vmatprep.subr.bf16.mxu0 0
  %4091 = vmatpush1.bf16.msra.mxu0 %v3864
  %4092 = vmatprep.subr.bf16.mxu0 0
  %4093 = vmatpush1.bf16.msra.mxu0 %v3865
  %4094 = vmatprep.subr.bf16.mxu0 0
  %4095 = vmatpush1.bf16.msra.mxu0 %v3866
  %4096 = vmatprep.subr.bf16.mxu0 0
  %4097 = vmatpush1.bf16.msra.mxu0 %v3867
  %4098 = vmatprep.subr.bf16.mxu0 0
  %4099 = vmatpush1.bf16.msra.mxu0 %v3868
  %4100 = vmatprep.subr.bf16.mxu0 0
  %4101 = vmatpush1.bf16.msra.mxu0 %v3869
  %4102 = vmatprep.subr.bf16.mxu0 0
  %4103 = vmatpush1.bf16.msra.mxu0 %v3870
  %4104 = vmatprep.subr.bf16.mxu0 0
  %4105 = vmatpush1.bf16.msra.mxu0 %v3871
  %4106 = vmatprep.subr.bf16.mxu0 0
  %4107 = vmatpush1.bf16.msra.mxu0 %v3872
  %4108 = vmatprep.mubr.bf16.mxu0 %v1557
  %4109 = vmatmul.mubr.bf16.gmra.mrb[0].mxu0 %v1556
  %v4110 = vpop.f32.mrb[0].mxu0
  %v4111 = vadd.f32 %v3918, %v4110
  %v4112 = vpop.f32.mrb[0].mxu0
  %v4113 = vpop.f32.mrb[0].mxu0
  %v4114 = vadd.f32 %v3921, %v4113
  %v4115 = vpop.f32.mrb[0].mxu0
  %4116 = vmatprep.mubr.bf16.mxu0 %v1563
  %4117 = vmatmul.mubr.bf16.gmra.mrb[0].mxu0 %v1562
  %v4118 = vpop.f32.mrb[0].mxu0
  %v4119 = vadd.f32 %v3926, %v4118
  %v4120 = vpop.f32.mrb[0].mxu0
  %v4121 = vpop.f32.mrb[0].mxu0
  %v4122 = vadd.f32 %v3929, %v4121
  %v4123 = vpop.f32.mrb[0].mxu0
  %4124 = vmatprep.mubr.bf16.mxu0 %v1569
  %4125 = vmatmul.mubr.bf16.gmra.mrb[0].mxu0 %v1568
  %v4126 = vpop.f32.mrb[0].mxu0
  %v4127 = vadd.f32 %v3934, %v4126
  %v4128 = vpop.f32.mrb[0].mxu0
  %v4129 = vpop.f32.mrb[0].mxu0
  %v4130 = vadd.f32 %v3937, %v4129
  %v4131 = vpop.f32.mrb[0].mxu0
  %4132 = vmatprep.mubr.bf16.mxu0 %v1575
  %4133 = vmatmul.mubr.bf16.gmra.mrb[0].mxu0 %v1574
  %v4134 = vpop.f32.mrb[0].mxu0
  %v4135 = vadd.f32 %v3942, %v4134
  %v4136 = vpop.f32.mrb[0].mxu0
  %v4137 = vpop.f32.mrb[0].mxu0
  %v4138 = vadd.f32 %v3945, %v4137
  %v4139 = vpop.f32.mrb[0].mxu0
  %4140 = vmatprep.mubr.bf16.mxu0 %v1581
  %4141 = vmatmul.mubr.bf16.gmra.mrb[0].mxu0 %v1580
  %v4142 = vpop.f32.mrb[0].mxu0
  %v4143 = vadd.f32 %v3950, %v4142
  %v4144 = vpop.f32.mrb[0].mxu0
  %v4145 = vpop.f32.mrb[0].mxu0
  %v4146 = vadd.f32 %v3953, %v4145
  %v4147 = vpop.f32.mrb[0].mxu0
  %4148 = vmatprep.mubr.bf16.mxu0 %v1587
  %4149 = vmatmul.mubr.bf16.gmra.mrb[0].mxu0 %v1586
  %v4150 = vpop.f32.mrb[0].mxu0
  %v4151 = vadd.f32 %v3958, %v4150
  %v4152 = vpop.f32.mrb[0].mxu0
  %v4153 = vpop.f32.mrb[0].mxu0
  %v4154 = vadd.f32 %v3961, %v4153
  %v4155 = vpop.f32.mrb[0].mxu0
  %4156 = vmatprep.mubr.bf16.mxu0 %v1593
  %4157 = vmatmul.mubr.bf16.gmra.mrb[0].mxu0 %v1592
  %v4158 = vpop.f32.mrb[0].mxu0
  %v4159 = vadd.f32 %v3966, %v4158
  %v4160 = vpop.f32.mrb[0].mxu0
  %v4161 = vpop.f32.mrb[0].mxu0
  %v4162 = vadd.f32 %v3969, %v4161
  %v4163 = vpop.f32.mrb[0].mxu0
  %4164 = vmatprep.mubr.bf16.mxu0 %v1599
  %4165 = vmatmul.mubr.bf16.gmra.mrb[0].mxu0 %v1598
  %v4166 = vpop.f32.mrb[0].mxu0
  %v4167 = vadd.f32 %v3974, %v4166
  %v4168 = vpop.f32.mrb[0].mxu0
  %v4169 = vpop.f32.mrb[0].mxu0
  %v4170 = vadd.f32 %v3977, %v4169
  %v4171 = vpop.f32.mrb[0].mxu0
  %4172 = vmatprep.mubr.bf16.mxu0 %v1605
  %4173 = vmatmul.mubr.bf16.gmra.mrb[0].mxu0 %v1604
  %v4174 = vpop.f32.mrb[0].mxu0
  %v4175 = vadd.f32 %v3982, %v4174
  %v4176 = vpop.f32.mrb[0].mxu0
  %v4177 = vpop.f32.mrb[0].mxu0
  %v4178 = vadd.f32 %v3985, %v4177
  %v4179 = vpop.f32.mrb[0].mxu0
  %4180 = vmatprep.mubr.bf16.mxu0 %v1611
  %4181 = vmatmul.mubr.bf16.gmra.mrb[0].mxu0 %v1610
  %v4182 = vpop.f32.mrb[0].mxu0
  %v4183 = vadd.f32 %v3990, %v4182
  %v4184 = vpop.f32.mrb[0].mxu0
  %v4185 = vpop.f32.mrb[0].mxu0
  %v4186 = vadd.f32 %v3993, %v4185
  %v4187 = vpop.f32.mrb[0].mxu0
  %4188 = vmatprep.mubr.bf16.mxu0 %v1617
  %4189 = vmatmul.mubr.bf16.gmra.mrb[0].mxu0 %v1616
  %v4190 = vpop.f32.mrb[0].mxu0
  %v4191 = vadd.f32 %v3998, %v4190
  %v4192 = vpop.f32.mrb[0].mxu0
  %v4193 = vpop.f32.mrb[0].mxu0
  %v4194 = vadd.f32 %v4001, %v4193
  %v4195 = vpop.f32.mrb[0].mxu0
  %4196 = vmatprep.mubr.bf16.mxu0 %v1623
  %4197 = vmatmul.mubr.bf16.gmra.mrb[0].mxu0 %v1622
  %v4198 = vpop.f32.mrb[0].mxu0
  %v4199 = vadd.f32 %v4006, %v4198
  %v4200 = vpop.f32.mrb[0].mxu0
  %v4201 = vpop.f32.mrb[0].mxu0
  %v4202 = vadd.f32 %v4009, %v4201
  %v4203 = vpop.f32.mrb[0].mxu0
  %4204 = vmatprep.mubr.bf16.mxu0 %v1629
  %4205 = vmatmul.mubr.bf16.gmra.mrb[0].mxu0 %v1628
  %v4206 = vpop.f32.mrb[0].mxu0
  %v4207 = vadd.f32 %v4014, %v4206
  %v4208 = vpop.f32.mrb[0].mxu0
  %v4209 = vpop.f32.mrb[0].mxu0
  %v4210 = vadd.f32 %v4017, %v4209
  %v4211 = vpop.f32.mrb[0].mxu0
  %4212 = vmatprep.mubr.bf16.mxu0 %v1635
  %4213 = vmatmul.mubr.bf16.gmra.mrb[0].mxu0 %v1634
  %v4214 = vpop.f32.mrb[0].mxu0
  %v4215 = vadd.f32 %v4022, %v4214
  %v4216 = vpop.f32.mrb[0].mxu0
  %v4217 = vpop.f32.mrb[0].mxu0
  %v4218 = vadd.f32 %v4025, %v4217
  %v4219 = vpop.f32.mrb[0].mxu0
  %4220 = vmatprep.mubr.bf16.mxu0 %v1641
  %4221 = vmatmul.mubr.bf16.gmra.mrb[0].mxu0 %v1640
  %v4222 = vpop.f32.mrb[0].mxu0
  %v4223 = vadd.f32 %v4030, %v4222
  %v4224 = vpop.f32.mrb[0].mxu0
  %v4225 = vpop.f32.mrb[0].mxu0
  %v4226 = vadd.f32 %v4033, %v4225
  %v4227 = vpop.f32.mrb[0].mxu0
  %4228 = vmatprep.mubr.bf16.mxu0 %v1647
  %4229 = vmatmul.mubr.bf16.gmra.mrb[0].mxu0 %v1646
  %v4230 = vpop.f32.mrb[0].mxu0
  %v4231 = vadd.f32 %v4038, %v4230
  %v4232 = vpop.f32.mrb[0].mxu0
  %v4233 = vpop.f32.mrb[0].mxu0
  %v4234 = vadd.f32 %v4041, %v4233
  %v4235 = vpop.f32.mrb[0].mxu0
  %4236 = vmatprep.mubr.bf16.mxu0 %v1653
  %4237 = vmatmul.mubr.bf16.gmra.mrb[0].mxu0 %v1652
  %v4238 = vpop.f32.mrb[0].mxu0
  %v4239 = vadd.f32 %v4046, %v4238
  %v4240 = vpop.f32.mrb[0].mxu0
  %v4241 = vpop.f32.mrb[0].mxu0
  %v4242 = vadd.f32 %v4049, %v4241
  %v4243 = vpop.f32.mrb[0].mxu0
  %4244 = vmatprep.mubr.bf16.mxu0 %v1659
  %4245 = vmatmul.mubr.bf16.gmra.mrb[0].mxu0 %v1658
  %v4246 = vpop.f32.mrb[0].mxu0
  %v4247 = vadd.f32 %v4054, %v4246
  %v4248 = vpop.f32.mrb[0].mxu0
  %v4249 = vpop.f32.mrb[0].mxu0
  %v4250 = vadd.f32 %v4057, %v4249
  %v4251 = vpop.f32.mrb[0].mxu0
  %4252 = vmatprep.mubr.bf16.mxu0 %v1665
  %4253 = vmatmul.mubr.bf16.gmra.mrb[0].mxu0 %v1664
  %v4254 = vpop.f32.mrb[0].mxu0
  %v4255 = vadd.f32 %v4062, %v4254
  %v4256 = vpop.f32.mrb[0].mxu0
  %v4257 = vpop.f32.mrb[0].mxu0
  %v4258 = vadd.f32 %v4065, %v4257
  %v4259 = vpop.f32.mrb[0].mxu0
  %4260 = vmatprep.mubr.bf16.mxu0 %v1671
  %4261 = vmatmul.mubr.bf16.gmra.mrb[0].mxu0 %v1670
  %v4262 = vpop.f32.mrb[0].mxu0
  %v4263 = vadd.f32 %v4070, %v4262
  %v4264 = vpop.f32.mrb[0].mxu0
  %v4265 = vpop.f32.mrb[0].mxu0
  %v4266 = vadd.f32 %v4073, %v4265
  %v4267 = vpop.f32.mrb[0].mxu0
  %4268 = vdwg.mxu0
  %4269 = vmatprep.subr.bf16.mxu0 0
  %4270 = vmatpush1.bf16.msra.mxu0 %v3873
  %4271 = vmatprep.subr.bf16.mxu0 0
  %4272 = vmatpush1.bf16.msra.mxu0 %v3874
  %4273 = vmatprep.subr.bf16.mxu0 0
  %4274 = vmatpush1.bf16.msra.mxu0 %v3875
  %4275 = vmatprep.subr.bf16.mxu0 0
  %4276 = vmatpush1.bf16.msra.mxu0 %v3876
  %4277 = vmatprep.subr.bf16.mxu0 0
  %4278 = vmatpush1.bf16.msra.mxu0 %v3877
  %4279 = vmatprep.subr.bf16.mxu0 0
  %4280 = vmatpush1.bf16.msra.mxu0 %v3878
  %4281 = vmatprep.subr.bf16.mxu0 0
  %4282 = vmatpush1.bf16.msra.mxu0 %v3879
  %4283 = vmatprep.subr.bf16.mxu0 0
  %4284 = vmatpush1.bf16.msra.mxu0 %v3880
  %4285 = vmatprep.subr.bf16.mxu0 0
  %4286 = vmatpush1.bf16.msra.mxu0 %v3881
  %4287 = vmatprep.subr.bf16.mxu0 0
  %4288 = vmatpush1.bf16.msra.mxu0 %v3882
  %4289 = vmatprep.subr.bf16.mxu0 0
  %4290 = vmatpush1.bf16.msra.mxu0 0
  %4291 = vmatprep.subr.bf16.mxu0 0
  %4292 = vmatpush1.bf16.msra.mxu0 0
  %4293 = vmatprep.subr.bf16.mxu0 0
  %4294 = vmatpush1.bf16.msra.mxu0 0
  %4295 = vmatprep.subr.bf16.mxu0 0
  %4296 = vmatpush1.bf16.msra.mxu0 0
  %4297 = vmatprep.subr.bf16.mxu0 0
  %4298 = vmatpush1.bf16.msra.mxu0 0
  %4299 = vmatprep.subr.bf16.mxu0 0
  %4300 = vmatpush1.bf16.msra.mxu0 0
  %4301 = vmatprep.mubr.bf16.mxu0 %v1776
  %4302 = vmatmul.mubr.bf16.gmra.mrb[0].mxu0 %v1558
  %v4303 = vpop.f32.mrb[0].mxu0
  %v4304 = vadd.f32 %v4111, %v4303
  %v4305 = vpop.f32.mrb[0].mxu0
  %v4306 = vpop.f32.mrb[0].mxu0
  %v4307 = vadd.f32 %v4114, %v4306
  %v4308 = vpop.f32.mrb[0].mxu0
  %4309 = vmatprep.mubr.bf16.mxu0 %v1779
  %4310 = vmatmul.mubr.bf16.gmra.mrb[0].mxu0 %v1564
  %v4311 = vpop.f32.mrb[0].mxu0
  %v4312 = vadd.f32 %v4119, %v4311
  %v4313 = vpop.f32.mrb[0].mxu0
  %v4314 = vpop.f32.mrb[0].mxu0
  %v4315 = vadd.f32 %v4122, %v4314
  %v4316 = vpop.f32.mrb[0].mxu0
  %4317 = vmatprep.mubr.bf16.mxu0 %v1782
  %4318 = vmatmul.mubr.bf16.gmra.mrb[0].mxu0 %v1570
  %v4319 = vpop.f32.mrb[0].mxu0
  %v4320 = vadd.f32 %v4127, %v4319
  %v4321 = vpop.f32.mrb[0].mxu0
  %v4322 = vpop.f32.mrb[0].mxu0
  %v4323 = vadd.f32 %v4130, %v4322
  %v4324 = vpop.f32.mrb[0].mxu0
  %4325 = vmatprep.mubr.bf16.mxu0 %v1785
  %4326 = vmatmul.mubr.bf16.gmra.mrb[0].mxu0 %v1576
  %v4327 = vpop.f32.mrb[0].mxu0
  %v4328 = vadd.f32 %v4135, %v4327
  %v4329 = vpop.f32.mrb[0].mxu0
  %v4330 = vpop.f32.mrb[0].mxu0
  %v4331 = vadd.f32 %v4138, %v4330
  %v4332 = vpop.f32.mrb[0].mxu0
  %4333 = vmatprep.mubr.bf16.mxu0 %v1788
  %4334 = vmatmul.mubr.bf16.gmra.mrb[0].mxu0 %v1582
  %v4335 = vpop.f32.mrb[0].mxu0
  %v4336 = vadd.f32 %v4143, %v4335
  %v4337 = vpop.f32.mrb[0].mxu0
  %v4338 = vpop.f32.mrb[0].mxu0
  %v4339 = vadd.f32 %v4146, %v4338
  %v4340 = vpop.f32.mrb[0].mxu0
  %4341 = vmatprep.mubr.bf16.mxu0 %v1791
  %4342 = vmatmul.mubr.bf16.gmra.mrb[0].mxu0 %v1588
  %v4343 = vpop.f32.mrb[0].mxu0
  %v4344 = vadd.f32 %v4151, %v4343
  %v4345 = vpop.f32.mrb[0].mxu0
  %v4346 = vpop.f32.mrb[0].mxu0
  %v4347 = vadd.f32 %v4154, %v4346
  %v4348 = vpop.f32.mrb[0].mxu0
  %4349 = vmatprep.mubr.bf16.mxu0 %v1794
  %4350 = vmatmul.mubr.bf16.gmra.mrb[0].mxu0 %v1594
  %v4351 = vpop.f32.mrb[0].mxu0
  %v4352 = vadd.f32 %v4159, %v4351
  %v4353 = vpop.f32.mrb[0].mxu0
  %v4354 = vpop.f32.mrb[0].mxu0
  %v4355 = vadd.f32 %v4162, %v4354
  %v4356 = vpop.f32.mrb[0].mxu0
  %4357 = vmatprep.mubr.bf16.mxu0 %v1797
  %4358 = vmatmul.mubr.bf16.gmra.mrb[0].mxu0 %v1600
  %v4359 = vpop.f32.mrb[0].mxu0
  %v4360 = vadd.f32 %v4167, %v4359
  %v4361 = vpop.f32.mrb[0].mxu0
  %v4362 = vpop.f32.mrb[0].mxu0
  %v4363 = vadd.f32 %v4170, %v4362
  %v4364 = vpop.f32.mrb[0].mxu0
  %4365 = vmatprep.mubr.bf16.mxu0 %v1800
  %4366 = vmatmul.mubr.bf16.gmra.mrb[0].mxu0 %v1606
  %v4367 = vpop.f32.mrb[0].mxu0
  %v4368 = vadd.f32 %v4175, %v4367
  %v4369 = vpop.f32.mrb[0].mxu0
  %v4370 = vpop.f32.mrb[0].mxu0
  %v4371 = vadd.f32 %v4178, %v4370
  %v4372 = vpop.f32.mrb[0].mxu0
  %4373 = vmatprep.mubr.bf16.mxu0 %v1803
  %4374 = vmatmul.mubr.bf16.gmra.mrb[0].mxu0 %v1612
  %v4375 = vpop.f32.mrb[0].mxu0
  %v4376 = vadd.f32 %v4183, %v4375
  %v4377 = vpop.f32.mrb[0].mxu0
  %v4378 = vpop.f32.mrb[0].mxu0
  %v4379 = vadd.f32 %v4186, %v4378
  %v4380 = vpop.f32.mrb[0].mxu0
  %4381 = vmatprep.mubr.bf16.mxu0 %v1806
  %4382 = vmatmul.mubr.bf16.gmra.mrb[0].mxu0 %v1618
  %v4383 = vpop.f32.mrb[0].mxu0
  %v4384 = vadd.f32 %v4191, %v4383
  %v4385 = vpop.f32.mrb[0].mxu0
  %v4386 = vpop.f32.mrb[0].mxu0
  %v4387 = vadd.f32 %v4194, %v4386
  %v4388 = vpop.f32.mrb[0].mxu0
  %4389 = vmatprep.mubr.bf16.mxu0 %v1809
  %4390 = vmatmul.mubr.bf16.gmra.mrb[0].mxu0 %v1624
  %v4391 = vpop.f32.mrb[0].mxu0
  %v4392 = vadd.f32 %v4199, %v4391
  %v4393 = vpop.f32.mrb[0].mxu0
  %v4394 = vpop.f32.mrb[0].mxu0
  %v4395 = vadd.f32 %v4202, %v4394
  %v4396 = vpop.f32.mrb[0].mxu0
  %4397 = vmatprep.mubr.bf16.mxu0 %v1812
  %4398 = vmatmul.mubr.bf16.gmra.mrb[0].mxu0 %v1630
  %v4399 = vpop.f32.mrb[0].mxu0
  %v4400 = vadd.f32 %v4207, %v4399
  %v4401 = vpop.f32.mrb[0].mxu0
  %v4402 = vpop.f32.mrb[0].mxu0
  %v4403 = vadd.f32 %v4210, %v4402
  %v4404 = vpop.f32.mrb[0].mxu0
  %4405 = vmatprep.mubr.bf16.mxu0 %v1815
  %4406 = vmatmul.mubr.bf16.gmra.mrb[0].mxu0 %v1636
  %v4407 = vpop.f32.mrb[0].mxu0
  %v4408 = vadd.f32 %v4215, %v4407
  %v4409 = vpop.f32.mrb[0].mxu0
  %v4410 = vpop.f32.mrb[0].mxu0
  %v4411 = vadd.f32 %v4218, %v4410
  %v4412 = vpop.f32.mrb[0].mxu0
  %4413 = vmatprep.mubr.bf16.mxu0 %v1818
  %4414 = vmatmul.mubr.bf16.gmra.mrb[0].mxu0 %v1642
  %v4415 = vpop.f32.mrb[0].mxu0
  %v4416 = vadd.f32 %v4223, %v4415
  %v4417 = vpop.f32.mrb[0].mxu0
  %v4418 = vpop.f32.mrb[0].mxu0
  %v4419 = vadd.f32 %v4226, %v4418
  %v4420 = vpop.f32.mrb[0].mxu0
  %4421 = vmatprep.mubr.bf16.mxu0 %v1821
  %4422 = vmatmul.mubr.bf16.gmra.mrb[0].mxu0 %v1648
  %v4423 = vpop.f32.mrb[0].mxu0
  %v4424 = vadd.f32 %v4231, %v4423
  %v4425 = vpop.f32.mrb[0].mxu0
  %v4426 = vpop.f32.mrb[0].mxu0
  %v4427 = vadd.f32 %v4234, %v4426
  %v4428 = vpop.f32.mrb[0].mxu0
  %4429 = vmatprep.mubr.bf16.mxu0 %v1824
  %4430 = vmatmul.mubr.bf16.gmra.mrb[0].mxu0 %v1654
  %v4431 = vpop.f32.mrb[0].mxu0
  %v4432 = vadd.f32 %v4239, %v4431
  %v4433 = vpop.f32.mrb[0].mxu0
  %v4434 = vpop.f32.mrb[0].mxu0
  %v4435 = vadd.f32 %v4242, %v4434
  %v4436 = vpop.f32.mrb[0].mxu0
  %4437 = vmatprep.mubr.bf16.mxu0 %v1827
  %4438 = vmatmul.mubr.bf16.gmra.mrb[0].mxu0 %v1660
  %v4439 = vpop.f32.mrb[0].mxu0
  %v4440 = vadd.f32 %v4247, %v4439
  %v4441 = vpop.f32.mrb[0].mxu0
  %v4442 = vpop.f32.mrb[0].mxu0
  %v4443 = vadd.f32 %v4250, %v4442
  %v4444 = vpop.f32.mrb[0].mxu0
  %4445 = vmatprep.mubr.bf16.mxu0 %v1830
  %4446 = vmatmul.mubr.bf16.gmra.mrb[0].mxu0 %v1666
  %v4447 = vpop.f32.mrb[0].mxu0
  %v4448 = vadd.f32 %v4255, %v4447
  %v4449 = vpop.f32.mrb[0].mxu0
  %v4450 = vpop.f32.mrb[0].mxu0
  %v4451 = vadd.f32 %v4258, %v4450
  %v4452 = vpop.f32.mrb[0].mxu0
  %4453 = vmatprep.mubr.bf16.mxu0 %v1833
  %4454 = vmatmul.mubr.bf16.gmra.mrb[0].mxu0 %v1672
  %v4455 = vpop.f32.mrb[0].mxu0
  %v4456 = vadd.f32 %v4263, %v4455
  %v4457 = vpop.f32.mrb[0].mxu0
  %v4458 = vpop.f32.mrb[0].mxu0
  %v4459 = vadd.f32 %v4266, %v4458
  %v4460 = vpop.f32.mrb[0].mxu0
  %4461 = vdwg.mxu0
  %v4462 = vmax.f32 %v4304, %v4384
  %v4463 = vmax.f32 %v4307, %v4387
  %v4464 = vmax.f32 %v4312, %v4392
  %v4465 = vmax.f32 %v4315, %v4395
  %v4466 = vmax.f32 %v4320, %v4400
  %v4467 = vmax.f32 %v4323, %v4403
  %v4468 = vmax.f32 %v4328, %v4408
  %v4469 = vmax.f32 %v4331, %v4411
  %v4470 = vmax.f32 %v4336, %v4416
  %v4471 = vmax.f32 %v4339, %v4419
  %v4472 = vmax.f32 %v4344, %v4424
  %v4473 = vmax.f32 %v4347, %v4427
  %v4474 = vmax.f32 %v4352, %v4432
  %v4475 = vmax.f32 %v4355, %v4435
  %v4476 = vmax.f32 %v4360, %v4440
  %v4477 = vmax.f32 %v4363, %v4443
  %v4478 = vmax.f32 %v4368, %v4448
  %v4479 = vmax.f32 %v4371, %v4451
  %v4480 = vmax.f32 %v4376, %v4456
  %v4481 = vmax.f32 %v4379, %v4459
  %v4482 = vmax.f32 %v4462, %v4464
  %v4483 = vmax.f32 %v4463, %v4465
  %v4484 = vmax.f32 %v4466, %v4468
  %v4485 = vmax.f32 %v4467, %v4469
  %v4486 = vmax.f32 %v4470, %v4472
  %v4487 = vmax.f32 %v4471, %v4473
  %v4488 = vmax.f32 %v4474, %v4476
  %v4489 = vmax.f32 %v4475, %v4477
  %v4490 = vmax.f32 %v4478, %v4480
  %v4491 = vmax.f32 %v4479, %v4481
  %v4492 = vadd.f32 %v4482, %v318
  %v4493 = vadd.f32 %v4483, %v323
  %v4494 = vadd.f32 %v4484, %v328
  %v4495 = vadd.f32 %v4485, %v333
  %v4496 = vadd.f32 %v4486, %v338
  %v4497 = vadd.f32 %v4487, %v343
  %v4498 = vadd.f32 %v4488, %v348
  %v4499 = vadd.f32 %v4489, %v353
  %v4500 = vadd.f32 %v4490, %v358
  %v4501 = vadd.f32 %v4491, %v363
  %v4502 = vmax.f32 %v4492, 0.0
  %v4503 = vmax.f32 %v4493, 0.0
  %v4504 = vmax.f32 %v4494, 0.0
  %v4505 = vmax.f32 %v4495, 0.0
  %v4506 = vmax.f32 %v4496, 0.0
  %v4507 = vmax.f32 %v4497, 0.0
  %v4508 = vmax.f32 %v4498, 0.0
  %v4509 = vmax.f32 %v4499, 0.0
  %v4510 = vmax.f32 %v4500, 0.0
  %v4511 = vmax.f32 %v4501, 0.0
  %v4512 = vpack.c.bf16 %v4503, %v4502
  %v4513 = vpack.c.bf16 %v4505, %v4504
  %v4514 = vpack.c.bf16 %v4507, %v4506
  %v4515 = vpack.c.bf16 %v4509, %v4508
  %v4516 = vpack.c.bf16 %v4511, %v4510
  %s4517 = scalar_lea.vmem [#allocation3], 120
  %4518 = vst [vmem:[%s4517] sm:$0xff] %v4512
  %4519 = vst [vmem:[%s4517 + $0x8] sm:$0xff] %v4513
  %4520 = vst [vmem:[%s4517 + $0x10] sm:$0xff] %v4514
  %4521 = vst [vmem:[%s4517 + $0x18] sm:$0xff] %v4515
  %4522 = vst [vmem:[%s4517 + $0x20] sm:$0xff] %v4516
  %s4523 = scalar_lea.vmem [#allocation2], 448
  %v4524 = vld [vmem:[%s4523] sm:$0xff]
  %v4525 = vld [vmem:[%s4523 + $0x8] sm:$0xff]
  %v4526 = vld [vmem:[%s4523 + $0x10] sm:$0xff]
  %v4527 = vld [vmem:[%s4523 + $0x18] sm:$0xff]
  %v4528 = vld [vmem:[%s4523 + $0x20] sm:$0xff]
  %v4529 = vld [vmem:[%s4523 + $0x28] sm:$0xff]
  %v4530 = vld [vmem:[%s4523 + $0x30] sm:$0xff]
  %v4531 = vld [vmem:[%s4523 + $0x38] sm:$0xff]
  %v4532 = vld [vmem:[%s4523 + $0x40] sm:$0xff]
  %v4533 = vld [vmem:[%s4523 + $0x48] sm:$0xff]
  %v4534 = vld [vmem:[%s4523 + $0x50] sm:$0xff]
  %v4535 = vld [vmem:[%s4523 + $0x58] sm:$0xff]
  %v4536 = vld [vmem:[%s4523 + $0x60] sm:$0xff]
  %v4537 = vld [vmem:[%s4523 + $0x68] sm:$0xff]
  %v4538 = vld [vmem:[%s4523 + $0x70] sm:$0xff]
  %v4539 = vld [vmem:[%s4523 + $0x78] sm:$0xff]
  %v4540 = vld [vmem:[%s4523 + $0x80] sm:$0xff]
  %v4541 = vld [vmem:[%s4523 + $0x88] sm:$0xff]
  %v4542 = vld [vmem:[%s4523 + $0x90] sm:$0xff]
  %v4543 = vld [vmem:[%s4523 + $0x98] sm:$0xff]
  %v4544 = vld [vmem:[%s4523 + $0xa0] sm:$0xff]
  %v4545 = vld [vmem:[%s4523 + $0xa8] sm:$0xff]
  %v4546 = vld [vmem:[%s4523 + $0xb0] sm:$0xff]
  %v4547 = vld [vmem:[%s4523 + $0xb8] sm:$0xff]
  %v4548 = vld [vmem:[%s4523 + $0xc0] sm:$0xff]
  %v4549 = vld [vmem:[%s4523 + $0xc8] sm:$0xff]
  %v4550 = vld [vmem:[%s4523 + $0xd0] sm:$0xff]
  %v4551 = vld [vmem:[%s4523 + $0xd8] sm:$0xff]
  %v4552 = vld [vmem:[%s4523 + $0xe0] sm:$0xff]
  %v4553 = vld [vmem:[%s4523 + $0xe8] sm:$0xff]
  %v4554 = vld [vmem:[%s4523 + $0xf0] sm:$0xff]
  %v4555 = vld [vmem:[%s4523 + $0xf8] sm:$0xff]
  %v4556 = vld [vmem:[%s4523 + $0x100] sm:$0xff]
  %v4557 = vld [vmem:[%s4523 + $0x108] sm:$0xff]
  %v4558 = vld [vmem:[%s4523 + $0x110] sm:$0xff]
  %v4559 = vld [vmem:[%s4523 + $0x118] sm:$0xff]
  %v4560 = vld [vmem:[%s4523 + $0x120] sm:$0xff]
  %v4561 = vld [vmem:[%s4523 + $0x128] sm:$0xff]
  %v4562 = vld [vmem:[%s4523 + $0x130] sm:$0xff]
  %v4563 = vld [vmem:[%s4523 + $0x138] sm:$0xff]
  %v4564 = vld [vmem:[%s4523 + $0x140] sm:$0xff]
  %v4565 = vld [vmem:[%s4523 + $0x148] sm:$0xff]
  %4566 = vmatprep.subr.bf16.mxu0 0
  %4567 = vmatpush1.bf16.msra.mxu0 %v4524
  %4568 = vmatprep.subr.bf16.mxu0 0
  %4569 = vmatpush1.bf16.msra.mxu0 %v4525
  %4570 = vmatprep.subr.bf16.mxu0 0
  %4571 = vmatpush1.bf16.msra.mxu0 %v4526
  %4572 = vmatprep.subr.bf16.mxu0 0
  %4573 = vmatpush1.bf16.msra.mxu0 %v4527
  %4574 = vmatprep.subr.bf16.mxu0 0
  %4575 = vmatpush1.bf16.msra.mxu0 %v4528
  %4576 = vmatprep.subr.bf16.mxu0 0
  %4577 = vmatpush1.bf16.msra.mxu0 %v4529
  %4578 = vmatprep.subr.bf16.mxu0 0
  %4579 = vmatpush1.bf16.msra.mxu0 %v4530
  %4580 = vmatprep.subr.bf16.mxu0 0
  %4581 = vmatpush1.bf16.msra.mxu0 %v4531
  %4582 = vmatprep.subr.bf16.mxu0 0
  %4583 = vmatpush1.bf16.msra.mxu0 %v4532
  %4584 = vmatprep.subr.bf16.mxu0 0
  %4585 = vmatpush1.bf16.msra.mxu0 %v4533
  %4586 = vmatprep.subr.bf16.mxu0 0
  %4587 = vmatpush1.bf16.msra.mxu0 %v4534
  %4588 = vmatprep.subr.bf16.mxu0 0
  %4589 = vmatpush1.bf16.msra.mxu0 %v4535
  %4590 = vmatprep.subr.bf16.mxu0 0
  %4591 = vmatpush1.bf16.msra.mxu0 %v4536
  %4592 = vmatprep.subr.bf16.mxu0 0
  %4593 = vmatpush1.bf16.msra.mxu0 %v4537
  %4594 = vmatprep.subr.bf16.mxu0 0
  %4595 = vmatpush1.bf16.msra.mxu0 %v4538
  %4596 = vmatprep.subr.bf16.mxu0 0
  %4597 = vmatpush1.bf16.msra.mxu0 %v4539
  %4598 = vmatprep.mubr.bf16.mxu0 %v1555
  %4599 = vmatmul.mubr.bf16.gmra.mrb[0].mxu0 %v1554
  %v4600 = vpop.f32.mrb[0].mxu0
  %v4601 = vadd.f32 0.0, %v4600
  %v4602 = vpop.f32.mrb[0].mxu0
  %v4603 = vpop.f32.mrb[0].mxu0
  %v4604 = vadd.f32 0.0, %v4603
  %v4605 = vpop.f32.mrb[0].mxu0
  %4606 = vmatprep.mubr.bf16.mxu0 %v1561
  %4607 = vmatmul.mubr.bf16.gmra.mrb[0].mxu0 %v1560
  %v4608 = vpop.f32.mrb[0].mxu0
  %v4609 = vadd.f32 0.0, %v4608
  %v4610 = vpop.f32.mrb[0].mxu0
  %v4611 = vpop.f32.mrb[0].mxu0
  %v4612 = vadd.f32 0.0, %v4611
  %v4613 = vpop.f32.mrb[0].mxu0
  %4614 = vmatprep.mubr.bf16.mxu0 %v1567
  %4615 = vmatmul.mubr.bf16.gmra.mrb[0].mxu0 %v1566
  %v4616 = vpop.f32.mrb[0].mxu0
  %v4617 = vadd.f32 0.0, %v4616
  %v4618 = vpop.f32.mrb[0].mxu0
  %v4619 = vpop.f32.mrb[0].mxu0
  %v4620 = vadd.f32 0.0, %v4619
  %v4621 = vpop.f32.mrb[0].mxu0
  %4622 = vmatprep.mubr.bf16.mxu0 %v1573
  %4623 = vmatmul.mubr.bf16.gmra.mrb[0].mxu0 %v1572
  %v4624 = vpop.f32.mrb[0].mxu0
  %v4625 = vadd.f32 0.0, %v4624
  %v4626 = vpop.f32.mrb[0].mxu0
  %v4627 = vpop.f32.mrb[0].mxu0
  %v4628 = vadd.f32 0.0, %v4627
  %v4629 = vpop.f32.mrb[0].mxu0
  %4630 = vmatprep.mubr.bf16.mxu0 %v1579
  %4631 = vmatmul.mubr.bf16.gmra.mrb[0].mxu0 %v1578
  %v4632 = vpop.f32.mrb[0].mxu0
  %v4633 = vadd.f32 0.0, %v4632
  %v4634 = vpop.f32.mrb[0].mxu0
  %v4635 = vpop.f32.mrb[0].mxu0
  %v4636 = vadd.f32 0.0, %v4635
  %v4637 = vpop.f32.mrb[0].mxu0
  %4638 = vmatprep.mubr.bf16.mxu0 %v1585
  %4639 = vmatmul.mubr.bf16.gmra.mrb[0].mxu0 %v1584
  %v4640 = vpop.f32.mrb[0].mxu0
  %v4641 = vadd.f32 0.0, %v4640
  %v4642 = vpop.f32.mrb[0].mxu0
  %v4643 = vpop.f32.mrb[0].mxu0
  %v4644 = vadd.f32 0.0, %v4643
  %v4645 = vpop.f32.mrb[0].mxu0
  %4646 = vmatprep.mubr.bf16.mxu0 %v1591
  %4647 = vmatmul.mubr.bf16.gmra.mrb[0].mxu0 %v1590
  %v4648 = vpop.f32.mrb[0].mxu0
  %v4649 = vadd.f32 0.0, %v4648
  %v4650 = vpop.f32.mrb[0].mxu0
  %v4651 = vpop.f32.mrb[0].mxu0
  %v4652 = vadd.f32 0.0, %v4651
  %v4653 = vpop.f32.mrb[0].mxu0
  %4654 = vmatprep.mubr.bf16.mxu0 %v1597
  %4655 = vmatmul.mubr.bf16.gmra.mrb[0].mxu0 %v1596
  %v4656 = vpop.f32.mrb[0].mxu0
  %v4657 = vadd.f32 0.0, %v4656
  %v4658 = vpop.f32.mrb[0].mxu0
  %v4659 = vpop.f32.mrb[0].mxu0
  %v4660 = vadd.f32 0.0, %v4659
  %v4661 = vpop.f32.mrb[0].mxu0
  %4662 = vmatprep.mubr.bf16.mxu0 %v1603
  %4663 = vmatmul.mubr.bf16.gmra.mrb[0].mxu0 %v1602
  %v4664 = vpop.f32.mrb[0].mxu0
  %v4665 = vadd.f32 0.0, %v4664
  %v4666 = vpop.f32.mrb[0].mxu0
  %v4667 = vpop.f32.mrb[0].mxu0
  %v4668 = vadd.f32 0.0, %v4667
  %v4669 = vpop.f32.mrb[0].mxu0
  %4670 = vmatprep.mubr.bf16.mxu0 %v1609
  %4671 = vmatmul.mubr.bf16.gmra.mrb[0].mxu0 %v1608
  %v4672 = vpop.f32.mrb[0].mxu0
  %v4673 = vadd.f32 0.0, %v4672
  %v4674 = vpop.f32.mrb[0].mxu0
  %v4675 = vpop.f32.mrb[0].mxu0
  %v4676 = vadd.f32 0.0, %v4675
  %v4677 = vpop.f32.mrb[0].mxu0
  %4678 = vmatprep.mubr.bf16.mxu0 %v1615
  %4679 = vmatmul.mubr.bf16.gmra.mrb[0].mxu0 %v1614
  %v4680 = vpop.f32.mrb[0].mxu0
  %v4681 = vadd.f32 0.0, %v4680
  %v4682 = vpop.f32.mrb[0].mxu0
  %v4683 = vpop.f32.mrb[0].mxu0
  %v4684 = vadd.f32 0.0, %v4683
  %v4685 = vpop.f32.mrb[0].mxu0
  %4686 = vmatprep.mubr.bf16.mxu0 %v1621
  %4687 = vmatmul.mubr.bf16.gmra.mrb[0].mxu0 %v1620
  %v4688 = vpop.f32.mrb[0].mxu0
  %v4689 = vadd.f32 0.0, %v4688
  %v4690 = vpop.f32.mrb[0].mxu0
  %v4691 = vpop.f32.mrb[0].mxu0
  %v4692 = vadd.f32 0.0, %v4691
  %v4693 = vpop.f32.mrb[0].mxu0
  %4694 = vmatprep.mubr.bf16.mxu0 %v1627
  %4695 = vmatmul.mubr.bf16.gmra.mrb[0].mxu0 %v1626
  %v4696 = vpop.f32.mrb[0].mxu0
  %v4697 = vadd.f32 0.0, %v4696
  %v4698 = vpop.f32.mrb[0].mxu0
  %v4699 = vpop.f32.mrb[0].mxu0
  %v4700 = vadd.f32 0.0, %v4699
  %v4701 = vpop.f32.mrb[0].mxu0
  %4702 = vmatprep.mubr.bf16.mxu0 %v1633
  %4703 = vmatmul.mubr.bf16.gmra.mrb[0].mxu0 %v1632
  %v4704 = vpop.f32.mrb[0].mxu0
  %v4705 = vadd.f32 0.0, %v4704
  %v4706 = vpop.f32.mrb[0].mxu0
  %v4707 = vpop.f32.mrb[0].mxu0
  %v4708 = vadd.f32 0.0, %v4707
  %v4709 = vpop.f32.mrb[0].mxu0
  %4710 = vmatprep.mubr.bf16.mxu0 %v1639
  %4711 = vmatmul.mubr.bf16.gmra.mrb[0].mxu0 %v1638
  %v4712 = vpop.f32.mrb[0].mxu0
  %v4713 = vadd.f32 0.0, %v4712
  %v4714 = vpop.f32.mrb[0].mxu0
  %v4715 = vpop.f32.mrb[0].mxu0
  %v4716 = vadd.f32 0.0, %v4715
  %v4717 = vpop.f32.mrb[0].mxu0
  %4718 = vmatprep.mubr.bf16.mxu0 %v1645
  %4719 = vmatmul.mubr.bf16.gmra.mrb[0].mxu0 %v1644
  %v4720 = vpop.f32.mrb[0].mxu0
  %v4721 = vadd.f32 0.0, %v4720
  %v4722 = vpop.f32.mrb[0].mxu0
  %v4723 = vpop.f32.mrb[0].mxu0
  %v4724 = vadd.f32 0.0, %v4723
  %v4725 = vpop.f32.mrb[0].mxu0
  %4726 = vmatprep.mubr.bf16.mxu0 %v1651
  %4727 = vmatmul.mubr.bf16.gmra.mrb[0].mxu0 %v1650
  %v4728 = vpop.f32.mrb[0].mxu0
  %v4729 = vadd.f32 0.0, %v4728
  %v4730 = vpop.f32.mrb[0].mxu0
  %v4731 = vpop.f32.mrb[0].mxu0
  %v4732 = vadd.f32 0.0, %v4731
  %v4733 = vpop.f32.mrb[0].mxu0
  %4734 = vmatprep.mubr.bf16.mxu0 %v1657
  %4735 = vmatmul.mubr.bf16.gmra.mrb[0].mxu0 %v1656
  %v4736 = vpop.f32.mrb[0].mxu0
  %v4737 = vadd.f32 0.0, %v4736
  %v4738 = vpop.f32.mrb[0].mxu0
  %v4739 = vpop.f32.mrb[0].mxu0
  %v4740 = vadd.f32 0.0, %v4739
  %v4741 = vpop.f32.mrb[0].mxu0
  %4742 = vmatprep.mubr.bf16.mxu0 %v1663
  %4743 = vmatmul.mubr.bf16.gmra.mrb[0].mxu0 %v1662
  %v4744 = vpop.f32.mrb[0].mxu0
  %v4745 = vadd.f32 0.0, %v4744
  %v4746 = vpop.f32.mrb[0].mxu0
  %v4747 = vpop.f32.mrb[0].mxu0
  %v4748 = vadd.f32 0.0, %v4747
  %v4749 = vpop.f32.mrb[0].mxu0
  %4750 = vmatprep.mubr.bf16.mxu0 %v1669
  %4751 = vmatmul.mubr.bf16.gmra.mrb[0].mxu0 %v1668
  %v4752 = vpop.f32.mrb[0].mxu0
  %v4753 = vadd.f32 0.0, %v4752
  %v4754 = vpop.f32.mrb[0].mxu0
  %v4755 = vpop.f32.mrb[0].mxu0
  %v4756 = vadd.f32 0.0, %v4755
  %v4757 = vpop.f32.mrb[0].mxu0
  %4758 = vdwg.mxu0
  %4759 = vmatprep.subr.bf16.mxu0 0
  %4760 = vmatpush1.bf16.msra.mxu0 %v4540
  %4761 = vmatprep.subr.bf16.mxu0 0
  %4762 = vmatpush1.bf16.msra.mxu0 %v4541
  %4763 = vmatprep.subr.bf16.mxu0 0
  %4764 = vmatpush1.bf16.msra.mxu0 %v4542
  %4765 = vmatprep.subr.bf16.mxu0 0
  %4766 = vmatpush1.bf16.msra.mxu0 %v4543
  %4767 = vmatprep.subr.bf16.mxu0 0
  %4768 = vmatpush1.bf16.msra.mxu0 %v4544
  %4769 = vmatprep.subr.bf16.mxu0 0
  %4770 = vmatpush1.bf16.msra.mxu0 %v4545
  %4771 = vmatprep.subr.bf16.mxu0 0
  %4772 = vmatpush1.bf16.msra.mxu0 %v4546
  %4773 = vmatprep.subr.bf16.mxu0 0
  %4774 = vmatpush1.bf16.msra.mxu0 %v4547
  %4775 = vmatprep.subr.bf16.mxu0 0
  %4776 = vmatpush1.bf16.msra.mxu0 %v4548
  %4777 = vmatprep.subr.bf16.mxu0 0
  %4778 = vmatpush1.bf16.msra.mxu0 %v4549
  %4779 = vmatprep.subr.bf16.mxu0 0
  %4780 = vmatpush1.bf16.msra.mxu0 %v4550
  %4781 = vmatprep.subr.bf16.mxu0 0
  %4782 = vmatpush1.bf16.msra.mxu0 %v4551
  %4783 = vmatprep.subr.bf16.mxu0 0
  %4784 = vmatpush1.bf16.msra.mxu0 %v4552
  %4785 = vmatprep.subr.bf16.mxu0 0
  %4786 = vmatpush1.bf16.msra.mxu0 %v4553
  %4787 = vmatprep.subr.bf16.mxu0 0
  %4788 = vmatpush1.bf16.msra.mxu0 %v4554
  %4789 = vmatprep.subr.bf16.mxu0 0
  %4790 = vmatpush1.bf16.msra.mxu0 %v4555
  %4791 = vmatprep.mubr.bf16.mxu0 %v1557
  %4792 = vmatmul.mubr.bf16.gmra.mrb[0].mxu0 %v1556
  %v4793 = vpop.f32.mrb[0].mxu0
  %v4794 = vadd.f32 %v4601, %v4793
  %v4795 = vpop.f32.mrb[0].mxu0
  %v4796 = vpop.f32.mrb[0].mxu0
  %v4797 = vadd.f32 %v4604, %v4796
  %v4798 = vpop.f32.mrb[0].mxu0
  %4799 = vmatprep.mubr.bf16.mxu0 %v1563
  %4800 = vmatmul.mubr.bf16.gmra.mrb[0].mxu0 %v1562
  %v4801 = vpop.f32.mrb[0].mxu0
  %v4802 = vadd.f32 %v4609, %v4801
  %v4803 = vpop.f32.mrb[0].mxu0
  %v4804 = vpop.f32.mrb[0].mxu0
  %v4805 = vadd.f32 %v4612, %v4804
  %v4806 = vpop.f32.mrb[0].mxu0
  %4807 = vmatprep.mubr.bf16.mxu0 %v1569
  %4808 = vmatmul.mubr.bf16.gmra.mrb[0].mxu0 %v1568
  %v4809 = vpop.f32.mrb[0].mxu0
  %v4810 = vadd.f32 %v4617, %v4809
  %v4811 = vpop.f32.mrb[0].mxu0
  %v4812 = vpop.f32.mrb[0].mxu0
  %v4813 = vadd.f32 %v4620, %v4812
  %v4814 = vpop.f32.mrb[0].mxu0
  %4815 = vmatprep.mubr.bf16.mxu0 %v1575
  %4816 = vmatmul.mubr.bf16.gmra.mrb[0].mxu0 %v1574
  %v4817 = vpop.f32.mrb[0].mxu0
  %v4818 = vadd.f32 %v4625, %v4817
  %v4819 = vpop.f32.mrb[0].mxu0
  %v4820 = vpop.f32.mrb[0].mxu0
  %v4821 = vadd.f32 %v4628, %v4820
  %v4822 = vpop.f32.mrb[0].mxu0
  %4823 = vmatprep.mubr.bf16.mxu0 %v1581
  %4824 = vmatmul.mubr.bf16.gmra.mrb[0].mxu0 %v1580
  %v4825 = vpop.f32.mrb[0].mxu0
  %v4826 = vadd.f32 %v4633, %v4825
  %v4827 = vpop.f32.mrb[0].mxu0
  %v4828 = vpop.f32.mrb[0].mxu0
  %v4829 = vadd.f32 %v4636, %v4828
  %v4830 = vpop.f32.mrb[0].mxu0
  %4831 = vmatprep.mubr.bf16.mxu0 %v1587
  %4832 = vmatmul.mubr.bf16.gmra.mrb[0].mxu0 %v1586
  %v4833 = vpop.f32.mrb[0].mxu0
  %v4834 = vadd.f32 %v4641, %v4833
  %v4835 = vpop.f32.mrb[0].mxu0
  %v4836 = vpop.f32.mrb[0].mxu0
  %v4837 = vadd.f32 %v4644, %v4836
  %v4838 = vpop.f32.mrb[0].mxu0
  %4839 = vmatprep.mubr.bf16.mxu0 %v1593
  %4840 = vmatmul.mubr.bf16.gmra.mrb[0].mxu0 %v1592
  %v4841 = vpop.f32.mrb[0].mxu0
  %v4842 = vadd.f32 %v4649, %v4841
  %v4843 = vpop.f32.mrb[0].mxu0
  %v4844 = vpop.f32.mrb[0].mxu0
  %v4845 = vadd.f32 %v4652, %v4844
  %v4846 = vpop.f32.mrb[0].mxu0
  %4847 = vmatprep.mubr.bf16.mxu0 %v1599
  %4848 = vmatmul.mubr.bf16.gmra.mrb[0].mxu0 %v1598
  %v4849 = vpop.f32.mrb[0].mxu0
  %v4850 = vadd.f32 %v4657, %v4849
  %v4851 = vpop.f32.mrb[0].mxu0
  %v4852 = vpop.f32.mrb[0].mxu0
  %v4853 = vadd.f32 %v4660, %v4852
  %v4854 = vpop.f32.mrb[0].mxu0
  %4855 = vmatprep.mubr.bf16.mxu0 %v1605
  %4856 = vmatmul.mubr.bf16.gmra.mrb[0].mxu0 %v1604
  %v4857 = vpop.f32.mrb[0].mxu0
  %v4858 = vadd.f32 %v4665, %v4857
  %v4859 = vpop.f32.mrb[0].mxu0
  %v4860 = vpop.f32.mrb[0].mxu0
  %v4861 = vadd.f32 %v4668, %v4860
  %v4862 = vpop.f32.mrb[0].mxu0
  %4863 = vmatprep.mubr.bf16.mxu0 %v1611
  %4864 = vmatmul.mubr.bf16.gmra.mrb[0].mxu0 %v1610
  %v4865 = vpop.f32.mrb[0].mxu0
  %v4866 = vadd.f32 %v4673, %v4865
  %v4867 = vpop.f32.mrb[0].mxu0
  %v4868 = vpop.f32.mrb[0].mxu0
  %v4869 = vadd.f32 %v4676, %v4868
  %v4870 = vpop.f32.mrb[0].mxu0
  %4871 = vmatprep.mubr.bf16.mxu0 %v1617
  %4872 = vmatmul.mubr.bf16.gmra.mrb[0].mxu0 %v1616
  %v4873 = vpop.f32.mrb[0].mxu0
  %v4874 = vadd.f32 %v4681, %v4873
  %v4875 = vpop.f32.mrb[0].mxu0
  %v4876 = vpop.f32.mrb[0].mxu0
  %v4877 = vadd.f32 %v4684, %v4876
  %v4878 = vpop.f32.mrb[0].mxu0
  %4879 = vmatprep.mubr.bf16.mxu0 %v1623
  %4880 = vmatmul.mubr.bf16.gmra.mrb[0].mxu0 %v1622
  %v4881 = vpop.f32.mrb[0].mxu0
  %v4882 = vadd.f32 %v4689, %v4881
  %v4883 = vpop.f32.mrb[0].mxu0
  %v4884 = vpop.f32.mrb[0].mxu0
  %v4885 = vadd.f32 %v4692, %v4884
  %v4886 = vpop.f32.mrb[0].mxu0
  %4887 = vmatprep.mubr.bf16.mxu0 %v1629
  %4888 = vmatmul.mubr.bf16.gmra.mrb[0].mxu0 %v1628
  %v4889 = vpop.f32.mrb[0].mxu0
  %v4890 = vadd.f32 %v4697, %v4889
  %v4891 = vpop.f32.mrb[0].mxu0
  %v4892 = vpop.f32.mrb[0].mxu0
  %v4893 = vadd.f32 %v4700, %v4892
  %v4894 = vpop.f32.mrb[0].mxu0
  %4895 = vmatprep.mubr.bf16.mxu0 %v1635
  %4896 = vmatmul.mubr.bf16.gmra.mrb[0].mxu0 %v1634
  %v4897 = vpop.f32.mrb[0].mxu0
  %v4898 = vadd.f32 %v4705, %v4897
  %v4899 = vpop.f32.mrb[0].mxu0
  %v4900 = vpop.f32.mrb[0].mxu0
  %v4901 = vadd.f32 %v4708, %v4900
  %v4902 = vpop.f32.mrb[0].mxu0
  %4903 = vmatprep.mubr.bf16.mxu0 %v1641
  %4904 = vmatmul.mubr.bf16.gmra.mrb[0].mxu0 %v1640
  %v4905 = vpop.f32.mrb[0].mxu0
  %v4906 = vadd.f32 %v4713, %v4905
  %v4907 = vpop.f32.mrb[0].mxu0
  %v4908 = vpop.f32.mrb[0].mxu0
  %v4909 = vadd.f32 %v4716, %v4908
  %v4910 = vpop.f32.mrb[0].mxu0
  %4911 = vmatprep.mubr.bf16.mxu0 %v1647
  %4912 = vmatmul.mubr.bf16.gmra.mrb[0].mxu0 %v1646
  %v4913 = vpop.f32.mrb[0].mxu0
  %v4914 = vadd.f32 %v4721, %v4913
  %v4915 = vpop.f32.mrb[0].mxu0
  %v4916 = vpop.f32.mrb[0].mxu0
  %v4917 = vadd.f32 %v4724, %v4916
  %v4918 = vpop.f32.mrb[0].mxu0
  %4919 = vmatprep.mubr.bf16.mxu0 %v1653
  %4920 = vmatmul.mubr.bf16.gmra.mrb[0].mxu0 %v1652
  %v4921 = vpop.f32.mrb[0].mxu0
  %v4922 = vadd.f32 %v4729, %v4921
  %v4923 = vpop.f32.mrb[0].mxu0
  %v4924 = vpop.f32.mrb[0].mxu0
  %v4925 = vadd.f32 %v4732, %v4924
  %v4926 = vpop.f32.mrb[0].mxu0
  %4927 = vmatprep.mubr.bf16.mxu0 %v1659
  %4928 = vmatmul.mubr.bf16.gmra.mrb[0].mxu0 %v1658
  %v4929 = vpop.f32.mrb[0].mxu0
  %v4930 = vadd.f32 %v4737, %v4929
  %v4931 = vpop.f32.mrb[0].mxu0
  %v4932 = vpop.f32.mrb[0].mxu0
  %v4933 = vadd.f32 %v4740, %v4932
  %v4934 = vpop.f32.mrb[0].mxu0
  %4935 = vmatprep.mubr.bf16.mxu0 %v1665
  %4936 = vmatmul.mubr.bf16.gmra.mrb[0].mxu0 %v1664
  %v4937 = vpop.f32.mrb[0].mxu0
  %v4938 = vadd.f32 %v4745, %v4937
  %v4939 = vpop.f32.mrb[0].mxu0
  %v4940 = vpop.f32.mrb[0].mxu0
  %v4941 = vadd.f32 %v4748, %v4940
  %v4942 = vpop.f32.mrb[0].mxu0
  %4943 = vmatprep.mubr.bf16.mxu0 %v1671
  %4944 = vmatmul.mubr.bf16.gmra.mrb[0].mxu0 %v1670
  %v4945 = vpop.f32.mrb[0].mxu0
  %v4946 = vadd.f32 %v4753, %v4945
  %v4947 = vpop.f32.mrb[0].mxu0
  %v4948 = vpop.f32.mrb[0].mxu0
  %v4949 = vadd.f32 %v4756, %v4948
  %v4950 = vpop.f32.mrb[0].mxu0
  %4951 = vdwg.mxu0
  %4952 = vmatprep.subr.bf16.mxu0 0
  %4953 = vmatpush1.bf16.msra.mxu0 %v4556
  %4954 = vmatprep.subr.bf16.mxu0 0
  %4955 = vmatpush1.bf16.msra.mxu0 %v4557
  %4956 = vmatprep.subr.bf16.mxu0 0
  %4957 = vmatpush1.bf16.msra.mxu0 %v4558
  %4958 = vmatprep.subr.bf16.mxu0 0
  %4959 = vmatpush1.bf16.msra.mxu0 %v4559
  %4960 = vmatprep.subr.bf16.mxu0 0
  %4961 = vmatpush1.bf16.msra.mxu0 %v4560
  %4962 = vmatprep.subr.bf16.mxu0 0
  %4963 = vmatpush1.bf16.msra.mxu0 %v4561
  %4964 = vmatprep.subr.bf16.mxu0 0
  %4965 = vmatpush1.bf16.msra.mxu0 %v4562
  %4966 = vmatprep.subr.bf16.mxu0 0
  %4967 = vmatpush1.bf16.msra.mxu0 %v4563
  %4968 = vmatprep.subr.bf16.mxu0 0
  %4969 = vmatpush1.bf16.msra.mxu0 %v4564
  %4970 = vmatprep.subr.bf16.mxu0 0
  %4971 = vmatpush1.bf16.msra.mxu0 %v4565
  %4972 = vmatprep.subr.bf16.mxu0 0
  %4973 = vmatpush1.bf16.msra.mxu0 0
  %4974 = vmatprep.subr.bf16.mxu0 0
  %4975 = vmatpush1.bf16.msra.mxu0 0
  %4976 = vmatprep.subr.bf16.mxu0 0
  %4977 = vmatpush1.bf16.msra.mxu0 0
  %4978 = vmatprep.subr.bf16.mxu0 0
  %4979 = vmatpush1.bf16.msra.mxu0 0
  %4980 = vmatprep.subr.bf16.mxu0 0
  %4981 = vmatpush1.bf16.msra.mxu0 0
  %4982 = vmatprep.subr.bf16.mxu0 0
  %4983 = vmatpush1.bf16.msra.mxu0 0
  %4984 = vmatprep.mubr.bf16.mxu0 %v1776
  %4985 = vmatmul.mubr.bf16.gmra.mrb[0].mxu0 %v1558
  %v4986 = vpop.f32.mrb[0].mxu0
  %v4987 = vadd.f32 %v4794, %v4986
  %v4988 = vpop.f32.mrb[0].mxu0
  %v4989 = vpop.f32.mrb[0].mxu0
  %v4990 = vadd.f32 %v4797, %v4989
  %v4991 = vpop.f32.mrb[0].mxu0
  %4992 = vmatprep.mubr.bf16.mxu0 %v1779
  %4993 = vmatmul.mubr.bf16.gmra.mrb[0].mxu0 %v1564
  %v4994 = vpop.f32.mrb[0].mxu0
  %v4995 = vadd.f32 %v4802, %v4994
  %v4996 = vpop.f32.mrb[0].mxu0
  %v4997 = vpop.f32.mrb[0].mxu0
  %v4998 = vadd.f32 %v4805, %v4997
  %v4999 = vpop.f32.mrb[0].mxu0
  %5000 = vmatprep.mubr.bf16.mxu0 %v1782
  %5001 = vmatmul.mubr.bf16.gmra.mrb[0].mxu0 %v1570
  %v5002 = vpop.f32.mrb[0].mxu0
  %v5003 = vadd.f32 %v4810, %v5002
  %v5004 = vpop.f32.mrb[0].mxu0
  %v5005 = vpop.f32.mrb[0].mxu0
  %v5006 = vadd.f32 %v4813, %v5005
  %v5007 = vpop.f32.mrb[0].mxu0
  %5008 = vmatprep.mubr.bf16.mxu0 %v1785
  %5009 = vmatmul.mubr.bf16.gmra.mrb[0].mxu0 %v1576
  %v5010 = vpop.f32.mrb[0].mxu0
  %v5011 = vadd.f32 %v4818, %v5010
  %v5012 = vpop.f32.mrb[0].mxu0
  %v5013 = vpop.f32.mrb[0].mxu0
  %v5014 = vadd.f32 %v4821, %v5013
  %v5015 = vpop.f32.mrb[0].mxu0
  %5016 = vmatprep.mubr.bf16.mxu0 %v1788
  %5017 = vmatmul.mubr.bf16.gmra.mrb[0].mxu0 %v1582
  %v5018 = vpop.f32.mrb[0].mxu0
  %v5019 = vadd.f32 %v4826, %v5018
  %v5020 = vpop.f32.mrb[0].mxu0
  %v5021 = vpop.f32.mrb[0].mxu0
  %v5022 = vadd.f32 %v4829, %v5021
  %v5023 = vpop.f32.mrb[0].mxu0
  %5024 = vmatprep.mubr.bf16.mxu0 %v1791
  %5025 = vmatmul.mubr.bf16.gmra.mrb[0].mxu0 %v1588
  %v5026 = vpop.f32.mrb[0].mxu0
  %v5027 = vadd.f32 %v4834, %v5026
  %v5028 = vpop.f32.mrb[0].mxu0
  %v5029 = vpop.f32.mrb[0].mxu0
  %v5030 = vadd.f32 %v4837, %v5029
  %v5031 = vpop.f32.mrb[0].mxu0
  %5032 = vmatprep.mubr.bf16.mxu0 %v1794
  %5033 = vmatmul.mubr.bf16.gmra.mrb[0].mxu0 %v1594
  %v5034 = vpop.f32.mrb[0].mxu0
  %v5035 = vadd.f32 %v4842, %v5034
  %v5036 = vpop.f32.mrb[0].mxu0
  %v5037 = vpop.f32.mrb[0].mxu0
  %v5038 = vadd.f32 %v4845, %v5037
  %v5039 = vpop.f32.mrb[0].mxu0
  %5040 = vmatprep.mubr.bf16.mxu0 %v1797
  %5041 = vmatmul.mubr.bf16.gmra.mrb[0].mxu0 %v1600
  %v5042 = vpop.f32.mrb[0].mxu0
  %v5043 = vadd.f32 %v4850, %v5042
  %v5044 = vpop.f32.mrb[0].mxu0
  %v5045 = vpop.f32.mrb[0].mxu0
  %v5046 = vadd.f32 %v4853, %v5045
  %v5047 = vpop.f32.mrb[0].mxu0
  %5048 = vmatprep.mubr.bf16.mxu0 %v1800
  %5049 = vmatmul.mubr.bf16.gmra.mrb[0].mxu0 %v1606
  %v5050 = vpop.f32.mrb[0].mxu0
  %v5051 = vadd.f32 %v4858, %v5050
  %v5052 = vpop.f32.mrb[0].mxu0
  %v5053 = vpop.f32.mrb[0].mxu0
  %v5054 = vadd.f32 %v4861, %v5053
  %v5055 = vpop.f32.mrb[0].mxu0
  %5056 = vmatprep.mubr.bf16.mxu0 %v1803
  %5057 = vmatmul.mubr.bf16.gmra.mrb[0].mxu0 %v1612
  %v5058 = vpop.f32.mrb[0].mxu0
  %v5059 = vadd.f32 %v4866, %v5058
  %v5060 = vpop.f32.mrb[0].mxu0
  %v5061 = vpop.f32.mrb[0].mxu0
  %v5062 = vadd.f32 %v4869, %v5061
  %v5063 = vpop.f32.mrb[0].mxu0
  %5064 = vmatprep.mubr.bf16.mxu0 %v1806
  %5065 = vmatmul.mubr.bf16.gmra.mrb[0].mxu0 %v1618
  %v5066 = vpop.f32.mrb[0].mxu0
  %v5067 = vadd.f32 %v4874, %v5066
  %v5068 = vpop.f32.mrb[0].mxu0
  %v5069 = vpop.f32.mrb[0].mxu0
  %v5070 = vadd.f32 %v4877, %v5069
  %v5071 = vpop.f32.mrb[0].mxu0
  %5072 = vmatprep.mubr.bf16.mxu0 %v1809
  %5073 = vmatmul.mubr.bf16.gmra.mrb[0].mxu0 %v1624
  %v5074 = vpop.f32.mrb[0].mxu0
  %v5075 = vadd.f32 %v4882, %v5074
  %v5076 = vpop.f32.mrb[0].mxu0
  %v5077 = vpop.f32.mrb[0].mxu0
  %v5078 = vadd.f32 %v4885, %v5077
  %v5079 = vpop.f32.mrb[0].mxu0
  %5080 = vmatprep.mubr.bf16.mxu0 %v1812
  %5081 = vmatmul.mubr.bf16.gmra.mrb[0].mxu0 %v1630
  %v5082 = vpop.f32.mrb[0].mxu0
  %v5083 = vadd.f32 %v4890, %v5082
  %v5084 = vpop.f32.mrb[0].mxu0
  %v5085 = vpop.f32.mrb[0].mxu0
  %v5086 = vadd.f32 %v4893, %v5085
  %v5087 = vpop.f32.mrb[0].mxu0
  %5088 = vmatprep.mubr.bf16.mxu0 %v1815
  %5089 = vmatmul.mubr.bf16.gmra.mrb[0].mxu0 %v1636
  %v5090 = vpop.f32.mrb[0].mxu0
  %v5091 = vadd.f32 %v4898, %v5090
  %v5092 = vpop.f32.mrb[0].mxu0
  %v5093 = vpop.f32.mrb[0].mxu0
  %v5094 = vadd.f32 %v4901, %v5093
  %v5095 = vpop.f32.mrb[0].mxu0
  %5096 = vmatprep.mubr.bf16.mxu0 %v1818
  %5097 = vmatmul.mubr.bf16.gmra.mrb[0].mxu0 %v1642
  %v5098 = vpop.f32.mrb[0].mxu0
  %v5099 = vadd.f32 %v4906, %v5098
  %v5100 = vpop.f32.mrb[0].mxu0
  %v5101 = vpop.f32.mrb[0].mxu0
  %v5102 = vadd.f32 %v4909, %v5101
  %v5103 = vpop.f32.mrb[0].mxu0
  %5104 = vmatprep.mubr.bf16.mxu0 %v1821
  %5105 = vmatmul.mubr.bf16.gmra.mrb[0].mxu0 %v1648
  %v5106 = vpop.f32.mrb[0].mxu0
  %v5107 = vadd.f32 %v4914, %v5106
  %v5108 = vpop.f32.mrb[0].mxu0
  %v5109 = vpop.f32.mrb[0].mxu0
  %v5110 = vadd.f32 %v4917, %v5109
  %v5111 = vpop.f32.mrb[0].mxu0
  %5112 = vmatprep.mubr.bf16.mxu0 %v1824
  %5113 = vmatmul.mubr.bf16.gmra.mrb[0].mxu0 %v1654
  %v5114 = vpop.f32.mrb[0].mxu0
  %v5115 = vadd.f32 %v4922, %v5114
  %v5116 = vpop.f32.mrb[0].mxu0
  %v5117 = vpop.f32.mrb[0].mxu0
  %v5118 = vadd.f32 %v4925, %v5117
  %v5119 = vpop.f32.mrb[0].mxu0
  %5120 = vmatprep.mubr.bf16.mxu0 %v1827
  %5121 = vmatmul.mubr.bf16.gmra.mrb[0].mxu0 %v1660
  %v5122 = vpop.f32.mrb[0].mxu0
  %v5123 = vadd.f32 %v4930, %v5122
  %v5124 = vpop.f32.mrb[0].mxu0
  %v5125 = vpop.f32.mrb[0].mxu0
  %v5126 = vadd.f32 %v4933, %v5125
  %v5127 = vpop.f32.mrb[0].mxu0
  %5128 = vmatprep.mubr.bf16.mxu0 %v1830
  %5129 = vmatmul.mubr.bf16.gmra.mrb[0].mxu0 %v1666
  %v5130 = vpop.f32.mrb[0].mxu0
  %v5131 = vadd.f32 %v4938, %v5130
  %v5132 = vpop.f32.mrb[0].mxu0
  %v5133 = vpop.f32.mrb[0].mxu0
  %v5134 = vadd.f32 %v4941, %v5133
  %v5135 = vpop.f32.mrb[0].mxu0
  %5136 = vmatprep.mubr.bf16.mxu0 %v1833
  %5137 = vmatmul.mubr.bf16.gmra.mrb[0].mxu0 %v1672
  %v5138 = vpop.f32.mrb[0].mxu0
  %v5139 = vadd.f32 %v4946, %v5138
  %v5140 = vpop.f32.mrb[0].mxu0
  %v5141 = vpop.f32.mrb[0].mxu0
  %v5142 = vadd.f32 %v4949, %v5141
  %v5143 = vpop.f32.mrb[0].mxu0
  %5144 = vdwg.mxu0
  %v5145 = vmax.f32 %v4987, %v5067
  %v5146 = vmax.f32 %v4990, %v5070
  %v5147 = vmax.f32 %v4995, %v5075
  %v5148 = vmax.f32 %v4998, %v5078
  %v5149 = vmax.f32 %v5003, %v5083
  %v5150 = vmax.f32 %v5006, %v5086
  %v5151 = vmax.f32 %v5011, %v5091
  %v5152 = vmax.f32 %v5014, %v5094
  %v5153 = vmax.f32 %v5019, %v5099
  %v5154 = vmax.f32 %v5022, %v5102
  %v5155 = vmax.f32 %v5027, %v5107
  %v5156 = vmax.f32 %v5030, %v5110
  %v5157 = vmax.f32 %v5035, %v5115
  %v5158 = vmax.f32 %v5038, %v5118
  %v5159 = vmax.f32 %v5043, %v5123
  %v5160 = vmax.f32 %v5046, %v5126
  %v5161 = vmax.f32 %v5051, %v5131
  %v5162 = vmax.f32 %v5054, %v5134
  %v5163 = vmax.f32 %v5059, %v5139
  %v5164 = vmax.f32 %v5062, %v5142
  %v5165 = vmax.f32 %v5145, %v5147
  %v5166 = vmax.f32 %v5146, %v5148
  %v5167 = vmax.f32 %v5149, %v5151
  %v5168 = vmax.f32 %v5150, %v5152
  %v5169 = vmax.f32 %v5153, %v5155
  %v5170 = vmax.f32 %v5154, %v5156
  %v5171 = vmax.f32 %v5157, %v5159
  %v5172 = vmax.f32 %v5158, %v5160
  %v5173 = vmax.f32 %v5161, %v5163
  %v5174 = vmax.f32 %v5162, %v5164
  %v5175 = vadd.f32 %v5165, %v318
  %v5176 = vadd.f32 %v5166, %v323
  %v5177 = vadd.f32 %v5167, %v328
  %v5178 = vadd.f32 %v5168, %v333
  %v5179 = vadd.f32 %v5169, %v338
  %v5180 = vadd.f32 %v5170, %v343
  %v5181 = vadd.f32 %v5171, %v348
  %v5182 = vadd.f32 %v5172, %v353
  %v5183 = vadd.f32 %v5173, %v358
  %v5184 = vadd.f32 %v5174, %v363
  %v5185 = vmax.f32 %v5175, 0.0
  %v5186 = vmax.f32 %v5176, 0.0
  %v5187 = vmax.f32 %v5177, 0.0
  %v5188 = vmax.f32 %v5178, 0.0
  %v5189 = vmax.f32 %v5179, 0.0
  %v5190 = vmax.f32 %v5180, 0.0
  %v5191 = vmax.f32 %v5181, 0.0
  %v5192 = vmax.f32 %v5182, 0.0
  %v5193 = vmax.f32 %v5183, 0.0
  %v5194 = vmax.f32 %v5184, 0.0
  %v5195 = vpack.c.bf16 %v5186, %v5185
  %v5196 = vpack.c.bf16 %v5188, %v5187
  %v5197 = vpack.c.bf16 %v5190, %v5189
  %v5198 = vpack.c.bf16 %v5192, %v5191
  %v5199 = vpack.c.bf16 %v5194, %v5193
  %s5200 = scalar_lea.vmem [#allocation3], 160
  %5201 = vst [vmem:[%s5200] sm:$0xff] %v5195
  %5202 = vst [vmem:[%s5200 + $0x8] sm:$0xff] %v5196
  %5203 = vst [vmem:[%s5200 + $0x10] sm:$0xff] %v5197
  %5204 = vst [vmem:[%s5200 + $0x18] sm:$0xff] %v5198
  %5205 = vst [vmem:[%s5200 + $0x20] sm:$0xff] %v5199
  %v5206 = vld [vmem:[#allocation3] sm:$0xff]
  %v5207 = vld [vmem:[#allocation3 + $0x8] sm:$0xff]
  %v5208 = vld [vmem:[#allocation3 + $0x10] sm:$0xff]
  %v5209 = vld [vmem:[#allocation3 + $0x18] sm:$0xff]
  %v5210 = vld [vmem:[#allocation3 + $0x20] sm:$0xff]
  %v5211 = vld [vmem:[#allocation3 + $0x28] sm:$0xff]
  %v5212 = vld [vmem:[#allocation3 + $0x30] sm:$0xff]
  %v5213 = vld [vmem:[#allocation3 + $0x38] sm:$0xff]
  %v5214 = vld [vmem:[#allocation3 + $0x40] sm:$0xff]
  %v5215 = vld [vmem:[#allocation3 + $0x48] sm:$0xff]
  %v5216 = vld [vmem:[#allocation3 + $0x50] sm:$0xff]
  %v5217 = vld [vmem:[#allocation3 + $0x58] sm:$0xff]
  %v5218 = vld [vmem:[#allocation3 + $0x60] sm:$0xff]
  %v5219 = vld [vmem:[#allocation3 + $0x68] sm:$0xff]
  %v5220 = vld [vmem:[#allocation3 + $0x70] sm:$0xff]
  %v5221 = vld [vmem:[#allocation3 + $0x78] sm:$0xff]
  %v5222 = vld [vmem:[#allocation3 + $0x80] sm:$0xff]
  %v5223 = vld [vmem:[#allocation3 + $0x88] sm:$0xff]
  %v5224 = vld [vmem:[#allocation3 + $0x90] sm:$0xff]
  %v5225 = vld [vmem:[#allocation3 + $0x98] sm:$0xff]
  %v5226 = vld [vmem:[#allocation3 + $0xa0] sm:$0xff]
  %v5227 = vld [vmem:[#allocation3 + $0xa8] sm:$0xff]
  %v5228 = vld [vmem:[#allocation3 + $0xb0] sm:$0xff]
  %v5229 = vld [vmem:[#allocation3 + $0xb8] sm:$0xff]
  %v5230 = vld [vmem:[#allocation3 + $0xc0] sm:$0xff]
  %v5231 = vld [vmem:[%s5] sm:$0xff]
  %v5232 = vld [vmem:[%s5 + $0x8] sm:$0xff]
  %v5233 = vld [vmem:[%s5 + $0x10] sm:$0xff]
  %v5234 = vld [vmem:[%s5 + $0x18] sm:$0xff]
  %v5235 = vld [vmem:[%s5 + $0x20] sm:$0xff]
  %v5236 = vld [vmem:[%s5 + $0x28] sm:$0xff]
  %v5237 = vld [vmem:[%s5 + $0x30] sm:$0xff]
  %v5238 = vld [vmem:[%s5 + $0x38] sm:$0xff]
  %v5239 = vld [vmem:[%s5 + $0x40] sm:$0xff]
  %v5240 = vld [vmem:[%s5 + $0x48] sm:$0xff]
  %v5241 = vld [vmem:[%s5 + $0x50] sm:$0xff]
  %v5242 = vld [vmem:[%s5 + $0x58] sm:$0xff]
  %v5243 = vld [vmem:[%s5 + $0x60] sm:$0xff]
  %v5244 = vld [vmem:[%s5 + $0x68] sm:$0xff]
  %v5245 = vld [vmem:[%s5 + $0x70] sm:$0xff]
  %v5246 = vld [vmem:[%s5 + $0x78] sm:$0xff]
  %v5247 = vld [vmem:[%s5 + $0x80] sm:$0xff]
  %v5248 = vld [vmem:[%s5 + $0x88] sm:$0xff]
  %v5249 = vld [vmem:[%s5 + $0x90] sm:$0xff]
  %v5250 = vld [vmem:[%s5 + $0x98] sm:$0xff]
  %v5251 = vld [vmem:[%s5 + $0xa0] sm:$0xff]
  %v5252 = vld [vmem:[%s5 + $0xa8] sm:$0xff]
  %v5253 = vld [vmem:[%s5 + $0xb0] sm:$0xff]
  %v5254 = vld [vmem:[%s5 + $0xb8] sm:$0xff]
  %v5255 = vld [vmem:[%s5 + $0xc0] sm:$0xff]
  %v5256 = vld [vmem:[%s5 + $0xc8] sm:$0xff]
  %v5257 = vld [vmem:[%s5 + $0xd0] sm:$0xff]
  %v5258 = vld [vmem:[%s5 + $0xd8] sm:$0xff]
  %v5259 = vld [vmem:[%s5 + $0xe0] sm:$0xff]
  %v5260 = vld [vmem:[%s5 + $0xe8] sm:$0xff]
  %v5261 = vld [vmem:[%s5 + $0xf0] sm:$0xff]
  %v5262 = vld [vmem:[%s5 + $0xf8] sm:$0xff]
  %v5263 = vld [vmem:[%s6] sm:$0xff]
  %v5264 = vld [vmem:[%s6 + $0x8] sm:$0xff]
  %v5265 = vld [vmem:[%s6 + $0x10] sm:$0xff]
  %v5266 = vld [vmem:[%s6 + $0x18] sm:$0xff]
  %v5267 = vld [vmem:[%s6 + $0x20] sm:$0xff]
  %v5268 = vld [vmem:[%s6 + $0x28] sm:$0xff]
  %v5269 = vld [vmem:[%s6 + $0x30] sm:$0xff]
  %v5270 = vld [vmem:[%s6 + $0x38] sm:$0xff]
  %v5271 = vld [vmem:[%s6 + $0x40] sm:$0xff]
  %v5272 = vld [vmem:[%s6 + $0x48] sm:$0xff]
  %v5273 = vld [vmem:[%s6 + $0x50] sm:$0xff]
  %v5274 = vld [vmem:[%s6 + $0x58] sm:$0xff]
  %v5275 = vld [vmem:[%s6 + $0x60] sm:$0xff]
  %v5276 = vld [vmem:[%s6 + $0x68] sm:$0xff]
  %v5277 = vld [vmem:[%s6 + $0x70] sm:$0xff]
  %v5278 = vld [vmem:[%s6 + $0x78] sm:$0xff]
  %5280 = vset.pattern.permute.xlu0 0
  %5281 = vperm.xlu0 %5280, %v5263
  %v5282 = vpop.permute.xlu0 %5281
  %5285 = vset.pattern.permute.xlu0 0
  %5286 = vperm.xlu0 %5285, %v5264
  %v5287 = vpop.permute.xlu0 %5286
  %5290 = vset.pattern.permute.xlu0 0
  %5291 = vperm.xlu0 %5290, %v5265
  %v5292 = vpop.permute.xlu0 %5291
  %5295 = vset.pattern.permute.xlu0 0
  %5296 = vperm.xlu0 %5295, %v5266
  %v5297 = vpop.permute.xlu0 %5296
  %5300 = vset.pattern.permute.xlu0 0
  %5301 = vperm.xlu0 %5300, %v5267
  %v5302 = vpop.permute.xlu0 %5301
  %5305 = vset.pattern.permute.xlu0 0
  %5306 = vperm.xlu0 %5305, %v5268
  %v5307 = vpop.permute.xlu0 %5306
  %5310 = vset.pattern.permute.xlu0 0
  %5311 = vperm.xlu0 %5310, %v5269
  %v5312 = vpop.permute.xlu0 %5311
  %5315 = vset.pattern.permute.xlu0 0
  %5316 = vperm.xlu0 %5315, %v5270
  %v5317 = vpop.permute.xlu0 %5316
  %5320 = vset.pattern.permute.xlu0 0
  %5321 = vperm.xlu0 %5320, %v5271
  %v5322 = vpop.permute.xlu0 %5321
  %5325 = vset.pattern.permute.xlu0 0
  %5326 = vperm.xlu0 %5325, %v5272
  %v5327 = vpop.permute.xlu0 %5326
  %5330 = vset.pattern.permute.xlu0 0
  %5331 = vperm.xlu0 %5330, %v5273
  %v5332 = vpop.permute.xlu0 %5331
  %5335 = vset.pattern.permute.xlu0 0
  %5336 = vperm.xlu0 %5335, %v5274
  %v5337 = vpop.permute.xlu0 %5336
  %5340 = vset.pattern.permute.xlu0 0
  %5341 = vperm.xlu0 %5340, %v5275
  %v5342 = vpop.permute.xlu0 %5341
  %5345 = vset.pattern.permute.xlu0 0
  %5346 = vperm.xlu0 %5345, %v5276
  %v5347 = vpop.permute.xlu0 %5346
  %5350 = vset.pattern.permute.xlu0 0
  %5351 = vperm.xlu0 %5350, %v5277
  %v5352 = vpop.permute.xlu0 %5351
  %5355 = vset.pattern.permute.xlu0 0
  %5356 = vperm.xlu0 %5355, %v5278
  %v5357 = vpop.permute.xlu0 %5356
  %v5391 = vunpack.c.l.b16 %v5231
  %v5392 = vunpack.c.h.b16 %v5231
  %v5393 = vunpack.c.l.b16 %v5232
  %v5394 = vunpack.c.h.b16 %v5232
  %v5395 = vunpack.c.l.b16 %v5233
  %v5396 = vunpack.c.h.b16 %v5233
  %v5397 = vunpack.c.l.b16 %v5234
  %v5398 = vunpack.c.h.b16 %v5234
  %v5399 = vunpack.c.l.b16 %v5235
  %v5400 = vunpack.c.h.b16 %v5235
  %v5401 = vunpack.c.l.b16 %v5236
  %v5402 = vunpack.c.h.b16 %v5236
  %v5403 = vunpack.c.l.b16 %v5237
  %v5404 = vunpack.c.h.b16 %v5237
  %v5405 = vunpack.c.l.b16 %v5238
  %v5406 = vunpack.c.h.b16 %v5238
  %v5407 = vunpack.c.l.b16 %v5239
  %v5408 = vunpack.c.h.b16 %v5239
  %v5409 = vunpack.c.l.b16 %v5240
  %v5410 = vunpack.c.h.b16 %v5240
  %v5411 = vunpack.c.l.b16 %v5241
  %v5412 = vunpack.c.h.b16 %v5241
  %v5413 = vunpack.c.l.b16 %v5242
  %v5414 = vunpack.c.h.b16 %v5242
  %v5415 = vunpack.c.l.b16 %v5243
  %v5416 = vunpack.c.h.b16 %v5243
  %v5417 = vunpack.c.l.b16 %v5244
  %v5418 = vunpack.c.h.b16 %v5244
  %v5419 = vunpack.c.l.b16 %v5245
  %v5420 = vunpack.c.h.b16 %v5245
  %v5421 = vunpack.c.l.b16 %v5246
  %v5422 = vunpack.c.h.b16 %v5246
  %v5423 = vunpack.c.l.b16 %v5247
  %v5424 = vunpack.c.h.b16 %v5247
  %v5425 = vunpack.c.l.b16 %v5248
  %v5426 = vunpack.c.h.b16 %v5248
  %v5427 = vunpack.c.l.b16 %v5249
  %v5428 = vunpack.c.h.b16 %v5249
  %v5429 = vunpack.c.l.b16 %v5250
  %v5430 = vunpack.c.h.b16 %v5250
  %v5431 = vunpack.c.l.b16 %v5251
  %v5432 = vunpack.c.h.b16 %v5251
  %v5433 = vunpack.c.l.b16 %v5252
  %v5434 = vunpack.c.h.b16 %v5252
  %v5435 = vunpack.c.l.b16 %v5253
  %v5436 = vunpack.c.h.b16 %v5253
  %v5437 = vunpack.c.l.b16 %v5254
  %v5438 = vunpack.c.h.b16 %v5254
  %v5439 = vunpack.c.l.b16 %v5255
  %v5440 = vunpack.c.h.b16 %v5255
  %v5441 = vunpack.c.l.b16 %v5256
  %v5442 = vunpack.c.h.b16 %v5256
  %v5443 = vunpack.c.l.b16 %v5257
  %v5444 = vunpack.c.h.b16 %v5257
  %v5445 = vunpack.c.l.b16 %v5258
  %v5446 = vunpack.c.h.b16 %v5258
  %v5447 = vunpack.c.l.b16 %v5259
  %v5448 = vunpack.c.h.b16 %v5259
  %v5449 = vunpack.c.l.b16 %v5260
  %v5450 = vunpack.c.h.b16 %v5260
  %v5451 = vunpack.c.l.b16 %v5261
  %v5452 = vunpack.c.h.b16 %v5261
  %v5453 = vunpack.c.l.b16 %v5262
  %v5454 = vunpack.c.h.b16 %v5262
  %v5455 = vpack.c.b16 %v5395, %v5391
  %v5456 = vpack.c.b16 %v5396, %v5392
  %v5457 = vpack.c.b16 %v5397, %v5393
  %v5458 = vpack.c.b16 %v5398, %v5394
  %v5459 = vpack.c.b16 %v5403, %v5399
  %v5460 = vpack.c.b16 %v5404, %v5400
  %v5461 = vpack.c.b16 %v5405, %v5401
  %v5462 = vpack.c.b16 %v5406, %v5402
  %v5463 = vpack.c.b16 %v5411, %v5407
  %v5464 = vpack.c.b16 %v5412, %v5408
  %v5465 = vpack.c.b16 %v5413, %v5409
  %v5466 = vpack.c.b16 %v5414, %v5410
  %v5467 = vpack.c.b16 %v5419, %v5415
  %v5468 = vpack.c.b16 %v5420, %v5416
  %v5469 = vpack.c.b16 %v5421, %v5417
  %v5470 = vpack.c.b16 %v5422, %v5418
  %v5471 = vpack.c.b16 %v5427, %v5423
  %v5472 = vpack.c.b16 %v5428, %v5424
  %v5473 = vpack.c.b16 %v5429, %v5425
  %v5474 = vpack.c.b16 %v5430, %v5426
  %v5475 = vpack.c.b16 %v5435, %v5431
  %v5476 = vpack.c.b16 %v5436, %v5432
  %v5477 = vpack.c.b16 %v5437, %v5433
  %v5478 = vpack.c.b16 %v5438, %v5434
  %v5479 = vpack.c.b16 %v5443, %v5439
  %v5480 = vpack.c.b16 %v5444, %v5440
  %v5481 = vpack.c.b16 %v5445, %v5441
  %v5482 = vpack.c.b16 %v5446, %v5442
  %v5483 = vpack.c.b16 %v5451, %v5447
  %v5484 = vpack.c.b16 %v5452, %v5448
  %v5485 = vpack.c.b16 %v5453, %v5449
  %v5486 = vpack.c.b16 %v5454, %v5450
  %vm5511 = vcmask 130048
  %v5513 = vsel %vm5511, %v5458, 0
  %v5516 = vsel %vm5511, %v5462, 0
  %v5519 = vsel %vm5511, %v5466, 0
  %v5522 = vsel %vm5511, %v5470, 0
  %v5525 = vsel %vm5511, %v5474, 0
  %v5528 = vsel %vm5511, %v5478, 0
  %v5531 = vsel %vm5511, %v5482, 0
  %v5534 = vsel %vm5511, %v5486, 0
  %5536 = vmatprep.subr.bf16.mxu0 0
  %5537 = vmatpush1.bf16.msra.mxu0 %v5206
  %5538 = vmatprep.subr.bf16.mxu0 0
  %5539 = vmatpush1.bf16.msra.mxu0 %v5207
  %5540 = vmatprep.subr.bf16.mxu0 0
  %5541 = vmatpush1.bf16.msra.mxu0 %v5208
  %5542 = vmatprep.subr.bf16.mxu0 0
  %5543 = vmatpush1.bf16.msra.mxu0 %v5209
  %5544 = vmatprep.subr.bf16.mxu0 0
  %5545 = vmatpush1.bf16.msra.mxu0 %v5210
  %5546 = vmatprep.subr.bf16.mxu0 0
  %5547 = vmatpush1.bf16.msra.mxu0 %v5211
  %5548 = vmatprep.subr.bf16.mxu0 0
  %5549 = vmatpush1.bf16.msra.mxu0 %v5212
  %5550 = vmatprep.subr.bf16.mxu0 0
  %5551 = vmatpush1.bf16.msra.mxu0 %v5213
  %5552 = vmatprep.subr.bf16.mxu0 0
  %5553 = vmatpush1.bf16.msra.mxu0 %v5214
  %5554 = vmatprep.subr.bf16.mxu0 0
  %5555 = vmatpush1.bf16.msra.mxu0 %v5215
  %5556 = vmatprep.subr.bf16.mxu0 0
  %5557 = vmatpush1.bf16.msra.mxu0 %v5216
  %5558 = vmatprep.subr.bf16.mxu0 0
  %5559 = vmatpush1.bf16.msra.mxu0 %v5217
  %5560 = vmatprep.subr.bf16.mxu0 0
  %5561 = vmatpush1.bf16.msra.mxu0 %v5218
  %5562 = vmatprep.subr.bf16.mxu0 0
  %5563 = vmatpush1.bf16.msra.mxu0 %v5219
  %5564 = vmatprep.subr.bf16.mxu0 0
  %5565 = vmatpush1.bf16.msra.mxu0 %v5220
  %5566 = vmatprep.subr.bf16.mxu0 0
  %5567 = vmatpush1.bf16.msra.mxu0 %v5221
  %5568 = vmatprep.mubr.bf16.mxu0 %v5456
  %5569 = vmatmul.mubr.bf16.gmra.mrb[0].mxu0 %v5455
  %v5570 = vpop.f32.mrb[0].mxu0
  %v5571 = vadd.f32 %v5282, %v5570
  %v5572 = vpop.f32.mrb[0].mxu0
  %v5573 = vpop.f32.mrb[0].mxu0
  %v5574 = vadd.f32 %v5287, %v5573
  %v5575 = vpop.f32.mrb[0].mxu0
  %5576 = vmatprep.mubr.bf16.mxu0 %v5460
  %5577 = vmatmul.mubr.bf16.gmra.mrb[0].mxu0 %v5459
  %v5578 = vpop.f32.mrb[0].mxu0
  %v5579 = vadd.f32 %v5292, %v5578
  %v5580 = vpop.f32.mrb[0].mxu0
  %v5581 = vpop.f32.mrb[0].mxu0
  %v5582 = vadd.f32 %v5297, %v5581
  %v5583 = vpop.f32.mrb[0].mxu0
  %5584 = vmatprep.mubr.bf16.mxu0 %v5464
  %5585 = vmatmul.mubr.bf16.gmra.mrb[0].mxu0 %v5463
  %v5586 = vpop.f32.mrb[0].mxu0
  %v5587 = vadd.f32 %v5302, %v5586
  %v5588 = vpop.f32.mrb[0].mxu0
  %v5589 = vpop.f32.mrb[0].mxu0
  %v5590 = vadd.f32 %v5307, %v5589
  %v5591 = vpop.f32.mrb[0].mxu0
  %5592 = vmatprep.mubr.bf16.mxu0 %v5468
  %5593 = vmatmul.mubr.bf16.gmra.mrb[0].mxu0 %v5467
  %v5594 = vpop.f32.mrb[0].mxu0
  %v5595 = vadd.f32 %v5312, %v5594
  %v5596 = vpop.f32.mrb[0].mxu0
  %v5597 = vpop.f32.mrb[0].mxu0
  %v5598 = vadd.f32 %v5317, %v5597
  %v5599 = vpop.f32.mrb[0].mxu0
  %5600 = vmatprep.mubr.bf16.mxu0 %v5472
  %5601 = vmatmul.mubr.bf16.gmra.mrb[0].mxu0 %v5471
  %v5602 = vpop.f32.mrb[0].mxu0
  %v5603 = vadd.f32 %v5322, %v5602
  %v5604 = vpop.f32.mrb[0].mxu0
  %v5605 = vpop.f32.mrb[0].mxu0
  %v5606 = vadd.f32 %v5327, %v5605
  %v5607 = vpop.f32.mrb[0].mxu0
  %5608 = vmatprep.mubr.bf16.mxu0 %v5476
  %5609 = vmatmul.mubr.bf16.gmra.mrb[0].mxu0 %v5475
  %v5610 = vpop.f32.mrb[0].mxu0
  %v5611 = vadd.f32 %v5332, %v5610
  %v5612 = vpop.f32.mrb[0].mxu0
  %v5613 = vpop.f32.mrb[0].mxu0
  %v5614 = vadd.f32 %v5337, %v5613
  %v5615 = vpop.f32.mrb[0].mxu0
  %5616 = vmatprep.mubr.bf16.mxu0 %v5480
  %5617 = vmatmul.mubr.bf16.gmra.mrb[0].mxu0 %v5479
  %v5618 = vpop.f32.mrb[0].mxu0
  %v5619 = vadd.f32 %v5342, %v5618
  %v5620 = vpop.f32.mrb[0].mxu0
  %v5621 = vpop.f32.mrb[0].mxu0
  %v5622 = vadd.f32 %v5347, %v5621
  %v5623 = vpop.f32.mrb[0].mxu0
  %5624 = vmatprep.mubr.bf16.mxu0 %v5484
  %5625 = vmatmul.mubr.bf16.gmra.mrb[0].mxu0 %v5483
  %v5626 = vpop.f32.mrb[0].mxu0
  %v5627 = vadd.f32 %v5352, %v5626
  %v5628 = vpop.f32.mrb[0].mxu0
  %v5629 = vpop.f32.mrb[0].mxu0
  %v5630 = vadd.f32 %v5357, %v5629
  %v5631 = vpop.f32.mrb[0].mxu0
  %5632 = vdwg.mxu0
  %5633 = vmatprep.subr.bf16.mxu0 0
  %5634 = vmatpush1.bf16.msra.mxu0 %v5222
  %5635 = vmatprep.subr.bf16.mxu0 0
  %5636 = vmatpush1.bf16.msra.mxu0 %v5223
  %5637 = vmatprep.subr.bf16.mxu0 0
  %5638 = vmatpush1.bf16.msra.mxu0 %v5224
  %5639 = vmatprep.subr.bf16.mxu0 0
  %5640 = vmatpush1.bf16.msra.mxu0 %v5225
  %5641 = vmatprep.subr.bf16.mxu0 0
  %5642 = vmatpush1.bf16.msra.mxu0 %v5226
  %5643 = vmatprep.subr.bf16.mxu0 0
  %5644 = vmatpush1.bf16.msra.mxu0 %v5227
  %5645 = vmatprep.subr.bf16.mxu0 0
  %5646 = vmatpush1.bf16.msra.mxu0 %v5228
  %5647 = vmatprep.subr.bf16.mxu0 0
  %5648 = vmatpush1.bf16.msra.mxu0 %v5229
  %5649 = vmatprep.subr.bf16.mxu0 0
  %5650 = vmatpush1.bf16.msra.mxu0 %v5230
  %5651 = vmatprep.subr.bf16.mxu0 0
  %5652 = vmatpush1.bf16.msra.mxu0 0
  %5653 = vmatprep.subr.bf16.mxu0 0
  %5654 = vmatpush1.bf16.msra.mxu0 0
  %5655 = vmatprep.subr.bf16.mxu0 0
  %5656 = vmatpush1.bf16.msra.mxu0 0
  %5657 = vmatprep.subr.bf16.mxu0 0
  %5658 = vmatpush1.bf16.msra.mxu0 0
  %5659 = vmatprep.subr.bf16.mxu0 0
  %5660 = vmatpush1.bf16.msra.mxu0 0
  %5661 = vmatprep.subr.bf16.mxu0 0
  %5662 = vmatpush1.bf16.msra.mxu0 0
  %5663 = vmatprep.subr.bf16.mxu0 0
  %5664 = vmatpush1.bf16.msra.mxu0 0
  %5665 = vmatprep.mubr.bf16.mxu0 %v5513
  %5666 = vmatmul.mubr.bf16.gmra.mrb[0].mxu0 %v5457
  %v5667 = vpop.f32.mrb[0].mxu0
  %v5668 = vadd.f32 %v5571, %v5667
  %v5669 = vpop.f32.mrb[0].mxu0
  %v5670 = vpop.f32.mrb[0].mxu0
  %v5671 = vadd.f32 %v5574, %v5670
  %v5672 = vpop.f32.mrb[0].mxu0
  %5673 = vmatprep.mubr.bf16.mxu0 %v5516
  %5674 = vmatmul.mubr.bf16.gmra.mrb[0].mxu0 %v5461
  %v5675 = vpop.f32.mrb[0].mxu0
  %v5676 = vadd.f32 %v5579, %v5675
  %v5677 = vpop.f32.mrb[0].mxu0
  %v5678 = vpop.f32.mrb[0].mxu0
  %v5679 = vadd.f32 %v5582, %v5678
  %v5680 = vpop.f32.mrb[0].mxu0
  %5681 = vmatprep.mubr.bf16.mxu0 %v5519
  %5682 = vmatmul.mubr.bf16.gmra.mrb[0].mxu0 %v5465
  %v5683 = vpop.f32.mrb[0].mxu0
  %v5684 = vadd.f32 %v5587, %v5683
  %v5685 = vpop.f32.mrb[0].mxu0
  %v5686 = vpop.f32.mrb[0].mxu0
  %v5687 = vadd.f32 %v5590, %v5686
  %v5688 = vpop.f32.mrb[0].mxu0
  %5689 = vmatprep.mubr.bf16.mxu0 %v5522
  %5690 = vmatmul.mubr.bf16.gmra.mrb[0].mxu0 %v5469
  %v5691 = vpop.f32.mrb[0].mxu0
  %v5692 = vadd.f32 %v5595, %v5691
  %v5693 = vpop.f32.mrb[0].mxu0
  %v5694 = vpop.f32.mrb[0].mxu0
  %v5695 = vadd.f32 %v5598, %v5694
  %v5696 = vpop.f32.mrb[0].mxu0
  %5697 = vmatprep.mubr.bf16.mxu0 %v5525
  %5698 = vmatmul.mubr.bf16.gmra.mrb[0].mxu0 %v5473
  %v5699 = vpop.f32.mrb[0].mxu0
  %v5700 = vadd.f32 %v5603, %v5699
  %v5701 = vpop.f32.mrb[0].mxu0
  %v5702 = vpop.f32.mrb[0].mxu0
  %v5703 = vadd.f32 %v5606, %v5702
  %v5704 = vpop.f32.mrb[0].mxu0
  %5705 = vmatprep.mubr.bf16.mxu0 %v5528
  %5706 = vmatmul.mubr.bf16.gmra.mrb[0].mxu0 %v5477
  %v5707 = vpop.f32.mrb[0].mxu0
  %v5708 = vadd.f32 %v5611, %v5707
  %v5709 = vpop.f32.mrb[0].mxu0
  %v5710 = vpop.f32.mrb[0].mxu0
  %v5711 = vadd.f32 %v5614, %v5710
  %v5712 = vpop.f32.mrb[0].mxu0
  %5713 = vmatprep.mubr.bf16.mxu0 %v5531
  %5714 = vmatmul.mubr.bf16.gmra.mrb[0].mxu0 %v5481
  %v5715 = vpop.f32.mrb[0].mxu0
  %v5716 = vadd.f32 %v5619, %v5715
  %v5717 = vpop.f32.mrb[0].mxu0
  %v5718 = vpop.f32.mrb[0].mxu0
  %v5719 = vadd.f32 %v5622, %v5718
  %v5720 = vpop.f32.mrb[0].mxu0
  %5721 = vmatprep.mubr.bf16.mxu0 %v5534
  %5722 = vmatmul.mubr.bf16.gmra.mrb[0].mxu0 %v5485
  %v5723 = vpop.f32.mrb[0].mxu0
  %v5724 = vadd.f32 %v5627, %v5723
  %v5725 = vpop.f32.mrb[0].mxu0
  %v5726 = vpop.f32.mrb[0].mxu0
  %v5727 = vadd.f32 %v5630, %v5726
  %v5728 = vpop.f32.mrb[0].mxu0
  %5729 = vdwg.mxu0
  %v5730 = vmax.f32 %v5668, 0.0
  %v5731 = vmax.f32 %v5671, 0.0
  %v5732 = vmax.f32 %v5676, 0.0
  %v5733 = vmax.f32 %v5679, 0.0
  %v5734 = vmax.f32 %v5684, 0.0
  %v5735 = vmax.f32 %v5687, 0.0
  %v5736 = vmax.f32 %v5692, 0.0
  %v5737 = vmax.f32 %v5695, 0.0
  %v5738 = vmax.f32 %v5700, 0.0
  %v5739 = vmax.f32 %v5703, 0.0
  %v5740 = vmax.f32 %v5708, 0.0
  %v5741 = vmax.f32 %v5711, 0.0
  %v5742 = vmax.f32 %v5716, 0.0
  %v5743 = vmax.f32 %v5719, 0.0
  %v5744 = vmax.f32 %v5724, 0.0
  %v5745 = vmax.f32 %v5727, 0.0
  %v5746 = vpack.c.bf16 %v5731, %v5730
  %v5747 = vpack.c.bf16 %v5733, %v5732
  %v5748 = vpack.c.bf16 %v5735, %v5734
  %v5749 = vpack.c.bf16 %v5737, %v5736
  %v5750 = vpack.c.bf16 %v5739, %v5738
  %v5751 = vpack.c.bf16 %v5741, %v5740
  %v5752 = vpack.c.bf16 %v5743, %v5742
  %v5753 = vpack.c.bf16 %v5745, %v5744
  %v5754 = vld [vmem:[%s7] sm:$0xf]
  %v5755 = vld [vmem:[%s7 + $0x4] sm:$0xf]
  %v5756 = vld [vmem:[%s7 + $0x8] sm:$0xf]
  %v5757 = vld [vmem:[%s7 + $0xc] sm:$0xf]
  %v5758 = vld [vmem:[%s7 + $0x10] sm:$0xf]
  %v5759 = vld [vmem:[%s7 + $0x14] sm:$0xf]
  %v5760 = vld [vmem:[%s7 + $0x18] sm:$0xf]
  %v5761 = vld [vmem:[%s7 + $0x1c] sm:$0xf]
  %v5762 = vld [vmem:[%s7 + $0x20] sm:$0xf]
  %v5763 = vld [vmem:[%s7 + $0x24] sm:$0xf]
  %v5764 = vld [vmem:[%s7 + $0x28] sm:$0xf]
  %v5765 = vld [vmem:[%s7 + $0x2c] sm:$0xf]
  %v5766 = vld [vmem:[%s7 + $0x30] sm:$0xf]
  %v5767 = vld [vmem:[%s7 + $0x34] sm:$0xf]
  %v5768 = vld [vmem:[%s7 + $0x38] sm:$0xf]
  %v5769 = vld [vmem:[%s7 + $0x3c] sm:$0xf]
  %v5770 = vld [vmem:[%s8] sm:$0xff]
  %v5771 = vld [vmem:[%s8 + $0x8] sm:$0xff]
  %v5772 = vld [vmem:[%s8 + $0x10] sm:$0xff]
  %v5773 = vld [vmem:[%s8 + $0x18] sm:$0xff]
  %v5774 = vld [vmem:[%s8 + $0x20] sm:$0xff]
  %v5775 = vld [vmem:[%s8 + $0x28] sm:$0xff]
  %v5776 = vld [vmem:[%s8 + $0x30] sm:$0xff]
  %v5777 = vld [vmem:[%s8 + $0x38] sm:$0xff]
  %v5778 = vld [vmem:[%s8 + $0x40] sm:$0xff]
  %v5779 = vld [vmem:[%s8 + $0x48] sm:$0xff]
  %v5780 = vld [vmem:[%s8 + $0x50] sm:$0xff]
  %v5781 = vld [vmem:[%s8 + $0x58] sm:$0xff]
  %v5782 = vld [vmem:[%s8 + $0x60] sm:$0xff]
  %v5783 = vld [vmem:[%s8 + $0x68] sm:$0xff]
  %v5784 = vld [vmem:[%s8 + $0x70] sm:$0xff]
  %v5785 = vld [vmem:[%s8 + $0x78] sm:$0xff]
  %5787 = vset.pattern.permute.xlu0 0
  %5788 = vperm.xlu0 %5787, %v5770
  %v5789 = vpop.permute.xlu0 %5788
  %5792 = vset.pattern.permute.xlu0 0
  %5793 = vperm.xlu0 %5792, %v5771
  %v5794 = vpop.permute.xlu0 %5793
  %5797 = vset.pattern.permute.xlu0 0
  %5798 = vperm.xlu0 %5797, %v5772
  %v5799 = vpop.permute.xlu0 %5798
  %5802 = vset.pattern.permute.xlu0 0
  %5803 = vperm.xlu0 %5802, %v5773
  %v5804 = vpop.permute.xlu0 %5803
  %5807 = vset.pattern.permute.xlu0 0
  %5808 = vperm.xlu0 %5807, %v5774
  %v5809 = vpop.permute.xlu0 %5808
  %5812 = vset.pattern.permute.xlu0 0
  %5813 = vperm.xlu0 %5812, %v5775
  %v5814 = vpop.permute.xlu0 %5813
  %5817 = vset.pattern.permute.xlu0 0
  %5818 = vperm.xlu0 %5817, %v5776
  %v5819 = vpop.permute.xlu0 %5818
  %5822 = vset.pattern.permute.xlu0 0
  %5823 = vperm.xlu0 %5822, %v5777
  %v5824 = vpop.permute.xlu0 %5823
  %5827 = vset.pattern.permute.xlu0 0
  %5828 = vperm.xlu0 %5827, %v5778
  %v5829 = vpop.permute.xlu0 %5828
  %5832 = vset.pattern.permute.xlu0 0
  %5833 = vperm.xlu0 %5832, %v5779
  %v5834 = vpop.permute.xlu0 %5833
  %5837 = vset.pattern.permute.xlu0 0
  %5838 = vperm.xlu0 %5837, %v5780
  %v5839 = vpop.permute.xlu0 %5838
  %5842 = vset.pattern.permute.xlu0 0
  %5843 = vperm.xlu0 %5842, %v5781
  %v5844 = vpop.permute.xlu0 %5843
  %5847 = vset.pattern.permute.xlu0 0
  %5848 = vperm.xlu0 %5847, %v5782
  %v5849 = vpop.permute.xlu0 %5848
  %5852 = vset.pattern.permute.xlu0 0
  %5853 = vperm.xlu0 %5852, %v5783
  %v5854 = vpop.permute.xlu0 %5853
  %5857 = vset.pattern.permute.xlu0 0
  %5858 = vperm.xlu0 %5857, %v5784
  %v5859 = vpop.permute.xlu0 %5858
  %5862 = vset.pattern.permute.xlu0 0
  %5863 = vperm.xlu0 %5862, %v5785
  %v5864 = vpop.permute.xlu0 %5863
  %v5882 = vunpack.c.l.b16 %v5754
  %v5883 = vunpack.c.l.b16 %v5755
  %v5884 = vunpack.c.l.b16 %v5756
  %v5885 = vunpack.c.l.b16 %v5757
  %v5886 = vunpack.c.l.b16 %v5758
  %v5887 = vunpack.c.l.b16 %v5759
  %v5888 = vunpack.c.l.b16 %v5760
  %v5889 = vunpack.c.l.b16 %v5761
  %v5890 = vunpack.c.l.b16 %v5762
  %v5891 = vunpack.c.l.b16 %v5763
  %v5892 = vunpack.c.l.b16 %v5764
  %v5893 = vunpack.c.l.b16 %v5765
  %v5894 = vunpack.c.l.b16 %v5766
  %v5895 = vunpack.c.l.b16 %v5767
  %v5896 = vunpack.c.l.b16 %v5768
  %v5897 = vunpack.c.l.b16 %v5769
  %v5898 = vpack.c.b16 %v5883, %v5882
  %v5899 = vpack.c.b16 %v5885, %v5884
  %v5900 = vpack.c.b16 %v5887, %v5886
  %v5901 = vpack.c.b16 %v5889, %v5888
  %v5902 = vpack.c.b16 %v5891, %v5890
  %v5903 = vpack.c.b16 %v5893, %v5892
  %v5904 = vpack.c.b16 %v5895, %v5894
  %v5905 = vpack.c.b16 %v5897, %v5896
  %5914 = vmatprep.subr.bf16.mxu0 0
  %5915 = vmatpush1.bf16.msra.mxu0 %v5746
  %5916 = vmatprep.subr.bf16.mxu0 0
  %5917 = vmatpush1.bf16.msra.mxu0 %v5747
  %5918 = vmatprep.subr.bf16.mxu0 0
  %5919 = vmatpush1.bf16.msra.mxu0 %v5748
  %5920 = vmatprep.subr.bf16.mxu0 0
  %5921 = vmatpush1.bf16.msra.mxu0 %v5749
  %5922 = vmatprep.subr.bf16.mxu0 0
  %5923 = vmatpush1.bf16.msra.mxu0 %v5750
  %5924 = vmatprep.subr.bf16.mxu0 0
  %5925 = vmatpush1.bf16.msra.mxu0 %v5751
  %5926 = vmatprep.subr.bf16.mxu0 0
  %5927 = vmatpush1.bf16.msra.mxu0 %v5752
  %5928 = vmatprep.subr.bf16.mxu0 0
  %5929 = vmatpush1.bf16.msra.mxu0 %v5753
  %5930 = vmatprep.subr.bf16.mxu0 0
  %5931 = vmatpush1.bf16.msra.mxu0 0
  %5932 = vmatprep.subr.bf16.mxu0 0
  %5933 = vmatpush1.bf16.msra.mxu0 0
  %5934 = vmatprep.subr.bf16.mxu0 0
  %5935 = vmatpush1.bf16.msra.mxu0 0
  %5936 = vmatprep.subr.bf16.mxu0 0
  %5937 = vmatpush1.bf16.msra.mxu0 0
  %5938 = vmatprep.subr.bf16.mxu0 0
  %5939 = vmatpush1.bf16.msra.mxu0 0
  %5940 = vmatprep.subr.bf16.mxu0 0
  %5941 = vmatpush1.bf16.msra.mxu0 0
  %5942 = vmatprep.subr.bf16.mxu0 0
  %5943 = vmatpush1.bf16.msra.mxu0 0
  %5944 = vmatprep.subr.bf16.mxu0 0
  %5945 = vmatpush1.bf16.msra.mxu0 0
  %5946 = vmatprep.mubr.bf16.mxu0 0
  %5947 = vmatmul.mubr.bf16.gmra.mrb[0].mxu0 %v5898
  %v5948 = vpop.f32.mrb[0].mxu0
  %v5949 = vadd.f32 %v5789, %v5948
  %v5950 = vpop.f32.mrb[0].mxu0
  %v5951 = vpop.f32.mrb[0].mxu0
  %v5952 = vadd.f32 %v5794, %v5951
  %v5953 = vpop.f32.mrb[0].mxu0
  %5954 = vmatprep.mubr.bf16.mxu0 0
  %5955 = vmatmul.mubr.bf16.gmra.mrb[0].mxu0 %v5899
  %v5956 = vpop.f32.mrb[0].mxu0
  %v5957 = vadd.f32 %v5799, %v5956
  %v5958 = vpop.f32.mrb[0].mxu0
  %v5959 = vpop.f32.mrb[0].mxu0
  %v5960 = vadd.f32 %v5804, %v5959
  %v5961 = vpop.f32.mrb[0].mxu0
  %5962 = vmatprep.mubr.bf16.mxu0 0
  %5963 = vmatmul.mubr.bf16.gmra.mrb[0].mxu0 %v5900
  %v5964 = vpop.f32.mrb[0].mxu0
  %v5965 = vadd.f32 %v5809, %v5964
  %v5966 = vpop.f32.mrb[0].mxu0
  %v5967 = vpop.f32.mrb[0].mxu0
  %v5968 = vadd.f32 %v5814, %v5967
  %v5969 = vpop.f32.mrb[0].mxu0
  %5970 = vmatprep.mubr.bf16.mxu0 0
  %5971 = vmatmul.mubr.bf16.gmra.mrb[0].mxu0 %v5901
  %v5972 = vpop.f32.mrb[0].mxu0
  %v5973 = vadd.f32 %v5819, %v5972
  %v5974 = vpop.f32.mrb[0].mxu0
  %v5975 = vpop.f32.mrb[0].mxu0
  %v5976 = vadd.f32 %v5824, %v5975
  %v5977 = vpop.f32.mrb[0].mxu0
  %5978 = vmatprep.mubr.bf16.mxu0 0
  %5979 = vmatmul.mubr.bf16.gmra.mrb[0].mxu0 %v5902
  %v5980 = vpop.f32.mrb[0].mxu0
  %v5981 = vadd.f32 %v5829, %v5980
  %v5982 = vpop.f32.mrb[0].mxu0
  %v5983 = vpop.f32.mrb[0].mxu0
  %v5984 = vadd.f32 %v5834, %v5983
  %v5985 = vpop.f32.mrb[0].mxu0
  %5986 = vmatprep.mubr.bf16.mxu0 0
  %5987 = vmatmul.mubr.bf16.gmra.mrb[0].mxu0 %v5903
  %v5988 = vpop.f32.mrb[0].mxu0
  %v5989 = vadd.f32 %v5839, %v5988
  %v5990 = vpop.f32.mrb[0].mxu0
  %v5991 = vpop.f32.mrb[0].mxu0
  %v5992 = vadd.f32 %v5844, %v5991
  %v5993 = vpop.f32.mrb[0].mxu0
  %5994 = vmatprep.mubr.bf16.mxu0 0
  %5995 = vmatmul.mubr.bf16.gmra.mrb[0].mxu0 %v5904
  %v5996 = vpop.f32.mrb[0].mxu0
  %v5997 = vadd.f32 %v5849, %v5996
  %v5998 = vpop.f32.mrb[0].mxu0
  %v5999 = vpop.f32.mrb[0].mxu0
  %v6000 = vadd.f32 %v5854, %v5999
  %v6001 = vpop.f32.mrb[0].mxu0
  %6002 = vmatprep.mubr.bf16.mxu0 0
  %6003 = vmatmul.mubr.bf16.gmra.mrb[0].mxu0 %v5905
  %v6004 = vpop.f32.mrb[0].mxu0
  %v6005 = vadd.f32 %v5859, %v6004
  %v6006 = vpop.f32.mrb[0].mxu0
  %v6007 = vpop.f32.mrb[0].mxu0
  %v6008 = vadd.f32 %v5864, %v6007
  %v6009 = vpop.f32.mrb[0].mxu0
  %6010 = vdwg.mxu0
  %v6011 = vmax.f32 %v5949, 0.0
  %v6012 = vmax.f32 %v5952, 0.0
  %v6013 = vmax.f32 %v5957, 0.0
  %v6014 = vmax.f32 %v5960, 0.0
  %v6015 = vmax.f32 %v5965, 0.0
  %v6016 = vmax.f32 %v5968, 0.0
  %v6017 = vmax.f32 %v5973, 0.0
  %v6018 = vmax.f32 %v5976, 0.0
  %v6019 = vmax.f32 %v5981, 0.0
  %v6020 = vmax.f32 %v5984, 0.0
  %v6021 = vmax.f32 %v5989, 0.0
  %v6022 = vmax.f32 %v5992, 0.0
  %v6023 = vmax.f32 %v5997, 0.0
  %v6024 = vmax.f32 %v6000, 0.0
  %v6025 = vmax.f32 %v6005, 0.0
  %v6026 = vmax.f32 %v6008, 0.0
  %v6027 = vpack.c.bf16 %v6012, %v6011
  %v6028 = vpack.c.bf16 %v6014, %v6013
  %v6029 = vpack.c.bf16 %v6016, %v6015
  %v6030 = vpack.c.bf16 %v6018, %v6017
  %v6031 = vpack.c.bf16 %v6020, %v6019
  %v6032 = vpack.c.bf16 %v6022, %v6021
  %v6033 = vpack.c.bf16 %v6024, %v6023
  %v6034 = vpack.c.bf16 %v6026, %v6025
  %v6035 = vld [vmem:[%s9] sm:$0xf]
  %v6036 = vld [vmem:[%s9 + $0x4] sm:$0xf]
  %v6037 = vld [vmem:[%s9 + $0x8] sm:$0xf]
  %v6038 = vld [vmem:[%s9 + $0xc] sm:$0xf]
  %v6039 = vld [vmem:[%s9 + $0x10] sm:$0xf]
  %v6040 = vld [vmem:[%s9 + $0x14] sm:$0xf]
  %v6041 = vld [vmem:[%s9 + $0x18] sm:$0xf]
  %v6042 = vld [vmem:[%s9 + $0x1c] sm:$0xf]
  %v6043 = vld [vmem:[%s9 + $0x20] sm:$0xf]
  %v6044 = vld [vmem:[%s9 + $0x24] sm:$0xf]
  %v6045 = vld [vmem:[%s9 + $0x28] sm:$0xf]
  %v6046 = vld [vmem:[%s9 + $0x2c] sm:$0xf]
  %v6047 = vld [vmem:[%s9 + $0x30] sm:$0xf]
  %v6048 = vld [vmem:[%s9 + $0x34] sm:$0xf]
  %v6049 = vld [vmem:[%s9 + $0x38] sm:$0xf]
  %v6050 = vld [vmem:[%s9 + $0x3c] sm:$0xf]
  %v6051 = vld [vmem:[%s10] sm:$0xff]
  %v6052 = vld [vmem:[%s10 + $0x8] sm:$0xff]
  %v6053 = vld [vmem:[%s10 + $0x10] sm:$0xff]
  %v6054 = vld [vmem:[%s10 + $0x18] sm:$0xff]
  %v6055 = vld [vmem:[%s10 + $0x20] sm:$0xff]
  %v6056 = vld [vmem:[%s10 + $0x28] sm:$0xff]
  %v6057 = vld [vmem:[%s10 + $0x30] sm:$0xff]
  %v6058 = vld [vmem:[%s10 + $0x38] sm:$0xff]
  %v6059 = vld [vmem:[%s10 + $0x40] sm:$0xff]
  %v6060 = vld [vmem:[%s10 + $0x48] sm:$0xff]
  %v6061 = vld [vmem:[%s10 + $0x50] sm:$0xff]
  %v6062 = vld [vmem:[%s10 + $0x58] sm:$0xff]
  %v6063 = vld [vmem:[%s10 + $0x60] sm:$0xff]
  %v6064 = vld [vmem:[%s10 + $0x68] sm:$0xff]
  %v6065 = vld [vmem:[%s10 + $0x70] sm:$0xff]
  %v6066 = vld [vmem:[%s10 + $0x78] sm:$0xff]
  %6068 = vset.pattern.permute.xlu0 0
  %6069 = vperm.xlu0 %6068, %v6051
  %v6070 = vpop.permute.xlu0 %6069
  %6073 = vset.pattern.permute.xlu0 0
  %6074 = vperm.xlu0 %6073, %v6052
  %v6075 = vpop.permute.xlu0 %6074
  %6078 = vset.pattern.permute.xlu0 0
  %6079 = vperm.xlu0 %6078, %v6053
  %v6080 = vpop.permute.xlu0 %6079
  %6083 = vset.pattern.permute.xlu0 0
  %6084 = vperm.xlu0 %6083, %v6054
  %v6085 = vpop.permute.xlu0 %6084
  %6088 = vset.pattern.permute.xlu0 0
  %6089 = vperm.xlu0 %6088, %v6055
  %v6090 = vpop.permute.xlu0 %6089
  %6093 = vset.pattern.permute.xlu0 0
  %6094 = vperm.xlu0 %6093, %v6056
  %v6095 = vpop.permute.xlu0 %6094
  %6098 = vset.pattern.permute.xlu0 0
  %6099 = vperm.xlu0 %6098, %v6057
  %v6100 = vpop.permute.xlu0 %6099
  %6103 = vset.pattern.permute.xlu0 0
  %6104 = vperm.xlu0 %6103, %v6058
  %v6105 = vpop.permute.xlu0 %6104
  %6108 = vset.pattern.permute.xlu0 0
  %6109 = vperm.xlu0 %6108, %v6059
  %v6110 = vpop.permute.xlu0 %6109
  %6113 = vset.pattern.permute.xlu0 0
  %6114 = vperm.xlu0 %6113, %v6060
  %v6115 = vpop.permute.xlu0 %6114
  %6118 = vset.pattern.permute.xlu0 0
  %6119 = vperm.xlu0 %6118, %v6061
  %v6120 = vpop.permute.xlu0 %6119
  %6123 = vset.pattern.permute.xlu0 0
  %6124 = vperm.xlu0 %6123, %v6062
  %v6125 = vpop.permute.xlu0 %6124
  %6128 = vset.pattern.permute.xlu0 0
  %6129 = vperm.xlu0 %6128, %v6063
  %v6130 = vpop.permute.xlu0 %6129
  %6133 = vset.pattern.permute.xlu0 0
  %6134 = vperm.xlu0 %6133, %v6064
  %v6135 = vpop.permute.xlu0 %6134
  %6138 = vset.pattern.permute.xlu0 0
  %6139 = vperm.xlu0 %6138, %v6065
  %v6140 = vpop.permute.xlu0 %6139
  %6143 = vset.pattern.permute.xlu0 0
  %6144 = vperm.xlu0 %6143, %v6066
  %v6145 = vpop.permute.xlu0 %6144
  %v6163 = vunpack.c.l.b16 %v6035
  %v6164 = vunpack.c.l.b16 %v6036
  %v6165 = vunpack.c.l.b16 %v6037
  %v6166 = vunpack.c.l.b16 %v6038
  %v6167 = vunpack.c.l.b16 %v6039
  %v6168 = vunpack.c.l.b16 %v6040
  %v6169 = vunpack.c.l.b16 %v6041
  %v6170 = vunpack.c.l.b16 %v6042
  %v6171 = vunpack.c.l.b16 %v6043
  %v6172 = vunpack.c.l.b16 %v6044
  %v6173 = vunpack.c.l.b16 %v6045
  %v6174 = vunpack.c.l.b16 %v6046
  %v6175 = vunpack.c.l.b16 %v6047
  %v6176 = vunpack.c.l.b16 %v6048
  %v6177 = vunpack.c.l.b16 %v6049
  %v6178 = vunpack.c.l.b16 %v6050
  %v6179 = vpack.c.b16 %v6164, %v6163
  %v6180 = vpack.c.b16 %v6166, %v6165
  %v6181 = vpack.c.b16 %v6168, %v6167
  %v6182 = vpack.c.b16 %v6170, %v6169
  %v6183 = vpack.c.b16 %v6172, %v6171
  %v6184 = vpack.c.b16 %v6174, %v6173
  %v6185 = vpack.c.b16 %v6176, %v6175
  %v6186 = vpack.c.b16 %v6178, %v6177
  %6195 = vmatprep.subr.bf16.mxu0 0
  %6196 = vmatpush1.bf16.msra.mxu0 %v6027
  %6197 = vmatprep.subr.bf16.mxu0 0
  %6198 = vmatpush1.bf16.msra.mxu0 %v6028
  %6199 = vmatprep.subr.bf16.mxu0 0
  %6200 = vmatpush1.bf16.msra.mxu0 %v6029
  %6201 = vmatprep.subr.bf16.mxu0 0
  %6202 = vmatpush1.bf16.msra.mxu0 %v6030
  %6203 = vmatprep.subr.bf16.mxu0 0
  %6204 = vmatpush1.bf16.msra.mxu0 %v6031
  %6205 = vmatprep.subr.bf16.mxu0 0
  %6206 = vmatpush1.bf16.msra.mxu0 %v6032
  %6207 = vmatprep.subr.bf16.mxu0 0
  %6208 = vmatpush1.bf16.msra.mxu0 %v6033
  %6209 = vmatprep.subr.bf16.mxu0 0
  %6210 = vmatpush1.bf16.msra.mxu0 %v6034
  %6211 = vmatprep.subr.bf16.mxu0 0
  %6212 = vmatpush1.bf16.msra.mxu0 0
  %6213 = vmatprep.subr.bf16.mxu0 0
  %6214 = vmatpush1.bf16.msra.mxu0 0
  %6215 = vmatprep.subr.bf16.mxu0 0
  %6216 = vmatpush1.bf16.msra.mxu0 0
  %6217 = vmatprep.subr.bf16.mxu0 0
  %6218 = vmatpush1.bf16.msra.mxu0 0
  %6219 = vmatprep.subr.bf16.mxu0 0
  %6220 = vmatpush1.bf16.msra.mxu0 0
  %6221 = vmatprep.subr.bf16.mxu0 0
  %6222 = vmatpush1.bf16.msra.mxu0 0
  %6223 = vmatprep.subr.bf16.mxu0 0
  %6224 = vmatpush1.bf16.msra.mxu0 0
  %6225 = vmatprep.subr.bf16.mxu0 0
  %6226 = vmatpush1.bf16.msra.mxu0 0
  %6227 = vmatprep.mubr.bf16.mxu0 0
  %6228 = vmatmul.mubr.bf16.gmra.mrb[0].mxu0 %v6179
  %v6229 = vpop.f32.mrb[0].mxu0
  %v6230 = vadd.f32 %v6070, %v6229
  %v6231 = vpop.f32.mrb[0].mxu0
  %v6232 = vpop.f32.mrb[0].mxu0
  %v6233 = vadd.f32 %v6075, %v6232
  %v6234 = vpop.f32.mrb[0].mxu0
  %6235 = vmatprep.mubr.bf16.mxu0 0
  %6236 = vmatmul.mubr.bf16.gmra.mrb[0].mxu0 %v6180
  %v6237 = vpop.f32.mrb[0].mxu0
  %v6238 = vadd.f32 %v6080, %v6237
  %v6239 = vpop.f32.mrb[0].mxu0
  %v6240 = vpop.f32.mrb[0].mxu0
  %v6241 = vadd.f32 %v6085, %v6240
  %v6242 = vpop.f32.mrb[0].mxu0
  %6243 = vmatprep.mubr.bf16.mxu0 0
  %6244 = vmatmul.mubr.bf16.gmra.mrb[0].mxu0 %v6181
  %v6245 = vpop.f32.mrb[0].mxu0
  %v6246 = vadd.f32 %v6090, %v6245
  %v6247 = vpop.f32.mrb[0].mxu0
  %v6248 = vpop.f32.mrb[0].mxu0
  %v6249 = vadd.f32 %v6095, %v6248
  %v6250 = vpop.f32.mrb[0].mxu0
  %6251 = vmatprep.mubr.bf16.mxu0 0
  %6252 = vmatmul.mubr.bf16.gmra.mrb[0].mxu0 %v6182
  %v6253 = vpop.f32.mrb[0].mxu0
  %v6254 = vadd.f32 %v6100, %v6253
  %v6255 = vpop.f32.mrb[0].mxu0
  %v6256 = vpop.f32.mrb[0].mxu0
  %v6257 = vadd.f32 %v6105, %v6256
  %v6258 = vpop.f32.mrb[0].mxu0
  %6259 = vmatprep.mubr.bf16.mxu0 0
  %6260 = vmatmul.mubr.bf16.gmra.mrb[0].mxu0 %v6183
  %v6261 = vpop.f32.mrb[0].mxu0
  %v6262 = vadd.f32 %v6110, %v6261
  %v6263 = vpop.f32.mrb[0].mxu0
  %v6264 = vpop.f32.mrb[0].mxu0
  %v6265 = vadd.f32 %v6115, %v6264
  %v6266 = vpop.f32.mrb[0].mxu0
  %6267 = vmatprep.mubr.bf16.mxu0 0
  %6268 = vmatmul.mubr.bf16.gmra.mrb[0].mxu0 %v6184
  %v6269 = vpop.f32.mrb[0].mxu0
  %v6270 = vadd.f32 %v6120, %v6269
  %v6271 = vpop.f32.mrb[0].mxu0
  %v6272 = vpop.f32.mrb[0].mxu0
  %v6273 = vadd.f32 %v6125, %v6272
  %v6274 = vpop.f32.mrb[0].mxu0
  %6275 = vmatprep.mubr.bf16.mxu0 0
  %6276 = vmatmul.mubr.bf16.gmra.mrb[0].mxu0 %v6185
  %v6277 = vpop.f32.mrb[0].mxu0
  %v6278 = vadd.f32 %v6130, %v6277
  %v6279 = vpop.f32.mrb[0].mxu0
  %v6280 = vpop.f32.mrb[0].mxu0
  %v6281 = vadd.f32 %v6135, %v6280
  %v6282 = vpop.f32.mrb[0].mxu0
  %6283 = vmatprep.mubr.bf16.mxu0 0
  %6284 = vmatmul.mubr.bf16.gmra.mrb[0].mxu0 %v6186
  %v6285 = vpop.f32.mrb[0].mxu0
  %v6286 = vadd.f32 %v6140, %v6285
  %v6287 = vpop.f32.mrb[0].mxu0
  %v6288 = vpop.f32.mrb[0].mxu0
  %v6289 = vadd.f32 %v6145, %v6288
  %v6290 = vpop.f32.mrb[0].mxu0
  %6291 = vdwg.mxu0
  %v6292 = vmax.f32 %v6230, 0.0
  %v6293 = vmax.f32 %v6233, 0.0
  %v6294 = vmax.f32 %v6238, 0.0
  %v6295 = vmax.f32 %v6241, 0.0
  %v6296 = vmax.f32 %v6246, 0.0
  %v6297 = vmax.f32 %v6249, 0.0
  %v6298 = vmax.f32 %v6254, 0.0
  %v6299 = vmax.f32 %v6257, 0.0
  %v6300 = vmax.f32 %v6262, 0.0
  %v6301 = vmax.f32 %v6265, 0.0
  %v6302 = vmax.f32 %v6270, 0.0
  %v6303 = vmax.f32 %v6273, 0.0
  %v6304 = vmax.f32 %v6278, 0.0
  %v6305 = vmax.f32 %v6281, 0.0
  %v6306 = vmax.f32 %v6286, 0.0
  %v6307 = vmax.f32 %v6289, 0.0
  %v6308 = vpack.c.bf16 %v6293, %v6292
  %v6309 = vpack.c.bf16 %v6295, %v6294
  %v6310 = vpack.c.bf16 %v6297, %v6296
  %v6311 = vpack.c.bf16 %v6299, %v6298
  %v6312 = vpack.c.bf16 %v6301, %v6300
  %v6313 = vpack.c.bf16 %v6303, %v6302
  %v6314 = vpack.c.bf16 %v6305, %v6304
  %v6315 = vpack.c.bf16 %v6307, %v6306
  %v6316 = vld [vmem:[%s11] sm:$0xf]
  %v6317 = vld [vmem:[%s11 + $0x4] sm:$0xf]
  %v6318 = vld [vmem:[%s11 + $0x8] sm:$0xf]
  %v6319 = vld [vmem:[%s11 + $0xc] sm:$0xf]
  %v6320 = vld [vmem:[%s12] sm:$0xff]
  %v6321 = vld [vmem:[%s12 + $0x8] sm:$0xff]
  %v6322 = vld [vmem:[%s12 + $0x10] sm:$0xff]
  %v6323 = vld [vmem:[%s12 + $0x18] sm:$0xff]
  %6325 = vset.pattern.permute.xlu0 0
  %6326 = vperm.xlu0 %6325, %v6320
  %v6327 = vpop.permute.xlu0 %6326
  %6330 = vset.pattern.permute.xlu0 0
  %6331 = vperm.xlu0 %6330, %v6321
  %v6332 = vpop.permute.xlu0 %6331
  %6335 = vset.pattern.permute.xlu0 0
  %6336 = vperm.xlu0 %6335, %v6322
  %v6337 = vpop.permute.xlu0 %6336
  %6340 = vset.pattern.permute.xlu0 0
  %6341 = vperm.xlu0 %6340, %v6323
  %v6342 = vpop.permute.xlu0 %6341
  %v6348 = vunpack.c.l.b16 %v6316
  %v6349 = vunpack.c.l.b16 %v6317
  %v6350 = vunpack.c.l.b16 %v6318
  %v6351 = vunpack.c.l.b16 %v6319
  %v6352 = vpack.c.b16 %v6349, %v6348
  %v6353 = vpack.c.b16 %v6351, %v6350
  %6356 = vmatprep.subr.bf16.mxu0 0
  %6357 = vmatpush1.bf16.msra.mxu0 %v6308
  %6358 = vmatprep.subr.bf16.mxu0 0
  %6359 = vmatpush1.bf16.msra.mxu0 %v6309
  %6360 = vmatprep.subr.bf16.mxu0 0
  %6361 = vmatpush1.bf16.msra.mxu0 %v6310
  %6362 = vmatprep.subr.bf16.mxu0 0
  %6363 = vmatpush1.bf16.msra.mxu0 %v6311
  %6364 = vmatprep.subr.bf16.mxu0 0
  %6365 = vmatpush1.bf16.msra.mxu0 %v6312
  %6366 = vmatprep.subr.bf16.mxu0 0
  %6367 = vmatpush1.bf16.msra.mxu0 %v6313
  %6368 = vmatprep.subr.bf16.mxu0 0
  %6369 = vmatpush1.bf16.msra.mxu0 %v6314
  %6370 = vmatprep.subr.bf16.mxu0 0
  %6371 = vmatpush1.bf16.msra.mxu0 %v6315
  %6372 = vmatprep.subr.bf16.mxu0 0
  %6373 = vmatpush1.bf16.msra.mxu0 0
  %6374 = vmatprep.subr.bf16.mxu0 0
  %6375 = vmatpush1.bf16.msra.mxu0 0
  %6376 = vmatprep.subr.bf16.mxu0 0
  %6377 = vmatpush1.bf16.msra.mxu0 0
  %6378 = vmatprep.subr.bf16.mxu0 0
  %6379 = vmatpush1.bf16.msra.mxu0 0
  %6380 = vmatprep.subr.bf16.mxu0 0
  %6381 = vmatpush1.bf16.msra.mxu0 0
  %6382 = vmatprep.subr.bf16.mxu0 0
  %6383 = vmatpush1.bf16.msra.mxu0 0
  %6384 = vmatprep.subr.bf16.mxu0 0
  %6385 = vmatpush1.bf16.msra.mxu0 0
  %6386 = vmatprep.subr.bf16.mxu0 0
  %6387 = vmatpush1.bf16.msra.mxu0 0
  %6388 = vmatprep.mubr.bf16.mxu0 0
  %6389 = vmatmul.mubr.bf16.gmra.mrb[0].mxu0 %v6352
  %v6390 = vpop.f32.mrb[0].mxu0
  %v6391 = vadd.f32 %v6327, %v6390
  %v6392 = vpop.f32.mrb[0].mxu0
  %v6393 = vpop.f32.mrb[0].mxu0
  %v6394 = vadd.f32 %v6332, %v6393
  %v6395 = vpop.f32.mrb[0].mxu0
  %6396 = vmatprep.mubr.bf16.mxu0 0
  %6397 = vmatmul.mubr.bf16.gmra.mrb[0].mxu0 %v6353
  %v6398 = vpop.f32.mrb[0].mxu0
  %v6399 = vadd.f32 %v6337, %v6398
  %v6400 = vpop.f32.mrb[0].mxu0
  %v6401 = vpop.f32.mrb[0].mxu0
  %v6402 = vadd.f32 %v6342, %v6401
  %v6403 = vpop.f32.mrb[0].mxu0
  %6404 = vdwg.mxu0
  %v6405 = vmax.f32 %v6391, %v6394
  %v6406 = vmax.f32 %v6399, %v6402
  %v6407 = vmax.f32 %v6405, %v6406
  %v6408 = vrot.slane %v6407, 4
  %v6409 = vmax.f32 %v6407, %v6408
  %v6410 = vrot.slane %v6409, 2
  %v6411 = vmax.f32 %v6409, %v6410
  %v6412 = vrot.slane %v6411, 1
  %v6413 = vmax.f32 %v6411, %v6412
  %v6414 = vsub.f32 %v6391, %v6413
  %v6415 = vsub.f32 %v6394, %v6413
  %v6416 = vsub.f32 %v6399, %v6413
  %v6417 = vsub.f32 %v6402, %v6413
  %v6418 = vmul.f32 %v6414, 1.442695
  %v6419 = vpow.pop %v6418
  %v6420 = vmul.f32 %v6415, 1.442695
  %v6421 = vpow.pop %v6420
  %v6422 = vmul.f32 %v6416, 1.442695
  %v6423 = vpow.pop %v6422
  %v6424 = vmul.f32 %v6417, 1.442695
  %v6425 = vpow.pop %v6424
  %v6426 = vadd.f32 %v6419, %v6421
  %v6427 = vadd.f32 %v6426, %v6423
  %v6428 = vadd.f32 %v6427, %v6425
  %v6429 = vrot.slane %v6428, 4
  %v6430 = vadd.f32 %v6428, %v6429
  %v6431 = vrot.slane %v6430, 2
  %v6432 = vadd.f32 %v6430, %v6431
  %v6433 = vrot.slane %v6432, 1
  %v6434 = vadd.f32 %v6432, %v6433
  %v6435 = vlog2.pop %v6434
  %v6436 = vmul.f32 %v6435, 0.6931472
  %v6437 = vsub.f32 %v6414, %v6436
  %v6438 = vsub.f32 %v6415, %v6436
  %v6439 = vsub.f32 %v6416, %v6436
  %v6440 = vsub.f32 %v6417, %v6436
  %6441 = vst [vmem:[%s13] sm:$0xff] %v6437
  %6442 = vst [vmem:[%s13 + $0x8] sm:$0xff] %v6438
  %6443 = vst [vmem:[%s13 + $0x10] sm:$0xff] %v6439
  %6444 = vst [vmem:[%s13 + $0x18] sm:$0xff] %v6440
  // Predicated region
  $region61: #{forward.1} parent=0 // pred_check
    _
  $region62: #{forward.1} parent=0 // pred_check_branch
    %6446 = sbr.rel (0) target = $region64
  $region63: #{forward.1} parent=0 // pred_region
    _
  $region64: #{forward.1} parent=0 // pred_fallthru
    _
  // Predicated region
  $region65: #{forward.1} parent=0 // pred_check
    _
  $region66: #{forward.1} parent=0 // pred_check_branch
    %6448 = sbr.rel (0) target = $region68
  $region67: #{forward.1} parent=0 // pred_region
    _
  $region68: #{forward.1} parent=0 // pred_fallthru
    _

</llo_original>
